<compile_context>
chip_gen: v7x
topology: tpu7x:2x2x1
jax: 0.10.0
libtpu: 0.0.40
codegen_flags: <defaults>
</compile_context>

<pallas_src>
import functools

import numpy as np

import jax
import jax.numpy as jnp
from jax import lax
from jax.experimental import pallas as pl
from jax.experimental.pallas import tpu as pltpu

_K = 5   # conv kernel size


# ----------------------------- fused Pallas kernel --------------------------

def _lenet_kernel(x_ref, b1c_ref, sb1_ref, bias1c_ref,
                  b2c_ref, sb2_ref, bias2c_ref,
                  wf1_ref, bf1_ref, wf2_ref, bf2_ref, wf3_ref, bf3_ref,
                  out_ref, acc1_scr, acc2_scr, fc_scr, *, n):
    """One batch tile of n images.  Row layout everywhere: row = h*n + image."""
    f32, bf16 = jnp.float32, jnp.bfloat16
    m1 = 28 * n      # conv1 output rows (28x28x6, lanes = w*6 + c)
    m2 = 10 * n      # conv2 output rows (10x10x16, lanes = w*16 + c)

    # ---- conv1: 5 banded bf16 matmuls, f32 accumulation in VMEM scratch ----
    acc1_scr[...] = jnp.dot(x_ref[pl.ds(0, m1), :], b1c_ref[0],
                            preferred_element_type=f32)
    for dh in range(1, _K):
        acc1_scr[...] += jnp.dot(x_ref[pl.ds(dh * n, m1), :], b1c_ref[dh],
                                 preferred_element_type=f32)

    # ---- pool1 rows: max of adjacent n-row blocks, in place in acc1_scr ----
    # (write region [i*n,(i+1)*n) never overlaps not-yet-read rows >= 2*i*n)
    for i in range(14):
        acc1_scr[pl.ds(i * n, n), :] = jnp.maximum(
            acc1_scr[pl.ds(2 * i * n, n), :],
            acc1_scr[pl.ds((2 * i + 1) * n, n), :])

    # ---- pool1 cols (0/1 selection matmuls) + deferred bias + relu ---------
    u1 = acc1_scr[pl.ds(0, 14 * n), :].astype(bf16)                 # (14n, 168)
    p1 = jnp.maximum(jnp.dot(u1, sb1_ref[0], preferred_element_type=f32),
                     jnp.dot(u1, sb1_ref[1], preferred_element_type=f32))
    p1 = jnp.maximum(p1 + bias1c_ref[...], 0.0)                     # (14n, 84) f32

    # ---- conv2: 5 banded bf16 matmuls, f32 accumulation in VMEM scratch ----
    acc2_scr[...] = jnp.dot(p1[0:m2, :].astype(bf16), b2c_ref[0],
                            preferred_element_type=f32)
    for dh in range(1, _K):
        acc2_scr[...] += jnp.dot(p1[dh * n: dh * n + m2, :].astype(bf16),
                                 b2c_ref[dh], preferred_element_type=f32)

    # ---- pool2: cols first, then row maxima + bias + relu, written straight
    # ---- into the fused (n, 400) fc1 operand (torch flatten baked into wf1).
    y2 = acc2_scr[...].astype(bf16)                                 # (10n, 160)
    y2c = jnp.maximum(jnp.dot(y2, sb2_ref[0], preferred_element_type=f32),
                      jnp.dot(y2, sb2_ref[1], preferred_element_type=f32))
    for i in range(5):
        blk = jnp.maximum(y2c[2 * i * n:(2 * i + 1) * n, :],
                          y2c[(2 * i + 1) * n:(2 * i + 2) * n, :])  # (n, 80)
        blk = jnp.maximum(blk + bias2c_ref[...], 0.0)
        fc_scr[:, pl.ds(i * 80, 80)] = blk.astype(bf16)

    # ---- fc1 + relu (single K=400 dot), fc2 + relu, fc3 (lane-padded) ------
    h = jnp.dot(fc_scr[...], wf1_ref[...], preferred_element_type=f32)
    h = jnp.maximum(h + bf1_ref[...], 0.0)                          # (n, 120)
    h = jnp.dot(h.astype(bf16), wf2_ref[...], preferred_element_type=f32)
    h = jnp.maximum(h + bf2_ref[...], 0.0)                          # (n, 84)
    out_ref[...] = (jnp.dot(h.astype(bf16), wf3_ref[...],
                            preferred_element_type=f32) + bf3_ref[...])


# ------------------------- host-side weight preparation ---------------------

def _band_matrices(w_oihw, w_in):
    """Conv weight (F, C, K, K) -> banded matrices (K, w_in*C, w_out*F).

    B[dh, wp*C + c, w*F + f] = w[f, c, dh, wp - w]  if 0 <= wp - w < K else 0.
    Built with gather + where only (no matmuls), numerically exact.
    """
    F, C, K, _ = w_oihw.shape
    w_out = w_in - K + 1
    wp = jnp.transpose(w_oihw, (2, 3, 1, 0)).astype(jnp.float32)   # (Kh,Kw,C,F)
    dw = np.arange(w_in)[None, :] - np.arange(w_out)[:, None]      # (w_out,w_in)
    mask = (dw >= 0) & (dw < K)
    g = wp[:, np.clip(dw, 0, K - 1)]               # (Kh, w_out, w_in, C, F)
    g = jnp.where(jnp.asarray(mask)[None, :, :, None, None], g, 0.0)
    g = jnp.transpose(g, (0, 2, 3, 1, 4))          # (Kh, w_in, C, w_out, F)
    return g.reshape(K, w_in * C, w_out * F)


def _col_select(w_conv, p_out, f):
    """0/1 matrices (2, w_conv*f, p_out*f) selecting lane block 2j+b."""
    sel = np.zeros((2, w_conv * f, p_out * f), np.float32)
    for b in range(2):
        for j in range(p_out):
            for c in range(f):
                sel[b, (2 * j + b) * f + c, j * f + c] = 1.0
    return jnp.asarray(sel)


def prepare_params(params):
    """One-time, batch-size-INDEPENDENT repack of LeNet params (bf16 ops)."""
    bf16, f32 = jnp.bfloat16, jnp.float32
    ops = {}
    # conv1: 32x32x3 -> 28x28x6
    ops["b1c"] = _band_matrices(params["conv1_w"], 32).astype(bf16)    # (5,96,168)
    ops["sb1"] = _col_select(28, 14, 6).astype(bf16)                   # (2,168,84)
    ops["bias1c"] = jnp.tile(params["conv1_b"].astype(f32), 14).reshape(1, -1)
    # conv2: 14x14x6 -> 10x10x16
    ops["b2c"] = _band_matrices(params["conv2_w"], 14).astype(bf16)    # (5,84,160)
    ops["sb2"] = _col_select(10, 5, 16).astype(bf16)                   # (2,160,80)
    ops["bias2c"] = jnp.tile(params["conv2_b"].astype(f32), 5).reshape(1, -1)
    # fc1: fuse the 5 spatial blocks into one (400,120) matrix; absorb torch's
    # NCHW flatten order (c*25 + i*5 + j) into our lane order (i*80 + j*16 + c).
    ops["wf1"] = (params["fc1_w"].astype(f32).reshape(16, 5, 5, 120)
                  .transpose(1, 2, 0, 3).reshape(400, 120)).astype(bf16)
    ops["bf1"] = params["fc1_b"].astype(f32).reshape(1, -1)
    ops["wf2"] = params["fc2_w"].astype(bf16)
    ops["bf2"] = params["fc2_b"].astype(f32).reshape(1, -1)
    # fc3 padded to 128 lane-dense output columns (wrapper slices back to 3).
    ops["wf3"] = (jnp.zeros((84, 128), f32)
                  .at[:, :3].set(params["fc3_w"].astype(f32)).astype(bf16))
    ops["bf3"] = jnp.zeros((1, 128), f32).at[0, :3].set(params["fc3_b"].astype(f32))
    return ops


# ------------------------------- forward pass --------------------------------

def lenet_forward(prepared, x_nchw, *, block_batch=16):
    n = x_nchw.shape[0]
    if n % block_batch != 0:
        raise ValueError(f"batch {n} must be a multiple of block_batch {block_batch}")
    nt = n // block_batch

    # NCHW -> spatial-major rows inside each batch tile: row = h*B + image.
    x = jnp.transpose(x_nchw.astype(jnp.float32), (0, 2, 3, 1))        # (n,32,32,3)
    x = x.reshape(nt, block_batch, 32, 32 * 3)
    x = jnp.transpose(x, (0, 2, 1, 3))                                 # (nt,32,B,96)
    x0 = x.reshape(nt * 32 * block_batch, 32 * 3).astype(jnp.bfloat16)

    w_names = ("b1c", "sb1", "bias1c", "b2c", "sb2", "bias2c",
               "wf1", "bf1", "wf2", "bf2", "wf3", "bf3")
    weights = [prepared[name] for name in w_names]

    def resident(arr):                  # VMEM-resident weight: constant block idx
        nd = arr.ndim
        return pl.BlockSpec(arr.shape, lambda i, _nd=nd: (0,) * _nd)

    kernel = functools.partial(_lenet_kernel, n=block_batch)
    out = pl.pallas_call(
        kernel,
        grid=(nt,),
        out_shape=jax.ShapeDtypeStruct((n, 128), jnp.float32),
        in_specs=[pl.BlockSpec((32 * block_batch, 32 * 3), lambda i: (i, 0))]
                 + [resident(w) for w in weights],
        out_specs=pl.BlockSpec((block_batch, 128), lambda i: (i, 0)),
        scratch_shapes=[
            pltpu.VMEM((28 * block_batch, 28 * 6), jnp.float32),   # conv1 acc / pool1 rows
            pltpu.VMEM((10 * block_batch, 10 * 16), jnp.float32),  # conv2 acc
            pltpu.VMEM((block_batch, 400), jnp.bfloat16),          # fused fc1 operand
        ],
        compiler_params=pltpu.CompilerParams(
            dimension_semantics=("parallel",)),
    )(x0, *weights)
    return out[:, :3]


# ------------------------------- parameters ----------------------------------

def init_params(key):
    ks = jax.random.split(key, 10)

    def uni(k, shape, fan_in):
        bound = 1.0 / float(fan_in) ** 0.5
        return jax.random.uniform(k, shape, jnp.float32, -bound, bound)

    p = {}
    p["conv1_w"] = uni(ks[0], (6, 3, 5, 5), 3 * 5 * 5)       # OIHW (PyTorch)
    p["conv1_b"] = uni(ks[1], (6,), 3 * 5 * 5)
    p["conv2_w"] = uni(ks[2], (16, 6, 5, 5), 6 * 5 * 5)
    p["conv2_b"] = uni(ks[3], (16,), 6 * 5 * 5)
    p["fc1_w"] = uni(ks[4], (16 * 5 * 5, 120), 16 * 5 * 5)   # stored (in, out)
    p["fc1_b"] = uni(ks[5], (120,), 16 * 5 * 5)
    p["fc2_w"] = uni(ks[6], (120, 84), 120)
    p["fc2_b"] = uni(ks[7], (84,), 120)
    p["fc3_w"] = uni(ks[8], (84, 3), 84)
    p["fc3_b"] = uni(ks[9], (3,), 84)
    return p


# --------------------------- pure-JAX reference ------------------------------

def lenet_reference(params, x_nchw):
    x = x_nchw.astype(jnp.float32)

    def conv(x, w, b):
        y = lax.conv_general_dilated(x, w, (1, 1), "VALID",
                                     dimension_numbers=("NCHW", "OIHW", "NCHW"))
        return jax.nn.relu(y + b[None, :, None, None])

    def pool(x):
        return lax.reduce_window(x, -jnp.inf, lax.max,
                                 (1, 1, 2, 2), (1, 1, 2, 2), "VALID")

    x = pool(conv(x, params["conv1_w"], params["conv1_b"]))
    x = pool(conv(x, params["conv2_w"], params["conv2_b"]))
    x = x.reshape(x.shape[0], -1)
    x = jax.nn.relu(x @ params["fc1_w"] + params["fc1_b"])
    x = jax.nn.relu(x @ params["fc2_w"] + params["fc2_b"])
    return x @ params["fc3_w"] + params["fc3_b"]


if __name__ == "__main__":
    key = jax.random.PRNGKey(0)
    pkey, xkey = jax.random.split(key)
    params = init_params(pkey)

    # 32 images of 32x32x3 (what fc1 = Linear(16*5*5, 120) implies), tiled as
    # two "parallel" grid steps of 16 images each.
    batch, block_batch = 32, 16
    x = jax.random.normal(xkey, (batch, 3, 32, 32), jnp.float32)

    prepared = prepare_params(params)            # batch-size-independent repack
    fwd = jax.jit(functools.partial(lenet_forward, block_batch=block_batch))

    out = jax.block_until_ready(fwd(prepared, x))
    ref = jax.block_until_ready(lenet_reference(params, x))

    assert out.shape == (batch, 3), out.shape
    # bf16 matmul operands with f32 accumulation -> loosened tolerance.
    assert jnp.allclose(out, ref, atol=5e-2, rtol=5e-2), \
        float(jnp.max(jnp.abs(out - ref)))
    print("KERNEL_OK")
</pallas_src>

<mosaic_0001>
module attributes {stable_mosaic.version = 11 : i64} {
  func.func @_lenet_kernel(%arg0: i32, %arg1: memref<512x96xbf16, #tpu.memory_space<vmem>>, %arg2: memref<5x96x168xbf16, #tpu.memory_space<vmem>>, %arg3: memref<2x168x84xbf16, #tpu.memory_space<vmem>>, %arg4: memref<1x84xf32, #tpu.memory_space<vmem>>, %arg5: memref<5x84x160xbf16, #tpu.memory_space<vmem>>, %arg6: memref<2x160x80xbf16, #tpu.memory_space<vmem>>, %arg7: memref<1x80xf32, #tpu.memory_space<vmem>>, %arg8: memref<400x120xbf16, #tpu.memory_space<vmem>>, %arg9: memref<1x120xf32, #tpu.memory_space<vmem>>, %arg10: memref<120x84xbf16, #tpu.memory_space<vmem>>, %arg11: memref<1x84xf32, #tpu.memory_space<vmem>>, %arg12: memref<84x128xbf16, #tpu.memory_space<vmem>>, %arg13: memref<1x128xf32, #tpu.memory_space<vmem>>, %arg14: memref<16x128xf32, #tpu.memory_space<vmem>>, %arg15: memref<448x168xf32, #tpu.memory_space<vmem>>, %arg16: memref<160x160xf32, #tpu.memory_space<vmem>>, %arg17: memref<16x400xbf16, #tpu.memory_space<vmem>>) attributes {dimension_semantics = [#tpu.dimension_semantics<parallel>], iteration_bounds = array<i64: 2>, scalar_prefetch = 0 : i64, scratch_operands = 3 : i64, tpu.core_type = #tpu.core_type<tc>, window_params = [{transform_indices = @transform_0, window_bounds = array<i64: 512, 96>}, {pipeline_mode = #tpu.pipeline_mode<synchronous>, transform_indices = @transform_1, window_bounds = array<i64: 5, 96, 168>}, {pipeline_mode = #tpu.pipeline_mode<synchronous>, transform_indices = @transform_2, window_bounds = array<i64: 2, 168, 84>}, {pipeline_mode = #tpu.pipeline_mode<synchronous>, transform_indices = @transform_3, window_bounds = array<i64: 1, 84>}, {pipeline_mode = #tpu.pipeline_mode<synchronous>, transform_indices = @transform_4, window_bounds = array<i64: 5, 84, 160>}, {pipeline_mode = #tpu.pipeline_mode<synchronous>, transform_indices = @transform_5, window_bounds = array<i64: 2, 160, 80>}, {pipeline_mode = #tpu.pipeline_mode<synchronous>, transform_indices = @transform_6, window_bounds = array<i64: 1, 80>}, {pipeline_mode = #tpu.pipeline_mode<synchronous>, transform_indices = @transform_7, window_bounds = array<i64: 400, 120>}, {pipeline_mode = #tpu.pipeline_mode<synchronous>, transform_indices = @transform_8, window_bounds = array<i64: 1, 120>}, {pipeline_mode = #tpu.pipeline_mode<synchronous>, transform_indices = @transform_9, window_bounds = array<i64: 120, 84>}, {pipeline_mode = #tpu.pipeline_mode<synchronous>, transform_indices = @transform_10, window_bounds = array<i64: 1, 84>}, {pipeline_mode = #tpu.pipeline_mode<synchronous>, transform_indices = @transform_11, window_bounds = array<i64: 84, 128>}, {pipeline_mode = #tpu.pipeline_mode<synchronous>, transform_indices = @transform_12, window_bounds = array<i64: 1, 128>}, {transform_indices = @transform_13, window_bounds = array<i64: 16, 128>}]} {
    %c0 = arith.constant 0 : index
    %c0_0 = arith.constant 0 : index
    %0 = vector.load %arg1[%c0, %c0_0] : memref<512x96xbf16, #tpu.memory_space<vmem>>, vector<448x96xbf16>
    %c0_1 = arith.constant 0 : index
    %c0_2 = arith.constant 0 : index
    %c0_3 = arith.constant 0 : index
    %1 = vector.load %arg2[%c0_1, %c0_2, %c0_3] : memref<5x96x168xbf16, #tpu.memory_space<vmem>>, vector<1x96x168xbf16>
    %2 = vector.shape_cast %1 : vector<1x96x168xbf16> to vector<96x168xbf16>
    %cst = arith.constant dense<0.000000e+00> : vector<448x168xf32>
    %3 = tpu.matmul %0, %2, %cst {dimension_numbers = #tpu.dot_dimension_numbers<[1], [0], [0], [1], [0, 0, 1, 1], [], []>} : vector<448x96xbf16>, vector<96x168xbf16>, vector<448x168xf32> -> vector<448x168xf32>
    %c0_4 = arith.constant 0 : index
    %c0_5 = arith.constant 0 : index
    %4 = vector.load %arg15[%c0_4, %c0_5] : memref<448x168xf32, #tpu.memory_space<vmem>>, vector<448x168xf32>
    tpu.vector_store %arg15[%c0_4, %c0_5], %3 {strides = array<i32>} : memref<448x168xf32, #tpu.memory_space<vmem>>, vector<448x168xf32>,
    %c0_6 = arith.constant 0 : index
    %c0_7 = arith.constant 0 : index
    %5 = vector.load %arg15[%c0_6, %c0_7] : memref<448x168xf32, #tpu.memory_space<vmem>>, vector<448x168xf32>
    %c16 = arith.constant 16 : index
    %c0_8 = arith.constant 0 : index
    %6 = vector.load %arg1[%c16, %c0_8] : memref<512x96xbf16, #tpu.memory_space<vmem>>, vector<448x96xbf16>
    %c1 = arith.constant 1 : index
    %c0_9 = arith.constant 0 : index
    %c0_10 = arith.constant 0 : index
    %7 = vector.load %arg2[%c1, %c0_9, %c0_10] : memref<5x96x168xbf16, #tpu.memory_space<vmem>>, vector<1x96x168xbf16>
    %8 = vector.shape_cast %7 : vector<1x96x168xbf16> to vector<96x168xbf16>
    %cst_11 = arith.constant dense<0.000000e+00> : vector<448x168xf32>
    %9 = tpu.matmul %6, %8, %cst_11 {dimension_numbers = #tpu.dot_dimension_numbers<[1], [0], [0], [1], [0, 0, 1, 1], [], []>} : vector<448x96xbf16>, vector<96x168xbf16>, vector<448x168xf32> -> vector<448x168xf32>
    %10 = arith.addf %5, %9 : vector<448x168xf32>
    %c0_12 = arith.constant 0 : index
    %c0_13 = arith.constant 0 : index
    %11 = vector.load %arg15[%c0_12, %c0_13] : memref<448x168xf32, #tpu.memory_space<vmem>>, vector<448x168xf32>
    tpu.vector_store %arg15[%c0_12, %c0_13], %10 {strides = array<i32>} : memref<448x168xf32, #tpu.memory_space<vmem>>, vector<448x168xf32>,
    %c0_14 = arith.constant 0 : index
    %c0_15 = arith.constant 0 : index
    %12 = vector.load %arg15[%c0_14, %c0_15] : memref<448x168xf32, #tpu.memory_space<vmem>>, vector<448x168xf32>
    %c32 = arith.constant 32 : index
    %c0_16 = arith.constant 0 : index
    %13 = vector.load %arg1[%c32, %c0_16] : memref<512x96xbf16, #tpu.memory_space<vmem>>, vector<448x96xbf16>
    %c2 = arith.constant 2 : index
    %c0_17 = arith.constant 0 : index
    %c0_18 = arith.constant 0 : index
    %14 = vector.load %arg2[%c2, %c0_17, %c0_18] : memref<5x96x168xbf16, #tpu.memory_space<vmem>>, vector<1x96x168xbf16>
    %15 = vector.shape_cast %14 : vector<1x96x168xbf16> to vector<96x168xbf16>
    %cst_19 = arith.constant dense<0.000000e+00> : vector<448x168xf32>
    %16 = tpu.matmul %13, %15, %cst_19 {dimension_numbers = #tpu.dot_dimension_numbers<[1], [0], [0], [1], [0, 0, 1, 1], [], []>} : vector<448x96xbf16>, vector<96x168xbf16>, vector<448x168xf32> -> vector<448x168xf32>
    %17 = arith.addf %12, %16 : vector<448x168xf32>
    %c0_20 = arith.constant 0 : index
    %c0_21 = arith.constant 0 : index
    %18 = vector.load %arg15[%c0_20, %c0_21] : memref<448x168xf32, #tpu.memory_space<vmem>>, vector<448x168xf32>
    tpu.vector_store %arg15[%c0_20, %c0_21], %17 {strides = array<i32>} : memref<448x168xf32, #tpu.memory_space<vmem>>, vector<448x168xf32>,
    %c0_22 = arith.constant 0 : index
    %c0_23 = arith.constant 0 : index
    %19 = vector.load %arg15[%c0_22, %c0_23] : memref<448x168xf32, #tpu.memory_space<vmem>>, vector<448x168xf32>
    %c48 = arith.constant 48 : index
    %c0_24 = arith.constant 0 : index
    %20 = vector.load %arg1[%c48, %c0_24] : memref<512x96xbf16, #tpu.memory_space<vmem>>, vector<448x96xbf16>
    %c3 = arith.constant 3 : index
    %c0_25 = arith.constant 0 : index
    %c0_26 = arith.constant 0 : index
    %21 = vector.load %arg2[%c3, %c0_25, %c0_26] : memref<5x96x168xbf16, #tpu.memory_space<vmem>>, vector<1x96x168xbf16>
    %22 = vector.shape_cast %21 : vector<1x96x168xbf16> to vector<96x168xbf16>
    %cst_27 = arith.constant dense<0.000000e+00> : vector<448x168xf32>
    %23 = tpu.matmul %20, %22, %cst_27 {dimension_numbers = #tpu.dot_dimension_numbers<[1], [0], [0], [1], [0, 0, 1, 1], [], []>} : vector<448x96xbf16>, vector<96x168xbf16>, vector<448x168xf32> -> vector<448x168xf32>
    %24 = arith.addf %19, %23 : vector<448x168xf32>
    %c0_28 = arith.constant 0 : index
    %c0_29 = arith.constant 0 : index
    %25 = vector.load %arg15[%c0_28, %c0_29] : memref<448x168xf32, #tpu.memory_space<vmem>>, vector<448x168xf32>
    tpu.vector_store %arg15[%c0_28, %c0_29], %24 {strides = array<i32>} : memref<448x168xf32, #tpu.memory_space<vmem>>, vector<448x168xf32>,
    %c0_30 = arith.constant 0 : index
    %c0_31 = arith.constant 0 : index
    %26 = vector.load %arg15[%c0_30, %c0_31] : memref<448x168xf32, #tpu.memory_space<vmem>>, vector<448x168xf32>
    %c64 = arith.constant 64 : index
    %c0_32 = arith.constant 0 : index
    %27 = vector.load %arg1[%c64, %c0_32] : memref<512x96xbf16, #tpu.memory_space<vmem>>, vector<448x96xbf16>
    %c4 = arith.constant 4 : index
    %c0_33 = arith.constant 0 : index
    %c0_34 = arith.constant 0 : index
    %28 = vector.load %arg2[%c4, %c0_33, %c0_34] : memref<5x96x168xbf16, #tpu.memory_space<vmem>>, vector<1x96x168xbf16>
    %29 = vector.shape_cast %28 : vector<1x96x168xbf16> to vector<96x168xbf16>
    %cst_35 = arith.constant dense<0.000000e+00> : vector<448x168xf32>
    %30 = tpu.matmul %27, %29, %cst_35 {dimension_numbers = #tpu.dot_dimension_numbers<[1], [0], [0], [1], [0, 0, 1, 1], [], []>} : vector<448x96xbf16>, vector<96x168xbf16>, vector<448x168xf32> -> vector<448x168xf32>
    %31 = arith.addf %26, %30 : vector<448x168xf32>
    %c0_36 = arith.constant 0 : index
    %c0_37 = arith.constant 0 : index
    %32 = vector.load %arg15[%c0_36, %c0_37] : memref<448x168xf32, #tpu.memory_space<vmem>>, vector<448x168xf32>
    tpu.vector_store %arg15[%c0_36, %c0_37], %31 {strides = array<i32>} : memref<448x168xf32, #tpu.memory_space<vmem>>, vector<448x168xf32>,
    %c0_38 = arith.constant 0 : index
    %c0_39 = arith.constant 0 : index
    %33 = vector.load %arg15[%c0_38, %c0_39] : memref<448x168xf32, #tpu.memory_space<vmem>>, vector<16x168xf32>
    %c16_40 = arith.constant 16 : index
    %c0_41 = arith.constant 0 : index
    %34 = vector.load %arg15[%c16_40, %c0_41] : memref<448x168xf32, #tpu.memory_space<vmem>>, vector<16x168xf32>
    %35 = arith.maximumf %33, %34 : vector<16x168xf32>
    %c0_42 = arith.constant 0 : index
    %c0_43 = arith.constant 0 : index
    %36 = vector.load %arg15[%c0_42, %c0_43] : memref<448x168xf32, #tpu.memory_space<vmem>>, vector<16x168xf32>
    tpu.vector_store %arg15[%c0_42, %c0_43], %35 {strides = array<i32>} : memref<448x168xf32, #tpu.memory_space<vmem>>, vector<16x168xf32>,
    %c32_44 = arith.constant 32 : index
    %c0_45 = arith.constant 0 : index
    %37 = vector.load %arg15[%c32_44, %c0_45] : memref<448x168xf32, #tpu.memory_space<vmem>>, vector<16x168xf32>
    %c48_46 = arith.constant 48 : index
    %c0_47 = arith.constant 0 : index
    %38 = vector.load %arg15[%c48_46, %c0_47] : memref<448x168xf32, #tpu.memory_space<vmem>>, vector<16x168xf32>
    %39 = arith.maximumf %37, %38 : vector<16x168xf32>
    %c16_48 = arith.constant 16 : index
    %c0_49 = arith.constant 0 : index
    %40 = vector.load %arg15[%c16_48, %c0_49] : memref<448x168xf32, #tpu.memory_space<vmem>>, vector<16x168xf32>
    tpu.vector_store %arg15[%c16_48, %c0_49], %39 {strides = array<i32>} : memref<448x168xf32, #tpu.memory_space<vmem>>, vector<16x168xf32>,
    %c64_50 = arith.constant 64 : index
    %c0_51 = arith.constant 0 : index
    %41 = vector.load %arg15[%c64_50, %c0_51] : memref<448x168xf32, #tpu.memory_space<vmem>>, vector<16x168xf32>
    %c80 = arith.constant 80 : index
    %c0_52 = arith.constant 0 : index
    %42 = vector.load %arg15[%c80, %c0_52] : memref<448x168xf32, #tpu.memory_space<vmem>>, vector<16x168xf32>
    %43 = arith.maximumf %41, %42 : vector<16x168xf32>
    %c32_53 = arith.constant 32 : index
    %c0_54 = arith.constant 0 : index
    %44 = vector.load %arg15[%c32_53, %c0_54] : memref<448x168xf32, #tpu.memory_space<vmem>>, vector<16x168xf32>
    tpu.vector_store %arg15[%c32_53, %c0_54], %43 {strides = array<i32>} : memref<448x168xf32, #tpu.memory_space<vmem>>, vector<16x168xf32>,
    %c96 = arith.constant 96 : index
    %c0_55 = arith.constant 0 : index
    %45 = vector.load %arg15[%c96, %c0_55] : memref<448x168xf32, #tpu.memory_space<vmem>>, vector<16x168xf32>
    %c112 = arith.constant 112 : index
    %c0_56 = arith.constant 0 : index
    %46 = vector.load %arg15[%c112, %c0_56] : memref<448x168xf32, #tpu.memory_space<vmem>>, vector<16x168xf32>
    %47 = arith.maximumf %45, %46 : vector<16x168xf32>
    %c48_57 = arith.constant 48 : index
    %c0_58 = arith.constant 0 : index
    %48 = vector.load %arg15[%c48_57, %c0_58] : memref<448x168xf32, #tpu.memory_space<vmem>>, vector<16x168xf32>
    tpu.vector_store %arg15[%c48_57, %c0_58], %47 {strides = array<i32>} : memref<448x168xf32, #tpu.memory_space<vmem>>, vector<16x168xf32>,
    %c128 = arith.constant 128 : index
    %c0_59 = arith.constant 0 : index
    %49 = vector.load %arg15[%c128, %c0_59] : memref<448x168xf32, #tpu.memory_space<vmem>>, vector<16x168xf32>
    %c144 = arith.constant 144 : index
    %c0_60 = arith.constant 0 : index
    %50 = vector.load %arg15[%c144, %c0_60] : memref<448x168xf32, #tpu.memory_space<vmem>>, vector<16x168xf32>
    %51 = arith.maximumf %49, %50 : vector<16x168xf32>
    %c64_61 = arith.constant 64 : index
    %c0_62 = arith.constant 0 : index
    %52 = vector.load %arg15[%c64_61, %c0_62] : memref<448x168xf32, #tpu.memory_space<vmem>>, vector<16x168xf32>
    tpu.vector_store %arg15[%c64_61, %c0_62], %51 {strides = array<i32>} : memref<448x168xf32, #tpu.memory_space<vmem>>, vector<16x168xf32>,
    %c160 = arith.constant 160 : index
    %c0_63 = arith.constant 0 : index
    %53 = vector.load %arg15[%c160, %c0_63] : memref<448x168xf32, #tpu.memory_space<vmem>>, vector<16x168xf32>
    %c176 = arith.constant 176 : index
    %c0_64 = arith.constant 0 : index
    %54 = vector.load %arg15[%c176, %c0_64] : memref<448x168xf32, #tpu.memory_space<vmem>>, vector<16x168xf32>
    %55 = arith.maximumf %53, %54 : vector<16x168xf32>
    %c80_65 = arith.constant 80 : index
    %c0_66 = arith.constant 0 : index
    %56 = vector.load %arg15[%c80_65, %c0_66] : memref<448x168xf32, #tpu.memory_space<vmem>>, vector<16x168xf32>
    tpu.vector_store %arg15[%c80_65, %c0_66], %55 {strides = array<i32>} : memref<448x168xf32, #tpu.memory_space<vmem>>, vector<16x168xf32>,
    %c192 = arith.constant 192 : index
    %c0_67 = arith.constant 0 : index
    %57 = vector.load %arg15[%c192, %c0_67] : memref<448x168xf32, #tpu.memory_space<vmem>>, vector<16x168xf32>
    %c208 = arith.constant 208 : index
    %c0_68 = arith.constant 0 : index
    %58 = vector.load %arg15[%c208, %c0_68] : memref<448x168xf32, #tpu.memory_space<vmem>>, vector<16x168xf32>
    %59 = arith.maximumf %57, %58 : vector<16x168xf32>
    %c96_69 = arith.constant 96 : index
    %c0_70 = arith.constant 0 : index
    %60 = vector.load %arg15[%c96_69, %c0_70] : memref<448x168xf32, #tpu.memory_space<vmem>>, vector<16x168xf32>
    tpu.vector_store %arg15[%c96_69, %c0_70], %59 {strides = array<i32>} : memref<448x168xf32, #tpu.memory_space<vmem>>, vector<16x168xf32>,
    %c224 = arith.constant 224 : index
    %c0_71 = arith.constant 0 : index
    %61 = vector.load %arg15[%c224, %c0_71] : memref<448x168xf32, #tpu.memory_space<vmem>>, vector<16x168xf32>
    %c240 = arith.constant 240 : index
    %c0_72 = arith.constant 0 : index
    %62 = vector.load %arg15[%c240, %c0_72] : memref<448x168xf32, #tpu.memory_space<vmem>>, vector<16x168xf32>
    %63 = arith.maximumf %61, %62 : vector<16x168xf32>
    %c112_73 = arith.constant 112 : index
    %c0_74 = arith.constant 0 : index
    %64 = vector.load %arg15[%c112_73, %c0_74] : memref<448x168xf32, #tpu.memory_space<vmem>>, vector<16x168xf32>
    tpu.vector_store %arg15[%c112_73, %c0_74], %63 {strides = array<i32>} : memref<448x168xf32, #tpu.memory_space<vmem>>, vector<16x168xf32>,
    %c256 = arith.constant 256 : index
    %c0_75 = arith.constant 0 : index
    %65 = vector.load %arg15[%c256, %c0_75] : memref<448x168xf32, #tpu.memory_space<vmem>>, vector<16x168xf32>
    %c272 = arith.constant 272 : index
    %c0_76 = arith.constant 0 : index
    %66 = vector.load %arg15[%c272, %c0_76] : memref<448x168xf32, #tpu.memory_space<vmem>>, vector<16x168xf32>
    %67 = arith.maximumf %65, %66 : vector<16x168xf32>
    %c128_77 = arith.constant 128 : index
    %c0_78 = arith.constant 0 : index
    %68 = vector.load %arg15[%c128_77, %c0_78] : memref<448x168xf32, #tpu.memory_space<vmem>>, vector<16x168xf32>
    tpu.vector_store %arg15[%c128_77, %c0_78], %67 {strides = array<i32>} : memref<448x168xf32, #tpu.memory_space<vmem>>, vector<16x168xf32>,
    %c288 = arith.constant 288 : index
    %c0_79 = arith.constant 0 : index
    %69 = vector.load %arg15[%c288, %c0_79] : memref<448x168xf32, #tpu.memory_space<vmem>>, vector<16x168xf32>
    %c304 = arith.constant 304 : index
    %c0_80 = arith.constant 0 : index
    %70 = vector.load %arg15[%c304, %c0_80] : memref<448x168xf32, #tpu.memory_space<vmem>>, vector<16x168xf32>
    %71 = arith.maximumf %69, %70 : vector<16x168xf32>
    %c144_81 = arith.constant 144 : index
    %c0_82 = arith.constant 0 : index
    %72 = vector.load %arg15[%c144_81, %c0_82] : memref<448x168xf32, #tpu.memory_space<vmem>>, vector<16x168xf32>
    tpu.vector_store %arg15[%c144_81, %c0_82], %71 {strides = array<i32>} : memref<448x168xf32, #tpu.memory_space<vmem>>, vector<16x168xf32>,
    %c320 = arith.constant 320 : index
    %c0_83 = arith.constant 0 : index
    %73 = vector.load %arg15[%c320, %c0_83] : memref<448x168xf32, #tpu.memory_space<vmem>>, vector<16x168xf32>
    %c336 = arith.constant 336 : index
    %c0_84 = arith.constant 0 : index
    %74 = vector.load %arg15[%c336, %c0_84] : memref<448x168xf32, #tpu.memory_space<vmem>>, vector<16x168xf32>
    %75 = arith.maximumf %73, %74 : vector<16x168xf32>
    %c160_85 = arith.constant 160 : index
    %c0_86 = arith.constant 0 : index
    %76 = vector.load %arg15[%c160_85, %c0_86] : memref<448x168xf32, #tpu.memory_space<vmem>>, vector<16x168xf32>
    tpu.vector_store %arg15[%c160_85, %c0_86], %75 {strides = array<i32>} : memref<448x168xf32, #tpu.memory_space<vmem>>, vector<16x168xf32>,
    %c352 = arith.constant 352 : index
    %c0_87 = arith.constant 0 : index
    %77 = vector.load %arg15[%c352, %c0_87] : memref<448x168xf32, #tpu.memory_space<vmem>>, vector<16x168xf32>
    %c368 = arith.constant 368 : index
    %c0_88 = arith.constant 0 : index
    %78 = vector.load %arg15[%c368, %c0_88] : memref<448x168xf32, #tpu.memory_space<vmem>>, vector<16x168xf32>
    %79 = arith.maximumf %77, %78 : vector<16x168xf32>
    %c176_89 = arith.constant 176 : index
    %c0_90 = arith.constant 0 : index
    %80 = vector.load %arg15[%c176_89, %c0_90] : memref<448x168xf32, #tpu.memory_space<vmem>>, vector<16x168xf32>
    tpu.vector_store %arg15[%c176_89, %c0_90], %79 {strides = array<i32>} : memref<448x168xf32, #tpu.memory_space<vmem>>, vector<16x168xf32>,
    %c384 = arith.constant 384 : index
    %c0_91 = arith.constant 0 : index
    %81 = vector.load %arg15[%c384, %c0_91] : memref<448x168xf32, #tpu.memory_space<vmem>>, vector<16x168xf32>
    %c400 = arith.constant 400 : index
    %c0_92 = arith.constant 0 : index
    %82 = vector.load %arg15[%c400, %c0_92] : memref<448x168xf32, #tpu.memory_space<vmem>>, vector<16x168xf32>
    %83 = arith.maximumf %81, %82 : vector<16x168xf32>
    %c192_93 = arith.constant 192 : index
    %c0_94 = arith.constant 0 : index
    %84 = vector.load %arg15[%c192_93, %c0_94] : memref<448x168xf32, #tpu.memory_space<vmem>>, vector<16x168xf32>
    tpu.vector_store %arg15[%c192_93, %c0_94], %83 {strides = array<i32>} : memref<448x168xf32, #tpu.memory_space<vmem>>, vector<16x168xf32>,
    %c416 = arith.constant 416 : index
    %c0_95 = arith.constant 0 : index
    %85 = vector.load %arg15[%c416, %c0_95] : memref<448x168xf32, #tpu.memory_space<vmem>>, vector<16x168xf32>
    %c432 = arith.constant 432 : index
    %c0_96 = arith.constant 0 : index
    %86 = vector.load %arg15[%c432, %c0_96] : memref<448x168xf32, #tpu.memory_space<vmem>>, vector<16x168xf32>
    %87 = arith.maximumf %85, %86 : vector<16x168xf32>
    %c208_97 = arith.constant 208 : index
    %c0_98 = arith.constant 0 : index
    %88 = vector.load %arg15[%c208_97, %c0_98] : memref<448x168xf32, #tpu.memory_space<vmem>>, vector<16x168xf32>
    tpu.vector_store %arg15[%c208_97, %c0_98], %87 {strides = array<i32>} : memref<448x168xf32, #tpu.memory_space<vmem>>, vector<16x168xf32>,
    %c0_99 = arith.constant 0 : index
    %c0_100 = arith.constant 0 : index
    %89 = vector.load %arg15[%c0_99, %c0_100] : memref<448x168xf32, #tpu.memory_space<vmem>>, vector<224x168xf32>
    %90 = arith.truncf %89 : vector<224x168xf32> to vector<224x168xbf16>
    %c0_101 = arith.constant 0 : index
    %c0_102 = arith.constant 0 : index
    %c0_103 = arith.constant 0 : index
    %91 = vector.load %arg3[%c0_101, %c0_102, %c0_103] : memref<2x168x84xbf16, #tpu.memory_space<vmem>>, vector<1x168x84xbf16>
    %92 = vector.shape_cast %91 : vector<1x168x84xbf16> to vector<168x84xbf16>
    %cst_104 = arith.constant dense<0.000000e+00> : vector<224x84xf32>
    %93 = tpu.matmul %90, %92, %cst_104 {dimension_numbers = #tpu.dot_dimension_numbers<[1], [0], [0], [1], [0, 0, 1, 1], [], []>} : vector<224x168xbf16>, vector<168x84xbf16>, vector<224x84xf32> -> vector<224x84xf32>
    %c1_105 = arith.constant 1 : index
    %c0_106 = arith.constant 0 : index
    %c0_107 = arith.constant 0 : index
    %94 = vector.load %arg3[%c1_105, %c0_106, %c0_107] : memref<2x168x84xbf16, #tpu.memory_space<vmem>>, vector<1x168x84xbf16>
    %95 = vector.shape_cast %94 : vector<1x168x84xbf16> to vector<168x84xbf16>
    %cst_108 = arith.constant dense<0.000000e+00> : vector<224x84xf32>
    %96 = tpu.matmul %90, %95, %cst_108 {dimension_numbers = #tpu.dot_dimension_numbers<[1], [0], [0], [1], [0, 0, 1, 1], [], []>} : vector<224x168xbf16>, vector<168x84xbf16>, vector<224x84xf32> -> vector<224x84xf32>
    %97 = arith.maximumf %93, %96 : vector<224x84xf32>
    %c0_109 = arith.constant 0 : index
    %c0_110 = arith.constant 0 : index
    %98 = vector.load %arg4[%c0_109, %c0_110] : memref<1x84xf32, #tpu.memory_space<vmem>>, vector<1x84xf32>
    %99 = vector.broadcast %98 : vector<1x84xf32> to vector<224x84xf32>
    %100 = arith.addf %97, %99 : vector<224x84xf32>
    %cst_111 = arith.constant 0.000000e+00 : f32
    %101 = vector.broadcast %cst_111 : f32 to vector<224x84xf32>
    %102 = arith.maximumf %100, %101 : vector<224x84xf32>
    %103 = vector.extract_strided_slice %102 {offsets = [0, 0], sizes = [160, 84], strides = [1, 1]} : vector<224x84xf32> to vector<160x84xf32>
    %104 = arith.truncf %103 : vector<160x84xf32> to vector<160x84xbf16>
    %c0_112 = arith.constant 0 : index
    %c0_113 = arith.constant 0 : index
    %c0_114 = arith.constant 0 : index
    %105 = vector.load %arg5[%c0_112, %c0_113, %c0_114] : memref<5x84x160xbf16, #tpu.memory_space<vmem>>, vector<1x84x160xbf16>
    %106 = vector.shape_cast %105 : vector<1x84x160xbf16> to vector<84x160xbf16>
    %cst_115 = arith.constant dense<0.000000e+00> : vector<160x160xf32>
    %107 = tpu.matmul %104, %106, %cst_115 {dimension_numbers = #tpu.dot_dimension_numbers<[1], [0], [0], [1], [0, 0, 1, 1], [], []>} : vector<160x84xbf16>, vector<84x160xbf16>, vector<160x160xf32> -> vector<160x160xf32>
    %c0_116 = arith.constant 0 : index
    %c0_117 = arith.constant 0 : index
    %108 = vector.load %arg16[%c0_116, %c0_117] : memref<160x160xf32, #tpu.memory_space<vmem>>, vector<160x160xf32>
    tpu.vector_store %arg16[%c0_116, %c0_117], %107 {strides = array<i32>} : memref<160x160xf32, #tpu.memory_space<vmem>>, vector<160x160xf32>,
    %c0_118 = arith.constant 0 : index
    %c0_119 = arith.constant 0 : index
    %109 = vector.load %arg16[%c0_118, %c0_119] : memref<160x160xf32, #tpu.memory_space<vmem>>, vector<160x160xf32>
    %110 = vector.extract_strided_slice %102 {offsets = [16, 0], sizes = [160, 84], strides = [1, 1]} : vector<224x84xf32> to vector<160x84xf32>
    %111 = arith.truncf %110 : vector<160x84xf32> to vector<160x84xbf16>
    %c1_120 = arith.constant 1 : index
    %c0_121 = arith.constant 0 : index
    %c0_122 = arith.constant 0 : index
    %112 = vector.load %arg5[%c1_120, %c0_121, %c0_122] : memref<5x84x160xbf16, #tpu.memory_space<vmem>>, vector<1x84x160xbf16>
    %113 = vector.shape_cast %112 : vector<1x84x160xbf16> to vector<84x160xbf16>
    %cst_123 = arith.constant dense<0.000000e+00> : vector<160x160xf32>
    %114 = tpu.matmul %111, %113, %cst_123 {dimension_numbers = #tpu.dot_dimension_numbers<[1], [0], [0], [1], [0, 0, 1, 1], [], []>} : vector<160x84xbf16>, vector<84x160xbf16>, vector<160x160xf32> -> vector<160x160xf32>
    %115 = arith.addf %109, %114 : vector<160x160xf32>
    %c0_124 = arith.constant 0 : index
    %c0_125 = arith.constant 0 : index
    %116 = vector.load %arg16[%c0_124, %c0_125] : memref<160x160xf32, #tpu.memory_space<vmem>>, vector<160x160xf32>
    tpu.vector_store %arg16[%c0_124, %c0_125], %115 {strides = array<i32>} : memref<160x160xf32, #tpu.memory_space<vmem>>, vector<160x160xf32>,
    %c0_126 = arith.constant 0 : index
    %c0_127 = arith.constant 0 : index
    %117 = vector.load %arg16[%c0_126, %c0_127] : memref<160x160xf32, #tpu.memory_space<vmem>>, vector<160x160xf32>
    %118 = vector.extract_strided_slice %102 {offsets = [32, 0], sizes = [160, 84], strides = [1, 1]} : vector<224x84xf32> to vector<160x84xf32>
    %119 = arith.truncf %118 : vector<160x84xf32> to vector<160x84xbf16>
    %c2_128 = arith.constant 2 : index
    %c0_129 = arith.constant 0 : index
    %c0_130 = arith.constant 0 : index
    %120 = vector.load %arg5[%c2_128, %c0_129, %c0_130] : memref<5x84x160xbf16, #tpu.memory_space<vmem>>, vector<1x84x160xbf16>
    %121 = vector.shape_cast %120 : vector<1x84x160xbf16> to vector<84x160xbf16>
    %cst_131 = arith.constant dense<0.000000e+00> : vector<160x160xf32>
    %122 = tpu.matmul %119, %121, %cst_131 {dimension_numbers = #tpu.dot_dimension_numbers<[1], [0], [0], [1], [0, 0, 1, 1], [], []>} : vector<160x84xbf16>, vector<84x160xbf16>, vector<160x160xf32> -> vector<160x160xf32>
    %123 = arith.addf %117, %122 : vector<160x160xf32>
    %c0_132 = arith.constant 0 : index
    %c0_133 = arith.constant 0 : index
    %124 = vector.load %arg16[%c0_132, %c0_133] : memref<160x160xf32, #tpu.memory_space<vmem>>, vector<160x160xf32>
    tpu.vector_store %arg16[%c0_132, %c0_133], %123 {strides = array<i32>} : memref<160x160xf32, #tpu.memory_space<vmem>>, vector<160x160xf32>,
    %c0_134 = arith.constant 0 : index
    %c0_135 = arith.constant 0 : index
    %125 = vector.load %arg16[%c0_134, %c0_135] : memref<160x160xf32, #tpu.memory_space<vmem>>, vector<160x160xf32>
    %126 = vector.extract_strided_slice %102 {offsets = [48, 0], sizes = [160, 84], strides = [1, 1]} : vector<224x84xf32> to vector<160x84xf32>
    %127 = arith.truncf %126 : vector<160x84xf32> to vector<160x84xbf16>
    %c3_136 = arith.constant 3 : index
    %c0_137 = arith.constant 0 : index
    %c0_138 = arith.constant 0 : index
    %128 = vector.load %arg5[%c3_136, %c0_137, %c0_138] : memref<5x84x160xbf16, #tpu.memory_space<vmem>>, vector<1x84x160xbf16>
    %129 = vector.shape_cast %128 : vector<1x84x160xbf16> to vector<84x160xbf16>
    %cst_139 = arith.constant dense<0.000000e+00> : vector<160x160xf32>
    %130 = tpu.matmul %127, %129, %cst_139 {dimension_numbers = #tpu.dot_dimension_numbers<[1], [0], [0], [1], [0, 0, 1, 1], [], []>} : vector<160x84xbf16>, vector<84x160xbf16>, vector<160x160xf32> -> vector<160x160xf32>
    %131 = arith.addf %125, %130 : vector<160x160xf32>
    %c0_140 = arith.constant 0 : index
    %c0_141 = arith.constant 0 : index
    %132 = vector.load %arg16[%c0_140, %c0_141] : memref<160x160xf32, #tpu.memory_space<vmem>>, vector<160x160xf32>
    tpu.vector_store %arg16[%c0_140, %c0_141], %131 {strides = array<i32>} : memref<160x160xf32, #tpu.memory_space<vmem>>, vector<160x160xf32>,
    %c0_142 = arith.constant 0 : index
    %c0_143 = arith.constant 0 : index
    %133 = vector.load %arg16[%c0_142, %c0_143] : memref<160x160xf32, #tpu.memory_space<vmem>>, vector<160x160xf32>
    %134 = vector.extract_strided_slice %102 {offsets = [64, 0], sizes = [160, 84], strides = [1, 1]} : vector<224x84xf32> to vector<160x84xf32>
    %135 = arith.truncf %134 : vector<160x84xf32> to vector<160x84xbf16>
    %c4_144 = arith.constant 4 : index
    %c0_145 = arith.constant 0 : index
    %c0_146 = arith.constant 0 : index
    %136 = vector.load %arg5[%c4_144, %c0_145, %c0_146] : memref<5x84x160xbf16, #tpu.memory_space<vmem>>, vector<1x84x160xbf16>
    %137 = vector.shape_cast %136 : vector<1x84x160xbf16> to vector<84x160xbf16>
    %cst_147 = arith.constant dense<0.000000e+00> : vector<160x160xf32>
    %138 = tpu.matmul %135, %137, %cst_147 {dimension_numbers = #tpu.dot_dimension_numbers<[1], [0], [0], [1], [0, 0, 1, 1], [], []>} : vector<160x84xbf16>, vector<84x160xbf16>, vector<160x160xf32> -> vector<160x160xf32>
    %139 = arith.addf %133, %138 : vector<160x160xf32>
    %c0_148 = arith.constant 0 : index
    %c0_149 = arith.constant 0 : index
    %140 = vector.load %arg16[%c0_148, %c0_149] : memref<160x160xf32, #tpu.memory_space<vmem>>, vector<160x160xf32>
    tpu.vector_store %arg16[%c0_148, %c0_149], %139 {strides = array<i32>} : memref<160x160xf32, #tpu.memory_space<vmem>>, vector<160x160xf32>,
    %c0_150 = arith.constant 0 : index
    %c0_151 = arith.constant 0 : index
    %141 = vector.load %arg16[%c0_150, %c0_151] : memref<160x160xf32, #tpu.memory_space<vmem>>, vector<160x160xf32>
    %142 = arith.truncf %141 : vector<160x160xf32> to vector<160x160xbf16>
    %c0_152 = arith.constant 0 : index
    %c0_153 = arith.constant 0 : index
    %c0_154 = arith.constant 0 : index
    %143 = vector.load %arg6[%c0_152, %c0_153, %c0_154] : memref<2x160x80xbf16, #tpu.memory_space<vmem>>, vector<1x160x80xbf16>
    %144 = vector.shape_cast %143 : vector<1x160x80xbf16> to vector<160x80xbf16>
    %cst_155 = arith.constant dense<0.000000e+00> : vector<160x80xf32>
    %145 = tpu.matmul %142, %144, %cst_155 {dimension_numbers = #tpu.dot_dimension_numbers<[1], [0], [0], [1], [0, 0, 1, 1], [], []>} : vector<160x160xbf16>, vector<160x80xbf16>, vector<160x80xf32> -> vector<160x80xf32>
    %c1_156 = arith.constant 1 : index
    %c0_157 = arith.constant 0 : index
    %c0_158 = arith.constant 0 : index
    %146 = vector.load %arg6[%c1_156, %c0_157, %c0_158] : memref<2x160x80xbf16, #tpu.memory_space<vmem>>, vector<1x160x80xbf16>
    %147 = vector.shape_cast %146 : vector<1x160x80xbf16> to vector<160x80xbf16>
    %cst_159 = arith.constant dense<0.000000e+00> : vector<160x80xf32>
    %148 = tpu.matmul %142, %147, %cst_159 {dimension_numbers = #tpu.dot_dimension_numbers<[1], [0], [0], [1], [0, 0, 1, 1], [], []>} : vector<160x160xbf16>, vector<160x80xbf16>, vector<160x80xf32> -> vector<160x80xf32>
    %149 = arith.maximumf %145, %148 : vector<160x80xf32>
    %150 = vector.extract_strided_slice %149 {offsets = [0, 0], sizes = [16, 80], strides = [1, 1]} : vector<160x80xf32> to vector<16x80xf32>
    %151 = vector.extract_strided_slice %149 {offsets = [16, 0], sizes = [16, 80], strides = [1, 1]} : vector<160x80xf32> to vector<16x80xf32>
    %152 = arith.maximumf %150, %151 : vector<16x80xf32>
    %c0_160 = arith.constant 0 : index
    %c0_161 = arith.constant 0 : index
    %153 = vector.load %arg7[%c0_160, %c0_161] : memref<1x80xf32, #tpu.memory_space<vmem>>, vector<1x80xf32>
    %154 = vector.broadcast %153 : vector<1x80xf32> to vector<16x80xf32>
    %155 = arith.addf %152, %154 : vector<16x80xf32>
    %cst_162 = arith.constant 0.000000e+00 : f32
    %156 = vector.broadcast %cst_162 : f32 to vector<16x80xf32>
    %157 = arith.maximumf %155, %156 : vector<16x80xf32>
    %158 = arith.truncf %157 : vector<16x80xf32> to vector<16x80xbf16>
    %c0_163 = arith.constant 0 : index
    %c0_164 = arith.constant 0 : index
    %159 = vector.load %arg17[%c0_163, %c0_164] : memref<16x400xbf16, #tpu.memory_space<vmem>>, vector<16x80xbf16>
    tpu.vector_store %arg17[%c0_163, %c0_164], %158 {strides = array<i32>} : memref<16x400xbf16, #tpu.memory_space<vmem>>, vector<16x80xbf16>,
    %160 = vector.extract_strided_slice %149 {offsets = [32, 0], sizes = [16, 80], strides = [1, 1]} : vector<160x80xf32> to vector<16x80xf32>
    %161 = vector.extract_strided_slice %149 {offsets = [48, 0], sizes = [16, 80], strides = [1, 1]} : vector<160x80xf32> to vector<16x80xf32>
    %162 = arith.maximumf %160, %161 : vector<16x80xf32>
    %c0_165 = arith.constant 0 : index
    %c0_166 = arith.constant 0 : index
    %163 = vector.load %arg7[%c0_165, %c0_166] : memref<1x80xf32, #tpu.memory_space<vmem>>, vector<1x80xf32>
    %164 = vector.broadcast %163 : vector<1x80xf32> to vector<16x80xf32>
    %165 = arith.addf %162, %164 : vector<16x80xf32>
    %cst_167 = arith.constant 0.000000e+00 : f32
    %166 = vector.broadcast %cst_167 : f32 to vector<16x80xf32>
    %167 = arith.maximumf %165, %166 : vector<16x80xf32>
    %168 = arith.truncf %167 : vector<16x80xf32> to vector<16x80xbf16>
    %c0_168 = arith.constant 0 : index
    %c80_169 = arith.constant 80 : index
    %169 = vector.load %arg17[%c0_168, %c80_169] : memref<16x400xbf16, #tpu.memory_space<vmem>>, vector<16x80xbf16>
    tpu.vector_store %arg17[%c0_168, %c80_169], %168 {strides = array<i32>} : memref<16x400xbf16, #tpu.memory_space<vmem>>, vector<16x80xbf16>,
    %170 = vector.extract_strided_slice %149 {offsets = [64, 0], sizes = [16, 80], strides = [1, 1]} : vector<160x80xf32> to vector<16x80xf32>
    %171 = vector.extract_strided_slice %149 {offsets = [80, 0], sizes = [16, 80], strides = [1, 1]} : vector<160x80xf32> to vector<16x80xf32>
    %172 = arith.maximumf %170, %171 : vector<16x80xf32>
    %c0_170 = arith.constant 0 : index
    %c0_171 = arith.constant 0 : index
    %173 = vector.load %arg7[%c0_170, %c0_171] : memref<1x80xf32, #tpu.memory_space<vmem>>, vector<1x80xf32>
    %174 = vector.broadcast %173 : vector<1x80xf32> to vector<16x80xf32>
    %175 = arith.addf %172, %174 : vector<16x80xf32>
    %cst_172 = arith.constant 0.000000e+00 : f32
    %176 = vector.broadcast %cst_172 : f32 to vector<16x80xf32>
    %177 = arith.maximumf %175, %176 : vector<16x80xf32>
    %178 = arith.truncf %177 : vector<16x80xf32> to vector<16x80xbf16>
    %c0_173 = arith.constant 0 : index
    %c160_174 = arith.constant 160 : index
    %179 = vector.load %arg17[%c0_173, %c160_174] : memref<16x400xbf16, #tpu.memory_space<vmem>>, vector<16x80xbf16>
    tpu.vector_store %arg17[%c0_173, %c160_174], %178 {strides = array<i32>} : memref<16x400xbf16, #tpu.memory_space<vmem>>, vector<16x80xbf16>,
    %180 = vector.extract_strided_slice %149 {offsets = [96, 0], sizes = [16, 80], strides = [1, 1]} : vector<160x80xf32> to vector<16x80xf32>
    %181 = vector.extract_strided_slice %149 {offsets = [112, 0], sizes = [16, 80], strides = [1, 1]} : vector<160x80xf32> to vector<16x80xf32>
    %182 = arith.maximumf %180, %181 : vector<16x80xf32>
    %c0_175 = arith.constant 0 : index
    %c0_176 = arith.constant 0 : index
    %183 = vector.load %arg7[%c0_175, %c0_176] : memref<1x80xf32, #tpu.memory_space<vmem>>, vector<1x80xf32>
    %184 = vector.broadcast %183 : vector<1x80xf32> to vector<16x80xf32>
    %185 = arith.addf %182, %184 : vector<16x80xf32>
    %cst_177 = arith.constant 0.000000e+00 : f32
    %186 = vector.broadcast %cst_177 : f32 to vector<16x80xf32>
    %187 = arith.maximumf %185, %186 : vector<16x80xf32>
    %188 = arith.truncf %187 : vector<16x80xf32> to vector<16x80xbf16>
    %c0_178 = arith.constant 0 : index
    %c240_179 = arith.constant 240 : index
    %189 = vector.load %arg17[%c0_178, %c240_179] : memref<16x400xbf16, #tpu.memory_space<vmem>>, vector<16x80xbf16>
    tpu.vector_store %arg17[%c0_178, %c240_179], %188 {strides = array<i32>} : memref<16x400xbf16, #tpu.memory_space<vmem>>, vector<16x80xbf16>,
    %190 = vector.extract_strided_slice %149 {offsets = [128, 0], sizes = [16, 80], strides = [1, 1]} : vector<160x80xf32> to vector<16x80xf32>
    %191 = vector.extract_strided_slice %149 {offsets = [144, 0], sizes = [16, 80], strides = [1, 1]} : vector<160x80xf32> to vector<16x80xf32>
    %192 = arith.maximumf %190, %191 : vector<16x80xf32>
    %c0_180 = arith.constant 0 : index
    %c0_181 = arith.constant 0 : index
    %193 = vector.load %arg7[%c0_180, %c0_181] : memref<1x80xf32, #tpu.memory_space<vmem>>, vector<1x80xf32>
    %194 = vector.broadcast %193 : vector<1x80xf32> to vector<16x80xf32>
    %195 = arith.addf %192, %194 : vector<16x80xf32>
    %cst_182 = arith.constant 0.000000e+00 : f32
    %196 = vector.broadcast %cst_182 : f32 to vector<16x80xf32>
    %197 = arith.maximumf %195, %196 : vector<16x80xf32>
    %198 = arith.truncf %197 : vector<16x80xf32> to vector<16x80xbf16>
    %c0_183 = arith.constant 0 : index
    %c320_184 = arith.constant 320 : index
    %199 = vector.load %arg17[%c0_183, %c320_184] : memref<16x400xbf16, #tpu.memory_space<vmem>>, vector<16x80xbf16>
    tpu.vector_store %arg17[%c0_183, %c320_184], %198 {strides = array<i32>} : memref<16x400xbf16, #tpu.memory_space<vmem>>, vector<16x80xbf16>,
    %c0_185 = arith.constant 0 : index
    %c0_186 = arith.constant 0 : index
    %200 = vector.load %arg17[%c0_185, %c0_186] : memref<16x400xbf16, #tpu.memory_space<vmem>>, vector<16x400xbf16>
    %c0_187 = arith.constant 0 : index
    %c0_188 = arith.constant 0 : index
    %201 = vector.load %arg8[%c0_187, %c0_188] : memref<400x120xbf16, #tpu.memory_space<vmem>>, vector<400x120xbf16>
    %cst_189 = arith.constant dense<0.000000e+00> : vector<16x120xf32>
    %202 = tpu.matmul %200, %201, %cst_189 {dimension_numbers = #tpu.dot_dimension_numbers<[1], [0], [0], [1], [0, 0, 1, 1], [], []>} : vector<16x400xbf16>, vector<400x120xbf16>, vector<16x120xf32> -> vector<16x120xf32>
    %c0_190 = arith.constant 0 : index
    %c0_191 = arith.constant 0 : index
    %203 = vector.load %arg9[%c0_190, %c0_191] : memref<1x120xf32, #tpu.memory_space<vmem>>, vector<1x120xf32>
    %204 = vector.broadcast %203 : vector<1x120xf32> to vector<16x120xf32>
    %205 = arith.addf %202, %204 : vector<16x120xf32>
    %cst_192 = arith.constant 0.000000e+00 : f32
    %206 = vector.broadcast %cst_192 : f32 to vector<16x120xf32>
    %207 = arith.maximumf %205, %206 : vector<16x120xf32>
    %208 = arith.truncf %207 : vector<16x120xf32> to vector<16x120xbf16>
    %c0_193 = arith.constant 0 : index
    %c0_194 = arith.constant 0 : index
    %209 = vector.load %arg10[%c0_193, %c0_194] : memref<120x84xbf16, #tpu.memory_space<vmem>>, vector<120x84xbf16>
    %cst_195 = arith.constant dense<0.000000e+00> : vector<16x84xf32>
    %210 = tpu.matmul %208, %209, %cst_195 {dimension_numbers = #tpu.dot_dimension_numbers<[1], [0], [0], [1], [0, 0, 1, 1], [], []>} : vector<16x120xbf16>, vector<120x84xbf16>, vector<16x84xf32> -> vector<16x84xf32>
    %c0_196 = arith.constant 0 : index
    %c0_197 = arith.constant 0 : index
    %211 = vector.load %arg11[%c0_196, %c0_197] : memref<1x84xf32, #tpu.memory_space<vmem>>, vector<1x84xf32>
    %212 = vector.broadcast %211 : vector<1x84xf32> to vector<16x84xf32>
    %213 = arith.addf %210, %212 : vector<16x84xf32>
    %cst_198 = arith.constant 0.000000e+00 : f32
    %214 = vector.broadcast %cst_198 : f32 to vector<16x84xf32>
    %215 = arith.maximumf %213, %214 : vector<16x84xf32>
    %216 = arith.truncf %215 : vector<16x84xf32> to vector<16x84xbf16>
    %c0_199 = arith.constant 0 : index
    %c0_200 = arith.constant 0 : index
    %217 = vector.load %arg12[%c0_199, %c0_200] : memref<84x128xbf16, #tpu.memory_space<vmem>>, vector<84x128xbf16>
    %cst_201 = arith.constant dense<0.000000e+00> : vector<16x128xf32>
    %218 = tpu.matmul %216, %217, %cst_201 {dimension_numbers = #tpu.dot_dimension_numbers<[1], [0], [0], [1], [0, 0, 1, 1], [], []>} : vector<16x84xbf16>, vector<84x128xbf16>, vector<16x128xf32> -> vector<16x128xf32>
    %c0_202 = arith.constant 0 : index
    %c0_203 = arith.constant 0 : index
    %219 = vector.load %arg13[%c0_202, %c0_203] : memref<1x128xf32, #tpu.memory_space<vmem>>, vector<1x128xf32>
    %220 = vector.broadcast %219 : vector<1x128xf32> to vector<16x128xf32>
    %221 = arith.addf %218, %220 : vector<16x128xf32>
    %c0_204 = arith.constant 0 : index
    %c0_205 = arith.constant 0 : index
    %222 = vector.load %arg14[%c0_204, %c0_205] : memref<16x128xf32, #tpu.memory_space<vmem>>, vector<16x128xf32>
    tpu.vector_store %arg14[%c0_204, %c0_205], %221 {strides = array<i32>} : memref<16x128xf32, #tpu.memory_space<vmem>>, vector<16x128xf32>,
    return
  }
  func.func @transform_0(%arg0: i32) -> (i32, i32) {
    %c0_i32 = arith.constant 0 : i32
    %c0_i32_0 = arith.constant 0 : i32
    return %arg0, %c0_i32 : i32, i32
  }
  func.func @transform_1(%arg0: i32) -> (i32, i32, i32) {
    %c0_i32 = arith.constant 0 : i32
    %c0_i32_0 = arith.constant 0 : i32
    %c0_i32_1 = arith.constant 0 : i32
    %c0_i32_2 = arith.constant 0 : i32
    return %c0_i32, %c0_i32_0, %c0_i32_1 : i32, i32, i32
  }
  func.func @transform_2(%arg0: i32) -> (i32, i32, i32) {
    %c0_i32 = arith.constant 0 : i32
    %c0_i32_0 = arith.constant 0 : i32
    %c0_i32_1 = arith.constant 0 : i32
    %c0_i32_2 = arith.constant 0 : i32
    return %c0_i32, %c0_i32_0, %c0_i32_1 : i32, i32, i32
  }
  func.func @transform_3(%arg0: i32) -> (i32, i32) {
    %c0_i32 = arith.constant 0 : i32
    %c0_i32_0 = arith.constant 0 : i32
    %c0_i32_1 = arith.constant 0 : i32
    return %c0_i32, %c0_i32_0 : i32, i32
  }
  func.func @transform_4(%arg0: i32) -> (i32, i32, i32) {
    %c0_i32 = arith.constant 0 : i32
    %c0_i32_0 = arith.constant 0 : i32
    %c0_i32_1 = arith.constant 0 : i32
    %c0_i32_2 = arith.constant 0 : i32
    return %c0_i32, %c0_i32_0, %c0_i32_1 : i32, i32, i32
  }
  func.func @transform_5(%arg0: i32) -> (i32, i32, i32) {
    %c0_i32 = arith.constant 0 : i32
    %c0_i32_0 = arith.constant 0 : i32
    %c0_i32_1 = arith.constant 0 : i32
    %c0_i32_2 = arith.constant 0 : i32
    return %c0_i32, %c0_i32_0, %c0_i32_1 : i32, i32, i32
  }
  func.func @transform_6(%arg0: i32) -> (i32, i32) {
    %c0_i32 = arith.constant 0 : i32
    %c0_i32_0 = arith.constant 0 : i32
    %c0_i32_1 = arith.constant 0 : i32
    return %c0_i32, %c0_i32_0 : i32, i32
  }
  func.func @transform_7(%arg0: i32) -> (i32, i32) {
    %c0_i32 = arith.constant 0 : i32
    %c0_i32_0 = arith.constant 0 : i32
    %c0_i32_1 = arith.constant 0 : i32
    return %c0_i32, %c0_i32_0 : i32, i32
  }
  func.func @transform_8(%arg0: i32) -> (i32, i32) {
    %c0_i32 = arith.constant 0 : i32
    %c0_i32_0 = arith.constant 0 : i32
    %c0_i32_1 = arith.constant 0 : i32
    return %c0_i32, %c0_i32_0 : i32, i32
  }
  func.func @transform_9(%arg0: i32) -> (i32, i32) {
    %c0_i32 = arith.constant 0 : i32
    %c0_i32_0 = arith.constant 0 : i32
    %c0_i32_1 = arith.constant 0 : i32
    return %c0_i32, %c0_i32_0 : i32, i32
  }
  func.func @transform_10(%arg0: i32) -> (i32, i32) {
    %c0_i32 = arith.constant 0 : i32
    %c0_i32_0 = arith.constant 0 : i32
    %c0_i32_1 = arith.constant 0 : i32
    return %c0_i32, %c0_i32_0 : i32, i32
  }
  func.func @transform_11(%arg0: i32) -> (i32, i32) {
    %c0_i32 = arith.constant 0 : i32
    %c0_i32_0 = arith.constant 0 : i32
    %c0_i32_1 = arith.constant 0 : i32
    return %c0_i32, %c0_i32_0 : i32, i32
  }
  func.func @transform_12(%arg0: i32) -> (i32, i32) {
    %c0_i32 = arith.constant 0 : i32
    %c0_i32_0 = arith.constant 0 : i32
    %c0_i32_1 = arith.constant 0 : i32
    return %c0_i32, %c0_i32_0 : i32, i32
  }
  func.func @transform_13(%arg0: i32) -> (i32, i32) {
    %c0_i32 = arith.constant 0 : i32
    %c0_i32_0 = arith.constant 0 : i32
    return %arg0, %c0_i32 : i32, i32
  }
}

</mosaic_0001>

<llo_original>
// kernel: lenet_forward.1
$region0: #{lenet_forward.1}
  #allocation0 [shape = 'u32[]', space=smem, size = 0x4, offset = 0x4, fixed_abs, tag = 'smem constant byte address 0x4 - core index']
  #allocation1 [shape = 'u32[144,128]{1,0:T(1,128)}', space=vmem, size = 0x12000, scoped, tag = 'internal scratch']
  #allocation2 [shape = 'f32[448,168]{1,0:T(8,128)}', space=vmem, size = 0x70000, scoped, tag = 'scratch operand']
  #allocation3 [shape = 'f32[160,160]{1,0:T(8,128)}', space=vmem, size = 0x28000, scoped, tag = 'scratch operand']
  #allocation4 [shape = 'bf16[16,400]{1,0:T(16,128)(2,1)}', space=vmem, size = 0x4000, scoped, tag = 'scratch operand']
  %s0 = inlined_call_operand.vmem [shape: bf16[1024,96], index: 0, kind: input, shape index: {}]
  %s1 = inlined_call_operand.vmem [shape: bf16[5,96,168], index: 1, kind: input, shape index: {}]
  %s2 = inlined_call_operand.vmem [shape: bf16[2,168,84], index: 2, kind: input, shape index: {}]
  %s3 = inlined_call_operand.vmem [shape: f32[1,84], index: 3, kind: input, shape index: {}]
  %s4 = inlined_call_operand.vmem [shape: bf16[5,84,160], index: 4, kind: input, shape index: {}]
  %s5 = inlined_call_operand.vmem [shape: bf16[2,160,80], index: 5, kind: input, shape index: {}]
  %s6 = inlined_call_operand.vmem [shape: f32[1,80], index: 6, kind: input, shape index: {}]
  %s7 = inlined_call_operand.vmem [shape: bf16[400,120], index: 7, kind: input, shape index: {}]
  %s8 = inlined_call_operand.vmem [shape: f32[1,120], index: 8, kind: input, shape index: {}]
  %s9 = inlined_call_operand.vmem [shape: bf16[120,84], index: 9, kind: input, shape index: {}]
  %s10 = inlined_call_operand.vmem [shape: f32[1,84], index: 10, kind: input, shape index: {}]
  %s11 = inlined_call_operand.vmem [shape: bf16[84,128], index: 11, kind: input, shape index: {}]
  %s12 = inlined_call_operand.vmem [shape: f32[1,128], index: 12, kind: input, shape index: {}]
  %s13 = inlined_call_operand.vmem [shape: f32[32,128], index: 13, kind: output, shape index: {}]
  %s14 = sld [smem:[#allocation0]]
  $region85: #{lenet_forward.1} parent=0
    _
  %s16 = ssub.s32 1, %s14
  %s17 = scalar_select 0, %s16, %s14
  loop: start=0, step=1, limit=4
  $region2: #{lenet_forward.1} parent=0 // loop_pre_header
    _
  $region3: #{lenet_forward.1} parent=0 // loop_header
    %s19 = sphi 0, %s23
    %p20 = scmp.ge.s32.totalorder %s19, 4
    %s29 = sphi 0, %s31
    %s32 = sphi 0, %s29
    %s33 = sphi 0, %s32
    %s49 = sphi 0, %s33
    %s53 = sphi 0, %s53
    %s55 = sphi 0, %s53
    %s56 = sphi 0, %s55
    %s70 = sphi 0, %s56
    %s74 = sphi 0, %s74
    %s76 = sphi 0, %s74
    %s77 = sphi 0, %s76
    %s91 = sphi 0, %s77
    %s95 = sphi 0, %s95
    %s97 = sphi 0, %s95
    %s98 = sphi 0, %s97
    %s112 = sphi 0, %s98
    %s116 = sphi 0, %s116
    %s118 = sphi 0, %s116
    %s119 = sphi 0, %s118
    %s133 = sphi 0, %s119
    %s137 = sphi 0, %s137
    %s139 = sphi 0, %s137
    %s140 = sphi 0, %s139
    %s154 = sphi 0, %s140
    %s158 = sphi 0, %s158
    %s160 = sphi 0, %s158
    %s161 = sphi 0, %s160
    %s175 = sphi 0, %s161
    %s179 = sphi 0, %s179
    %s181 = sphi 0, %s179
    %s182 = sphi 0, %s181
    %s196 = sphi 0, %s182
    %s200 = sphi 0, %s200
    %s202 = sphi 0, %s200
    %s203 = sphi 0, %s202
    %s217 = sphi 0, %s203
    %s221 = sphi 0, %s221
    %s223 = sphi 0, %s221
    %s224 = sphi 0, %s223
    %s238 = sphi 0, %s224
    %s242 = sphi 0, %s242
    %s244 = sphi 0, %s242
    %s245 = sphi 0, %s244
    %s259 = sphi 0, %s245
    %s263 = sphi 0, %s263
    %s265 = sphi 0, %s263
    %s266 = sphi 0, %s265
    %s280 = sphi 0, %s266
    %s284 = sphi 0, %s284
    %s286 = sphi 0, %s284
    %s287 = sphi 0, %s286
    %s301 = sphi 0, %s287
    %s307 = sphi 0, %s309
    %s310 = sphi 0, %s307
    %s311 = sphi 0, %s310
    %s327 = sphi 0, %s311
  $region4: #{lenet_forward.1} parent=0 // loop_header_branch
    %22 = sbr.rel (%p20) target = $region8
  $region5: #{lenet_forward.1} parent=0 // loop_body
    %s24 = ssub.s32 %s19, 1
    %s25 = ssub.s32 %s19, 2
    %s26 = sadd.s32 %s19, 1
    %s27 = ssub.s32 %s19, %s26
    %p28 = scmp.eq.s32.totalorder %s27, 0
    %s30 = sadd.s32 %s29, 1
    %s31 = scalar_select %p28, %s29, %s30
    %p34 = pneg %p28
    %p35 = scmp.eq.s32.totalorder %s19, 1
    %p36 = por %p34, %p35
    %p37 = scmp.ne.s32.totalorder %s29, %s32
    %p38 = scmp.eq.s32.totalorder %s19, 0
    %p39 = por %p37, %p38
    %p40 = scmp.ne.s32.totalorder %s29, %s32
    %p41 = scmp.eq.s32.totalorder %s24, 1
    %p42 = por %p40, %p41
    %p43 = scmp.ne.s32.totalorder %s32, %s33
    %p44 = scmp.eq.s32.totalorder %s24, 0
    %p45 = por %p43, %p44
    %p46 = scmp.ne.s32.totalorder %s32, %s33
    %p47 = scmp.eq.s32.totalorder %s25, 1
    %p48 = por %p46, %p47
    %p50 = scmp.ne.s32.totalorder %s33, %s49
    %p51 = scmp.eq.s32.totalorder %s25, 0
    %p52 = por %p50, %p51
    %s54 = sadd.s32 %s53, 1
    %p57 = scmp.eq.s32.totalorder %s19, 1
    %p58 = scmp.ne.s32.totalorder %s53, %s55
    %p59 = scmp.eq.s32.totalorder %s19, 0
    %p60 = por %p58, %p59
    %p61 = scmp.ne.s32.totalorder %s53, %s55
    %p62 = scmp.eq.s32.totalorder %s24, 1
    %p63 = por %p61, %p62
    %p64 = scmp.ne.s32.totalorder %s55, %s56
    %p65 = scmp.eq.s32.totalorder %s24, 0
    %p66 = por %p64, %p65
    %p67 = scmp.ne.s32.totalorder %s55, %s56
    %p68 = scmp.eq.s32.totalorder %s25, 1
    %p69 = por %p67, %p68
    %p71 = scmp.ne.s32.totalorder %s56, %s70
    %p72 = scmp.eq.s32.totalorder %s25, 0
    %p73 = por %p71, %p72
    %s75 = sadd.s32 %s74, 1
    %p78 = scmp.eq.s32.totalorder %s19, 1
    %p79 = scmp.ne.s32.totalorder %s74, %s76
    %p80 = scmp.eq.s32.totalorder %s19, 0
    %p81 = por %p79, %p80
    %p82 = scmp.ne.s32.totalorder %s74, %s76
    %p83 = scmp.eq.s32.totalorder %s24, 1
    %p84 = por %p82, %p83
    %p85 = scmp.ne.s32.totalorder %s76, %s77
    %p86 = scmp.eq.s32.totalorder %s24, 0
    %p87 = por %p85, %p86
    %p88 = scmp.ne.s32.totalorder %s76, %s77
    %p89 = scmp.eq.s32.totalorder %s25, 1
    %p90 = por %p88, %p89
    %p92 = scmp.ne.s32.totalorder %s77, %s91
    %p93 = scmp.eq.s32.totalorder %s25, 0
    %p94 = por %p92, %p93
    %s96 = sadd.s32 %s95, 1
    %p99 = scmp.eq.s32.totalorder %s19, 1
    %p100 = scmp.ne.s32.totalorder %s95, %s97
    %p101 = scmp.eq.s32.totalorder %s19, 0
    %p102 = por %p100, %p101
    %p103 = scmp.ne.s32.totalorder %s95, %s97
    %p104 = scmp.eq.s32.totalorder %s24, 1
    %p105 = por %p103, %p104
    %p106 = scmp.ne.s32.totalorder %s97, %s98
    %p107 = scmp.eq.s32.totalorder %s24, 0
    %p108 = por %p106, %p107
    %p109 = scmp.ne.s32.totalorder %s97, %s98
    %p110 = scmp.eq.s32.totalorder %s25, 1
    %p111 = por %p109, %p110
    %p113 = scmp.ne.s32.totalorder %s98, %s112
    %p114 = scmp.eq.s32.totalorder %s25, 0
    %p115 = por %p113, %p114
    %s117 = sadd.s32 %s116, 1
    %p120 = scmp.eq.s32.totalorder %s19, 1
    %p121 = scmp.ne.s32.totalorder %s116, %s118
    %p122 = scmp.eq.s32.totalorder %s19, 0
    %p123 = por %p121, %p122
    %p124 = scmp.ne.s32.totalorder %s116, %s118
    %p125 = scmp.eq.s32.totalorder %s24, 1
    %p126 = por %p124, %p125
    %p127 = scmp.ne.s32.totalorder %s118, %s119
    %p128 = scmp.eq.s32.totalorder %s24, 0
    %p129 = por %p127, %p128
    %p130 = scmp.ne.s32.totalorder %s118, %s119
    %p131 = scmp.eq.s32.totalorder %s25, 1
    %p132 = por %p130, %p131
    %p134 = scmp.ne.s32.totalorder %s119, %s133
    %p135 = scmp.eq.s32.totalorder %s25, 0
    %p136 = por %p134, %p135
    %s138 = sadd.s32 %s137, 1
    %p141 = scmp.eq.s32.totalorder %s19, 1
    %p142 = scmp.ne.s32.totalorder %s137, %s139
    %p143 = scmp.eq.s32.totalorder %s19, 0
    %p144 = por %p142, %p143
    %p145 = scmp.ne.s32.totalorder %s137, %s139
    %p146 = scmp.eq.s32.totalorder %s24, 1
    %p147 = por %p145, %p146
    %p148 = scmp.ne.s32.totalorder %s139, %s140
    %p149 = scmp.eq.s32.totalorder %s24, 0
    %p150 = por %p148, %p149
    %p151 = scmp.ne.s32.totalorder %s139, %s140
    %p152 = scmp.eq.s32.totalorder %s25, 1
    %p153 = por %p151, %p152
    %p155 = scmp.ne.s32.totalorder %s140, %s154
    %p156 = scmp.eq.s32.totalorder %s25, 0
    %p157 = por %p155, %p156
    %s159 = sadd.s32 %s158, 1
    %p162 = scmp.eq.s32.totalorder %s19, 1
    %p163 = scmp.ne.s32.totalorder %s158, %s160
    %p164 = scmp.eq.s32.totalorder %s19, 0
    %p165 = por %p163, %p164
    %p166 = scmp.ne.s32.totalorder %s158, %s160
    %p167 = scmp.eq.s32.totalorder %s24, 1
    %p168 = por %p166, %p167
    %p169 = scmp.ne.s32.totalorder %s160, %s161
    %p170 = scmp.eq.s32.totalorder %s24, 0
    %p171 = por %p169, %p170
    %p172 = scmp.ne.s32.totalorder %s160, %s161
    %p173 = scmp.eq.s32.totalorder %s25, 1
    %p174 = por %p172, %p173
    %p176 = scmp.ne.s32.totalorder %s161, %s175
    %p177 = scmp.eq.s32.totalorder %s25, 0
    %p178 = por %p176, %p177
    %s180 = sadd.s32 %s179, 1
    %p183 = scmp.eq.s32.totalorder %s19, 1
    %p184 = scmp.ne.s32.totalorder %s179, %s181
    %p185 = scmp.eq.s32.totalorder %s19, 0
    %p186 = por %p184, %p185
    %p187 = scmp.ne.s32.totalorder %s179, %s181
    %p188 = scmp.eq.s32.totalorder %s24, 1
    %p189 = por %p187, %p188
    %p190 = scmp.ne.s32.totalorder %s181, %s182
    %p191 = scmp.eq.s32.totalorder %s24, 0
    %p192 = por %p190, %p191
    %p193 = scmp.ne.s32.totalorder %s181, %s182
    %p194 = scmp.eq.s32.totalorder %s25, 1
    %p195 = por %p193, %p194
    %p197 = scmp.ne.s32.totalorder %s182, %s196
    %p198 = scmp.eq.s32.totalorder %s25, 0
    %p199 = por %p197, %p198
    %s201 = sadd.s32 %s200, 1
    %p204 = scmp.eq.s32.totalorder %s19, 1
    %p205 = scmp.ne.s32.totalorder %s200, %s202
    %p206 = scmp.eq.s32.totalorder %s19, 0
    %p207 = por %p205, %p206
    %p208 = scmp.ne.s32.totalorder %s200, %s202
    %p209 = scmp.eq.s32.totalorder %s24, 1
    %p210 = por %p208, %p209
    %p211 = scmp.ne.s32.totalorder %s202, %s203
    %p212 = scmp.eq.s32.totalorder %s24, 0
    %p213 = por %p211, %p212
    %p214 = scmp.ne.s32.totalorder %s202, %s203
    %p215 = scmp.eq.s32.totalorder %s25, 1
    %p216 = por %p214, %p215
    %p218 = scmp.ne.s32.totalorder %s203, %s217
    %p219 = scmp.eq.s32.totalorder %s25, 0
    %p220 = por %p218, %p219
    %s222 = sadd.s32 %s221, 1
    %p225 = scmp.eq.s32.totalorder %s19, 1
    %p226 = scmp.ne.s32.totalorder %s221, %s223
    %p227 = scmp.eq.s32.totalorder %s19, 0
    %p228 = por %p226, %p227
    %p229 = scmp.ne.s32.totalorder %s221, %s223
    %p230 = scmp.eq.s32.totalorder %s24, 1
    %p231 = por %p229, %p230
    %p232 = scmp.ne.s32.totalorder %s223, %s224
    %p233 = scmp.eq.s32.totalorder %s24, 0
    %p234 = por %p232, %p233
    %p235 = scmp.ne.s32.totalorder %s223, %s224
    %p236 = scmp.eq.s32.totalorder %s25, 1
    %p237 = por %p235, %p236
    %p239 = scmp.ne.s32.totalorder %s224, %s238
    %p240 = scmp.eq.s32.totalorder %s25, 0
    %p241 = por %p239, %p240
    %s243 = sadd.s32 %s242, 1
    %p246 = scmp.eq.s32.totalorder %s19, 1
    %p247 = scmp.ne.s32.totalorder %s242, %s244
    %p248 = scmp.eq.s32.totalorder %s19, 0
    %p249 = por %p247, %p248
    %p250 = scmp.ne.s32.totalorder %s242, %s244
    %p251 = scmp.eq.s32.totalorder %s24, 1
    %p252 = por %p250, %p251
    %p253 = scmp.ne.s32.totalorder %s244, %s245
    %p254 = scmp.eq.s32.totalorder %s24, 0
    %p255 = por %p253, %p254
    %p256 = scmp.ne.s32.totalorder %s244, %s245
    %p257 = scmp.eq.s32.totalorder %s25, 1
    %p258 = por %p256, %p257
    %p260 = scmp.ne.s32.totalorder %s245, %s259
    %p261 = scmp.eq.s32.totalorder %s25, 0
    %p262 = por %p260, %p261
    %s264 = sadd.s32 %s263, 1
    %p267 = scmp.eq.s32.totalorder %s19, 1
    %p268 = scmp.ne.s32.totalorder %s263, %s265
    %p269 = scmp.eq.s32.totalorder %s19, 0
    %p270 = por %p268, %p269
    %p271 = scmp.ne.s32.totalorder %s263, %s265
    %p272 = scmp.eq.s32.totalorder %s24, 1
    %p273 = por %p271, %p272
    %p274 = scmp.ne.s32.totalorder %s265, %s266
    %p275 = scmp.eq.s32.totalorder %s24, 0
    %p276 = por %p274, %p275
    %p277 = scmp.ne.s32.totalorder %s265, %s266
    %p278 = scmp.eq.s32.totalorder %s25, 1
    %p279 = por %p277, %p278
    %p281 = scmp.ne.s32.totalorder %s266, %s280
    %p282 = scmp.eq.s32.totalorder %s25, 0
    %p283 = por %p281, %p282
    %s285 = sadd.s32 %s284, 1
    %p288 = scmp.eq.s32.totalorder %s19, 1
    %p289 = scmp.ne.s32.totalorder %s284, %s286
    %p290 = scmp.eq.s32.totalorder %s19, 0
    %p291 = por %p289, %p290
    %p292 = scmp.ne.s32.totalorder %s284, %s286
    %p293 = scmp.eq.s32.totalorder %s24, 1
    %p294 = por %p292, %p293
    %p295 = scmp.ne.s32.totalorder %s286, %s287
    %p296 = scmp.eq.s32.totalorder %s24, 0
    %p297 = por %p295, %p296
    %p298 = scmp.ne.s32.totalorder %s286, %s287
    %p299 = scmp.eq.s32.totalorder %s25, 1
    %p300 = por %p298, %p299
    %p302 = scmp.ne.s32.totalorder %s287, %s301
    %p303 = scmp.eq.s32.totalorder %s25, 0
    %p304 = por %p302, %p303
    %s305 = ssub.s32 %s19, %s26
    %p306 = scmp.eq.s32.totalorder %s305, 0
    %s308 = sadd.s32 %s307, 1
    %s309 = scalar_select %p306, %s307, %s308
    %p312 = pneg %p306
    %p313 = scmp.eq.s32.totalorder %s19, 1
    %p314 = por %p312, %p313
    %p315 = scmp.ne.s32.totalorder %s307, %s310
    %p316 = scmp.eq.s32.totalorder %s19, 0
    %p317 = por %p315, %p316
    %p318 = scmp.ne.s32.totalorder %s307, %s310
    %p319 = scmp.eq.s32.totalorder %s24, 1
    %p320 = por %p318, %p319
    %p321 = scmp.ne.s32.totalorder %s310, %s311
    %p322 = scmp.eq.s32.totalorder %s24, 0
    %p323 = por %p321, %p322
    %p324 = scmp.ne.s32.totalorder %s310, %s311
    %p325 = scmp.eq.s32.totalorder %s25, 1
    %p326 = por %p324, %p325
    %p328 = scmp.ne.s32.totalorder %s311, %s327
    %p329 = scmp.eq.s32.totalorder %s25, 0
    %p330 = por %p328, %p329
    %p331 = scmp.le.s32.totalorder 1, %s19
    %p332 = scmp.lt.s32.totalorder %s19, 3
    %p333 = pnand %p331, %p332
    %p334 = pneg %p333
    // Predicated region
    $region9: #{lenet_forward.1} parent=5 // pred_check
      _
    $region10: #{lenet_forward.1} parent=5 // pred_check_branch
      %336 = sbr.rel (%p333) target = $region12
    $region11: #{lenet_forward.1} parent=5 // pred_region
      %s337 = ssub.s32 %s19, 1
      // Predicated region
      $region13: #{lenet_forward.1} parent=11 // pred_check
        %p338 = pneg %p66
      $region14: #{lenet_forward.1} parent=11 // pred_check_branch
        %340 = sbr.rel (%p338) target = $region16
      $region15: #{lenet_forward.1} parent=11 // pred_region
        _
      $region16: #{lenet_forward.1} parent=11 // pred_fallthru
        _
      // Predicated region
      $region17: #{lenet_forward.1} parent=11 // pred_check
        %p341 = pneg %p87
      $region18: #{lenet_forward.1} parent=11 // pred_check_branch
        %343 = sbr.rel (%p341) target = $region20
      $region19: #{lenet_forward.1} parent=11 // pred_region
        _
      $region20: #{lenet_forward.1} parent=11 // pred_fallthru
        _
      // Predicated region
      $region21: #{lenet_forward.1} parent=11 // pred_check
        %p344 = pneg %p108
      $region22: #{lenet_forward.1} parent=11 // pred_check_branch
        %346 = sbr.rel (%p344) target = $region24
      $region23: #{lenet_forward.1} parent=11 // pred_region
        _
      $region24: #{lenet_forward.1} parent=11 // pred_fallthru
        _
      // Predicated region
      $region25: #{lenet_forward.1} parent=11 // pred_check
        %p347 = pneg %p129
      $region26: #{lenet_forward.1} parent=11 // pred_check_branch
        %349 = sbr.rel (%p347) target = $region28
      $region27: #{lenet_forward.1} parent=11 // pred_region
        _
      $region28: #{lenet_forward.1} parent=11 // pred_fallthru
        _
      // Predicated region
      $region29: #{lenet_forward.1} parent=11 // pred_check
        %p350 = pneg %p150
      $region30: #{lenet_forward.1} parent=11 // pred_check_branch
        %352 = sbr.rel (%p350) target = $region32
      $region31: #{lenet_forward.1} parent=11 // pred_region
        _
      $region32: #{lenet_forward.1} parent=11 // pred_fallthru
        _
      // Predicated region
      $region33: #{lenet_forward.1} parent=11 // pred_check
        %p353 = pneg %p171
      $region34: #{lenet_forward.1} parent=11 // pred_check_branch
        %355 = sbr.rel (%p353) target = $region36
      $region35: #{lenet_forward.1} parent=11 // pred_region
        _
      $region36: #{lenet_forward.1} parent=11 // pred_fallthru
        _
      // Predicated region
      $region37: #{lenet_forward.1} parent=11 // pred_check
        %p356 = pneg %p192
      $region38: #{lenet_forward.1} parent=11 // pred_check_branch
        %358 = sbr.rel (%p356) target = $region40
      $region39: #{lenet_forward.1} parent=11 // pred_region
        _
      $region40: #{lenet_forward.1} parent=11 // pred_fallthru
        _
      // Predicated region
      $region41: #{lenet_forward.1} parent=11 // pred_check
        %p359 = pneg %p213
      $region42: #{lenet_forward.1} parent=11 // pred_check_branch
        %361 = sbr.rel (%p359) target = $region44
      $region43: #{lenet_forward.1} parent=11 // pred_region
        _
      $region44: #{lenet_forward.1} parent=11 // pred_fallthru
        _
      // Predicated region
      $region45: #{lenet_forward.1} parent=11 // pred_check
        %p362 = pneg %p234
      $region46: #{lenet_forward.1} parent=11 // pred_check_branch
        %364 = sbr.rel (%p362) target = $region48
      $region47: #{lenet_forward.1} parent=11 // pred_region
        _
      $region48: #{lenet_forward.1} parent=11 // pred_fallthru
        _
      // Predicated region
      $region49: #{lenet_forward.1} parent=11 // pred_check
        %p365 = pneg %p255
      $region50: #{lenet_forward.1} parent=11 // pred_check_branch
        %367 = sbr.rel (%p365) target = $region52
      $region51: #{lenet_forward.1} parent=11 // pred_region
        _
      $region52: #{lenet_forward.1} parent=11 // pred_fallthru
        _
      // Predicated region
      $region53: #{lenet_forward.1} parent=11 // pred_check
        %p368 = pneg %p276
      $region54: #{lenet_forward.1} parent=11 // pred_check_branch
        %370 = sbr.rel (%p368) target = $region56
      $region55: #{lenet_forward.1} parent=11 // pred_region
        _
      $region56: #{lenet_forward.1} parent=11 // pred_fallthru
        _
      // Predicated region
      $region57: #{lenet_forward.1} parent=11 // pred_check
        %p371 = pneg %p297
      $region58: #{lenet_forward.1} parent=11 // pred_check_branch
        %373 = sbr.rel (%p371) target = $region60
      $region59: #{lenet_forward.1} parent=11 // pred_region
        _
      $region60: #{lenet_forward.1} parent=11 // pred_fallthru
        _
    $region12: #{lenet_forward.1} parent=5 // pred_fallthru
      _
    %p374 = scmp.lt.s32.totalorder %s19, 2
    // Predicated region
    $region61: #{lenet_forward.1} parent=5 // pred_check
      %p375 = pneg %p374
    $region62: #{lenet_forward.1} parent=5 // pred_check_branch
      %377 = sbr.rel (%p375) target = $region64
    $region63: #{lenet_forward.1} parent=5 // pred_region
      // Predicated region
      $region65: #{lenet_forward.1} parent=63 // pred_check
        %p378 = pneg %p39
      $region66: #{lenet_forward.1} parent=63 // pred_check_branch
        %380 = sbr.rel (%p378) target = $region68
      $region67: #{lenet_forward.1} parent=63 // pred_region
        %s381 = smul.u32 64, %s19
        %p382 = scmp.lt.s32.totalorder %s381, 127
        %s383 = scalar_select %p382, %s381, 127
        %s384 = smul.addr %s383, 4
        %s385 = scalar_lea.vmem %s0, %s384
        %s386 = smul.u32 64, %s19
      $region68: #{lenet_forward.1} parent=63 // pred_fallthru
        _
    $region64: #{lenet_forward.1} parent=5 // pred_fallthru
      _
    %p387 = scmp.le.s32.totalorder 1, %s19
    %p388 = scmp.lt.s32.totalorder %s19, 3
    %p389 = pnand %p387, %p388
    %p390 = pneg %p389
    // Predicated region
    $region69: #{lenet_forward.1} parent=5 // pred_check
      _
    $region70: #{lenet_forward.1} parent=5 // pred_check_branch
      %392 = sbr.rel (%p389) target = $region72
    $region71: #{lenet_forward.1} parent=5 // pred_region
      %s393 = ssub.s32 %s19, 1
      %s394 = smul.u32 64, %s24
      %p395 = scmp.lt.s32.totalorder %s394, 127
      %s396 = scalar_select %p395, %s394, 127
      %s397 = smul.addr %s396, 4
      %s398 = scalar_lea.vmem %s0, %s397
      %p399 = pneg %p45
      %p400 = pneg %p42
      %p401 = pneg %p66
      %p402 = pneg %p63
      %p403 = pneg %p87
      %p404 = pneg %p84
      %p405 = pneg %p108
      %p406 = pneg %p105
      %p407 = pneg %p129
      %p408 = pneg %p126
      %p409 = pneg %p150
      %p410 = pneg %p147
      %p411 = pneg %p171
      %p412 = pneg %p168
      %p413 = pneg %p192
      %p414 = pneg %p189
      %p415 = pneg %p213
      %p416 = pneg %p210
      %p417 = pneg %p234
      %p418 = pneg %p231
      %p419 = pneg %p255
      %p420 = pneg %p252
      %p421 = pneg %p276
      %p422 = pneg %p273
      %p423 = pneg %p297
      %p424 = pneg %p294
      %p425 = pneg %p323
      %p426 = pneg %p320
      %s427 = smul.u32 2, %s24
      %p428 = scmp.lt.s32.totalorder %s427, 3
      %s429 = scalar_select %p428, %s427, 3
      %s430 = smul.addr %s429, 8
      %s431 = scalar_lea.vmem %s13, %s430
      %s432 = smul.u32 64, %s24
      %p433 = scmp.lt.s32.totalorder %s432, 127
      %s434 = scalar_select %p433, %s432, 127
      %s435 = smul.addr %s434, 4
      %s436 = scalar_lea.vmem %s0, %s435
      %s437 = smul.u32 64, %s24
      %s438 = smul.u32 2, %s24
      %p439 = scmp.lt.s32.totalorder %s438, 3
      %s440 = scalar_select %p439, %s438, 3
      %s441 = smul.addr %s440, 8
      %s442 = scalar_lea.vmem %s13, %s441
      %s443 = smul.u32 2, %s24
      %v445 = vld [vmem:[%s436] sm:$0xf]
      %v446 = vld [vmem:[%s436 + $0x4] sm:$0xf]
      %v447 = vld [vmem:[%s436 + $0x8] sm:$0xf]
      %v448 = vld [vmem:[%s436 + $0xc] sm:$0xf]
      %v449 = vld [vmem:[%s436 + $0x10] sm:$0xf]
      %v450 = vld [vmem:[%s436 + $0x14] sm:$0xf]
      %v451 = vld [vmem:[%s436 + $0x18] sm:$0xf]
      %v452 = vld [vmem:[%s436 + $0x1c] sm:$0xf]
      %v453 = vld [vmem:[%s436 + $0x20] sm:$0xf]
      %v454 = vld [vmem:[%s436 + $0x24] sm:$0xf]
      %v455 = vld [vmem:[%s436 + $0x28] sm:$0xf]
      %v456 = vld [vmem:[%s436 + $0x2c] sm:$0xf]
      %v457 = vld [vmem:[%s436 + $0x30] sm:$0xf]
      %v458 = vld [vmem:[%s436 + $0x34] sm:$0xf]
      %v459 = vld [vmem:[%s436 + $0x38] sm:$0xf]
      %v460 = vld [vmem:[%s436 + $0x3c] sm:$0xf]
      %v461 = vld [vmem:[%s436 + $0x40] sm:$0xf]
      %v462 = vld [vmem:[%s436 + $0x44] sm:$0xf]
      %v463 = vld [vmem:[%s436 + $0x48] sm:$0xf]
      %v464 = vld [vmem:[%s436 + $0x4c] sm:$0xf]
      %v465 = vld [vmem:[%s436 + $0x50] sm:$0xf]
      %v466 = vld [vmem:[%s436 + $0x54] sm:$0xf]
      %v467 = vld [vmem:[%s436 + $0x58] sm:$0xf]
      %v468 = vld [vmem:[%s436 + $0x5c] sm:$0xf]
      %v469 = vld [vmem:[%s436 + $0x60] sm:$0xf]
      %v470 = vld [vmem:[%s436 + $0x64] sm:$0xf]
      %v471 = vld [vmem:[%s436 + $0x68] sm:$0xf]
      %v472 = vld [vmem:[%s436 + $0x6c] sm:$0xf]
      %v473 = vld [vmem:[%s436 + $0x70] sm:$0xf]
      %v474 = vld [vmem:[%s436 + $0x74] sm:$0xf]
      %v475 = vld [vmem:[%s436 + $0x78] sm:$0xf]
      %v476 = vld [vmem:[%s436 + $0x7c] sm:$0xf]
      %v477 = vld [vmem:[%s436 + $0x80] sm:$0xf]
      %v478 = vld [vmem:[%s436 + $0x84] sm:$0xf]
      %v479 = vld [vmem:[%s436 + $0x88] sm:$0xf]
      %v480 = vld [vmem:[%s436 + $0x8c] sm:$0xf]
      %v481 = vld [vmem:[%s436 + $0x90] sm:$0xf]
      %v482 = vld [vmem:[%s436 + $0x94] sm:$0xf]
      %v483 = vld [vmem:[%s436 + $0x98] sm:$0xf]
      %v484 = vld [vmem:[%s436 + $0x9c] sm:$0xf]
      %v485 = vld [vmem:[%s436 + $0xa0] sm:$0xf]
      %v486 = vld [vmem:[%s436 + $0xa4] sm:$0xf]
      %v487 = vld [vmem:[%s436 + $0xa8] sm:$0xf]
      %v488 = vld [vmem:[%s436 + $0xac] sm:$0xf]
      %v489 = vld [vmem:[%s436 + $0xb0] sm:$0xf]
      %v490 = vld [vmem:[%s436 + $0xb4] sm:$0xf]
      %v491 = vld [vmem:[%s436 + $0xb8] sm:$0xf]
      %v492 = vld [vmem:[%s436 + $0xbc] sm:$0xf]
      %v493 = vld [vmem:[%s436 + $0xc0] sm:$0xf]
      %v494 = vld [vmem:[%s436 + $0xc4] sm:$0xf]
      %v495 = vld [vmem:[%s436 + $0xc8] sm:$0xf]
      %v496 = vld [vmem:[%s436 + $0xcc] sm:$0xf]
      %v497 = vld [vmem:[%s436 + $0xd0] sm:$0xf]
      %v498 = vld [vmem:[%s436 + $0xd4] sm:$0xf]
      %v499 = vld [vmem:[%s436 + $0xd8] sm:$0xf]
      %v500 = vld [vmem:[%s436 + $0xdc] sm:$0xf]
      %v501 = vld [vmem:[%s1] sm:$0xff]
      %v502 = vld [vmem:[%s1 + $0x8] sm:$0xff]
      %v503 = vld [vmem:[%s1 + $0x10] sm:$0xff]
      %v504 = vld [vmem:[%s1 + $0x18] sm:$0xff]
      %v505 = vld [vmem:[%s1 + $0x20] sm:$0xff]
      %v506 = vld [vmem:[%s1 + $0x28] sm:$0xff]
      %v507 = vld [vmem:[%s1 + $0x30] sm:$0xff]
      %v508 = vld [vmem:[%s1 + $0x38] sm:$0xff]
      %v509 = vld [vmem:[%s1 + $0x40] sm:$0xff]
      %v510 = vld [vmem:[%s1 + $0x48] sm:$0xff]
      %v511 = vld [vmem:[%s1 + $0x50] sm:$0xff]
      %v512 = vld [vmem:[%s1 + $0x58] sm:$0xff]
      %v569 = vunpack.c.l.b16 %v445
      %v570 = vunpack.c.l.b16 %v446
      %v571 = vunpack.c.l.b16 %v447
      %v572 = vunpack.c.l.b16 %v448
      %v573 = vunpack.c.l.b16 %v449
      %v574 = vunpack.c.l.b16 %v450
      %v575 = vunpack.c.l.b16 %v451
      %v576 = vunpack.c.l.b16 %v452
      %v577 = vunpack.c.l.b16 %v453
      %v578 = vunpack.c.l.b16 %v454
      %v579 = vunpack.c.l.b16 %v455
      %v580 = vunpack.c.l.b16 %v456
      %v581 = vunpack.c.l.b16 %v457
      %v582 = vunpack.c.l.b16 %v458
      %v583 = vunpack.c.l.b16 %v459
      %v584 = vunpack.c.l.b16 %v460
      %v585 = vunpack.c.l.b16 %v461
      %v586 = vunpack.c.l.b16 %v462
      %v587 = vunpack.c.l.b16 %v463
      %v588 = vunpack.c.l.b16 %v464
      %v589 = vunpack.c.l.b16 %v465
      %v590 = vunpack.c.l.b16 %v466
      %v591 = vunpack.c.l.b16 %v467
      %v592 = vunpack.c.l.b16 %v468
      %v593 = vunpack.c.l.b16 %v469
      %v594 = vunpack.c.l.b16 %v470
      %v595 = vunpack.c.l.b16 %v471
      %v596 = vunpack.c.l.b16 %v472
      %v597 = vunpack.c.l.b16 %v473
      %v598 = vunpack.c.l.b16 %v474
      %v599 = vunpack.c.l.b16 %v475
      %v600 = vunpack.c.l.b16 %v476
      %v601 = vunpack.c.l.b16 %v477
      %v602 = vunpack.c.l.b16 %v478
      %v603 = vunpack.c.l.b16 %v479
      %v604 = vunpack.c.l.b16 %v480
      %v605 = vunpack.c.l.b16 %v481
      %v606 = vunpack.c.l.b16 %v482
      %v607 = vunpack.c.l.b16 %v483
      %v608 = vunpack.c.l.b16 %v484
      %v609 = vunpack.c.l.b16 %v485
      %v610 = vunpack.c.l.b16 %v486
      %v611 = vunpack.c.l.b16 %v487
      %v612 = vunpack.c.l.b16 %v488
      %v613 = vunpack.c.l.b16 %v489
      %v614 = vunpack.c.l.b16 %v490
      %v615 = vunpack.c.l.b16 %v491
      %v616 = vunpack.c.l.b16 %v492
      %v617 = vunpack.c.l.b16 %v493
      %v618 = vunpack.c.l.b16 %v494
      %v619 = vunpack.c.l.b16 %v495
      %v620 = vunpack.c.l.b16 %v496
      %v621 = vunpack.c.l.b16 %v497
      %v622 = vunpack.c.l.b16 %v498
      %v623 = vunpack.c.l.b16 %v499
      %v624 = vunpack.c.l.b16 %v500
      %v625 = vpack.c.b16 %v570, %v569
      %v626 = vpack.c.b16 %v572, %v571
      %v627 = vpack.c.b16 %v574, %v573
      %v628 = vpack.c.b16 %v576, %v575
      %v629 = vpack.c.b16 %v578, %v577
      %v630 = vpack.c.b16 %v580, %v579
      %v631 = vpack.c.b16 %v582, %v581
      %v632 = vpack.c.b16 %v584, %v583
      %v633 = vpack.c.b16 %v586, %v585
      %v634 = vpack.c.b16 %v588, %v587
      %v635 = vpack.c.b16 %v590, %v589
      %v636 = vpack.c.b16 %v592, %v591
      %v637 = vpack.c.b16 %v594, %v593
      %v638 = vpack.c.b16 %v596, %v595
      %v639 = vpack.c.b16 %v598, %v597
      %v640 = vpack.c.b16 %v600, %v599
      %v641 = vpack.c.b16 %v602, %v601
      %v642 = vpack.c.b16 %v604, %v603
      %v643 = vpack.c.b16 %v606, %v605
      %v644 = vpack.c.b16 %v608, %v607
      %v645 = vpack.c.b16 %v610, %v609
      %v646 = vpack.c.b16 %v612, %v611
      %v647 = vpack.c.b16 %v614, %v613
      %v648 = vpack.c.b16 %v616, %v615
      %v649 = vpack.c.b16 %v618, %v617
      %v650 = vpack.c.b16 %v620, %v619
      %v651 = vpack.c.b16 %v622, %v621
      %v652 = vpack.c.b16 %v624, %v623
      %v665 = vunpack.c.l.b16 %v501
      %v666 = vunpack.c.h.b16 %v501
      %v667 = vunpack.c.l.b16 %v502
      %v668 = vunpack.c.h.b16 %v502
      %v669 = vunpack.c.l.b16 %v503
      %v670 = vunpack.c.h.b16 %v503
      %v671 = vunpack.c.l.b16 %v504
      %v672 = vunpack.c.h.b16 %v504
      %v673 = vunpack.c.l.b16 %v505
      %v674 = vunpack.c.h.b16 %v505
      %v675 = vunpack.c.l.b16 %v506
      %v676 = vunpack.c.h.b16 %v506
      %v677 = vunpack.c.l.b16 %v507
      %v678 = vunpack.c.h.b16 %v507
      %v679 = vunpack.c.l.b16 %v508
      %v680 = vunpack.c.h.b16 %v508
      %v681 = vunpack.c.l.b16 %v509
      %v682 = vunpack.c.h.b16 %v509
      %v683 = vunpack.c.l.b16 %v510
      %v684 = vunpack.c.h.b16 %v510
      %v685 = vunpack.c.l.b16 %v511
      %v686 = vunpack.c.h.b16 %v511
      %v687 = vunpack.c.l.b16 %v512
      %v688 = vunpack.c.h.b16 %v512
      %v689 = vpack.c.b16 %v667, %v665
      %v690 = vpack.c.b16 %v668, %v666
      %v691 = vpack.c.b16 %v671, %v669
      %v692 = vpack.c.b16 %v672, %v670
      %v693 = vpack.c.b16 %v675, %v673
      %v694 = vpack.c.b16 %v676, %v674
      %v695 = vpack.c.b16 %v679, %v677
      %v696 = vpack.c.b16 %v680, %v678
      %v697 = vpack.c.b16 %v683, %v681
      %v698 = vpack.c.b16 %v684, %v682
      %v699 = vpack.c.b16 %v687, %v685
      %v700 = vpack.c.b16 %v688, %v686
      %vm713 = vcmask 785408
      %v715 = vsel %vm713, %v625, 0
      %v718 = vsel %vm713, %v626, 0
      %v721 = vsel %vm713, %v627, 0
      %v724 = vsel %vm713, %v628, 0
      %v727 = vsel %vm713, %v629, 0
      %v730 = vsel %vm713, %v630, 0
      %v733 = vsel %vm713, %v631, 0
      %v736 = vsel %vm713, %v632, 0
      %v739 = vsel %vm713, %v633, 0
      %v742 = vsel %vm713, %v634, 0
      %v745 = vsel %vm713, %v635, 0
      %v748 = vsel %vm713, %v636, 0
      %v751 = vsel %vm713, %v637, 0
      %v754 = vsel %vm713, %v638, 0
      %v757 = vsel %vm713, %v639, 0
      %v760 = vsel %vm713, %v640, 0
      %v763 = vsel %vm713, %v641, 0
      %v766 = vsel %vm713, %v642, 0
      %v769 = vsel %vm713, %v643, 0
      %v772 = vsel %vm713, %v644, 0
      %v775 = vsel %vm713, %v645, 0
      %v778 = vsel %vm713, %v646, 0
      %v781 = vsel %vm713, %v647, 0
      %v784 = vsel %vm713, %v648, 0
      %v787 = vsel %vm713, %v649, 0
      %v790 = vsel %vm713, %v650, 0
      %v793 = vsel %vm713, %v651, 0
      %v796 = vsel %vm713, %v652, 0
      %798 = vmatprep.subr.bf16.mxu0 %v690
      %799 = vmatpush1.bf16.msra.mxu0 %v689
      %800 = vmatprep.subr.bf16.mxu0 %v692
      %801 = vmatpush1.bf16.msra.mxu0 %v691
      %802 = vmatprep.subr.bf16.mxu0 %v694
      %803 = vmatpush1.bf16.msra.mxu0 %v693
      %804 = vmatprep.subr.bf16.mxu0 %v696
      %805 = vmatpush1.bf16.msra.mxu0 %v695
      %806 = vmatprep.subr.bf16.mxu0 %v698
      %807 = vmatpush1.bf16.msra.mxu0 %v697
      %808 = vmatprep.subr.bf16.mxu0 %v700
      %809 = vmatpush1.bf16.msra.mxu0 %v699
      %810 = vmatprep.subr.bf16.mxu0 0
      %811 = vmatpush1.bf16.msra.mxu0 0
      %812 = vmatprep.subr.bf16.mxu0 0
      %813 = vmatpush1.bf16.msra.mxu0 0
      %814 = vmatprep.subr.bf16.mxu0 0
      %815 = vmatpush1.bf16.msra.mxu0 0
      %816 = vmatprep.subr.bf16.mxu0 0
      %817 = vmatpush1.bf16.msra.mxu0 0
      %818 = vmatprep.subr.bf16.mxu0 0
      %819 = vmatpush1.bf16.msra.mxu0 0
      %820 = vmatprep.subr.bf16.mxu0 0
      %821 = vmatpush1.bf16.msra.mxu0 0
      %822 = vmatprep.subr.bf16.mxu0 0
      %823 = vmatpush1.bf16.msra.mxu0 0
      %824 = vmatprep.subr.bf16.mxu0 0
      %825 = vmatpush1.bf16.msra.mxu0 0
      %826 = vmatprep.subr.bf16.mxu0 0
      %827 = vmatpush1.bf16.msra.mxu0 0
      %828 = vmatprep.subr.bf16.mxu0 0
      %829 = vmatpush1.bf16.msra.mxu0 0
      %830 = vmatprep.mubr.bf16.mxu0 0
      %831 = vmatmul.mubr.bf16.gmra.mrb[0].mxu0 %v715
      %v832 = vpop.f32.mrb[0].mxu0
      %v833 = vadd.f32 0.0, %v832
      %v834 = vpop.f32.mrb[0].mxu0
      %v835 = vadd.f32 0.0, %v834
      %v836 = vpop.f32.mrb[0].mxu0
      %v837 = vadd.f32 0.0, %v836
      %v838 = vpop.f32.mrb[0].mxu0
      %v839 = vadd.f32 0.0, %v838
      %840 = vmatprep.mubr.bf16.mxu0 0
      %841 = vmatmul.mubr.bf16.gmra.mrb[0].mxu0 %v718
      %v842 = vpop.f32.mrb[0].mxu0
      %v843 = vadd.f32 0.0, %v842
      %v844 = vpop.f32.mrb[0].mxu0
      %v845 = vadd.f32 0.0, %v844
      %v846 = vpop.f32.mrb[0].mxu0
      %v847 = vadd.f32 0.0, %v846
      %v848 = vpop.f32.mrb[0].mxu0
      %v849 = vadd.f32 0.0, %v848
      %850 = vmatprep.mubr.bf16.mxu0 0
      %851 = vmatmul.mubr.bf16.gmra.mrb[0].mxu0 %v721
      %v852 = vpop.f32.mrb[0].mxu0
      %v853 = vadd.f32 0.0, %v852
      %v854 = vpop.f32.mrb[0].mxu0
      %v855 = vadd.f32 0.0, %v854
      %v856 = vpop.f32.mrb[0].mxu0
      %v857 = vadd.f32 0.0, %v856
      %v858 = vpop.f32.mrb[0].mxu0
      %v859 = vadd.f32 0.0, %v858
      %860 = vmatprep.mubr.bf16.mxu0 0
      %861 = vmatmul.mubr.bf16.gmra.mrb[0].mxu0 %v724
      %v862 = vpop.f32.mrb[0].mxu0
      %v863 = vadd.f32 0.0, %v862
      %v864 = vpop.f32.mrb[0].mxu0
      %v865 = vadd.f32 0.0, %v864
      %v866 = vpop.f32.mrb[0].mxu0
      %v867 = vadd.f32 0.0, %v866
      %v868 = vpop.f32.mrb[0].mxu0
      %v869 = vadd.f32 0.0, %v868
      %870 = vmatprep.mubr.bf16.mxu0 0
      %871 = vmatmul.mubr.bf16.gmra.mrb[0].mxu0 %v727
      %v872 = vpop.f32.mrb[0].mxu0
      %v873 = vadd.f32 0.0, %v872
      %v874 = vpop.f32.mrb[0].mxu0
      %v875 = vadd.f32 0.0, %v874
      %v876 = vpop.f32.mrb[0].mxu0
      %v877 = vadd.f32 0.0, %v876
      %v878 = vpop.f32.mrb[0].mxu0
      %v879 = vadd.f32 0.0, %v878
      %880 = vmatprep.mubr.bf16.mxu0 0
      %881 = vmatmul.mubr.bf16.gmra.mrb[0].mxu0 %v730
      %v882 = vpop.f32.mrb[0].mxu0
      %v883 = vadd.f32 0.0, %v882
      %v884 = vpop.f32.mrb[0].mxu0
      %v885 = vadd.f32 0.0, %v884
      %v886 = vpop.f32.mrb[0].mxu0
      %v887 = vadd.f32 0.0, %v886
      %v888 = vpop.f32.mrb[0].mxu0
      %v889 = vadd.f32 0.0, %v888
      %890 = vmatprep.mubr.bf16.mxu0 0
      %891 = vmatmul.mubr.bf16.gmra.mrb[0].mxu0 %v733
      %v892 = vpop.f32.mrb[0].mxu0
      %v893 = vadd.f32 0.0, %v892
      %v894 = vpop.f32.mrb[0].mxu0
      %v895 = vadd.f32 0.0, %v894
      %v896 = vpop.f32.mrb[0].mxu0
      %v897 = vadd.f32 0.0, %v896
      %v898 = vpop.f32.mrb[0].mxu0
      %v899 = vadd.f32 0.0, %v898
      %900 = vmatprep.mubr.bf16.mxu0 0
      %901 = vmatmul.mubr.bf16.gmra.mrb[0].mxu0 %v736
      %v902 = vpop.f32.mrb[0].mxu0
      %v903 = vadd.f32 0.0, %v902
      %v904 = vpop.f32.mrb[0].mxu0
      %v905 = vadd.f32 0.0, %v904
      %v906 = vpop.f32.mrb[0].mxu0
      %v907 = vadd.f32 0.0, %v906
      %v908 = vpop.f32.mrb[0].mxu0
      %v909 = vadd.f32 0.0, %v908
      %910 = vmatprep.mubr.bf16.mxu0 0
      %911 = vmatmul.mubr.bf16.gmra.mrb[0].mxu0 %v739
      %v912 = vpop.f32.mrb[0].mxu0
      %v913 = vadd.f32 0.0, %v912
      %v914 = vpop.f32.mrb[0].mxu0
      %v915 = vadd.f32 0.0, %v914
      %v916 = vpop.f32.mrb[0].mxu0
      %v917 = vadd.f32 0.0, %v916
      %v918 = vpop.f32.mrb[0].mxu0
      %v919 = vadd.f32 0.0, %v918
      %920 = vmatprep.mubr.bf16.mxu0 0
      %921 = vmatmul.mubr.bf16.gmra.mrb[0].mxu0 %v742
      %v922 = vpop.f32.mrb[0].mxu0
      %v923 = vadd.f32 0.0, %v922
      %v924 = vpop.f32.mrb[0].mxu0
      %v925 = vadd.f32 0.0, %v924
      %v926 = vpop.f32.mrb[0].mxu0
      %v927 = vadd.f32 0.0, %v926
      %v928 = vpop.f32.mrb[0].mxu0
      %v929 = vadd.f32 0.0, %v928
      %930 = vmatprep.mubr.bf16.mxu0 0
      %931 = vmatmul.mubr.bf16.gmra.mrb[0].mxu0 %v745
      %v932 = vpop.f32.mrb[0].mxu0
      %v933 = vadd.f32 0.0, %v932
      %v934 = vpop.f32.mrb[0].mxu0
      %v935 = vadd.f32 0.0, %v934
      %v936 = vpop.f32.mrb[0].mxu0
      %v937 = vadd.f32 0.0, %v936
      %v938 = vpop.f32.mrb[0].mxu0
      %v939 = vadd.f32 0.0, %v938
      %940 = vmatprep.mubr.bf16.mxu0 0
      %941 = vmatmul.mubr.bf16.gmra.mrb[0].mxu0 %v748
      %v942 = vpop.f32.mrb[0].mxu0
      %v943 = vadd.f32 0.0, %v942
      %v944 = vpop.f32.mrb[0].mxu0
      %v945 = vadd.f32 0.0, %v944
      %v946 = vpop.f32.mrb[0].mxu0
      %v947 = vadd.f32 0.0, %v946
      %v948 = vpop.f32.mrb[0].mxu0
      %v949 = vadd.f32 0.0, %v948
      %950 = vmatprep.mubr.bf16.mxu0 0
      %951 = vmatmul.mubr.bf16.gmra.mrb[0].mxu0 %v751
      %v952 = vpop.f32.mrb[0].mxu0
      %v953 = vadd.f32 0.0, %v952
      %v954 = vpop.f32.mrb[0].mxu0
      %v955 = vadd.f32 0.0, %v954
      %v956 = vpop.f32.mrb[0].mxu0
      %v957 = vadd.f32 0.0, %v956
      %v958 = vpop.f32.mrb[0].mxu0
      %v959 = vadd.f32 0.0, %v958
      %960 = vmatprep.mubr.bf16.mxu0 0
      %961 = vmatmul.mubr.bf16.gmra.mrb[0].mxu0 %v754
      %v962 = vpop.f32.mrb[0].mxu0
      %v963 = vadd.f32 0.0, %v962
      %v964 = vpop.f32.mrb[0].mxu0
      %v965 = vadd.f32 0.0, %v964
      %v966 = vpop.f32.mrb[0].mxu0
      %v967 = vadd.f32 0.0, %v966
      %v968 = vpop.f32.mrb[0].mxu0
      %v969 = vadd.f32 0.0, %v968
      %970 = vmatprep.mubr.bf16.mxu0 0
      %971 = vmatmul.mubr.bf16.gmra.mrb[0].mxu0 %v757
      %v972 = vpop.f32.mrb[0].mxu0
      %v973 = vadd.f32 0.0, %v972
      %v974 = vpop.f32.mrb[0].mxu0
      %v975 = vadd.f32 0.0, %v974
      %v976 = vpop.f32.mrb[0].mxu0
      %v977 = vadd.f32 0.0, %v976
      %v978 = vpop.f32.mrb[0].mxu0
      %v979 = vadd.f32 0.0, %v978
      %980 = vmatprep.mubr.bf16.mxu0 0
      %981 = vmatmul.mubr.bf16.gmra.mrb[0].mxu0 %v760
      %v982 = vpop.f32.mrb[0].mxu0
      %v983 = vadd.f32 0.0, %v982
      %v984 = vpop.f32.mrb[0].mxu0
      %v985 = vadd.f32 0.0, %v984
      %v986 = vpop.f32.mrb[0].mxu0
      %v987 = vadd.f32 0.0, %v986
      %v988 = vpop.f32.mrb[0].mxu0
      %v989 = vadd.f32 0.0, %v988
      %990 = vmatprep.mubr.bf16.mxu0 0
      %991 = vmatmul.mubr.bf16.gmra.mrb[0].mxu0 %v763
      %v992 = vpop.f32.mrb[0].mxu0
      %v993 = vadd.f32 0.0, %v992
      %v994 = vpop.f32.mrb[0].mxu0
      %v995 = vadd.f32 0.0, %v994
      %v996 = vpop.f32.mrb[0].mxu0
      %v997 = vadd.f32 0.0, %v996
      %v998 = vpop.f32.mrb[0].mxu0
      %v999 = vadd.f32 0.0, %v998
      %1000 = vmatprep.mubr.bf16.mxu0 0
      %1001 = vmatmul.mubr.bf16.gmra.mrb[0].mxu0 %v766
      %v1002 = vpop.f32.mrb[0].mxu0
      %v1003 = vadd.f32 0.0, %v1002
      %v1004 = vpop.f32.mrb[0].mxu0
      %v1005 = vadd.f32 0.0, %v1004
      %v1006 = vpop.f32.mrb[0].mxu0
      %v1007 = vadd.f32 0.0, %v1006
      %v1008 = vpop.f32.mrb[0].mxu0
      %v1009 = vadd.f32 0.0, %v1008
      %1010 = vmatprep.mubr.bf16.mxu0 0
      %1011 = vmatmul.mubr.bf16.gmra.mrb[0].mxu0 %v769
      %v1012 = vpop.f32.mrb[0].mxu0
      %v1013 = vadd.f32 0.0, %v1012
      %v1014 = vpop.f32.mrb[0].mxu0
      %v1015 = vadd.f32 0.0, %v1014
      %v1016 = vpop.f32.mrb[0].mxu0
      %v1017 = vadd.f32 0.0, %v1016
      %v1018 = vpop.f32.mrb[0].mxu0
      %v1019 = vadd.f32 0.0, %v1018
      %1020 = vmatprep.mubr.bf16.mxu0 0
      %1021 = vmatmul.mubr.bf16.gmra.mrb[0].mxu0 %v772
      %v1022 = vpop.f32.mrb[0].mxu0
      %v1023 = vadd.f32 0.0, %v1022
      %v1024 = vpop.f32.mrb[0].mxu0
      %v1025 = vadd.f32 0.0, %v1024
      %v1026 = vpop.f32.mrb[0].mxu0
      %v1027 = vadd.f32 0.0, %v1026
      %v1028 = vpop.f32.mrb[0].mxu0
      %v1029 = vadd.f32 0.0, %v1028
      %1030 = vmatprep.mubr.bf16.mxu0 0
      %1031 = vmatmul.mubr.bf16.gmra.mrb[0].mxu0 %v775
      %v1032 = vpop.f32.mrb[0].mxu0
      %v1033 = vadd.f32 0.0, %v1032
      %v1034 = vpop.f32.mrb[0].mxu0
      %v1035 = vadd.f32 0.0, %v1034
      %v1036 = vpop.f32.mrb[0].mxu0
      %v1037 = vadd.f32 0.0, %v1036
      %v1038 = vpop.f32.mrb[0].mxu0
      %v1039 = vadd.f32 0.0, %v1038
      %1040 = vmatprep.mubr.bf16.mxu0 0
      %1041 = vmatmul.mubr.bf16.gmra.mrb[0].mxu0 %v778
      %v1042 = vpop.f32.mrb[0].mxu0
      %v1043 = vadd.f32 0.0, %v1042
      %v1044 = vpop.f32.mrb[0].mxu0
      %v1045 = vadd.f32 0.0, %v1044
      %v1046 = vpop.f32.mrb[0].mxu0
      %v1047 = vadd.f32 0.0, %v1046
      %v1048 = vpop.f32.mrb[0].mxu0
      %v1049 = vadd.f32 0.0, %v1048
      %1050 = vmatprep.mubr.bf16.mxu0 0
      %1051 = vmatmul.mubr.bf16.gmra.mrb[0].mxu0 %v781
      %v1052 = vpop.f32.mrb[0].mxu0
      %v1053 = vadd.f32 0.0, %v1052
      %v1054 = vpop.f32.mrb[0].mxu0
      %v1055 = vadd.f32 0.0, %v1054
      %v1056 = vpop.f32.mrb[0].mxu0
      %v1057 = vadd.f32 0.0, %v1056
      %v1058 = vpop.f32.mrb[0].mxu0
      %v1059 = vadd.f32 0.0, %v1058
      %1060 = vmatprep.mubr.bf16.mxu0 0
      %1061 = vmatmul.mubr.bf16.gmra.mrb[0].mxu0 %v784
      %v1062 = vpop.f32.mrb[0].mxu0
      %v1063 = vadd.f32 0.0, %v1062
      %v1064 = vpop.f32.mrb[0].mxu0
      %v1065 = vadd.f32 0.0, %v1064
      %v1066 = vpop.f32.mrb[0].mxu0
      %v1067 = vadd.f32 0.0, %v1066
      %v1068 = vpop.f32.mrb[0].mxu0
      %v1069 = vadd.f32 0.0, %v1068
      %1070 = vmatprep.mubr.bf16.mxu0 0
      %1071 = vmatmul.mubr.bf16.gmra.mrb[0].mxu0 %v787
      %v1072 = vpop.f32.mrb[0].mxu0
      %v1073 = vadd.f32 0.0, %v1072
      %v1074 = vpop.f32.mrb[0].mxu0
      %v1075 = vadd.f32 0.0, %v1074
      %v1076 = vpop.f32.mrb[0].mxu0
      %v1077 = vadd.f32 0.0, %v1076
      %v1078 = vpop.f32.mrb[0].mxu0
      %v1079 = vadd.f32 0.0, %v1078
      %1080 = vmatprep.mubr.bf16.mxu0 0
      %1081 = vmatmul.mubr.bf16.gmra.mrb[0].mxu0 %v790
      %v1082 = vpop.f32.mrb[0].mxu0
      %v1083 = vadd.f32 0.0, %v1082
      %v1084 = vpop.f32.mrb[0].mxu0
      %v1085 = vadd.f32 0.0, %v1084
      %v1086 = vpop.f32.mrb[0].mxu0
      %v1087 = vadd.f32 0.0, %v1086
      %v1088 = vpop.f32.mrb[0].mxu0
      %v1089 = vadd.f32 0.0, %v1088
      %1090 = vmatprep.mubr.bf16.mxu0 0
      %1091 = vmatmul.mubr.bf16.gmra.mrb[0].mxu0 %v793
      %v1092 = vpop.f32.mrb[0].mxu0
      %v1093 = vadd.f32 0.0, %v1092
      %v1094 = vpop.f32.mrb[0].mxu0
      %v1095 = vadd.f32 0.0, %v1094
      %v1096 = vpop.f32.mrb[0].mxu0
      %v1097 = vadd.f32 0.0, %v1096
      %v1098 = vpop.f32.mrb[0].mxu0
      %v1099 = vadd.f32 0.0, %v1098
      %1100 = vmatprep.mubr.bf16.mxu0 0
      %1101 = vmatmul.mubr.bf16.gmra.mrb[0].mxu0 %v796
      %v1102 = vpop.f32.mrb[0].mxu0
      %v1103 = vadd.f32 0.0, %v1102
      %v1104 = vpop.f32.mrb[0].mxu0
      %v1105 = vadd.f32 0.0, %v1104
      %v1106 = vpop.f32.mrb[0].mxu0
      %v1107 = vadd.f32 0.0, %v1106
      %v1108 = vpop.f32.mrb[0].mxu0
      %v1109 = vadd.f32 0.0, %v1108
      %1110 = vdwg.mxu0
      %1111 = vst [vmem:[#allocation2] sm:$0xff] %v833
      %vm1112 = vcmask 326656
      %1113 = vst.msk [vmem:[#allocation2 + $0x8] sm:$0xff] %vm1112, %v835
      %1114 = vst [vmem:[#allocation2 + $0x10] sm:$0xff] %v837
      %1115 = vst.msk [vmem:[#allocation2 + $0x18] sm:$0xff] %vm1112, %v839
      %1116 = vst [vmem:[#allocation2 + $0x20] sm:$0xff] %v843
      %1117 = vst.msk [vmem:[#allocation2 + $0x28] sm:$0xff] %vm1112, %v845
      %1118 = vst [vmem:[#allocation2 + $0x30] sm:$0xff] %v847
      %1119 = vst.msk [vmem:[#allocation2 + $0x38] sm:$0xff] %vm1112, %v849
      %1120 = vst [vmem:[#allocation2 + $0x40] sm:$0xff] %v853
      %1121 = vst.msk [vmem:[#allocation2 + $0x48] sm:$0xff] %vm1112, %v855
      %1122 = vst [vmem:[#allocation2 + $0x50] sm:$0xff] %v857
      %1123 = vst.msk [vmem:[#allocation2 + $0x58] sm:$0xff] %vm1112, %v859
      %1124 = vst [vmem:[#allocation2 + $0x60] sm:$0xff] %v863
      %1125 = vst.msk [vmem:[#allocation2 + $0x68] sm:$0xff] %vm1112, %v865
      %1126 = vst [vmem:[#allocation2 + $0x70] sm:$0xff] %v867
      %1127 = vst.msk [vmem:[#allocation2 + $0x78] sm:$0xff] %vm1112, %v869
      %1128 = vst [vmem:[#allocation2 + $0x80] sm:$0xff] %v873
      %1129 = vst.msk [vmem:[#allocation2 + $0x88] sm:$0xff] %vm1112, %v875
      %1130 = vst [vmem:[#allocation2 + $0x90] sm:$0xff] %v877
      %1131 = vst.msk [vmem:[#allocation2 + $0x98] sm:$0xff] %vm1112, %v879
      %1132 = vst [vmem:[#allocation2 + $0xa0] sm:$0xff] %v883
      %1133 = vst.msk [vmem:[#allocation2 + $0xa8] sm:$0xff] %vm1112, %v885
      %1134 = vst [vmem:[#allocation2 + $0xb0] sm:$0xff] %v887
      %1135 = vst.msk [vmem:[#allocation2 + $0xb8] sm:$0xff] %vm1112, %v889
      %1136 = vst [vmem:[#allocation2 + $0xc0] sm:$0xff] %v893
      %1137 = vst.msk [vmem:[#allocation2 + $0xc8] sm:$0xff] %vm1112, %v895
      %1138 = vst [vmem:[#allocation2 + $0xd0] sm:$0xff] %v897
      %1139 = vst.msk [vmem:[#allocation2 + $0xd8] sm:$0xff] %vm1112, %v899
      %1140 = vst [vmem:[#allocation2 + $0xe0] sm:$0xff] %v903
      %1141 = vst.msk [vmem:[#allocation2 + $0xe8] sm:$0xff] %vm1112, %v905
      %1142 = vst [vmem:[#allocation2 + $0xf0] sm:$0xff] %v907
      %1143 = vst.msk [vmem:[#allocation2 + $0xf8] sm:$0xff] %vm1112, %v909
      %1144 = vst [vmem:[#allocation2 + $0x100] sm:$0xff] %v913
      %1145 = vst.msk [vmem:[#allocation2 + $0x108] sm:$0xff] %vm1112, %v915
      %1146 = vst [vmem:[#allocation2 + $0x110] sm:$0xff] %v917
      %1147 = vst.msk [vmem:[#allocation2 + $0x118] sm:$0xff] %vm1112, %v919
      %1148 = vst [vmem:[#allocation2 + $0x120] sm:$0xff] %v923
      %1149 = vst.msk [vmem:[#allocation2 + $0x128] sm:$0xff] %vm1112, %v925
      %1150 = vst [vmem:[#allocation2 + $0x130] sm:$0xff] %v927
      %1151 = vst.msk [vmem:[#allocation2 + $0x138] sm:$0xff] %vm1112, %v929
      %1152 = vst [vmem:[#allocation2 + $0x140] sm:$0xff] %v933
      %1153 = vst.msk [vmem:[#allocation2 + $0x148] sm:$0xff] %vm1112, %v935
      %1154 = vst [vmem:[#allocation2 + $0x150] sm:$0xff] %v937
      %1155 = vst.msk [vmem:[#allocation2 + $0x158] sm:$0xff] %vm1112, %v939
      %1156 = vst [vmem:[#allocation2 + $0x160] sm:$0xff] %v943
      %1157 = vst.msk [vmem:[#allocation2 + $0x168] sm:$0xff] %vm1112, %v945
      %1158 = vst [vmem:[#allocation2 + $0x170] sm:$0xff] %v947
      %1159 = vst.msk [vmem:[#allocation2 + $0x178] sm:$0xff] %vm1112, %v949
      %1160 = vst [vmem:[#allocation2 + $0x180] sm:$0xff] %v953
      %1161 = vst.msk [vmem:[#allocation2 + $0x188] sm:$0xff] %vm1112, %v955
      %1162 = vst [vmem:[#allocation2 + $0x190] sm:$0xff] %v957
      %1163 = vst.msk [vmem:[#allocation2 + $0x198] sm:$0xff] %vm1112, %v959
      %1164 = vst [vmem:[#allocation2 + $0x1a0] sm:$0xff] %v963
      %1165 = vst.msk [vmem:[#allocation2 + $0x1a8] sm:$0xff] %vm1112, %v965
      %1166 = vst [vmem:[#allocation2 + $0x1b0] sm:$0xff] %v967
      %1167 = vst.msk [vmem:[#allocation2 + $0x1b8] sm:$0xff] %vm1112, %v969
      %1168 = vst [vmem:[#allocation2 + $0x1c0] sm:$0xff] %v973
      %1169 = vst.msk [vmem:[#allocation2 + $0x1c8] sm:$0xff] %vm1112, %v975
      %1170 = vst [vmem:[#allocation2 + $0x1d0] sm:$0xff] %v977
      %1171 = vst.msk [vmem:[#allocation2 + $0x1d8] sm:$0xff] %vm1112, %v979
      %1172 = vst [vmem:[#allocation2 + $0x1e0] sm:$0xff] %v983
      %1173 = vst.msk [vmem:[#allocation2 + $0x1e8] sm:$0xff] %vm1112, %v985
      %1174 = vst [vmem:[#allocation2 + $0x1f0] sm:$0xff] %v987
      %1175 = vst.msk [vmem:[#allocation2 + $0x1f8] sm:$0xff] %vm1112, %v989
      %1176 = vst [vmem:[#allocation2 + $0x200] sm:$0xff] %v993
      %1177 = vst.msk [vmem:[#allocation2 + $0x208] sm:$0xff] %vm1112, %v995
      %1178 = vst [vmem:[#allocation2 + $0x210] sm:$0xff] %v997
      %1179 = vst.msk [vmem:[#allocation2 + $0x218] sm:$0xff] %vm1112, %v999
      %1180 = vst [vmem:[#allocation2 + $0x220] sm:$0xff] %v1003
      %1181 = vst.msk [vmem:[#allocation2 + $0x228] sm:$0xff] %vm1112, %v1005
      %1182 = vst [vmem:[#allocation2 + $0x230] sm:$0xff] %v1007
      %1183 = vst.msk [vmem:[#allocation2 + $0x238] sm:$0xff] %vm1112, %v1009
      %1184 = vst [vmem:[#allocation2 + $0x240] sm:$0xff] %v1013
      %1185 = vst.msk [vmem:[#allocation2 + $0x248] sm:$0xff] %vm1112, %v1015
      %1186 = vst [vmem:[#allocation2 + $0x250] sm:$0xff] %v1017
      %1187 = vst.msk [vmem:[#allocation2 + $0x258] sm:$0xff] %vm1112, %v1019
      %1188 = vst [vmem:[#allocation2 + $0x260] sm:$0xff] %v1023
      %1189 = vst.msk [vmem:[#allocation2 + $0x268] sm:$0xff] %vm1112, %v1025
      %1190 = vst [vmem:[#allocation2 + $0x270] sm:$0xff] %v1027
      %1191 = vst.msk [vmem:[#allocation2 + $0x278] sm:$0xff] %vm1112, %v1029
      %1192 = vst [vmem:[#allocation2 + $0x280] sm:$0xff] %v1033
      %1193 = vst.msk [vmem:[#allocation2 + $0x288] sm:$0xff] %vm1112, %v1035
      %1194 = vst [vmem:[#allocation2 + $0x290] sm:$0xff] %v1037
      %1195 = vst.msk [vmem:[#allocation2 + $0x298] sm:$0xff] %vm1112, %v1039
      %1196 = vst [vmem:[#allocation2 + $0x2a0] sm:$0xff] %v1043
      %1197 = vst.msk [vmem:[#allocation2 + $0x2a8] sm:$0xff] %vm1112, %v1045
      %1198 = vst [vmem:[#allocation2 + $0x2b0] sm:$0xff] %v1047
      %1199 = vst.msk [vmem:[#allocation2 + $0x2b8] sm:$0xff] %vm1112, %v1049
      %1200 = vst [vmem:[#allocation2 + $0x2c0] sm:$0xff] %v1053
      %1201 = vst.msk [vmem:[#allocation2 + $0x2c8] sm:$0xff] %vm1112, %v1055
      %1202 = vst [vmem:[#allocation2 + $0x2d0] sm:$0xff] %v1057
      %1203 = vst.msk [vmem:[#allocation2 + $0x2d8] sm:$0xff] %vm1112, %v1059
      %1204 = vst [vmem:[#allocation2 + $0x2e0] sm:$0xff] %v1063
      %1205 = vst.msk [vmem:[#allocation2 + $0x2e8] sm:$0xff] %vm1112, %v1065
      %1206 = vst [vmem:[#allocation2 + $0x2f0] sm:$0xff] %v1067
      %1207 = vst.msk [vmem:[#allocation2 + $0x2f8] sm:$0xff] %vm1112, %v1069
      %1208 = vst [vmem:[#allocation2 + $0x300] sm:$0xff] %v1073
      %1209 = vst.msk [vmem:[#allocation2 + $0x308] sm:$0xff] %vm1112, %v1075
      %1210 = vst [vmem:[#allocation2 + $0x310] sm:$0xff] %v1077
      %1211 = vst.msk [vmem:[#allocation2 + $0x318] sm:$0xff] %vm1112, %v1079
      %1212 = vst [vmem:[#allocation2 + $0x320] sm:$0xff] %v1083
      %1213 = vst.msk [vmem:[#allocation2 + $0x328] sm:$0xff] %vm1112, %v1085
      %1214 = vst [vmem:[#allocation2 + $0x330] sm:$0xff] %v1087
      %1215 = vst.msk [vmem:[#allocation2 + $0x338] sm:$0xff] %vm1112, %v1089
      %1216 = vst [vmem:[#allocation2 + $0x340] sm:$0xff] %v1093
      %1217 = vst.msk [vmem:[#allocation2 + $0x348] sm:$0xff] %vm1112, %v1095
      %1218 = vst [vmem:[#allocation2 + $0x350] sm:$0xff] %v1097
      %1219 = vst.msk [vmem:[#allocation2 + $0x358] sm:$0xff] %vm1112, %v1099
      %1220 = vst [vmem:[#allocation2 + $0x360] sm:$0xff] %v1103
      %1221 = vst.msk [vmem:[#allocation2 + $0x368] sm:$0xff] %vm1112, %v1105
      %1222 = vst [vmem:[#allocation2 + $0x370] sm:$0xff] %v1107
      %1223 = vst.msk [vmem:[#allocation2 + $0x378] sm:$0xff] %vm1112, %v1109
      %v1224 = vld [vmem:[#allocation2] sm:$0xff]
      %v1225 = vld [vmem:[#allocation2 + $0x8] sm:$0xff]
      %v1226 = vld [vmem:[#allocation2 + $0x10] sm:$0xff]
      %v1227 = vld [vmem:[#allocation2 + $0x18] sm:$0xff]
      %v1228 = vld [vmem:[#allocation2 + $0x20] sm:$0xff]
      %v1229 = vld [vmem:[#allocation2 + $0x28] sm:$0xff]
      %v1230 = vld [vmem:[#allocation2 + $0x30] sm:$0xff]
      %v1231 = vld [vmem:[#allocation2 + $0x38] sm:$0xff]
      %v1232 = vld [vmem:[#allocation2 + $0x40] sm:$0xff]
      %v1233 = vld [vmem:[#allocation2 + $0x48] sm:$0xff]
      %v1234 = vld [vmem:[#allocation2 + $0x50] sm:$0xff]
      %v1235 = vld [vmem:[#allocation2 + $0x58] sm:$0xff]
      %v1236 = vld [vmem:[#allocation2 + $0x60] sm:$0xff]
      %v1237 = vld [vmem:[#allocation2 + $0x68] sm:$0xff]
      %v1238 = vld [vmem:[#allocation2 + $0x70] sm:$0xff]
      %v1239 = vld [vmem:[#allocation2 + $0x78] sm:$0xff]
      %v1240 = vld [vmem:[#allocation2 + $0x80] sm:$0xff]
      %v1241 = vld [vmem:[#allocation2 + $0x88] sm:$0xff]
      %v1242 = vld [vmem:[#allocation2 + $0x90] sm:$0xff]
      %v1243 = vld [vmem:[#allocation2 + $0x98] sm:$0xff]
      %v1244 = vld [vmem:[#allocation2 + $0xa0] sm:$0xff]
      %v1245 = vld [vmem:[#allocation2 + $0xa8] sm:$0xff]
      %v1246 = vld [vmem:[#allocation2 + $0xb0] sm:$0xff]
      %v1247 = vld [vmem:[#allocation2 + $0xb8] sm:$0xff]
      %v1248 = vld [vmem:[#allocation2 + $0xc0] sm:$0xff]
      %v1249 = vld [vmem:[#allocation2 + $0xc8] sm:$0xff]
      %v1250 = vld [vmem:[#allocation2 + $0xd0] sm:$0xff]
      %v1251 = vld [vmem:[#allocation2 + $0xd8] sm:$0xff]
      %v1252 = vld [vmem:[#allocation2 + $0xe0] sm:$0xff]
      %v1253 = vld [vmem:[#allocation2 + $0xe8] sm:$0xff]
      %v1254 = vld [vmem:[#allocation2 + $0xf0] sm:$0xff]
      %v1255 = vld [vmem:[#allocation2 + $0xf8] sm:$0xff]
      %v1256 = vld [vmem:[#allocation2 + $0x100] sm:$0xff]
      %v1257 = vld [vmem:[#allocation2 + $0x108] sm:$0xff]
      %v1258 = vld [vmem:[#allocation2 + $0x110] sm:$0xff]
      %v1259 = vld [vmem:[#allocation2 + $0x118] sm:$0xff]
      %v1260 = vld [vmem:[#allocation2 + $0x120] sm:$0xff]
      %v1261 = vld [vmem:[#allocation2 + $0x128] sm:$0xff]
      %v1262 = vld [vmem:[#allocation2 + $0x130] sm:$0xff]
      %v1263 = vld [vmem:[#allocation2 + $0x138] sm:$0xff]
      %v1264 = vld [vmem:[#allocation2 + $0x140] sm:$0xff]
      %v1265 = vld [vmem:[#allocation2 + $0x148] sm:$0xff]
      %v1266 = vld [vmem:[#allocation2 + $0x150] sm:$0xff]
      %v1267 = vld [vmem:[#allocation2 + $0x158] sm:$0xff]
      %v1268 = vld [vmem:[#allocation2 + $0x160] sm:$0xff]
      %v1269 = vld [vmem:[#allocation2 + $0x168] sm:$0xff]
      %v1270 = vld [vmem:[#allocation2 + $0x170] sm:$0xff]
      %v1271 = vld [vmem:[#allocation2 + $0x178] sm:$0xff]
      %v1272 = vld [vmem:[#allocation2 + $0x180] sm:$0xff]
      %v1273 = vld [vmem:[#allocation2 + $0x188] sm:$0xff]
      %v1274 = vld [vmem:[#allocation2 + $0x190] sm:$0xff]
      %v1275 = vld [vmem:[#allocation2 + $0x198] sm:$0xff]
      %v1276 = vld [vmem:[#allocation2 + $0x1a0] sm:$0xff]
      %v1277 = vld [vmem:[#allocation2 + $0x1a8] sm:$0xff]
      %v1278 = vld [vmem:[#allocation2 + $0x1b0] sm:$0xff]
      %v1279 = vld [vmem:[#allocation2 + $0x1b8] sm:$0xff]
      %v1280 = vld [vmem:[#allocation2 + $0x1c0] sm:$0xff]
      %v1281 = vld [vmem:[#allocation2 + $0x1c8] sm:$0xff]
      %v1282 = vld [vmem:[#allocation2 + $0x1d0] sm:$0xff]
      %v1283 = vld [vmem:[#allocation2 + $0x1d8] sm:$0xff]
      %v1284 = vld [vmem:[#allocation2 + $0x1e0] sm:$0xff]
      %v1285 = vld [vmem:[#allocation2 + $0x1e8] sm:$0xff]
      %v1286 = vld [vmem:[#allocation2 + $0x1f0] sm:$0xff]
      %v1287 = vld [vmem:[#allocation2 + $0x1f8] sm:$0xff]
      %v1288 = vld [vmem:[#allocation2 + $0x200] sm:$0xff]
      %v1289 = vld [vmem:[#allocation2 + $0x208] sm:$0xff]
      %v1290 = vld [vmem:[#allocation2 + $0x210] sm:$0xff]
      %v1291 = vld [vmem:[#allocation2 + $0x218] sm:$0xff]
      %v1292 = vld [vmem:[#allocation2 + $0x220] sm:$0xff]
      %v1293 = vld [vmem:[#allocation2 + $0x228] sm:$0xff]
      %v1294 = vld [vmem:[#allocation2 + $0x230] sm:$0xff]
      %v1295 = vld [vmem:[#allocation2 + $0x238] sm:$0xff]
      %v1296 = vld [vmem:[#allocation2 + $0x240] sm:$0xff]
      %v1297 = vld [vmem:[#allocation2 + $0x248] sm:$0xff]
      %v1298 = vld [vmem:[#allocation2 + $0x250] sm:$0xff]
      %v1299 = vld [vmem:[#allocation2 + $0x258] sm:$0xff]
      %v1300 = vld [vmem:[#allocation2 + $0x260] sm:$0xff]
      %v1301 = vld [vmem:[#allocation2 + $0x268] sm:$0xff]
      %v1302 = vld [vmem:[#allocation2 + $0x270] sm:$0xff]
      %v1303 = vld [vmem:[#allocation2 + $0x278] sm:$0xff]
      %v1304 = vld [vmem:[#allocation2 + $0x280] sm:$0xff]
      %v1305 = vld [vmem:[#allocation2 + $0x288] sm:$0xff]
      %v1306 = vld [vmem:[#allocation2 + $0x290] sm:$0xff]
      %v1307 = vld [vmem:[#allocation2 + $0x298] sm:$0xff]
      %v1308 = vld [vmem:[#allocation2 + $0x2a0] sm:$0xff]
      %v1309 = vld [vmem:[#allocation2 + $0x2a8] sm:$0xff]
      %v1310 = vld [vmem:[#allocation2 + $0x2b0] sm:$0xff]
      %v1311 = vld [vmem:[#allocation2 + $0x2b8] sm:$0xff]
      %v1312 = vld [vmem:[#allocation2 + $0x2c0] sm:$0xff]
      %v1313 = vld [vmem:[#allocation2 + $0x2c8] sm:$0xff]
      %v1314 = vld [vmem:[#allocation2 + $0x2d0] sm:$0xff]
      %v1315 = vld [vmem:[#allocation2 + $0x2d8] sm:$0xff]
      %v1316 = vld [vmem:[#allocation2 + $0x2e0] sm:$0xff]
      %v1317 = vld [vmem:[#allocation2 + $0x2e8] sm:$0xff]
      %v1318 = vld [vmem:[#allocation2 + $0x2f0] sm:$0xff]
      %v1319 = vld [vmem:[#allocation2 + $0x2f8] sm:$0xff]
      %v1320 = vld [vmem:[#allocation2 + $0x300] sm:$0xff]
      %v1321 = vld [vmem:[#allocation2 + $0x308] sm:$0xff]
      %v1322 = vld [vmem:[#allocation2 + $0x310] sm:$0xff]
      %v1323 = vld [vmem:[#allocation2 + $0x318] sm:$0xff]
      %v1324 = vld [vmem:[#allocation2 + $0x320] sm:$0xff]
      %v1325 = vld [vmem:[#allocation2 + $0x328] sm:$0xff]
      %v1326 = vld [vmem:[#allocation2 + $0x330] sm:$0xff]
      %v1327 = vld [vmem:[#allocation2 + $0x338] sm:$0xff]
      %v1328 = vld [vmem:[#allocation2 + $0x340] sm:$0xff]
      %v1329 = vld [vmem:[#allocation2 + $0x348] sm:$0xff]
      %v1330 = vld [vmem:[#allocation2 + $0x350] sm:$0xff]
      %v1331 = vld [vmem:[#allocation2 + $0x358] sm:$0xff]
      %v1332 = vld [vmem:[#allocation2 + $0x360] sm:$0xff]
      %v1333 = vld [vmem:[#allocation2 + $0x368] sm:$0xff]
      %v1334 = vld [vmem:[#allocation2 + $0x370] sm:$0xff]
      %v1335 = vld [vmem:[#allocation2 + $0x378] sm:$0xff]
      %v1336 = vld [vmem:[%s436 + $0x8] sm:$0xf]
      %v1337 = vld [vmem:[%s436 + $0xc] sm:$0xf]
      %v1338 = vld [vmem:[%s436 + $0x10] sm:$0xf]
      %v1339 = vld [vmem:[%s436 + $0x14] sm:$0xf]
      %v1340 = vld [vmem:[%s436 + $0x18] sm:$0xf]
      %v1341 = vld [vmem:[%s436 + $0x1c] sm:$0xf]
      %v1342 = vld [vmem:[%s436 + $0x20] sm:$0xf]
      %v1343 = vld [vmem:[%s436 + $0x24] sm:$0xf]
      %v1344 = vld [vmem:[%s436 + $0x28] sm:$0xf]
      %v1345 = vld [vmem:[%s436 + $0x2c] sm:$0xf]
      %v1346 = vld [vmem:[%s436 + $0x30] sm:$0xf]
      %v1347 = vld [vmem:[%s436 + $0x34] sm:$0xf]
      %v1348 = vld [vmem:[%s436 + $0x38] sm:$0xf]
      %v1349 = vld [vmem:[%s436 + $0x3c] sm:$0xf]
      %v1350 = vld [vmem:[%s436 + $0x40] sm:$0xf]
      %v1351 = vld [vmem:[%s436 + $0x44] sm:$0xf]
      %v1352 = vld [vmem:[%s436 + $0x48] sm:$0xf]
      %v1353 = vld [vmem:[%s436 + $0x4c] sm:$0xf]
      %v1354 = vld [vmem:[%s436 + $0x50] sm:$0xf]
      %v1355 = vld [vmem:[%s436 + $0x54] sm:$0xf]
      %v1356 = vld [vmem:[%s436 + $0x58] sm:$0xf]
      %v1357 = vld [vmem:[%s436 + $0x5c] sm:$0xf]
      %v1358 = vld [vmem:[%s436 + $0x60] sm:$0xf]
      %v1359 = vld [vmem:[%s436 + $0x64] sm:$0xf]
      %v1360 = vld [vmem:[%s436 + $0x68] sm:$0xf]
      %v1361 = vld [vmem:[%s436 + $0x6c] sm:$0xf]
      %v1362 = vld [vmem:[%s436 + $0x70] sm:$0xf]
      %v1363 = vld [vmem:[%s436 + $0x74] sm:$0xf]
      %v1364 = vld [vmem:[%s436 + $0x78] sm:$0xf]
      %v1365 = vld [vmem:[%s436 + $0x7c] sm:$0xf]
      %v1366 = vld [vmem:[%s436 + $0x80] sm:$0xf]
      %v1367 = vld [vmem:[%s436 + $0x84] sm:$0xf]
      %v1368 = vld [vmem:[%s436 + $0x88] sm:$0xf]
      %v1369 = vld [vmem:[%s436 + $0x8c] sm:$0xf]
      %v1370 = vld [vmem:[%s436 + $0x90] sm:$0xf]
      %v1371 = vld [vmem:[%s436 + $0x94] sm:$0xf]
      %v1372 = vld [vmem:[%s436 + $0x98] sm:$0xf]
      %v1373 = vld [vmem:[%s436 + $0x9c] sm:$0xf]
      %v1374 = vld [vmem:[%s436 + $0xa0] sm:$0xf]
      %v1375 = vld [vmem:[%s436 + $0xa4] sm:$0xf]
      %v1376 = vld [vmem:[%s436 + $0xa8] sm:$0xf]
      %v1377 = vld [vmem:[%s436 + $0xac] sm:$0xf]
      %v1378 = vld [vmem:[%s436 + $0xb0] sm:$0xf]
      %v1379 = vld [vmem:[%s436 + $0xb4] sm:$0xf]
      %v1380 = vld [vmem:[%s436 + $0xb8] sm:$0xf]
      %v1381 = vld [vmem:[%s436 + $0xbc] sm:$0xf]
      %v1382 = vld [vmem:[%s436 + $0xc0] sm:$0xf]
      %v1383 = vld [vmem:[%s436 + $0xc4] sm:$0xf]
      %v1384 = vld [vmem:[%s436 + $0xc8] sm:$0xf]
      %v1385 = vld [vmem:[%s436 + $0xcc] sm:$0xf]
      %v1386 = vld [vmem:[%s436 + $0xd0] sm:$0xf]
      %v1387 = vld [vmem:[%s436 + $0xd4] sm:$0xf]
      %v1388 = vld [vmem:[%s436 + $0xd8] sm:$0xf]
      %v1389 = vld [vmem:[%s436 + $0xdc] sm:$0xf]
      %v1390 = vld [vmem:[%s436 + $0xe0] sm:$0xf]
      %v1391 = vld [vmem:[%s436 + $0xe4] sm:$0xf]
      %s1392 = scalar_lea.vmem %s1, 96
      %v1393 = vld [vmem:[%s1392] sm:$0xff]
      %v1394 = vld [vmem:[%s1392 + $0x8] sm:$0xff]
      %v1395 = vld [vmem:[%s1392 + $0x10] sm:$0xff]
      %v1396 = vld [vmem:[%s1392 + $0x18] sm:$0xff]
      %v1397 = vld [vmem:[%s1392 + $0x20] sm:$0xff]
      %v1398 = vld [vmem:[%s1392 + $0x28] sm:$0xff]
      %v1399 = vld [vmem:[%s1392 + $0x30] sm:$0xff]
      %v1400 = vld [vmem:[%s1392 + $0x38] sm:$0xff]
      %v1401 = vld [vmem:[%s1392 + $0x40] sm:$0xff]
      %v1402 = vld [vmem:[%s1392 + $0x48] sm:$0xff]
      %v1403 = vld [vmem:[%s1392 + $0x50] sm:$0xff]
      %v1404 = vld [vmem:[%s1392 + $0x58] sm:$0xff]
      %v1461 = vunpack.c.l.b16 %v1336
      %v1462 = vunpack.c.l.b16 %v1337
      %v1463 = vunpack.c.l.b16 %v1338
      %v1464 = vunpack.c.l.b16 %v1339
      %v1465 = vunpack.c.l.b16 %v1340
      %v1466 = vunpack.c.l.b16 %v1341
      %v1467 = vunpack.c.l.b16 %v1342
      %v1468 = vunpack.c.l.b16 %v1343
      %v1469 = vunpack.c.l.b16 %v1344
      %v1470 = vunpack.c.l.b16 %v1345
      %v1471 = vunpack.c.l.b16 %v1346
      %v1472 = vunpack.c.l.b16 %v1347
      %v1473 = vunpack.c.l.b16 %v1348
      %v1474 = vunpack.c.l.b16 %v1349
      %v1475 = vunpack.c.l.b16 %v1350
      %v1476 = vunpack.c.l.b16 %v1351
      %v1477 = vunpack.c.l.b16 %v1352
      %v1478 = vunpack.c.l.b16 %v1353
      %v1479 = vunpack.c.l.b16 %v1354
      %v1480 = vunpack.c.l.b16 %v1355
      %v1481 = vunpack.c.l.b16 %v1356
      %v1482 = vunpack.c.l.b16 %v1357
      %v1483 = vunpack.c.l.b16 %v1358
      %v1484 = vunpack.c.l.b16 %v1359
      %v1485 = vunpack.c.l.b16 %v1360
      %v1486 = vunpack.c.l.b16 %v1361
      %v1487 = vunpack.c.l.b16 %v1362
      %v1488 = vunpack.c.l.b16 %v1363
      %v1489 = vunpack.c.l.b16 %v1364
      %v1490 = vunpack.c.l.b16 %v1365
      %v1491 = vunpack.c.l.b16 %v1366
      %v1492 = vunpack.c.l.b16 %v1367
      %v1493 = vunpack.c.l.b16 %v1368
      %v1494 = vunpack.c.l.b16 %v1369
      %v1495 = vunpack.c.l.b16 %v1370
      %v1496 = vunpack.c.l.b16 %v1371
      %v1497 = vunpack.c.l.b16 %v1372
      %v1498 = vunpack.c.l.b16 %v1373
      %v1499 = vunpack.c.l.b16 %v1374
      %v1500 = vunpack.c.l.b16 %v1375
      %v1501 = vunpack.c.l.b16 %v1376
      %v1502 = vunpack.c.l.b16 %v1377
      %v1503 = vunpack.c.l.b16 %v1378
      %v1504 = vunpack.c.l.b16 %v1379
      %v1505 = vunpack.c.l.b16 %v1380
      %v1506 = vunpack.c.l.b16 %v1381
      %v1507 = vunpack.c.l.b16 %v1382
      %v1508 = vunpack.c.l.b16 %v1383
      %v1509 = vunpack.c.l.b16 %v1384
      %v1510 = vunpack.c.l.b16 %v1385
      %v1511 = vunpack.c.l.b16 %v1386
      %v1512 = vunpack.c.l.b16 %v1387
      %v1513 = vunpack.c.l.b16 %v1388
      %v1514 = vunpack.c.l.b16 %v1389
      %v1515 = vunpack.c.l.b16 %v1390
      %v1516 = vunpack.c.l.b16 %v1391
      %v1517 = vpack.c.b16 %v1462, %v1461
      %v1518 = vpack.c.b16 %v1464, %v1463
      %v1519 = vpack.c.b16 %v1466, %v1465
      %v1520 = vpack.c.b16 %v1468, %v1467
      %v1521 = vpack.c.b16 %v1470, %v1469
      %v1522 = vpack.c.b16 %v1472, %v1471
      %v1523 = vpack.c.b16 %v1474, %v1473
      %v1524 = vpack.c.b16 %v1476, %v1475
      %v1525 = vpack.c.b16 %v1478, %v1477
      %v1526 = vpack.c.b16 %v1480, %v1479
      %v1527 = vpack.c.b16 %v1482, %v1481
      %v1528 = vpack.c.b16 %v1484, %v1483
      %v1529 = vpack.c.b16 %v1486, %v1485
      %v1530 = vpack.c.b16 %v1488, %v1487
      %v1531 = vpack.c.b16 %v1490, %v1489
      %v1532 = vpack.c.b16 %v1492, %v1491
      %v1533 = vpack.c.b16 %v1494, %v1493
      %v1534 = vpack.c.b16 %v1496, %v1495
      %v1535 = vpack.c.b16 %v1498, %v1497
      %v1536 = vpack.c.b16 %v1500, %v1499
      %v1537 = vpack.c.b16 %v1502, %v1501
      %v1538 = vpack.c.b16 %v1504, %v1503
      %v1539 = vpack.c.b16 %v1506, %v1505
      %v1540 = vpack.c.b16 %v1508, %v1507
      %v1541 = vpack.c.b16 %v1510, %v1509
      %v1542 = vpack.c.b16 %v1512, %v1511
      %v1543 = vpack.c.b16 %v1514, %v1513
      %v1544 = vpack.c.b16 %v1516, %v1515
      %v1557 = vunpack.c.l.b16 %v1393
      %v1558 = vunpack.c.h.b16 %v1393
      %v1559 = vunpack.c.l.b16 %v1394
      %v1560 = vunpack.c.h.b16 %v1394
      %v1561 = vunpack.c.l.b16 %v1395
      %v1562 = vunpack.c.h.b16 %v1395
      %v1563 = vunpack.c.l.b16 %v1396
      %v1564 = vunpack.c.h.b16 %v1396
      %v1565 = vunpack.c.l.b16 %v1397
      %v1566 = vunpack.c.h.b16 %v1397
      %v1567 = vunpack.c.l.b16 %v1398
      %v1568 = vunpack.c.h.b16 %v1398
      %v1569 = vunpack.c.l.b16 %v1399
      %v1570 = vunpack.c.h.b16 %v1399
      %v1571 = vunpack.c.l.b16 %v1400
      %v1572 = vunpack.c.h.b16 %v1400
      %v1573 = vunpack.c.l.b16 %v1401
      %v1574 = vunpack.c.h.b16 %v1401
      %v1575 = vunpack.c.l.b16 %v1402
      %v1576 = vunpack.c.h.b16 %v1402
      %v1577 = vunpack.c.l.b16 %v1403
      %v1578 = vunpack.c.h.b16 %v1403
      %v1579 = vunpack.c.l.b16 %v1404
      %v1580 = vunpack.c.h.b16 %v1404
      %v1581 = vpack.c.b16 %v1559, %v1557
      %v1582 = vpack.c.b16 %v1560, %v1558
      %v1583 = vpack.c.b16 %v1563, %v1561
      %v1584 = vpack.c.b16 %v1564, %v1562
      %v1585 = vpack.c.b16 %v1567, %v1565
      %v1586 = vpack.c.b16 %v1568, %v1566
      %v1587 = vpack.c.b16 %v1571, %v1569
      %v1588 = vpack.c.b16 %v1572, %v1570
      %v1589 = vpack.c.b16 %v1575, %v1573
      %v1590 = vpack.c.b16 %v1576, %v1574
      %v1591 = vpack.c.b16 %v1579, %v1577
      %v1592 = vpack.c.b16 %v1580, %v1578
      %v1606 = vsel %vm713, %v1517, 0
      %v1609 = vsel %vm713, %v1518, 0
      %v1612 = vsel %vm713, %v1519, 0
      %v1615 = vsel %vm713, %v1520, 0
      %v1618 = vsel %vm713, %v1521, 0
      %v1621 = vsel %vm713, %v1522, 0
      %v1624 = vsel %vm713, %v1523, 0
      %v1627 = vsel %vm713, %v1524, 0
      %v1630 = vsel %vm713, %v1525, 0
      %v1633 = vsel %vm713, %v1526, 0
      %v1636 = vsel %vm713, %v1527, 0
      %v1639 = vsel %vm713, %v1528, 0
      %v1642 = vsel %vm713, %v1529, 0
      %v1645 = vsel %vm713, %v1530, 0
      %v1648 = vsel %vm713, %v1531, 0
      %v1651 = vsel %vm713, %v1532, 0
      %v1654 = vsel %vm713, %v1533, 0
      %v1657 = vsel %vm713, %v1534, 0
      %v1660 = vsel %vm713, %v1535, 0
      %v1663 = vsel %vm713, %v1536, 0
      %v1666 = vsel %vm713, %v1537, 0
      %v1669 = vsel %vm713, %v1538, 0
      %v1672 = vsel %vm713, %v1539, 0
      %v1675 = vsel %vm713, %v1540, 0
      %v1678 = vsel %vm713, %v1541, 0
      %v1681 = vsel %vm713, %v1542, 0
      %v1684 = vsel %vm713, %v1543, 0
      %v1687 = vsel %vm713, %v1544, 0
      %1689 = vmatprep.subr.bf16.mxu0 %v1582
      %1690 = vmatpush1.bf16.msra.mxu0 %v1581
      %1691 = vmatprep.subr.bf16.mxu0 %v1584
      %1692 = vmatpush1.bf16.msra.mxu0 %v1583
      %1693 = vmatprep.subr.bf16.mxu0 %v1586
      %1694 = vmatpush1.bf16.msra.mxu0 %v1585
      %1695 = vmatprep.subr.bf16.mxu0 %v1588
      %1696 = vmatpush1.bf16.msra.mxu0 %v1587
      %1697 = vmatprep.subr.bf16.mxu0 %v1590
      %1698 = vmatpush1.bf16.msra.mxu0 %v1589
      %1699 = vmatprep.subr.bf16.mxu0 %v1592
      %1700 = vmatpush1.bf16.msra.mxu0 %v1591
      %1701 = vmatprep.subr.bf16.mxu0 0
      %1702 = vmatpush1.bf16.msra.mxu0 0
      %1703 = vmatprep.subr.bf16.mxu0 0
      %1704 = vmatpush1.bf16.msra.mxu0 0
      %1705 = vmatprep.subr.bf16.mxu0 0
      %1706 = vmatpush1.bf16.msra.mxu0 0
      %1707 = vmatprep.subr.bf16.mxu0 0
      %1708 = vmatpush1.bf16.msra.mxu0 0
      %1709 = vmatprep.subr.bf16.mxu0 0
      %1710 = vmatpush1.bf16.msra.mxu0 0
      %1711 = vmatprep.subr.bf16.mxu0 0
      %1712 = vmatpush1.bf16.msra.mxu0 0
      %1713 = vmatprep.subr.bf16.mxu0 0
      %1714 = vmatpush1.bf16.msra.mxu0 0
      %1715 = vmatprep.subr.bf16.mxu0 0
      %1716 = vmatpush1.bf16.msra.mxu0 0
      %1717 = vmatprep.subr.bf16.mxu0 0
      %1718 = vmatpush1.bf16.msra.mxu0 0
      %1719 = vmatprep.subr.bf16.mxu0 0
      %1720 = vmatpush1.bf16.msra.mxu0 0
      %1721 = vmatprep.mubr.bf16.mxu0 0
      %1722 = vmatmul.mubr.bf16.gmra.mrb[0].mxu0 %v1606
      %v1723 = vpop.f32.mrb[0].mxu0
      %v1724 = vadd.f32 0.0, %v1723
      %v1725 = vpop.f32.mrb[0].mxu0
      %v1726 = vadd.f32 0.0, %v1725
      %v1727 = vpop.f32.mrb[0].mxu0
      %v1728 = vadd.f32 0.0, %v1727
      %v1729 = vpop.f32.mrb[0].mxu0
      %v1730 = vadd.f32 0.0, %v1729
      %1731 = vmatprep.mubr.bf16.mxu0 0
      %1732 = vmatmul.mubr.bf16.gmra.mrb[0].mxu0 %v1609
      %v1733 = vpop.f32.mrb[0].mxu0
      %v1734 = vadd.f32 0.0, %v1733
      %v1735 = vpop.f32.mrb[0].mxu0
      %v1736 = vadd.f32 0.0, %v1735
      %v1737 = vpop.f32.mrb[0].mxu0
      %v1738 = vadd.f32 0.0, %v1737
      %v1739 = vpop.f32.mrb[0].mxu0
      %v1740 = vadd.f32 0.0, %v1739
      %1741 = vmatprep.mubr.bf16.mxu0 0
      %1742 = vmatmul.mubr.bf16.gmra.mrb[0].mxu0 %v1612
      %v1743 = vpop.f32.mrb[0].mxu0
      %v1744 = vadd.f32 0.0, %v1743
      %v1745 = vpop.f32.mrb[0].mxu0
      %v1746 = vadd.f32 0.0, %v1745
      %v1747 = vpop.f32.mrb[0].mxu0
      %v1748 = vadd.f32 0.0, %v1747
      %v1749 = vpop.f32.mrb[0].mxu0
      %v1750 = vadd.f32 0.0, %v1749
      %1751 = vmatprep.mubr.bf16.mxu0 0
      %1752 = vmatmul.mubr.bf16.gmra.mrb[0].mxu0 %v1615
      %v1753 = vpop.f32.mrb[0].mxu0
      %v1754 = vadd.f32 0.0, %v1753
      %v1755 = vpop.f32.mrb[0].mxu0
      %v1756 = vadd.f32 0.0, %v1755
      %v1757 = vpop.f32.mrb[0].mxu0
      %v1758 = vadd.f32 0.0, %v1757
      %v1759 = vpop.f32.mrb[0].mxu0
      %v1760 = vadd.f32 0.0, %v1759
      %1761 = vmatprep.mubr.bf16.mxu0 0
      %1762 = vmatmul.mubr.bf16.gmra.mrb[0].mxu0 %v1618
      %v1763 = vpop.f32.mrb[0].mxu0
      %v1764 = vadd.f32 0.0, %v1763
      %v1765 = vpop.f32.mrb[0].mxu0
      %v1766 = vadd.f32 0.0, %v1765
      %v1767 = vpop.f32.mrb[0].mxu0
      %v1768 = vadd.f32 0.0, %v1767
      %v1769 = vpop.f32.mrb[0].mxu0
      %v1770 = vadd.f32 0.0, %v1769
      %1771 = vmatprep.mubr.bf16.mxu0 0
      %1772 = vmatmul.mubr.bf16.gmra.mrb[0].mxu0 %v1621
      %v1773 = vpop.f32.mrb[0].mxu0
      %v1774 = vadd.f32 0.0, %v1773
      %v1775 = vpop.f32.mrb[0].mxu0
      %v1776 = vadd.f32 0.0, %v1775
      %v1777 = vpop.f32.mrb[0].mxu0
      %v1778 = vadd.f32 0.0, %v1777
      %v1779 = vpop.f32.mrb[0].mxu0
      %v1780 = vadd.f32 0.0, %v1779
      %1781 = vmatprep.mubr.bf16.mxu0 0
      %1782 = vmatmul.mubr.bf16.gmra.mrb[0].mxu0 %v1624
      %v1783 = vpop.f32.mrb[0].mxu0
      %v1784 = vadd.f32 0.0, %v1783
      %v1785 = vpop.f32.mrb[0].mxu0
      %v1786 = vadd.f32 0.0, %v1785
      %v1787 = vpop.f32.mrb[0].mxu0
      %v1788 = vadd.f32 0.0, %v1787
      %v1789 = vpop.f32.mrb[0].mxu0
      %v1790 = vadd.f32 0.0, %v1789
      %1791 = vmatprep.mubr.bf16.mxu0 0
      %1792 = vmatmul.mubr.bf16.gmra.mrb[0].mxu0 %v1627
      %v1793 = vpop.f32.mrb[0].mxu0
      %v1794 = vadd.f32 0.0, %v1793
      %v1795 = vpop.f32.mrb[0].mxu0
      %v1796 = vadd.f32 0.0, %v1795
      %v1797 = vpop.f32.mrb[0].mxu0
      %v1798 = vadd.f32 0.0, %v1797
      %v1799 = vpop.f32.mrb[0].mxu0
      %v1800 = vadd.f32 0.0, %v1799
      %1801 = vmatprep.mubr.bf16.mxu0 0
      %1802 = vmatmul.mubr.bf16.gmra.mrb[0].mxu0 %v1630
      %v1803 = vpop.f32.mrb[0].mxu0
      %v1804 = vadd.f32 0.0, %v1803
      %v1805 = vpop.f32.mrb[0].mxu0
      %v1806 = vadd.f32 0.0, %v1805
      %v1807 = vpop.f32.mrb[0].mxu0
      %v1808 = vadd.f32 0.0, %v1807
      %v1809 = vpop.f32.mrb[0].mxu0
      %v1810 = vadd.f32 0.0, %v1809
      %1811 = vmatprep.mubr.bf16.mxu0 0
      %1812 = vmatmul.mubr.bf16.gmra.mrb[0].mxu0 %v1633
      %v1813 = vpop.f32.mrb[0].mxu0
      %v1814 = vadd.f32 0.0, %v1813
      %v1815 = vpop.f32.mrb[0].mxu0
      %v1816 = vadd.f32 0.0, %v1815
      %v1817 = vpop.f32.mrb[0].mxu0
      %v1818 = vadd.f32 0.0, %v1817
      %v1819 = vpop.f32.mrb[0].mxu0
      %v1820 = vadd.f32 0.0, %v1819
      %1821 = vmatprep.mubr.bf16.mxu0 0
      %1822 = vmatmul.mubr.bf16.gmra.mrb[0].mxu0 %v1636
      %v1823 = vpop.f32.mrb[0].mxu0
      %v1824 = vadd.f32 0.0, %v1823
      %v1825 = vpop.f32.mrb[0].mxu0
      %v1826 = vadd.f32 0.0, %v1825
      %v1827 = vpop.f32.mrb[0].mxu0
      %v1828 = vadd.f32 0.0, %v1827
      %v1829 = vpop.f32.mrb[0].mxu0
      %v1830 = vadd.f32 0.0, %v1829
      %1831 = vmatprep.mubr.bf16.mxu0 0
      %1832 = vmatmul.mubr.bf16.gmra.mrb[0].mxu0 %v1639
      %v1833 = vpop.f32.mrb[0].mxu0
      %v1834 = vadd.f32 0.0, %v1833
      %v1835 = vpop.f32.mrb[0].mxu0
      %v1836 = vadd.f32 0.0, %v1835
      %v1837 = vpop.f32.mrb[0].mxu0
      %v1838 = vadd.f32 0.0, %v1837
      %v1839 = vpop.f32.mrb[0].mxu0
      %v1840 = vadd.f32 0.0, %v1839
      %1841 = vmatprep.mubr.bf16.mxu0 0
      %1842 = vmatmul.mubr.bf16.gmra.mrb[0].mxu0 %v1642
      %v1843 = vpop.f32.mrb[0].mxu0
      %v1844 = vadd.f32 0.0, %v1843
      %v1845 = vpop.f32.mrb[0].mxu0
      %v1846 = vadd.f32 0.0, %v1845
      %v1847 = vpop.f32.mrb[0].mxu0
      %v1848 = vadd.f32 0.0, %v1847
      %v1849 = vpop.f32.mrb[0].mxu0
      %v1850 = vadd.f32 0.0, %v1849
      %1851 = vmatprep.mubr.bf16.mxu0 0
      %1852 = vmatmul.mubr.bf16.gmra.mrb[0].mxu0 %v1645
      %v1853 = vpop.f32.mrb[0].mxu0
      %v1854 = vadd.f32 0.0, %v1853
      %v1855 = vpop.f32.mrb[0].mxu0
      %v1856 = vadd.f32 0.0, %v1855
      %v1857 = vpop.f32.mrb[0].mxu0
      %v1858 = vadd.f32 0.0, %v1857
      %v1859 = vpop.f32.mrb[0].mxu0
      %v1860 = vadd.f32 0.0, %v1859
      %1861 = vmatprep.mubr.bf16.mxu0 0
      %1862 = vmatmul.mubr.bf16.gmra.mrb[0].mxu0 %v1648
      %v1863 = vpop.f32.mrb[0].mxu0
      %v1864 = vadd.f32 0.0, %v1863
      %v1865 = vpop.f32.mrb[0].mxu0
      %v1866 = vadd.f32 0.0, %v1865
      %v1867 = vpop.f32.mrb[0].mxu0
      %v1868 = vadd.f32 0.0, %v1867
      %v1869 = vpop.f32.mrb[0].mxu0
      %v1870 = vadd.f32 0.0, %v1869
      %1871 = vmatprep.mubr.bf16.mxu0 0
      %1872 = vmatmul.mubr.bf16.gmra.mrb[0].mxu0 %v1651
      %v1873 = vpop.f32.mrb[0].mxu0
      %v1874 = vadd.f32 0.0, %v1873
      %v1875 = vpop.f32.mrb[0].mxu0
      %v1876 = vadd.f32 0.0, %v1875
      %v1877 = vpop.f32.mrb[0].mxu0
      %v1878 = vadd.f32 0.0, %v1877
      %v1879 = vpop.f32.mrb[0].mxu0
      %v1880 = vadd.f32 0.0, %v1879
      %1881 = vmatprep.mubr.bf16.mxu0 0
      %1882 = vmatmul.mubr.bf16.gmra.mrb[0].mxu0 %v1654
      %v1883 = vpop.f32.mrb[0].mxu0
      %v1884 = vadd.f32 0.0, %v1883
      %v1885 = vpop.f32.mrb[0].mxu0
      %v1886 = vadd.f32 0.0, %v1885
      %v1887 = vpop.f32.mrb[0].mxu0
      %v1888 = vadd.f32 0.0, %v1887
      %v1889 = vpop.f32.mrb[0].mxu0
      %v1890 = vadd.f32 0.0, %v1889
      %1891 = vmatprep.mubr.bf16.mxu0 0
      %1892 = vmatmul.mubr.bf16.gmra.mrb[0].mxu0 %v1657
      %v1893 = vpop.f32.mrb[0].mxu0
      %v1894 = vadd.f32 0.0, %v1893
      %v1895 = vpop.f32.mrb[0].mxu0
      %v1896 = vadd.f32 0.0, %v1895
      %v1897 = vpop.f32.mrb[0].mxu0
      %v1898 = vadd.f32 0.0, %v1897
      %v1899 = vpop.f32.mrb[0].mxu0
      %v1900 = vadd.f32 0.0, %v1899
      %1901 = vmatprep.mubr.bf16.mxu0 0
      %1902 = vmatmul.mubr.bf16.gmra.mrb[0].mxu0 %v1660
      %v1903 = vpop.f32.mrb[0].mxu0
      %v1904 = vadd.f32 0.0, %v1903
      %v1905 = vpop.f32.mrb[0].mxu0
      %v1906 = vadd.f32 0.0, %v1905
      %v1907 = vpop.f32.mrb[0].mxu0
      %v1908 = vadd.f32 0.0, %v1907
      %v1909 = vpop.f32.mrb[0].mxu0
      %v1910 = vadd.f32 0.0, %v1909
      %1911 = vmatprep.mubr.bf16.mxu0 0
      %1912 = vmatmul.mubr.bf16.gmra.mrb[0].mxu0 %v1663
      %v1913 = vpop.f32.mrb[0].mxu0
      %v1914 = vadd.f32 0.0, %v1913
      %v1915 = vpop.f32.mrb[0].mxu0
      %v1916 = vadd.f32 0.0, %v1915
      %v1917 = vpop.f32.mrb[0].mxu0
      %v1918 = vadd.f32 0.0, %v1917
      %v1919 = vpop.f32.mrb[0].mxu0
      %v1920 = vadd.f32 0.0, %v1919
      %1921 = vmatprep.mubr.bf16.mxu0 0
      %1922 = vmatmul.mubr.bf16.gmra.mrb[0].mxu0 %v1666
      %v1923 = vpop.f32.mrb[0].mxu0
      %v1924 = vadd.f32 0.0, %v1923
      %v1925 = vpop.f32.mrb[0].mxu0
      %v1926 = vadd.f32 0.0, %v1925
      %v1927 = vpop.f32.mrb[0].mxu0
      %v1928 = vadd.f32 0.0, %v1927
      %v1929 = vpop.f32.mrb[0].mxu0
      %v1930 = vadd.f32 0.0, %v1929
      %1931 = vmatprep.mubr.bf16.mxu0 0
      %1932 = vmatmul.mubr.bf16.gmra.mrb[0].mxu0 %v1669
      %v1933 = vpop.f32.mrb[0].mxu0
      %v1934 = vadd.f32 0.0, %v1933
      %v1935 = vpop.f32.mrb[0].mxu0
      %v1936 = vadd.f32 0.0, %v1935
      %v1937 = vpop.f32.mrb[0].mxu0
      %v1938 = vadd.f32 0.0, %v1937
      %v1939 = vpop.f32.mrb[0].mxu0
      %v1940 = vadd.f32 0.0, %v1939
      %1941 = vmatprep.mubr.bf16.mxu0 0
      %1942 = vmatmul.mubr.bf16.gmra.mrb[0].mxu0 %v1672
      %v1943 = vpop.f32.mrb[0].mxu0
      %v1944 = vadd.f32 0.0, %v1943
      %v1945 = vpop.f32.mrb[0].mxu0
      %v1946 = vadd.f32 0.0, %v1945
      %v1947 = vpop.f32.mrb[0].mxu0
      %v1948 = vadd.f32 0.0, %v1947
      %v1949 = vpop.f32.mrb[0].mxu0
      %v1950 = vadd.f32 0.0, %v1949
      %1951 = vmatprep.mubr.bf16.mxu0 0
      %1952 = vmatmul.mubr.bf16.gmra.mrb[0].mxu0 %v1675
      %v1953 = vpop.f32.mrb[0].mxu0
      %v1954 = vadd.f32 0.0, %v1953
      %v1955 = vpop.f32.mrb[0].mxu0
      %v1956 = vadd.f32 0.0, %v1955
      %v1957 = vpop.f32.mrb[0].mxu0
      %v1958 = vadd.f32 0.0, %v1957
      %v1959 = vpop.f32.mrb[0].mxu0
      %v1960 = vadd.f32 0.0, %v1959
      %1961 = vmatprep.mubr.bf16.mxu0 0
      %1962 = vmatmul.mubr.bf16.gmra.mrb[0].mxu0 %v1678
      %v1963 = vpop.f32.mrb[0].mxu0
      %v1964 = vadd.f32 0.0, %v1963
      %v1965 = vpop.f32.mrb[0].mxu0
      %v1966 = vadd.f32 0.0, %v1965
      %v1967 = vpop.f32.mrb[0].mxu0
      %v1968 = vadd.f32 0.0, %v1967
      %v1969 = vpop.f32.mrb[0].mxu0
      %v1970 = vadd.f32 0.0, %v1969
      %1971 = vmatprep.mubr.bf16.mxu0 0
      %1972 = vmatmul.mubr.bf16.gmra.mrb[0].mxu0 %v1681
      %v1973 = vpop.f32.mrb[0].mxu0
      %v1974 = vadd.f32 0.0, %v1973
      %v1975 = vpop.f32.mrb[0].mxu0
      %v1976 = vadd.f32 0.0, %v1975
      %v1977 = vpop.f32.mrb[0].mxu0
      %v1978 = vadd.f32 0.0, %v1977
      %v1979 = vpop.f32.mrb[0].mxu0
      %v1980 = vadd.f32 0.0, %v1979
      %1981 = vmatprep.mubr.bf16.mxu0 0
      %1982 = vmatmul.mubr.bf16.gmra.mrb[0].mxu0 %v1684
      %v1983 = vpop.f32.mrb[0].mxu0
      %v1984 = vadd.f32 0.0, %v1983
      %v1985 = vpop.f32.mrb[0].mxu0
      %v1986 = vadd.f32 0.0, %v1985
      %v1987 = vpop.f32.mrb[0].mxu0
      %v1988 = vadd.f32 0.0, %v1987
      %v1989 = vpop.f32.mrb[0].mxu0
      %v1990 = vadd.f32 0.0, %v1989
      %1991 = vmatprep.mubr.bf16.mxu0 0
      %1992 = vmatmul.mubr.bf16.gmra.mrb[0].mxu0 %v1687
      %v1993 = vpop.f32.mrb[0].mxu0
      %v1994 = vadd.f32 0.0, %v1993
      %v1995 = vpop.f32.mrb[0].mxu0
      %v1996 = vadd.f32 0.0, %v1995
      %v1997 = vpop.f32.mrb[0].mxu0
      %v1998 = vadd.f32 0.0, %v1997
      %v1999 = vpop.f32.mrb[0].mxu0
      %v2000 = vadd.f32 0.0, %v1999
      %2001 = vdwg.mxu0
      %v2002 = vadd.f32 %v1224, %v1724
      %v2003 = vadd.f32 %v1225, %v1726
      %v2004 = vadd.f32 %v1226, %v1728
      %v2005 = vadd.f32 %v1227, %v1730
      %v2006 = vadd.f32 %v1228, %v1734
      %v2007 = vadd.f32 %v1229, %v1736
      %v2008 = vadd.f32 %v1230, %v1738
      %v2009 = vadd.f32 %v1231, %v1740
      %v2010 = vadd.f32 %v1232, %v1744
      %v2011 = vadd.f32 %v1233, %v1746
      %v2012 = vadd.f32 %v1234, %v1748
      %v2013 = vadd.f32 %v1235, %v1750
      %v2014 = vadd.f32 %v1236, %v1754
      %v2015 = vadd.f32 %v1237, %v1756
      %v2016 = vadd.f32 %v1238, %v1758
      %v2017 = vadd.f32 %v1239, %v1760
      %v2018 = vadd.f32 %v1240, %v1764
      %v2019 = vadd.f32 %v1241, %v1766
      %v2020 = vadd.f32 %v1242, %v1768
      %v2021 = vadd.f32 %v1243, %v1770
      %v2022 = vadd.f32 %v1244, %v1774
      %v2023 = vadd.f32 %v1245, %v1776
      %v2024 = vadd.f32 %v1246, %v1778
      %v2025 = vadd.f32 %v1247, %v1780
      %v2026 = vadd.f32 %v1248, %v1784
      %v2027 = vadd.f32 %v1249, %v1786
      %v2028 = vadd.f32 %v1250, %v1788
      %v2029 = vadd.f32 %v1251, %v1790
      %v2030 = vadd.f32 %v1252, %v1794
      %v2031 = vadd.f32 %v1253, %v1796
      %v2032 = vadd.f32 %v1254, %v1798
      %v2033 = vadd.f32 %v1255, %v1800
      %v2034 = vadd.f32 %v1256, %v1804
      %v2035 = vadd.f32 %v1257, %v1806
      %v2036 = vadd.f32 %v1258, %v1808
      %v2037 = vadd.f32 %v1259, %v1810
      %v2038 = vadd.f32 %v1260, %v1814
      %v2039 = vadd.f32 %v1261, %v1816
      %v2040 = vadd.f32 %v1262, %v1818
      %v2041 = vadd.f32 %v1263, %v1820
      %v2042 = vadd.f32 %v1264, %v1824
      %v2043 = vadd.f32 %v1265, %v1826
      %v2044 = vadd.f32 %v1266, %v1828
      %v2045 = vadd.f32 %v1267, %v1830
      %v2046 = vadd.f32 %v1268, %v1834
      %v2047 = vadd.f32 %v1269, %v1836
      %v2048 = vadd.f32 %v1270, %v1838
      %v2049 = vadd.f32 %v1271, %v1840
      %v2050 = vadd.f32 %v1272, %v1844
      %v2051 = vadd.f32 %v1273, %v1846
      %v2052 = vadd.f32 %v1274, %v1848
      %v2053 = vadd.f32 %v1275, %v1850
      %v2054 = vadd.f32 %v1276, %v1854
      %v2055 = vadd.f32 %v1277, %v1856
      %v2056 = vadd.f32 %v1278, %v1858
      %v2057 = vadd.f32 %v1279, %v1860
      %v2058 = vadd.f32 %v1280, %v1864
      %v2059 = vadd.f32 %v1281, %v1866
      %v2060 = vadd.f32 %v1282, %v1868
      %v2061 = vadd.f32 %v1283, %v1870
      %v2062 = vadd.f32 %v1284, %v1874
      %v2063 = vadd.f32 %v1285, %v1876
      %v2064 = vadd.f32 %v1286, %v1878
      %v2065 = vadd.f32 %v1287, %v1880
      %v2066 = vadd.f32 %v1288, %v1884
      %v2067 = vadd.f32 %v1289, %v1886
      %v2068 = vadd.f32 %v1290, %v1888
      %v2069 = vadd.f32 %v1291, %v1890
      %v2070 = vadd.f32 %v1292, %v1894
      %v2071 = vadd.f32 %v1293, %v1896
      %v2072 = vadd.f32 %v1294, %v1898
      %v2073 = vadd.f32 %v1295, %v1900
      %v2074 = vadd.f32 %v1296, %v1904
      %v2075 = vadd.f32 %v1297, %v1906
      %v2076 = vadd.f32 %v1298, %v1908
      %v2077 = vadd.f32 %v1299, %v1910
      %v2078 = vadd.f32 %v1300, %v1914
      %v2079 = vadd.f32 %v1301, %v1916
      %v2080 = vadd.f32 %v1302, %v1918
      %v2081 = vadd.f32 %v1303, %v1920
      %v2082 = vadd.f32 %v1304, %v1924
      %v2083 = vadd.f32 %v1305, %v1926
      %v2084 = vadd.f32 %v1306, %v1928
      %v2085 = vadd.f32 %v1307, %v1930
      %v2086 = vadd.f32 %v1308, %v1934
      %v2087 = vadd.f32 %v1309, %v1936
      %v2088 = vadd.f32 %v1310, %v1938
      %v2089 = vadd.f32 %v1311, %v1940
      %v2090 = vadd.f32 %v1312, %v1944
      %v2091 = vadd.f32 %v1313, %v1946
      %v2092 = vadd.f32 %v1314, %v1948
      %v2093 = vadd.f32 %v1315, %v1950
      %v2094 = vadd.f32 %v1316, %v1954
      %v2095 = vadd.f32 %v1317, %v1956
      %v2096 = vadd.f32 %v1318, %v1958
      %v2097 = vadd.f32 %v1319, %v1960
      %v2098 = vadd.f32 %v1320, %v1964
      %v2099 = vadd.f32 %v1321, %v1966
      %v2100 = vadd.f32 %v1322, %v1968
      %v2101 = vadd.f32 %v1323, %v1970
      %v2102 = vadd.f32 %v1324, %v1974
      %v2103 = vadd.f32 %v1325, %v1976
      %v2104 = vadd.f32 %v1326, %v1978
      %v2105 = vadd.f32 %v1327, %v1980
      %v2106 = vadd.f32 %v1328, %v1984
      %v2107 = vadd.f32 %v1329, %v1986
      %v2108 = vadd.f32 %v1330, %v1988
      %v2109 = vadd.f32 %v1331, %v1990
      %v2110 = vadd.f32 %v1332, %v1994
      %v2111 = vadd.f32 %v1333, %v1996
      %v2112 = vadd.f32 %v1334, %v1998
      %v2113 = vadd.f32 %v1335, %v2000
      %2114 = vst [vmem:[#allocation2] sm:$0xff] %v2002
      %2115 = vst.msk [vmem:[#allocation2 + $0x8] sm:$0xff] %vm1112, %v2003
      %2116 = vst [vmem:[#allocation2 + $0x10] sm:$0xff] %v2004
      %2117 = vst.msk [vmem:[#allocation2 + $0x18] sm:$0xff] %vm1112, %v2005
      %2118 = vst [vmem:[#allocation2 + $0x20] sm:$0xff] %v2006
      %2119 = vst.msk [vmem:[#allocation2 + $0x28] sm:$0xff] %vm1112, %v2007
      %2120 = vst [vmem:[#allocation2 + $0x30] sm:$0xff] %v2008
      %2121 = vst.msk [vmem:[#allocation2 + $0x38] sm:$0xff] %vm1112, %v2009
      %2122 = vst [vmem:[#allocation2 + $0x40] sm:$0xff] %v2010
      %2123 = vst.msk [vmem:[#allocation2 + $0x48] sm:$0xff] %vm1112, %v2011
      %2124 = vst [vmem:[#allocation2 + $0x50] sm:$0xff] %v2012
      %2125 = vst.msk [vmem:[#allocation2 + $0x58] sm:$0xff] %vm1112, %v2013
      %2126 = vst [vmem:[#allocation2 + $0x60] sm:$0xff] %v2014
      %2127 = vst.msk [vmem:[#allocation2 + $0x68] sm:$0xff] %vm1112, %v2015
      %2128 = vst [vmem:[#allocation2 + $0x70] sm:$0xff] %v2016
      %2129 = vst.msk [vmem:[#allocation2 + $0x78] sm:$0xff] %vm1112, %v2017
      %2130 = vst [vmem:[#allocation2 + $0x80] sm:$0xff] %v2018
      %2131 = vst.msk [vmem:[#allocation2 + $0x88] sm:$0xff] %vm1112, %v2019
      %2132 = vst [vmem:[#allocation2 + $0x90] sm:$0xff] %v2020
      %2133 = vst.msk [vmem:[#allocation2 + $0x98] sm:$0xff] %vm1112, %v2021
      %2134 = vst [vmem:[#allocation2 + $0xa0] sm:$0xff] %v2022
      %2135 = vst.msk [vmem:[#allocation2 + $0xa8] sm:$0xff] %vm1112, %v2023
      %2136 = vst [vmem:[#allocation2 + $0xb0] sm:$0xff] %v2024
      %2137 = vst.msk [vmem:[#allocation2 + $0xb8] sm:$0xff] %vm1112, %v2025
      %2138 = vst [vmem:[#allocation2 + $0xc0] sm:$0xff] %v2026
      %2139 = vst.msk [vmem:[#allocation2 + $0xc8] sm:$0xff] %vm1112, %v2027
      %2140 = vst [vmem:[#allocation2 + $0xd0] sm:$0xff] %v2028
      %2141 = vst.msk [vmem:[#allocation2 + $0xd8] sm:$0xff] %vm1112, %v2029
      %2142 = vst [vmem:[#allocation2 + $0xe0] sm:$0xff] %v2030
      %2143 = vst.msk [vmem:[#allocation2 + $0xe8] sm:$0xff] %vm1112, %v2031
      %2144 = vst [vmem:[#allocation2 + $0xf0] sm:$0xff] %v2032
      %2145 = vst.msk [vmem:[#allocation2 + $0xf8] sm:$0xff] %vm1112, %v2033
      %2146 = vst [vmem:[#allocation2 + $0x100] sm:$0xff] %v2034
      %2147 = vst.msk [vmem:[#allocation2 + $0x108] sm:$0xff] %vm1112, %v2035
      %2148 = vst [vmem:[#allocation2 + $0x110] sm:$0xff] %v2036
      %2149 = vst.msk [vmem:[#allocation2 + $0x118] sm:$0xff] %vm1112, %v2037
      %2150 = vst [vmem:[#allocation2 + $0x120] sm:$0xff] %v2038
      %2151 = vst.msk [vmem:[#allocation2 + $0x128] sm:$0xff] %vm1112, %v2039
      %2152 = vst [vmem:[#allocation2 + $0x130] sm:$0xff] %v2040
      %2153 = vst.msk [vmem:[#allocation2 + $0x138] sm:$0xff] %vm1112, %v2041
      %2154 = vst [vmem:[#allocation2 + $0x140] sm:$0xff] %v2042
      %2155 = vst.msk [vmem:[#allocation2 + $0x148] sm:$0xff] %vm1112, %v2043
      %2156 = vst [vmem:[#allocation2 + $0x150] sm:$0xff] %v2044
      %2157 = vst.msk [vmem:[#allocation2 + $0x158] sm:$0xff] %vm1112, %v2045
      %2158 = vst [vmem:[#allocation2 + $0x160] sm:$0xff] %v2046
      %2159 = vst.msk [vmem:[#allocation2 + $0x168] sm:$0xff] %vm1112, %v2047
      %2160 = vst [vmem:[#allocation2 + $0x170] sm:$0xff] %v2048
      %2161 = vst.msk [vmem:[#allocation2 + $0x178] sm:$0xff] %vm1112, %v2049
      %2162 = vst [vmem:[#allocation2 + $0x180] sm:$0xff] %v2050
      %2163 = vst.msk [vmem:[#allocation2 + $0x188] sm:$0xff] %vm1112, %v2051
      %2164 = vst [vmem:[#allocation2 + $0x190] sm:$0xff] %v2052
      %2165 = vst.msk [vmem:[#allocation2 + $0x198] sm:$0xff] %vm1112, %v2053
      %2166 = vst [vmem:[#allocation2 + $0x1a0] sm:$0xff] %v2054
      %2167 = vst.msk [vmem:[#allocation2 + $0x1a8] sm:$0xff] %vm1112, %v2055
      %2168 = vst [vmem:[#allocation2 + $0x1b0] sm:$0xff] %v2056
      %2169 = vst.msk [vmem:[#allocation2 + $0x1b8] sm:$0xff] %vm1112, %v2057
      %2170 = vst [vmem:[#allocation2 + $0x1c0] sm:$0xff] %v2058
      %2171 = vst.msk [vmem:[#allocation2 + $0x1c8] sm:$0xff] %vm1112, %v2059
      %2172 = vst [vmem:[#allocation2 + $0x1d0] sm:$0xff] %v2060
      %2173 = vst.msk [vmem:[#allocation2 + $0x1d8] sm:$0xff] %vm1112, %v2061
      %2174 = vst [vmem:[#allocation2 + $0x1e0] sm:$0xff] %v2062
      %2175 = vst.msk [vmem:[#allocation2 + $0x1e8] sm:$0xff] %vm1112, %v2063
      %2176 = vst [vmem:[#allocation2 + $0x1f0] sm:$0xff] %v2064
      %2177 = vst.msk [vmem:[#allocation2 + $0x1f8] sm:$0xff] %vm1112, %v2065
      %2178 = vst [vmem:[#allocation2 + $0x200] sm:$0xff] %v2066
      %2179 = vst.msk [vmem:[#allocation2 + $0x208] sm:$0xff] %vm1112, %v2067
      %2180 = vst [vmem:[#allocation2 + $0x210] sm:$0xff] %v2068
      %2181 = vst.msk [vmem:[#allocation2 + $0x218] sm:$0xff] %vm1112, %v2069
      %2182 = vst [vmem:[#allocation2 + $0x220] sm:$0xff] %v2070
      %2183 = vst.msk [vmem:[#allocation2 + $0x228] sm:$0xff] %vm1112, %v2071
      %2184 = vst [vmem:[#allocation2 + $0x230] sm:$0xff] %v2072
      %2185 = vst.msk [vmem:[#allocation2 + $0x238] sm:$0xff] %vm1112, %v2073
      %2186 = vst [vmem:[#allocation2 + $0x240] sm:$0xff] %v2074
      %2187 = vst.msk [vmem:[#allocation2 + $0x248] sm:$0xff] %vm1112, %v2075
      %2188 = vst [vmem:[#allocation2 + $0x250] sm:$0xff] %v2076
      %2189 = vst.msk [vmem:[#allocation2 + $0x258] sm:$0xff] %vm1112, %v2077
      %2190 = vst [vmem:[#allocation2 + $0x260] sm:$0xff] %v2078
      %2191 = vst.msk [vmem:[#allocation2 + $0x268] sm:$0xff] %vm1112, %v2079
      %2192 = vst [vmem:[#allocation2 + $0x270] sm:$0xff] %v2080
      %2193 = vst.msk [vmem:[#allocation2 + $0x278] sm:$0xff] %vm1112, %v2081
      %2194 = vst [vmem:[#allocation2 + $0x280] sm:$0xff] %v2082
      %2195 = vst.msk [vmem:[#allocation2 + $0x288] sm:$0xff] %vm1112, %v2083
      %2196 = vst [vmem:[#allocation2 + $0x290] sm:$0xff] %v2084
      %2197 = vst.msk [vmem:[#allocation2 + $0x298] sm:$0xff] %vm1112, %v2085
      %2198 = vst [vmem:[#allocation2 + $0x2a0] sm:$0xff] %v2086
      %2199 = vst.msk [vmem:[#allocation2 + $0x2a8] sm:$0xff] %vm1112, %v2087
      %2200 = vst [vmem:[#allocation2 + $0x2b0] sm:$0xff] %v2088
      %2201 = vst.msk [vmem:[#allocation2 + $0x2b8] sm:$0xff] %vm1112, %v2089
      %2202 = vst [vmem:[#allocation2 + $0x2c0] sm:$0xff] %v2090
      %2203 = vst.msk [vmem:[#allocation2 + $0x2c8] sm:$0xff] %vm1112, %v2091
      %2204 = vst [vmem:[#allocation2 + $0x2d0] sm:$0xff] %v2092
      %2205 = vst.msk [vmem:[#allocation2 + $0x2d8] sm:$0xff] %vm1112, %v2093
      %2206 = vst [vmem:[#allocation2 + $0x2e0] sm:$0xff] %v2094
      %2207 = vst.msk [vmem:[#allocation2 + $0x2e8] sm:$0xff] %vm1112, %v2095
      %2208 = vst [vmem:[#allocation2 + $0x2f0] sm:$0xff] %v2096
      %2209 = vst.msk [vmem:[#allocation2 + $0x2f8] sm:$0xff] %vm1112, %v2097
      %2210 = vst [vmem:[#allocation2 + $0x300] sm:$0xff] %v2098
      %2211 = vst.msk [vmem:[#allocation2 + $0x308] sm:$0xff] %vm1112, %v2099
      %2212 = vst [vmem:[#allocation2 + $0x310] sm:$0xff] %v2100
      %2213 = vst.msk [vmem:[#allocation2 + $0x318] sm:$0xff] %vm1112, %v2101
      %2214 = vst [vmem:[#allocation2 + $0x320] sm:$0xff] %v2102
      %2215 = vst.msk [vmem:[#allocation2 + $0x328] sm:$0xff] %vm1112, %v2103
      %2216 = vst [vmem:[#allocation2 + $0x330] sm:$0xff] %v2104
      %2217 = vst.msk [vmem:[#allocation2 + $0x338] sm:$0xff] %vm1112, %v2105
      %2218 = vst [vmem:[#allocation2 + $0x340] sm:$0xff] %v2106
      %2219 = vst.msk [vmem:[#allocation2 + $0x348] sm:$0xff] %vm1112, %v2107
      %2220 = vst [vmem:[#allocation2 + $0x350] sm:$0xff] %v2108
      %2221 = vst.msk [vmem:[#allocation2 + $0x358] sm:$0xff] %vm1112, %v2109
      %2222 = vst [vmem:[#allocation2 + $0x360] sm:$0xff] %v2110
      %2223 = vst.msk [vmem:[#allocation2 + $0x368] sm:$0xff] %vm1112, %v2111
      %2224 = vst [vmem:[#allocation2 + $0x370] sm:$0xff] %v2112
      %2225 = vst.msk [vmem:[#allocation2 + $0x378] sm:$0xff] %vm1112, %v2113
      %v2226 = vld [vmem:[#allocation2] sm:$0xff]
      %v2227 = vld [vmem:[#allocation2 + $0x8] sm:$0xff]
      %v2228 = vld [vmem:[#allocation2 + $0x10] sm:$0xff]
      %v2229 = vld [vmem:[#allocation2 + $0x18] sm:$0xff]
      %v2230 = vld [vmem:[#allocation2 + $0x20] sm:$0xff]
      %v2231 = vld [vmem:[#allocation2 + $0x28] sm:$0xff]
      %v2232 = vld [vmem:[#allocation2 + $0x30] sm:$0xff]
      %v2233 = vld [vmem:[#allocation2 + $0x38] sm:$0xff]
      %v2234 = vld [vmem:[#allocation2 + $0x40] sm:$0xff]
      %v2235 = vld [vmem:[#allocation2 + $0x48] sm:$0xff]
      %v2236 = vld [vmem:[#allocation2 + $0x50] sm:$0xff]
      %v2237 = vld [vmem:[#allocation2 + $0x58] sm:$0xff]
      %v2238 = vld [vmem:[#allocation2 + $0x60] sm:$0xff]
      %v2239 = vld [vmem:[#allocation2 + $0x68] sm:$0xff]
      %v2240 = vld [vmem:[#allocation2 + $0x70] sm:$0xff]
      %v2241 = vld [vmem:[#allocation2 + $0x78] sm:$0xff]
      %v2242 = vld [vmem:[#allocation2 + $0x80] sm:$0xff]
      %v2243 = vld [vmem:[#allocation2 + $0x88] sm:$0xff]
      %v2244 = vld [vmem:[#allocation2 + $0x90] sm:$0xff]
      %v2245 = vld [vmem:[#allocation2 + $0x98] sm:$0xff]
      %v2246 = vld [vmem:[#allocation2 + $0xa0] sm:$0xff]
      %v2247 = vld [vmem:[#allocation2 + $0xa8] sm:$0xff]
      %v2248 = vld [vmem:[#allocation2 + $0xb0] sm:$0xff]
      %v2249 = vld [vmem:[#allocation2 + $0xb8] sm:$0xff]
      %v2250 = vld [vmem:[#allocation2 + $0xc0] sm:$0xff]
      %v2251 = vld [vmem:[#allocation2 + $0xc8] sm:$0xff]
      %v2252 = vld [vmem:[#allocation2 + $0xd0] sm:$0xff]
      %v2253 = vld [vmem:[#allocation2 + $0xd8] sm:$0xff]
      %v2254 = vld [vmem:[#allocation2 + $0xe0] sm:$0xff]
      %v2255 = vld [vmem:[#allocation2 + $0xe8] sm:$0xff]
      %v2256 = vld [vmem:[#allocation2 + $0xf0] sm:$0xff]
      %v2257 = vld [vmem:[#allocation2 + $0xf8] sm:$0xff]
      %v2258 = vld [vmem:[#allocation2 + $0x100] sm:$0xff]
      %v2259 = vld [vmem:[#allocation2 + $0x108] sm:$0xff]
      %v2260 = vld [vmem:[#allocation2 + $0x110] sm:$0xff]
      %v2261 = vld [vmem:[#allocation2 + $0x118] sm:$0xff]
      %v2262 = vld [vmem:[#allocation2 + $0x120] sm:$0xff]
      %v2263 = vld [vmem:[#allocation2 + $0x128] sm:$0xff]
      %v2264 = vld [vmem:[#allocation2 + $0x130] sm:$0xff]
      %v2265 = vld [vmem:[#allocation2 + $0x138] sm:$0xff]
      %v2266 = vld [vmem:[#allocation2 + $0x140] sm:$0xff]
      %v2267 = vld [vmem:[#allocation2 + $0x148] sm:$0xff]
      %v2268 = vld [vmem:[#allocation2 + $0x150] sm:$0xff]
      %v2269 = vld [vmem:[#allocation2 + $0x158] sm:$0xff]
      %v2270 = vld [vmem:[#allocation2 + $0x160] sm:$0xff]
      %v2271 = vld [vmem:[#allocation2 + $0x168] sm:$0xff]
      %v2272 = vld [vmem:[#allocation2 + $0x170] sm:$0xff]
      %v2273 = vld [vmem:[#allocation2 + $0x178] sm:$0xff]
      %v2274 = vld [vmem:[#allocation2 + $0x180] sm:$0xff]
      %v2275 = vld [vmem:[#allocation2 + $0x188] sm:$0xff]
      %v2276 = vld [vmem:[#allocation2 + $0x190] sm:$0xff]
      %v2277 = vld [vmem:[#allocation2 + $0x198] sm:$0xff]
      %v2278 = vld [vmem:[#allocation2 + $0x1a0] sm:$0xff]
      %v2279 = vld [vmem:[#allocation2 + $0x1a8] sm:$0xff]
      %v2280 = vld [vmem:[#allocation2 + $0x1b0] sm:$0xff]
      %v2281 = vld [vmem:[#allocation2 + $0x1b8] sm:$0xff]
      %v2282 = vld [vmem:[#allocation2 + $0x1c0] sm:$0xff]
      %v2283 = vld [vmem:[#allocation2 + $0x1c8] sm:$0xff]
      %v2284 = vld [vmem:[#allocation2 + $0x1d0] sm:$0xff]
      %v2285 = vld [vmem:[#allocation2 + $0x1d8] sm:$0xff]
      %v2286 = vld [vmem:[#allocation2 + $0x1e0] sm:$0xff]
      %v2287 = vld [vmem:[#allocation2 + $0x1e8] sm:$0xff]
      %v2288 = vld [vmem:[#allocation2 + $0x1f0] sm:$0xff]
      %v2289 = vld [vmem:[#allocation2 + $0x1f8] sm:$0xff]
      %v2290 = vld [vmem:[#allocation2 + $0x200] sm:$0xff]
      %v2291 = vld [vmem:[#allocation2 + $0x208] sm:$0xff]
      %v2292 = vld [vmem:[#allocation2 + $0x210] sm:$0xff]
      %v2293 = vld [vmem:[#allocation2 + $0x218] sm:$0xff]
      %v2294 = vld [vmem:[#allocation2 + $0x220] sm:$0xff]
      %v2295 = vld [vmem:[#allocation2 + $0x228] sm:$0xff]
      %v2296 = vld [vmem:[#allocation2 + $0x230] sm:$0xff]
      %v2297 = vld [vmem:[#allocation2 + $0x238] sm:$0xff]
      %v2298 = vld [vmem:[#allocation2 + $0x240] sm:$0xff]
      %v2299 = vld [vmem:[#allocation2 + $0x248] sm:$0xff]
      %v2300 = vld [vmem:[#allocation2 + $0x250] sm:$0xff]
      %v2301 = vld [vmem:[#allocation2 + $0x258] sm:$0xff]
      %v2302 = vld [vmem:[#allocation2 + $0x260] sm:$0xff]
      %v2303 = vld [vmem:[#allocation2 + $0x268] sm:$0xff]
      %v2304 = vld [vmem:[#allocation2 + $0x270] sm:$0xff]
      %v2305 = vld [vmem:[#allocation2 + $0x278] sm:$0xff]
      %v2306 = vld [vmem:[#allocation2 + $0x280] sm:$0xff]
      %v2307 = vld [vmem:[#allocation2 + $0x288] sm:$0xff]
      %v2308 = vld [vmem:[#allocation2 + $0x290] sm:$0xff]
      %v2309 = vld [vmem:[#allocation2 + $0x298] sm:$0xff]
      %v2310 = vld [vmem:[#allocation2 + $0x2a0] sm:$0xff]
      %v2311 = vld [vmem:[#allocation2 + $0x2a8] sm:$0xff]
      %v2312 = vld [vmem:[#allocation2 + $0x2b0] sm:$0xff]
      %v2313 = vld [vmem:[#allocation2 + $0x2b8] sm:$0xff]
      %v2314 = vld [vmem:[#allocation2 + $0x2c0] sm:$0xff]
      %v2315 = vld [vmem:[#allocation2 + $0x2c8] sm:$0xff]
      %v2316 = vld [vmem:[#allocation2 + $0x2d0] sm:$0xff]
      %v2317 = vld [vmem:[#allocation2 + $0x2d8] sm:$0xff]
      %v2318 = vld [vmem:[#allocation2 + $0x2e0] sm:$0xff]
      %v2319 = vld [vmem:[#allocation2 + $0x2e8] sm:$0xff]
      %v2320 = vld [vmem:[#allocation2 + $0x2f0] sm:$0xff]
      %v2321 = vld [vmem:[#allocation2 + $0x2f8] sm:$0xff]
      %v2322 = vld [vmem:[#allocation2 + $0x300] sm:$0xff]
      %v2323 = vld [vmem:[#allocation2 + $0x308] sm:$0xff]
      %v2324 = vld [vmem:[#allocation2 + $0x310] sm:$0xff]
      %v2325 = vld [vmem:[#allocation2 + $0x318] sm:$0xff]
      %v2326 = vld [vmem:[#allocation2 + $0x320] sm:$0xff]
      %v2327 = vld [vmem:[#allocation2 + $0x328] sm:$0xff]
      %v2328 = vld [vmem:[#allocation2 + $0x330] sm:$0xff]
      %v2329 = vld [vmem:[#allocation2 + $0x338] sm:$0xff]
      %v2330 = vld [vmem:[#allocation2 + $0x340] sm:$0xff]
      %v2331 = vld [vmem:[#allocation2 + $0x348] sm:$0xff]
      %v2332 = vld [vmem:[#allocation2 + $0x350] sm:$0xff]
      %v2333 = vld [vmem:[#allocation2 + $0x358] sm:$0xff]
      %v2334 = vld [vmem:[#allocation2 + $0x360] sm:$0xff]
      %v2335 = vld [vmem:[#allocation2 + $0x368] sm:$0xff]
      %v2336 = vld [vmem:[#allocation2 + $0x370] sm:$0xff]
      %v2337 = vld [vmem:[#allocation2 + $0x378] sm:$0xff]
      %v2338 = vld [vmem:[%s436 + $0x10] sm:$0xf]
      %v2339 = vld [vmem:[%s436 + $0x14] sm:$0xf]
      %v2340 = vld [vmem:[%s436 + $0x18] sm:$0xf]
      %v2341 = vld [vmem:[%s436 + $0x1c] sm:$0xf]
      %v2342 = vld [vmem:[%s436 + $0x20] sm:$0xf]
      %v2343 = vld [vmem:[%s436 + $0x24] sm:$0xf]
      %v2344 = vld [vmem:[%s436 + $0x28] sm:$0xf]
      %v2345 = vld [vmem:[%s436 + $0x2c] sm:$0xf]
      %v2346 = vld [vmem:[%s436 + $0x30] sm:$0xf]
      %v2347 = vld [vmem:[%s436 + $0x34] sm:$0xf]
      %v2348 = vld [vmem:[%s436 + $0x38] sm:$0xf]
      %v2349 = vld [vmem:[%s436 + $0x3c] sm:$0xf]
      %v2350 = vld [vmem:[%s436 + $0x40] sm:$0xf]
      %v2351 = vld [vmem:[%s436 + $0x44] sm:$0xf]
      %v2352 = vld [vmem:[%s436 + $0x48] sm:$0xf]
      %v2353 = vld [vmem:[%s436 + $0x4c] sm:$0xf]
      %v2354 = vld [vmem:[%s436 + $0x50] sm:$0xf]
      %v2355 = vld [vmem:[%s436 + $0x54] sm:$0xf]
      %v2356 = vld [vmem:[%s436 + $0x58] sm:$0xf]
      %v2357 = vld [vmem:[%s436 + $0x5c] sm:$0xf]
      %v2358 = vld [vmem:[%s436 + $0x60] sm:$0xf]
      %v2359 = vld [vmem:[%s436 + $0x64] sm:$0xf]
      %v2360 = vld [vmem:[%s436 + $0x68] sm:$0xf]
      %v2361 = vld [vmem:[%s436 + $0x6c] sm:$0xf]
      %v2362 = vld [vmem:[%s436 + $0x70] sm:$0xf]
      %v2363 = vld [vmem:[%s436 + $0x74] sm:$0xf]
      %v2364 = vld [vmem:[%s436 + $0x78] sm:$0xf]
      %v2365 = vld [vmem:[%s436 + $0x7c] sm:$0xf]
      %v2366 = vld [vmem:[%s436 + $0x80] sm:$0xf]
      %v2367 = vld [vmem:[%s436 + $0x84] sm:$0xf]
      %v2368 = vld [vmem:[%s436 + $0x88] sm:$0xf]
      %v2369 = vld [vmem:[%s436 + $0x8c] sm:$0xf]
      %v2370 = vld [vmem:[%s436 + $0x90] sm:$0xf]
      %v2371 = vld [vmem:[%s436 + $0x94] sm:$0xf]
      %v2372 = vld [vmem:[%s436 + $0x98] sm:$0xf]
      %v2373 = vld [vmem:[%s436 + $0x9c] sm:$0xf]
      %v2374 = vld [vmem:[%s436 + $0xa0] sm:$0xf]
      %v2375 = vld [vmem:[%s436 + $0xa4] sm:$0xf]
      %v2376 = vld [vmem:[%s436 + $0xa8] sm:$0xf]
      %v2377 = vld [vmem:[%s436 + $0xac] sm:$0xf]
      %v2378 = vld [vmem:[%s436 + $0xb0] sm:$0xf]
      %v2379 = vld [vmem:[%s436 + $0xb4] sm:$0xf]
      %v2380 = vld [vmem:[%s436 + $0xb8] sm:$0xf]
      %v2381 = vld [vmem:[%s436 + $0xbc] sm:$0xf]
      %v2382 = vld [vmem:[%s436 + $0xc0] sm:$0xf]
      %v2383 = vld [vmem:[%s436 + $0xc4] sm:$0xf]
      %v2384 = vld [vmem:[%s436 + $0xc8] sm:$0xf]
      %v2385 = vld [vmem:[%s436 + $0xcc] sm:$0xf]
      %v2386 = vld [vmem:[%s436 + $0xd0] sm:$0xf]
      %v2387 = vld [vmem:[%s436 + $0xd4] sm:$0xf]
      %v2388 = vld [vmem:[%s436 + $0xd8] sm:$0xf]
      %v2389 = vld [vmem:[%s436 + $0xdc] sm:$0xf]
      %v2390 = vld [vmem:[%s436 + $0xe0] sm:$0xf]
      %v2391 = vld [vmem:[%s436 + $0xe4] sm:$0xf]
      %v2392 = vld [vmem:[%s436 + $0xe8] sm:$0xf]
      %v2393 = vld [vmem:[%s436 + $0xec] sm:$0xf]
      %s2394 = scalar_lea.vmem %s1, 192
      %v2395 = vld [vmem:[%s2394] sm:$0xff]
      %v2396 = vld [vmem:[%s2394 + $0x8] sm:$0xff]
      %v2397 = vld [vmem:[%s2394 + $0x10] sm:$0xff]
      %v2398 = vld [vmem:[%s2394 + $0x18] sm:$0xff]
      %v2399 = vld [vmem:[%s2394 + $0x20] sm:$0xff]
      %v2400 = vld [vmem:[%s2394 + $0x28] sm:$0xff]
      %v2401 = vld [vmem:[%s2394 + $0x30] sm:$0xff]
      %v2402 = vld [vmem:[%s2394 + $0x38] sm:$0xff]
      %v2403 = vld [vmem:[%s2394 + $0x40] sm:$0xff]
      %v2404 = vld [vmem:[%s2394 + $0x48] sm:$0xff]
      %v2405 = vld [vmem:[%s2394 + $0x50] sm:$0xff]
      %v2406 = vld [vmem:[%s2394 + $0x58] sm:$0xff]
      %v2463 = vunpack.c.l.b16 %v2338
      %v2464 = vunpack.c.l.b16 %v2339
      %v2465 = vunpack.c.l.b16 %v2340
      %v2466 = vunpack.c.l.b16 %v2341
      %v2467 = vunpack.c.l.b16 %v2342
      %v2468 = vunpack.c.l.b16 %v2343
      %v2469 = vunpack.c.l.b16 %v2344
      %v2470 = vunpack.c.l.b16 %v2345
      %v2471 = vunpack.c.l.b16 %v2346
      %v2472 = vunpack.c.l.b16 %v2347
      %v2473 = vunpack.c.l.b16 %v2348
      %v2474 = vunpack.c.l.b16 %v2349
      %v2475 = vunpack.c.l.b16 %v2350
      %v2476 = vunpack.c.l.b16 %v2351
      %v2477 = vunpack.c.l.b16 %v2352
      %v2478 = vunpack.c.l.b16 %v2353
      %v2479 = vunpack.c.l.b16 %v2354
      %v2480 = vunpack.c.l.b16 %v2355
      %v2481 = vunpack.c.l.b16 %v2356
      %v2482 = vunpack.c.l.b16 %v2357
      %v2483 = vunpack.c.l.b16 %v2358
      %v2484 = vunpack.c.l.b16 %v2359
      %v2485 = vunpack.c.l.b16 %v2360
      %v2486 = vunpack.c.l.b16 %v2361
      %v2487 = vunpack.c.l.b16 %v2362
      %v2488 = vunpack.c.l.b16 %v2363
      %v2489 = vunpack.c.l.b16 %v2364
      %v2490 = vunpack.c.l.b16 %v2365
      %v2491 = vunpack.c.l.b16 %v2366
      %v2492 = vunpack.c.l.b16 %v2367
      %v2493 = vunpack.c.l.b16 %v2368
      %v2494 = vunpack.c.l.b16 %v2369
      %v2495 = vunpack.c.l.b16 %v2370
      %v2496 = vunpack.c.l.b16 %v2371
      %v2497 = vunpack.c.l.b16 %v2372
      %v2498 = vunpack.c.l.b16 %v2373
      %v2499 = vunpack.c.l.b16 %v2374
      %v2500 = vunpack.c.l.b16 %v2375
      %v2501 = vunpack.c.l.b16 %v2376
      %v2502 = vunpack.c.l.b16 %v2377
      %v2503 = vunpack.c.l.b16 %v2378
      %v2504 = vunpack.c.l.b16 %v2379
      %v2505 = vunpack.c.l.b16 %v2380
      %v2506 = vunpack.c.l.b16 %v2381
      %v2507 = vunpack.c.l.b16 %v2382
      %v2508 = vunpack.c.l.b16 %v2383
      %v2509 = vunpack.c.l.b16 %v2384
      %v2510 = vunpack.c.l.b16 %v2385
      %v2511 = vunpack.c.l.b16 %v2386
      %v2512 = vunpack.c.l.b16 %v2387
      %v2513 = vunpack.c.l.b16 %v2388
      %v2514 = vunpack.c.l.b16 %v2389
      %v2515 = vunpack.c.l.b16 %v2390
      %v2516 = vunpack.c.l.b16 %v2391
      %v2517 = vunpack.c.l.b16 %v2392
      %v2518 = vunpack.c.l.b16 %v2393
      %v2519 = vpack.c.b16 %v2464, %v2463
      %v2520 = vpack.c.b16 %v2466, %v2465
      %v2521 = vpack.c.b16 %v2468, %v2467
      %v2522 = vpack.c.b16 %v2470, %v2469
      %v2523 = vpack.c.b16 %v2472, %v2471
      %v2524 = vpack.c.b16 %v2474, %v2473
      %v2525 = vpack.c.b16 %v2476, %v2475
      %v2526 = vpack.c.b16 %v2478, %v2477
      %v2527 = vpack.c.b16 %v2480, %v2479
      %v2528 = vpack.c.b16 %v2482, %v2481
      %v2529 = vpack.c.b16 %v2484, %v2483
      %v2530 = vpack.c.b16 %v2486, %v2485
      %v2531 = vpack.c.b16 %v2488, %v2487
      %v2532 = vpack.c.b16 %v2490, %v2489
      %v2533 = vpack.c.b16 %v2492, %v2491
      %v2534 = vpack.c.b16 %v2494, %v2493
      %v2535 = vpack.c.b16 %v2496, %v2495
      %v2536 = vpack.c.b16 %v2498, %v2497
      %v2537 = vpack.c.b16 %v2500, %v2499
      %v2538 = vpack.c.b16 %v2502, %v2501
      %v2539 = vpack.c.b16 %v2504, %v2503
      %v2540 = vpack.c.b16 %v2506, %v2505
      %v2541 = vpack.c.b16 %v2508, %v2507
      %v2542 = vpack.c.b16 %v2510, %v2509
      %v2543 = vpack.c.b16 %v2512, %v2511
      %v2544 = vpack.c.b16 %v2514, %v2513
      %v2545 = vpack.c.b16 %v2516, %v2515
      %v2546 = vpack.c.b16 %v2518, %v2517
      %v2559 = vunpack.c.l.b16 %v2395
      %v2560 = vunpack.c.h.b16 %v2395
      %v2561 = vunpack.c.l.b16 %v2396
      %v2562 = vunpack.c.h.b16 %v2396
      %v2563 = vunpack.c.l.b16 %v2397
      %v2564 = vunpack.c.h.b16 %v2397
      %v2565 = vunpack.c.l.b16 %v2398
      %v2566 = vunpack.c.h.b16 %v2398
      %v2567 = vunpack.c.l.b16 %v2399
      %v2568 = vunpack.c.h.b16 %v2399
      %v2569 = vunpack.c.l.b16 %v2400
      %v2570 = vunpack.c.h.b16 %v2400
      %v2571 = vunpack.c.l.b16 %v2401
      %v2572 = vunpack.c.h.b16 %v2401
      %v2573 = vunpack.c.l.b16 %v2402
      %v2574 = vunpack.c.h.b16 %v2402
      %v2575 = vunpack.c.l.b16 %v2403
      %v2576 = vunpack.c.h.b16 %v2403
      %v2577 = vunpack.c.l.b16 %v2404
      %v2578 = vunpack.c.h.b16 %v2404
      %v2579 = vunpack.c.l.b16 %v2405
      %v2580 = vunpack.c.h.b16 %v2405
      %v2581 = vunpack.c.l.b16 %v2406
      %v2582 = vunpack.c.h.b16 %v2406
      %v2583 = vpack.c.b16 %v2561, %v2559
      %v2584 = vpack.c.b16 %v2562, %v2560
      %v2585 = vpack.c.b16 %v2565, %v2563
      %v2586 = vpack.c.b16 %v2566, %v2564
      %v2587 = vpack.c.b16 %v2569, %v2567
      %v2588 = vpack.c.b16 %v2570, %v2568
      %v2589 = vpack.c.b16 %v2573, %v2571
      %v2590 = vpack.c.b16 %v2574, %v2572
      %v2591 = vpack.c.b16 %v2577, %v2575
      %v2592 = vpack.c.b16 %v2578, %v2576
      %v2593 = vpack.c.b16 %v2581, %v2579
      %v2594 = vpack.c.b16 %v2582, %v2580
      %v2608 = vsel %vm713, %v2519, 0
      %v2611 = vsel %vm713, %v2520, 0
      %v2614 = vsel %vm713, %v2521, 0
      %v2617 = vsel %vm713, %v2522, 0
      %v2620 = vsel %vm713, %v2523, 0
      %v2623 = vsel %vm713, %v2524, 0
      %v2626 = vsel %vm713, %v2525, 0
      %v2629 = vsel %vm713, %v2526, 0
      %v2632 = vsel %vm713, %v2527, 0
      %v2635 = vsel %vm713, %v2528, 0
      %v2638 = vsel %vm713, %v2529, 0
      %v2641 = vsel %vm713, %v2530, 0
      %v2644 = vsel %vm713, %v2531, 0
      %v2647 = vsel %vm713, %v2532, 0
      %v2650 = vsel %vm713, %v2533, 0
      %v2653 = vsel %vm713, %v2534, 0
      %v2656 = vsel %vm713, %v2535, 0
      %v2659 = vsel %vm713, %v2536, 0
      %v2662 = vsel %vm713, %v2537, 0
      %v2665 = vsel %vm713, %v2538, 0
      %v2668 = vsel %vm713, %v2539, 0
      %v2671 = vsel %vm713, %v2540, 0
      %v2674 = vsel %vm713, %v2541, 0
      %v2677 = vsel %vm713, %v2542, 0
      %v2680 = vsel %vm713, %v2543, 0
      %v2683 = vsel %vm713, %v2544, 0
      %v2686 = vsel %vm713, %v2545, 0
      %v2689 = vsel %vm713, %v2546, 0
      %2691 = vmatprep.subr.bf16.mxu0 %v2584
      %2692 = vmatpush1.bf16.msra.mxu0 %v2583
      %2693 = vmatprep.subr.bf16.mxu0 %v2586
      %2694 = vmatpush1.bf16.msra.mxu0 %v2585
      %2695 = vmatprep.subr.bf16.mxu0 %v2588
      %2696 = vmatpush1.bf16.msra.mxu0 %v2587
      %2697 = vmatprep.subr.bf16.mxu0 %v2590
      %2698 = vmatpush1.bf16.msra.mxu0 %v2589
      %2699 = vmatprep.subr.bf16.mxu0 %v2592
      %2700 = vmatpush1.bf16.msra.mxu0 %v2591
      %2701 = vmatprep.subr.bf16.mxu0 %v2594
      %2702 = vmatpush1.bf16.msra.mxu0 %v2593
      %2703 = vmatprep.subr.bf16.mxu0 0
      %2704 = vmatpush1.bf16.msra.mxu0 0
      %2705 = vmatprep.subr.bf16.mxu0 0
      %2706 = vmatpush1.bf16.msra.mxu0 0
      %2707 = vmatprep.subr.bf16.mxu0 0
      %2708 = vmatpush1.bf16.msra.mxu0 0
      %2709 = vmatprep.subr.bf16.mxu0 0
      %2710 = vmatpush1.bf16.msra.mxu0 0
      %2711 = vmatprep.subr.bf16.mxu0 0
      %2712 = vmatpush1.bf16.msra.mxu0 0
      %2713 = vmatprep.subr.bf16.mxu0 0
      %2714 = vmatpush1.bf16.msra.mxu0 0
      %2715 = vmatprep.subr.bf16.mxu0 0
      %2716 = vmatpush1.bf16.msra.mxu0 0
      %2717 = vmatprep.subr.bf16.mxu0 0
      %2718 = vmatpush1.bf16.msra.mxu0 0
      %2719 = vmatprep.subr.bf16.mxu0 0
      %2720 = vmatpush1.bf16.msra.mxu0 0
      %2721 = vmatprep.subr.bf16.mxu0 0
      %2722 = vmatpush1.bf16.msra.mxu0 0
      %2723 = vmatprep.mubr.bf16.mxu0 0
      %2724 = vmatmul.mubr.bf16.gmra.mrb[0].mxu0 %v2608
      %v2725 = vpop.f32.mrb[0].mxu0
      %v2726 = vadd.f32 0.0, %v2725
      %v2727 = vpop.f32.mrb[0].mxu0
      %v2728 = vadd.f32 0.0, %v2727
      %v2729 = vpop.f32.mrb[0].mxu0
      %v2730 = vadd.f32 0.0, %v2729
      %v2731 = vpop.f32.mrb[0].mxu0
      %v2732 = vadd.f32 0.0, %v2731
      %2733 = vmatprep.mubr.bf16.mxu0 0
      %2734 = vmatmul.mubr.bf16.gmra.mrb[0].mxu0 %v2611
      %v2735 = vpop.f32.mrb[0].mxu0
      %v2736 = vadd.f32 0.0, %v2735
      %v2737 = vpop.f32.mrb[0].mxu0
      %v2738 = vadd.f32 0.0, %v2737
      %v2739 = vpop.f32.mrb[0].mxu0
      %v2740 = vadd.f32 0.0, %v2739
      %v2741 = vpop.f32.mrb[0].mxu0
      %v2742 = vadd.f32 0.0, %v2741
      %2743 = vmatprep.mubr.bf16.mxu0 0
      %2744 = vmatmul.mubr.bf16.gmra.mrb[0].mxu0 %v2614
      %v2745 = vpop.f32.mrb[0].mxu0
      %v2746 = vadd.f32 0.0, %v2745
      %v2747 = vpop.f32.mrb[0].mxu0
      %v2748 = vadd.f32 0.0, %v2747
      %v2749 = vpop.f32.mrb[0].mxu0
      %v2750 = vadd.f32 0.0, %v2749
      %v2751 = vpop.f32.mrb[0].mxu0
      %v2752 = vadd.f32 0.0, %v2751
      %2753 = vmatprep.mubr.bf16.mxu0 0
      %2754 = vmatmul.mubr.bf16.gmra.mrb[0].mxu0 %v2617
      %v2755 = vpop.f32.mrb[0].mxu0
      %v2756 = vadd.f32 0.0, %v2755
      %v2757 = vpop.f32.mrb[0].mxu0
      %v2758 = vadd.f32 0.0, %v2757
      %v2759 = vpop.f32.mrb[0].mxu0
      %v2760 = vadd.f32 0.0, %v2759
      %v2761 = vpop.f32.mrb[0].mxu0
      %v2762 = vadd.f32 0.0, %v2761
      %2763 = vmatprep.mubr.bf16.mxu0 0
      %2764 = vmatmul.mubr.bf16.gmra.mrb[0].mxu0 %v2620
      %v2765 = vpop.f32.mrb[0].mxu0
      %v2766 = vadd.f32 0.0, %v2765
      %v2767 = vpop.f32.mrb[0].mxu0
      %v2768 = vadd.f32 0.0, %v2767
      %v2769 = vpop.f32.mrb[0].mxu0
      %v2770 = vadd.f32 0.0, %v2769
      %v2771 = vpop.f32.mrb[0].mxu0
      %v2772 = vadd.f32 0.0, %v2771
      %2773 = vmatprep.mubr.bf16.mxu0 0
      %2774 = vmatmul.mubr.bf16.gmra.mrb[0].mxu0 %v2623
      %v2775 = vpop.f32.mrb[0].mxu0
      %v2776 = vadd.f32 0.0, %v2775
      %v2777 = vpop.f32.mrb[0].mxu0
      %v2778 = vadd.f32 0.0, %v2777
      %v2779 = vpop.f32.mrb[0].mxu0
      %v2780 = vadd.f32 0.0, %v2779
      %v2781 = vpop.f32.mrb[0].mxu0
      %v2782 = vadd.f32 0.0, %v2781
      %2783 = vmatprep.mubr.bf16.mxu0 0
      %2784 = vmatmul.mubr.bf16.gmra.mrb[0].mxu0 %v2626
      %v2785 = vpop.f32.mrb[0].mxu0
      %v2786 = vadd.f32 0.0, %v2785
      %v2787 = vpop.f32.mrb[0].mxu0
      %v2788 = vadd.f32 0.0, %v2787
      %v2789 = vpop.f32.mrb[0].mxu0
      %v2790 = vadd.f32 0.0, %v2789
      %v2791 = vpop.f32.mrb[0].mxu0
      %v2792 = vadd.f32 0.0, %v2791
      %2793 = vmatprep.mubr.bf16.mxu0 0
      %2794 = vmatmul.mubr.bf16.gmra.mrb[0].mxu0 %v2629
      %v2795 = vpop.f32.mrb[0].mxu0
      %v2796 = vadd.f32 0.0, %v2795
      %v2797 = vpop.f32.mrb[0].mxu0
      %v2798 = vadd.f32 0.0, %v2797
      %v2799 = vpop.f32.mrb[0].mxu0
      %v2800 = vadd.f32 0.0, %v2799
      %v2801 = vpop.f32.mrb[0].mxu0
      %v2802 = vadd.f32 0.0, %v2801
      %2803 = vmatprep.mubr.bf16.mxu0 0
      %2804 = vmatmul.mubr.bf16.gmra.mrb[0].mxu0 %v2632
      %v2805 = vpop.f32.mrb[0].mxu0
      %v2806 = vadd.f32 0.0, %v2805
      %v2807 = vpop.f32.mrb[0].mxu0
      %v2808 = vadd.f32 0.0, %v2807
      %v2809 = vpop.f32.mrb[0].mxu0
      %v2810 = vadd.f32 0.0, %v2809
      %v2811 = vpop.f32.mrb[0].mxu0
      %v2812 = vadd.f32 0.0, %v2811
      %2813 = vmatprep.mubr.bf16.mxu0 0
      %2814 = vmatmul.mubr.bf16.gmra.mrb[0].mxu0 %v2635
      %v2815 = vpop.f32.mrb[0].mxu0
      %v2816 = vadd.f32 0.0, %v2815
      %v2817 = vpop.f32.mrb[0].mxu0
      %v2818 = vadd.f32 0.0, %v2817
      %v2819 = vpop.f32.mrb[0].mxu0
      %v2820 = vadd.f32 0.0, %v2819
      %v2821 = vpop.f32.mrb[0].mxu0
      %v2822 = vadd.f32 0.0, %v2821
      %2823 = vmatprep.mubr.bf16.mxu0 0
      %2824 = vmatmul.mubr.bf16.gmra.mrb[0].mxu0 %v2638
      %v2825 = vpop.f32.mrb[0].mxu0
      %v2826 = vadd.f32 0.0, %v2825
      %v2827 = vpop.f32.mrb[0].mxu0
      %v2828 = vadd.f32 0.0, %v2827
      %v2829 = vpop.f32.mrb[0].mxu0
      %v2830 = vadd.f32 0.0, %v2829
      %v2831 = vpop.f32.mrb[0].mxu0
      %v2832 = vadd.f32 0.0, %v2831
      %2833 = vmatprep.mubr.bf16.mxu0 0
      %2834 = vmatmul.mubr.bf16.gmra.mrb[0].mxu0 %v2641
      %v2835 = vpop.f32.mrb[0].mxu0
      %v2836 = vadd.f32 0.0, %v2835
      %v2837 = vpop.f32.mrb[0].mxu0
      %v2838 = vadd.f32 0.0, %v2837
      %v2839 = vpop.f32.mrb[0].mxu0
      %v2840 = vadd.f32 0.0, %v2839
      %v2841 = vpop.f32.mrb[0].mxu0
      %v2842 = vadd.f32 0.0, %v2841
      %2843 = vmatprep.mubr.bf16.mxu0 0
      %2844 = vmatmul.mubr.bf16.gmra.mrb[0].mxu0 %v2644
      %v2845 = vpop.f32.mrb[0].mxu0
      %v2846 = vadd.f32 0.0, %v2845
      %v2847 = vpop.f32.mrb[0].mxu0
      %v2848 = vadd.f32 0.0, %v2847
      %v2849 = vpop.f32.mrb[0].mxu0
      %v2850 = vadd.f32 0.0, %v2849
      %v2851 = vpop.f32.mrb[0].mxu0
      %v2852 = vadd.f32 0.0, %v2851
      %2853 = vmatprep.mubr.bf16.mxu0 0
      %2854 = vmatmul.mubr.bf16.gmra.mrb[0].mxu0 %v2647
      %v2855 = vpop.f32.mrb[0].mxu0
      %v2856 = vadd.f32 0.0, %v2855
      %v2857 = vpop.f32.mrb[0].mxu0
      %v2858 = vadd.f32 0.0, %v2857
      %v2859 = vpop.f32.mrb[0].mxu0
      %v2860 = vadd.f32 0.0, %v2859
      %v2861 = vpop.f32.mrb[0].mxu0
      %v2862 = vadd.f32 0.0, %v2861
      %2863 = vmatprep.mubr.bf16.mxu0 0
      %2864 = vmatmul.mubr.bf16.gmra.mrb[0].mxu0 %v2650
      %v2865 = vpop.f32.mrb[0].mxu0
      %v2866 = vadd.f32 0.0, %v2865
      %v2867 = vpop.f32.mrb[0].mxu0
      %v2868 = vadd.f32 0.0, %v2867
      %v2869 = vpop.f32.mrb[0].mxu0
      %v2870 = vadd.f32 0.0, %v2869
      %v2871 = vpop.f32.mrb[0].mxu0
      %v2872 = vadd.f32 0.0, %v2871
      %2873 = vmatprep.mubr.bf16.mxu0 0
      %2874 = vmatmul.mubr.bf16.gmra.mrb[0].mxu0 %v2653
      %v2875 = vpop.f32.mrb[0].mxu0
      %v2876 = vadd.f32 0.0, %v2875
      %v2877 = vpop.f32.mrb[0].mxu0
      %v2878 = vadd.f32 0.0, %v2877
      %v2879 = vpop.f32.mrb[0].mxu0
      %v2880 = vadd.f32 0.0, %v2879
      %v2881 = vpop.f32.mrb[0].mxu0
      %v2882 = vadd.f32 0.0, %v2881
      %2883 = vmatprep.mubr.bf16.mxu0 0
      %2884 = vmatmul.mubr.bf16.gmra.mrb[0].mxu0 %v2656
      %v2885 = vpop.f32.mrb[0].mxu0
      %v2886 = vadd.f32 0.0, %v2885
      %v2887 = vpop.f32.mrb[0].mxu0
      %v2888 = vadd.f32 0.0, %v2887
      %v2889 = vpop.f32.mrb[0].mxu0
      %v2890 = vadd.f32 0.0, %v2889
      %v2891 = vpop.f32.mrb[0].mxu0
      %v2892 = vadd.f32 0.0, %v2891
      %2893 = vmatprep.mubr.bf16.mxu0 0
      %2894 = vmatmul.mubr.bf16.gmra.mrb[0].mxu0 %v2659
      %v2895 = vpop.f32.mrb[0].mxu0
      %v2896 = vadd.f32 0.0, %v2895
      %v2897 = vpop.f32.mrb[0].mxu0
      %v2898 = vadd.f32 0.0, %v2897
      %v2899 = vpop.f32.mrb[0].mxu0
      %v2900 = vadd.f32 0.0, %v2899
      %v2901 = vpop.f32.mrb[0].mxu0
      %v2902 = vadd.f32 0.0, %v2901
      %2903 = vmatprep.mubr.bf16.mxu0 0
      %2904 = vmatmul.mubr.bf16.gmra.mrb[0].mxu0 %v2662
      %v2905 = vpop.f32.mrb[0].mxu0
      %v2906 = vadd.f32 0.0, %v2905
      %v2907 = vpop.f32.mrb[0].mxu0
      %v2908 = vadd.f32 0.0, %v2907
      %v2909 = vpop.f32.mrb[0].mxu0
      %v2910 = vadd.f32 0.0, %v2909
      %v2911 = vpop.f32.mrb[0].mxu0
      %v2912 = vadd.f32 0.0, %v2911
      %2913 = vmatprep.mubr.bf16.mxu0 0
      %2914 = vmatmul.mubr.bf16.gmra.mrb[0].mxu0 %v2665
      %v2915 = vpop.f32.mrb[0].mxu0
      %v2916 = vadd.f32 0.0, %v2915
      %v2917 = vpop.f32.mrb[0].mxu0
      %v2918 = vadd.f32 0.0, %v2917
      %v2919 = vpop.f32.mrb[0].mxu0
      %v2920 = vadd.f32 0.0, %v2919
      %v2921 = vpop.f32.mrb[0].mxu0
      %v2922 = vadd.f32 0.0, %v2921
      %2923 = vmatprep.mubr.bf16.mxu0 0
      %2924 = vmatmul.mubr.bf16.gmra.mrb[0].mxu0 %v2668
      %v2925 = vpop.f32.mrb[0].mxu0
      %v2926 = vadd.f32 0.0, %v2925
      %v2927 = vpop.f32.mrb[0].mxu0
      %v2928 = vadd.f32 0.0, %v2927
      %v2929 = vpop.f32.mrb[0].mxu0
      %v2930 = vadd.f32 0.0, %v2929
      %v2931 = vpop.f32.mrb[0].mxu0
      %v2932 = vadd.f32 0.0, %v2931
      %2933 = vmatprep.mubr.bf16.mxu0 0
      %2934 = vmatmul.mubr.bf16.gmra.mrb[0].mxu0 %v2671
      %v2935 = vpop.f32.mrb[0].mxu0
      %v2936 = vadd.f32 0.0, %v2935
      %v2937 = vpop.f32.mrb[0].mxu0
      %v2938 = vadd.f32 0.0, %v2937
      %v2939 = vpop.f32.mrb[0].mxu0
      %v2940 = vadd.f32 0.0, %v2939
      %v2941 = vpop.f32.mrb[0].mxu0
      %v2942 = vadd.f32 0.0, %v2941
      %2943 = vmatprep.mubr.bf16.mxu0 0
      %2944 = vmatmul.mubr.bf16.gmra.mrb[0].mxu0 %v2674
      %v2945 = vpop.f32.mrb[0].mxu0
      %v2946 = vadd.f32 0.0, %v2945
      %v2947 = vpop.f32.mrb[0].mxu0
      %v2948 = vadd.f32 0.0, %v2947
      %v2949 = vpop.f32.mrb[0].mxu0
      %v2950 = vadd.f32 0.0, %v2949
      %v2951 = vpop.f32.mrb[0].mxu0
      %v2952 = vadd.f32 0.0, %v2951
      %2953 = vmatprep.mubr.bf16.mxu0 0
      %2954 = vmatmul.mubr.bf16.gmra.mrb[0].mxu0 %v2677
      %v2955 = vpop.f32.mrb[0].mxu0
      %v2956 = vadd.f32 0.0, %v2955
      %v2957 = vpop.f32.mrb[0].mxu0
      %v2958 = vadd.f32 0.0, %v2957
      %v2959 = vpop.f32.mrb[0].mxu0
      %v2960 = vadd.f32 0.0, %v2959
      %v2961 = vpop.f32.mrb[0].mxu0
      %v2962 = vadd.f32 0.0, %v2961
      %2963 = vmatprep.mubr.bf16.mxu0 0
      %2964 = vmatmul.mubr.bf16.gmra.mrb[0].mxu0 %v2680
      %v2965 = vpop.f32.mrb[0].mxu0
      %v2966 = vadd.f32 0.0, %v2965
      %v2967 = vpop.f32.mrb[0].mxu0
      %v2968 = vadd.f32 0.0, %v2967
      %v2969 = vpop.f32.mrb[0].mxu0
      %v2970 = vadd.f32 0.0, %v2969
      %v2971 = vpop.f32.mrb[0].mxu0
      %v2972 = vadd.f32 0.0, %v2971
      %2973 = vmatprep.mubr.bf16.mxu0 0
      %2974 = vmatmul.mubr.bf16.gmra.mrb[0].mxu0 %v2683
      %v2975 = vpop.f32.mrb[0].mxu0
      %v2976 = vadd.f32 0.0, %v2975
      %v2977 = vpop.f32.mrb[0].mxu0
      %v2978 = vadd.f32 0.0, %v2977
      %v2979 = vpop.f32.mrb[0].mxu0
      %v2980 = vadd.f32 0.0, %v2979
      %v2981 = vpop.f32.mrb[0].mxu0
      %v2982 = vadd.f32 0.0, %v2981
      %2983 = vmatprep.mubr.bf16.mxu0 0
      %2984 = vmatmul.mubr.bf16.gmra.mrb[0].mxu0 %v2686
      %v2985 = vpop.f32.mrb[0].mxu0
      %v2986 = vadd.f32 0.0, %v2985
      %v2987 = vpop.f32.mrb[0].mxu0
      %v2988 = vadd.f32 0.0, %v2987
      %v2989 = vpop.f32.mrb[0].mxu0
      %v2990 = vadd.f32 0.0, %v2989
      %v2991 = vpop.f32.mrb[0].mxu0
      %v2992 = vadd.f32 0.0, %v2991
      %2993 = vmatprep.mubr.bf16.mxu0 0
      %2994 = vmatmul.mubr.bf16.gmra.mrb[0].mxu0 %v2689
      %v2995 = vpop.f32.mrb[0].mxu0
      %v2996 = vadd.f32 0.0, %v2995
      %v2997 = vpop.f32.mrb[0].mxu0
      %v2998 = vadd.f32 0.0, %v2997
      %v2999 = vpop.f32.mrb[0].mxu0
      %v3000 = vadd.f32 0.0, %v2999
      %v3001 = vpop.f32.mrb[0].mxu0
      %v3002 = vadd.f32 0.0, %v3001
      %3003 = vdwg.mxu0
      %v3004 = vadd.f32 %v2226, %v2726
      %v3005 = vadd.f32 %v2227, %v2728
      %v3006 = vadd.f32 %v2228, %v2730
      %v3007 = vadd.f32 %v2229, %v2732
      %v3008 = vadd.f32 %v2230, %v2736
      %v3009 = vadd.f32 %v2231, %v2738
      %v3010 = vadd.f32 %v2232, %v2740
      %v3011 = vadd.f32 %v2233, %v2742
      %v3012 = vadd.f32 %v2234, %v2746
      %v3013 = vadd.f32 %v2235, %v2748
      %v3014 = vadd.f32 %v2236, %v2750
      %v3015 = vadd.f32 %v2237, %v2752
      %v3016 = vadd.f32 %v2238, %v2756
      %v3017 = vadd.f32 %v2239, %v2758
      %v3018 = vadd.f32 %v2240, %v2760
      %v3019 = vadd.f32 %v2241, %v2762
      %v3020 = vadd.f32 %v2242, %v2766
      %v3021 = vadd.f32 %v2243, %v2768
      %v3022 = vadd.f32 %v2244, %v2770
      %v3023 = vadd.f32 %v2245, %v2772
      %v3024 = vadd.f32 %v2246, %v2776
      %v3025 = vadd.f32 %v2247, %v2778
      %v3026 = vadd.f32 %v2248, %v2780
      %v3027 = vadd.f32 %v2249, %v2782
      %v3028 = vadd.f32 %v2250, %v2786
      %v3029 = vadd.f32 %v2251, %v2788
      %v3030 = vadd.f32 %v2252, %v2790
      %v3031 = vadd.f32 %v2253, %v2792
      %v3032 = vadd.f32 %v2254, %v2796
      %v3033 = vadd.f32 %v2255, %v2798
      %v3034 = vadd.f32 %v2256, %v2800
      %v3035 = vadd.f32 %v2257, %v2802
      %v3036 = vadd.f32 %v2258, %v2806
      %v3037 = vadd.f32 %v2259, %v2808
      %v3038 = vadd.f32 %v2260, %v2810
      %v3039 = vadd.f32 %v2261, %v2812
      %v3040 = vadd.f32 %v2262, %v2816
      %v3041 = vadd.f32 %v2263, %v2818
      %v3042 = vadd.f32 %v2264, %v2820
      %v3043 = vadd.f32 %v2265, %v2822
      %v3044 = vadd.f32 %v2266, %v2826
      %v3045 = vadd.f32 %v2267, %v2828
      %v3046 = vadd.f32 %v2268, %v2830
      %v3047 = vadd.f32 %v2269, %v2832
      %v3048 = vadd.f32 %v2270, %v2836
      %v3049 = vadd.f32 %v2271, %v2838
      %v3050 = vadd.f32 %v2272, %v2840
      %v3051 = vadd.f32 %v2273, %v2842
      %v3052 = vadd.f32 %v2274, %v2846
      %v3053 = vadd.f32 %v2275, %v2848
      %v3054 = vadd.f32 %v2276, %v2850
      %v3055 = vadd.f32 %v2277, %v2852
      %v3056 = vadd.f32 %v2278, %v2856
      %v3057 = vadd.f32 %v2279, %v2858
      %v3058 = vadd.f32 %v2280, %v2860
      %v3059 = vadd.f32 %v2281, %v2862
      %v3060 = vadd.f32 %v2282, %v2866
      %v3061 = vadd.f32 %v2283, %v2868
      %v3062 = vadd.f32 %v2284, %v2870
      %v3063 = vadd.f32 %v2285, %v2872
      %v3064 = vadd.f32 %v2286, %v2876
      %v3065 = vadd.f32 %v2287, %v2878
      %v3066 = vadd.f32 %v2288, %v2880
      %v3067 = vadd.f32 %v2289, %v2882
      %v3068 = vadd.f32 %v2290, %v2886
      %v3069 = vadd.f32 %v2291, %v2888
      %v3070 = vadd.f32 %v2292, %v2890
      %v3071 = vadd.f32 %v2293, %v2892
      %v3072 = vadd.f32 %v2294, %v2896
      %v3073 = vadd.f32 %v2295, %v2898
      %v3074 = vadd.f32 %v2296, %v2900
      %v3075 = vadd.f32 %v2297, %v2902
      %v3076 = vadd.f32 %v2298, %v2906
      %v3077 = vadd.f32 %v2299, %v2908
      %v3078 = vadd.f32 %v2300, %v2910
      %v3079 = vadd.f32 %v2301, %v2912
      %v3080 = vadd.f32 %v2302, %v2916
      %v3081 = vadd.f32 %v2303, %v2918
      %v3082 = vadd.f32 %v2304, %v2920
      %v3083 = vadd.f32 %v2305, %v2922
      %v3084 = vadd.f32 %v2306, %v2926
      %v3085 = vadd.f32 %v2307, %v2928
      %v3086 = vadd.f32 %v2308, %v2930
      %v3087 = vadd.f32 %v2309, %v2932
      %v3088 = vadd.f32 %v2310, %v2936
      %v3089 = vadd.f32 %v2311, %v2938
      %v3090 = vadd.f32 %v2312, %v2940
      %v3091 = vadd.f32 %v2313, %v2942
      %v3092 = vadd.f32 %v2314, %v2946
      %v3093 = vadd.f32 %v2315, %v2948
      %v3094 = vadd.f32 %v2316, %v2950
      %v3095 = vadd.f32 %v2317, %v2952
      %v3096 = vadd.f32 %v2318, %v2956
      %v3097 = vadd.f32 %v2319, %v2958
      %v3098 = vadd.f32 %v2320, %v2960
      %v3099 = vadd.f32 %v2321, %v2962
      %v3100 = vadd.f32 %v2322, %v2966
      %v3101 = vadd.f32 %v2323, %v2968
      %v3102 = vadd.f32 %v2324, %v2970
      %v3103 = vadd.f32 %v2325, %v2972
      %v3104 = vadd.f32 %v2326, %v2976
      %v3105 = vadd.f32 %v2327, %v2978
      %v3106 = vadd.f32 %v2328, %v2980
      %v3107 = vadd.f32 %v2329, %v2982
      %v3108 = vadd.f32 %v2330, %v2986
      %v3109 = vadd.f32 %v2331, %v2988
      %v3110 = vadd.f32 %v2332, %v2990
      %v3111 = vadd.f32 %v2333, %v2992
      %v3112 = vadd.f32 %v2334, %v2996
      %v3113 = vadd.f32 %v2335, %v2998
      %v3114 = vadd.f32 %v2336, %v3000
      %v3115 = vadd.f32 %v2337, %v3002
      %3116 = vst [vmem:[#allocation2] sm:$0xff] %v3004
      %3117 = vst.msk [vmem:[#allocation2 + $0x8] sm:$0xff] %vm1112, %v3005
      %3118 = vst [vmem:[#allocation2 + $0x10] sm:$0xff] %v3006
      %3119 = vst.msk [vmem:[#allocation2 + $0x18] sm:$0xff] %vm1112, %v3007
      %3120 = vst [vmem:[#allocation2 + $0x20] sm:$0xff] %v3008
      %3121 = vst.msk [vmem:[#allocation2 + $0x28] sm:$0xff] %vm1112, %v3009
      %3122 = vst [vmem:[#allocation2 + $0x30] sm:$0xff] %v3010
      %3123 = vst.msk [vmem:[#allocation2 + $0x38] sm:$0xff] %vm1112, %v3011
      %3124 = vst [vmem:[#allocation2 + $0x40] sm:$0xff] %v3012
      %3125 = vst.msk [vmem:[#allocation2 + $0x48] sm:$0xff] %vm1112, %v3013
      %3126 = vst [vmem:[#allocation2 + $0x50] sm:$0xff] %v3014
      %3127 = vst.msk [vmem:[#allocation2 + $0x58] sm:$0xff] %vm1112, %v3015
      %3128 = vst [vmem:[#allocation2 + $0x60] sm:$0xff] %v3016
      %3129 = vst.msk [vmem:[#allocation2 + $0x68] sm:$0xff] %vm1112, %v3017
      %3130 = vst [vmem:[#allocation2 + $0x70] sm:$0xff] %v3018
      %3131 = vst.msk [vmem:[#allocation2 + $0x78] sm:$0xff] %vm1112, %v3019
      %3132 = vst [vmem:[#allocation2 + $0x80] sm:$0xff] %v3020
      %3133 = vst.msk [vmem:[#allocation2 + $0x88] sm:$0xff] %vm1112, %v3021
      %3134 = vst [vmem:[#allocation2 + $0x90] sm:$0xff] %v3022
      %3135 = vst.msk [vmem:[#allocation2 + $0x98] sm:$0xff] %vm1112, %v3023
      %3136 = vst [vmem:[#allocation2 + $0xa0] sm:$0xff] %v3024
      %3137 = vst.msk [vmem:[#allocation2 + $0xa8] sm:$0xff] %vm1112, %v3025
      %3138 = vst [vmem:[#allocation2 + $0xb0] sm:$0xff] %v3026
      %3139 = vst.msk [vmem:[#allocation2 + $0xb8] sm:$0xff] %vm1112, %v3027
      %3140 = vst [vmem:[#allocation2 + $0xc0] sm:$0xff] %v3028
      %3141 = vst.msk [vmem:[#allocation2 + $0xc8] sm:$0xff] %vm1112, %v3029
      %3142 = vst [vmem:[#allocation2 + $0xd0] sm:$0xff] %v3030
      %3143 = vst.msk [vmem:[#allocation2 + $0xd8] sm:$0xff] %vm1112, %v3031
      %3144 = vst [vmem:[#allocation2 + $0xe0] sm:$0xff] %v3032
      %3145 = vst.msk [vmem:[#allocation2 + $0xe8] sm:$0xff] %vm1112, %v3033
      %3146 = vst [vmem:[#allocation2 + $0xf0] sm:$0xff] %v3034
      %3147 = vst.msk [vmem:[#allocation2 + $0xf8] sm:$0xff] %vm1112, %v3035
      %3148 = vst [vmem:[#allocation2 + $0x100] sm:$0xff] %v3036
      %3149 = vst.msk [vmem:[#allocation2 + $0x108] sm:$0xff] %vm1112, %v3037
      %3150 = vst [vmem:[#allocation2 + $0x110] sm:$0xff] %v3038
      %3151 = vst.msk [vmem:[#allocation2 + $0x118] sm:$0xff] %vm1112, %v3039
      %3152 = vst [vmem:[#allocation2 + $0x120] sm:$0xff] %v3040
      %3153 = vst.msk [vmem:[#allocation2 + $0x128] sm:$0xff] %vm1112, %v3041
      %3154 = vst [vmem:[#allocation2 + $0x130] sm:$0xff] %v3042
      %3155 = vst.msk [vmem:[#allocation2 + $0x138] sm:$0xff] %vm1112, %v3043
      %3156 = vst [vmem:[#allocation2 + $0x140] sm:$0xff] %v3044
      %3157 = vst.msk [vmem:[#allocation2 + $0x148] sm:$0xff] %vm1112, %v3045
      %3158 = vst [vmem:[#allocation2 + $0x150] sm:$0xff] %v3046
      %3159 = vst.msk [vmem:[#allocation2 + $0x158] sm:$0xff] %vm1112, %v3047
      %3160 = vst [vmem:[#allocation2 + $0x160] sm:$0xff] %v3048
      %3161 = vst.msk [vmem:[#allocation2 + $0x168] sm:$0xff] %vm1112, %v3049
      %3162 = vst [vmem:[#allocation2 + $0x170] sm:$0xff] %v3050
      %3163 = vst.msk [vmem:[#allocation2 + $0x178] sm:$0xff] %vm1112, %v3051
      %3164 = vst [vmem:[#allocation2 + $0x180] sm:$0xff] %v3052
      %3165 = vst.msk [vmem:[#allocation2 + $0x188] sm:$0xff] %vm1112, %v3053
      %3166 = vst [vmem:[#allocation2 + $0x190] sm:$0xff] %v3054
      %3167 = vst.msk [vmem:[#allocation2 + $0x198] sm:$0xff] %vm1112, %v3055
      %3168 = vst [vmem:[#allocation2 + $0x1a0] sm:$0xff] %v3056
      %3169 = vst.msk [vmem:[#allocation2 + $0x1a8] sm:$0xff] %vm1112, %v3057
      %3170 = vst [vmem:[#allocation2 + $0x1b0] sm:$0xff] %v3058
      %3171 = vst.msk [vmem:[#allocation2 + $0x1b8] sm:$0xff] %vm1112, %v3059
      %3172 = vst [vmem:[#allocation2 + $0x1c0] sm:$0xff] %v3060
      %3173 = vst.msk [vmem:[#allocation2 + $0x1c8] sm:$0xff] %vm1112, %v3061
      %3174 = vst [vmem:[#allocation2 + $0x1d0] sm:$0xff] %v3062
      %3175 = vst.msk [vmem:[#allocation2 + $0x1d8] sm:$0xff] %vm1112, %v3063
      %3176 = vst [vmem:[#allocation2 + $0x1e0] sm:$0xff] %v3064
      %3177 = vst.msk [vmem:[#allocation2 + $0x1e8] sm:$0xff] %vm1112, %v3065
      %3178 = vst [vmem:[#allocation2 + $0x1f0] sm:$0xff] %v3066
      %3179 = vst.msk [vmem:[#allocation2 + $0x1f8] sm:$0xff] %vm1112, %v3067
      %3180 = vst [vmem:[#allocation2 + $0x200] sm:$0xff] %v3068
      %3181 = vst.msk [vmem:[#allocation2 + $0x208] sm:$0xff] %vm1112, %v3069
      %3182 = vst [vmem:[#allocation2 + $0x210] sm:$0xff] %v3070
      %3183 = vst.msk [vmem:[#allocation2 + $0x218] sm:$0xff] %vm1112, %v3071
      %3184 = vst [vmem:[#allocation2 + $0x220] sm:$0xff] %v3072
      %3185 = vst.msk [vmem:[#allocation2 + $0x228] sm:$0xff] %vm1112, %v3073
      %3186 = vst [vmem:[#allocation2 + $0x230] sm:$0xff] %v3074
      %3187 = vst.msk [vmem:[#allocation2 + $0x238] sm:$0xff] %vm1112, %v3075
      %3188 = vst [vmem:[#allocation2 + $0x240] sm:$0xff] %v3076
      %3189 = vst.msk [vmem:[#allocation2 + $0x248] sm:$0xff] %vm1112, %v3077
      %3190 = vst [vmem:[#allocation2 + $0x250] sm:$0xff] %v3078
      %3191 = vst.msk [vmem:[#allocation2 + $0x258] sm:$0xff] %vm1112, %v3079
      %3192 = vst [vmem:[#allocation2 + $0x260] sm:$0xff] %v3080
      %3193 = vst.msk [vmem:[#allocation2 + $0x268] sm:$0xff] %vm1112, %v3081
      %3194 = vst [vmem:[#allocation2 + $0x270] sm:$0xff] %v3082
      %3195 = vst.msk [vmem:[#allocation2 + $0x278] sm:$0xff] %vm1112, %v3083
      %3196 = vst [vmem:[#allocation2 + $0x280] sm:$0xff] %v3084
      %3197 = vst.msk [vmem:[#allocation2 + $0x288] sm:$0xff] %vm1112, %v3085
      %3198 = vst [vmem:[#allocation2 + $0x290] sm:$0xff] %v3086
      %3199 = vst.msk [vmem:[#allocation2 + $0x298] sm:$0xff] %vm1112, %v3087
      %3200 = vst [vmem:[#allocation2 + $0x2a0] sm:$0xff] %v3088
      %3201 = vst.msk [vmem:[#allocation2 + $0x2a8] sm:$0xff] %vm1112, %v3089
      %3202 = vst [vmem:[#allocation2 + $0x2b0] sm:$0xff] %v3090
      %3203 = vst.msk [vmem:[#allocation2 + $0x2b8] sm:$0xff] %vm1112, %v3091
      %3204 = vst [vmem:[#allocation2 + $0x2c0] sm:$0xff] %v3092
      %3205 = vst.msk [vmem:[#allocation2 + $0x2c8] sm:$0xff] %vm1112, %v3093
      %3206 = vst [vmem:[#allocation2 + $0x2d0] sm:$0xff] %v3094
      %3207 = vst.msk [vmem:[#allocation2 + $0x2d8] sm:$0xff] %vm1112, %v3095
      %3208 = vst [vmem:[#allocation2 + $0x2e0] sm:$0xff] %v3096
      %3209 = vst.msk [vmem:[#allocation2 + $0x2e8] sm:$0xff] %vm1112, %v3097
      %3210 = vst [vmem:[#allocation2 + $0x2f0] sm:$0xff] %v3098
      %3211 = vst.msk [vmem:[#allocation2 + $0x2f8] sm:$0xff] %vm1112, %v3099
      %3212 = vst [vmem:[#allocation2 + $0x300] sm:$0xff] %v3100
      %3213 = vst.msk [vmem:[#allocation2 + $0x308] sm:$0xff] %vm1112, %v3101
      %3214 = vst [vmem:[#allocation2 + $0x310] sm:$0xff] %v3102
      %3215 = vst.msk [vmem:[#allocation2 + $0x318] sm:$0xff] %vm1112, %v3103
      %3216 = vst [vmem:[#allocation2 + $0x320] sm:$0xff] %v3104
      %3217 = vst.msk [vmem:[#allocation2 + $0x328] sm:$0xff] %vm1112, %v3105
      %3218 = vst [vmem:[#allocation2 + $0x330] sm:$0xff] %v3106
      %3219 = vst.msk [vmem:[#allocation2 + $0x338] sm:$0xff] %vm1112, %v3107
      %3220 = vst [vmem:[#allocation2 + $0x340] sm:$0xff] %v3108
      %3221 = vst.msk [vmem:[#allocation2 + $0x348] sm:$0xff] %vm1112, %v3109
      %3222 = vst [vmem:[#allocation2 + $0x350] sm:$0xff] %v3110
      %3223 = vst.msk [vmem:[#allocation2 + $0x358] sm:$0xff] %vm1112, %v3111
      %3224 = vst [vmem:[#allocation2 + $0x360] sm:$0xff] %v3112
      %3225 = vst.msk [vmem:[#allocation2 + $0x368] sm:$0xff] %vm1112, %v3113
      %3226 = vst [vmem:[#allocation2 + $0x370] sm:$0xff] %v3114
      %3227 = vst.msk [vmem:[#allocation2 + $0x378] sm:$0xff] %vm1112, %v3115
      %v3228 = vld [vmem:[#allocation2] sm:$0xff]
      %v3229 = vld [vmem:[#allocation2 + $0x8] sm:$0xff]
      %v3230 = vld [vmem:[#allocation2 + $0x10] sm:$0xff]
      %v3231 = vld [vmem:[#allocation2 + $0x18] sm:$0xff]
      %v3232 = vld [vmem:[#allocation2 + $0x20] sm:$0xff]
      %v3233 = vld [vmem:[#allocation2 + $0x28] sm:$0xff]
      %v3234 = vld [vmem:[#allocation2 + $0x30] sm:$0xff]
      %v3235 = vld [vmem:[#allocation2 + $0x38] sm:$0xff]
      %v3236 = vld [vmem:[#allocation2 + $0x40] sm:$0xff]
      %v3237 = vld [vmem:[#allocation2 + $0x48] sm:$0xff]
      %v3238 = vld [vmem:[#allocation2 + $0x50] sm:$0xff]
      %v3239 = vld [vmem:[#allocation2 + $0x58] sm:$0xff]
      %v3240 = vld [vmem:[#allocation2 + $0x60] sm:$0xff]
      %v3241 = vld [vmem:[#allocation2 + $0x68] sm:$0xff]
      %v3242 = vld [vmem:[#allocation2 + $0x70] sm:$0xff]
      %v3243 = vld [vmem:[#allocation2 + $0x78] sm:$0xff]
      %v3244 = vld [vmem:[#allocation2 + $0x80] sm:$0xff]
      %v3245 = vld [vmem:[#allocation2 + $0x88] sm:$0xff]
      %v3246 = vld [vmem:[#allocation2 + $0x90] sm:$0xff]
      %v3247 = vld [vmem:[#allocation2 + $0x98] sm:$0xff]
      %v3248 = vld [vmem:[#allocation2 + $0xa0] sm:$0xff]
      %v3249 = vld [vmem:[#allocation2 + $0xa8] sm:$0xff]
      %v3250 = vld [vmem:[#allocation2 + $0xb0] sm:$0xff]
      %v3251 = vld [vmem:[#allocation2 + $0xb8] sm:$0xff]
      %v3252 = vld [vmem:[#allocation2 + $0xc0] sm:$0xff]
      %v3253 = vld [vmem:[#allocation2 + $0xc8] sm:$0xff]
      %v3254 = vld [vmem:[#allocation2 + $0xd0] sm:$0xff]
      %v3255 = vld [vmem:[#allocation2 + $0xd8] sm:$0xff]
      %v3256 = vld [vmem:[#allocation2 + $0xe0] sm:$0xff]
      %v3257 = vld [vmem:[#allocation2 + $0xe8] sm:$0xff]
      %v3258 = vld [vmem:[#allocation2 + $0xf0] sm:$0xff]
      %v3259 = vld [vmem:[#allocation2 + $0xf8] sm:$0xff]
      %v3260 = vld [vmem:[#allocation2 + $0x100] sm:$0xff]
      %v3261 = vld [vmem:[#allocation2 + $0x108] sm:$0xff]
      %v3262 = vld [vmem:[#allocation2 + $0x110] sm:$0xff]
      %v3263 = vld [vmem:[#allocation2 + $0x118] sm:$0xff]
      %v3264 = vld [vmem:[#allocation2 + $0x120] sm:$0xff]
      %v3265 = vld [vmem:[#allocation2 + $0x128] sm:$0xff]
      %v3266 = vld [vmem:[#allocation2 + $0x130] sm:$0xff]
      %v3267 = vld [vmem:[#allocation2 + $0x138] sm:$0xff]
      %v3268 = vld [vmem:[#allocation2 + $0x140] sm:$0xff]
      %v3269 = vld [vmem:[#allocation2 + $0x148] sm:$0xff]
      %v3270 = vld [vmem:[#allocation2 + $0x150] sm:$0xff]
      %v3271 = vld [vmem:[#allocation2 + $0x158] sm:$0xff]
      %v3272 = vld [vmem:[#allocation2 + $0x160] sm:$0xff]
      %v3273 = vld [vmem:[#allocation2 + $0x168] sm:$0xff]
      %v3274 = vld [vmem:[#allocation2 + $0x170] sm:$0xff]
      %v3275 = vld [vmem:[#allocation2 + $0x178] sm:$0xff]
      %v3276 = vld [vmem:[#allocation2 + $0x180] sm:$0xff]
      %v3277 = vld [vmem:[#allocation2 + $0x188] sm:$0xff]
      %v3278 = vld [vmem:[#allocation2 + $0x190] sm:$0xff]
      %v3279 = vld [vmem:[#allocation2 + $0x198] sm:$0xff]
      %v3280 = vld [vmem:[#allocation2 + $0x1a0] sm:$0xff]
      %v3281 = vld [vmem:[#allocation2 + $0x1a8] sm:$0xff]
      %v3282 = vld [vmem:[#allocation2 + $0x1b0] sm:$0xff]
      %v3283 = vld [vmem:[#allocation2 + $0x1b8] sm:$0xff]
      %v3284 = vld [vmem:[#allocation2 + $0x1c0] sm:$0xff]
      %v3285 = vld [vmem:[#allocation2 + $0x1c8] sm:$0xff]
      %v3286 = vld [vmem:[#allocation2 + $0x1d0] sm:$0xff]
      %v3287 = vld [vmem:[#allocation2 + $0x1d8] sm:$0xff]
      %v3288 = vld [vmem:[#allocation2 + $0x1e0] sm:$0xff]
      %v3289 = vld [vmem:[#allocation2 + $0x1e8] sm:$0xff]
      %v3290 = vld [vmem:[#allocation2 + $0x1f0] sm:$0xff]
      %v3291 = vld [vmem:[#allocation2 + $0x1f8] sm:$0xff]
      %v3292 = vld [vmem:[#allocation2 + $0x200] sm:$0xff]
      %v3293 = vld [vmem:[#allocation2 + $0x208] sm:$0xff]
      %v3294 = vld [vmem:[#allocation2 + $0x210] sm:$0xff]
      %v3295 = vld [vmem:[#allocation2 + $0x218] sm:$0xff]
      %v3296 = vld [vmem:[#allocation2 + $0x220] sm:$0xff]
      %v3297 = vld [vmem:[#allocation2 + $0x228] sm:$0xff]
      %v3298 = vld [vmem:[#allocation2 + $0x230] sm:$0xff]
      %v3299 = vld [vmem:[#allocation2 + $0x238] sm:$0xff]
      %v3300 = vld [vmem:[#allocation2 + $0x240] sm:$0xff]
      %v3301 = vld [vmem:[#allocation2 + $0x248] sm:$0xff]
      %v3302 = vld [vmem:[#allocation2 + $0x250] sm:$0xff]
      %v3303 = vld [vmem:[#allocation2 + $0x258] sm:$0xff]
      %v3304 = vld [vmem:[#allocation2 + $0x260] sm:$0xff]
      %v3305 = vld [vmem:[#allocation2 + $0x268] sm:$0xff]
      %v3306 = vld [vmem:[#allocation2 + $0x270] sm:$0xff]
      %v3307 = vld [vmem:[#allocation2 + $0x278] sm:$0xff]
      %v3308 = vld [vmem:[#allocation2 + $0x280] sm:$0xff]
      %v3309 = vld [vmem:[#allocation2 + $0x288] sm:$0xff]
      %v3310 = vld [vmem:[#allocation2 + $0x290] sm:$0xff]
      %v3311 = vld [vmem:[#allocation2 + $0x298] sm:$0xff]
      %v3312 = vld [vmem:[#allocation2 + $0x2a0] sm:$0xff]
      %v3313 = vld [vmem:[#allocation2 + $0x2a8] sm:$0xff]
      %v3314 = vld [vmem:[#allocation2 + $0x2b0] sm:$0xff]
      %v3315 = vld [vmem:[#allocation2 + $0x2b8] sm:$0xff]
      %v3316 = vld [vmem:[#allocation2 + $0x2c0] sm:$0xff]
      %v3317 = vld [vmem:[#allocation2 + $0x2c8] sm:$0xff]
      %v3318 = vld [vmem:[#allocation2 + $0x2d0] sm:$0xff]
      %v3319 = vld [vmem:[#allocation2 + $0x2d8] sm:$0xff]
      %v3320 = vld [vmem:[#allocation2 + $0x2e0] sm:$0xff]
      %v3321 = vld [vmem:[#allocation2 + $0x2e8] sm:$0xff]
      %v3322 = vld [vmem:[#allocation2 + $0x2f0] sm:$0xff]
      %v3323 = vld [vmem:[#allocation2 + $0x2f8] sm:$0xff]
      %v3324 = vld [vmem:[#allocation2 + $0x300] sm:$0xff]
      %v3325 = vld [vmem:[#allocation2 + $0x308] sm:$0xff]
      %v3326 = vld [vmem:[#allocation2 + $0x310] sm:$0xff]
      %v3327 = vld [vmem:[#allocation2 + $0x318] sm:$0xff]
      %v3328 = vld [vmem:[#allocation2 + $0x320] sm:$0xff]
      %v3329 = vld [vmem:[#allocation2 + $0x328] sm:$0xff]
      %v3330 = vld [vmem:[#allocation2 + $0x330] sm:$0xff]
      %v3331 = vld [vmem:[#allocation2 + $0x338] sm:$0xff]
      %v3332 = vld [vmem:[#allocation2 + $0x340] sm:$0xff]
      %v3333 = vld [vmem:[#allocation2 + $0x348] sm:$0xff]
      %v3334 = vld [vmem:[#allocation2 + $0x350] sm:$0xff]
      %v3335 = vld [vmem:[#allocation2 + $0x358] sm:$0xff]
      %v3336 = vld [vmem:[#allocation2 + $0x360] sm:$0xff]
      %v3337 = vld [vmem:[#allocation2 + $0x368] sm:$0xff]
      %v3338 = vld [vmem:[#allocation2 + $0x370] sm:$0xff]
      %v3339 = vld [vmem:[#allocation2 + $0x378] sm:$0xff]
      %v3340 = vld [vmem:[%s436 + $0x18] sm:$0xf]
      %v3341 = vld [vmem:[%s436 + $0x1c] sm:$0xf]
      %v3342 = vld [vmem:[%s436 + $0x20] sm:$0xf]
      %v3343 = vld [vmem:[%s436 + $0x24] sm:$0xf]
      %v3344 = vld [vmem:[%s436 + $0x28] sm:$0xf]
      %v3345 = vld [vmem:[%s436 + $0x2c] sm:$0xf]
      %v3346 = vld [vmem:[%s436 + $0x30] sm:$0xf]
      %v3347 = vld [vmem:[%s436 + $0x34] sm:$0xf]
      %v3348 = vld [vmem:[%s436 + $0x38] sm:$0xf]
      %v3349 = vld [vmem:[%s436 + $0x3c] sm:$0xf]
      %v3350 = vld [vmem:[%s436 + $0x40] sm:$0xf]
      %v3351 = vld [vmem:[%s436 + $0x44] sm:$0xf]
      %v3352 = vld [vmem:[%s436 + $0x48] sm:$0xf]
      %v3353 = vld [vmem:[%s436 + $0x4c] sm:$0xf]
      %v3354 = vld [vmem:[%s436 + $0x50] sm:$0xf]
      %v3355 = vld [vmem:[%s436 + $0x54] sm:$0xf]
      %v3356 = vld [vmem:[%s436 + $0x58] sm:$0xf]
      %v3357 = vld [vmem:[%s436 + $0x5c] sm:$0xf]
      %v3358 = vld [vmem:[%s436 + $0x60] sm:$0xf]
      %v3359 = vld [vmem:[%s436 + $0x64] sm:$0xf]
      %v3360 = vld [vmem:[%s436 + $0x68] sm:$0xf]
      %v3361 = vld [vmem:[%s436 + $0x6c] sm:$0xf]
      %v3362 = vld [vmem:[%s436 + $0x70] sm:$0xf]
      %v3363 = vld [vmem:[%s436 + $0x74] sm:$0xf]
      %v3364 = vld [vmem:[%s436 + $0x78] sm:$0xf]
      %v3365 = vld [vmem:[%s436 + $0x7c] sm:$0xf]
      %v3366 = vld [vmem:[%s436 + $0x80] sm:$0xf]
      %v3367 = vld [vmem:[%s436 + $0x84] sm:$0xf]
      %v3368 = vld [vmem:[%s436 + $0x88] sm:$0xf]
      %v3369 = vld [vmem:[%s436 + $0x8c] sm:$0xf]
      %v3370 = vld [vmem:[%s436 + $0x90] sm:$0xf]
      %v3371 = vld [vmem:[%s436 + $0x94] sm:$0xf]
      %v3372 = vld [vmem:[%s436 + $0x98] sm:$0xf]
      %v3373 = vld [vmem:[%s436 + $0x9c] sm:$0xf]
      %v3374 = vld [vmem:[%s436 + $0xa0] sm:$0xf]
      %v3375 = vld [vmem:[%s436 + $0xa4] sm:$0xf]
      %v3376 = vld [vmem:[%s436 + $0xa8] sm:$0xf]
      %v3377 = vld [vmem:[%s436 + $0xac] sm:$0xf]
      %v3378 = vld [vmem:[%s436 + $0xb0] sm:$0xf]
      %v3379 = vld [vmem:[%s436 + $0xb4] sm:$0xf]
      %v3380 = vld [vmem:[%s436 + $0xb8] sm:$0xf]
      %v3381 = vld [vmem:[%s436 + $0xbc] sm:$0xf]
      %v3382 = vld [vmem:[%s436 + $0xc0] sm:$0xf]
      %v3383 = vld [vmem:[%s436 + $0xc4] sm:$0xf]
      %v3384 = vld [vmem:[%s436 + $0xc8] sm:$0xf]
      %v3385 = vld [vmem:[%s436 + $0xcc] sm:$0xf]
      %v3386 = vld [vmem:[%s436 + $0xd0] sm:$0xf]
      %v3387 = vld [vmem:[%s436 + $0xd4] sm:$0xf]
      %v3388 = vld [vmem:[%s436 + $0xd8] sm:$0xf]
      %v3389 = vld [vmem:[%s436 + $0xdc] sm:$0xf]
      %v3390 = vld [vmem:[%s436 + $0xe0] sm:$0xf]
      %v3391 = vld [vmem:[%s436 + $0xe4] sm:$0xf]
      %v3392 = vld [vmem:[%s436 + $0xe8] sm:$0xf]
      %v3393 = vld [vmem:[%s436 + $0xec] sm:$0xf]
      %v3394 = vld [vmem:[%s436 + $0xf0] sm:$0xf]
      %v3395 = vld [vmem:[%s436 + $0xf4] sm:$0xf]
      %s3396 = scalar_lea.vmem %s1, 288
      %v3397 = vld [vmem:[%s3396] sm:$0xff]
      %v3398 = vld [vmem:[%s3396 + $0x8] sm:$0xff]
      %v3399 = vld [vmem:[%s3396 + $0x10] sm:$0xff]
      %v3400 = vld [vmem:[%s3396 + $0x18] sm:$0xff]
      %v3401 = vld [vmem:[%s3396 + $0x20] sm:$0xff]
      %v3402 = vld [vmem:[%s3396 + $0x28] sm:$0xff]
      %v3403 = vld [vmem:[%s3396 + $0x30] sm:$0xff]
      %v3404 = vld [vmem:[%s3396 + $0x38] sm:$0xff]
      %v3405 = vld [vmem:[%s3396 + $0x40] sm:$0xff]
      %v3406 = vld [vmem:[%s3396 + $0x48] sm:$0xff]
      %v3407 = vld [vmem:[%s3396 + $0x50] sm:$0xff]
      %v3408 = vld [vmem:[%s3396 + $0x58] sm:$0xff]
      %v3465 = vunpack.c.l.b16 %v3340
      %v3466 = vunpack.c.l.b16 %v3341
      %v3467 = vunpack.c.l.b16 %v3342
      %v3468 = vunpack.c.l.b16 %v3343
      %v3469 = vunpack.c.l.b16 %v3344
      %v3470 = vunpack.c.l.b16 %v3345
      %v3471 = vunpack.c.l.b16 %v3346
      %v3472 = vunpack.c.l.b16 %v3347
      %v3473 = vunpack.c.l.b16 %v3348
      %v3474 = vunpack.c.l.b16 %v3349
      %v3475 = vunpack.c.l.b16 %v3350
      %v3476 = vunpack.c.l.b16 %v3351
      %v3477 = vunpack.c.l.b16 %v3352
      %v3478 = vunpack.c.l.b16 %v3353
      %v3479 = vunpack.c.l.b16 %v3354
      %v3480 = vunpack.c.l.b16 %v3355
      %v3481 = vunpack.c.l.b16 %v3356
      %v3482 = vunpack.c.l.b16 %v3357
      %v3483 = vunpack.c.l.b16 %v3358
      %v3484 = vunpack.c.l.b16 %v3359
      %v3485 = vunpack.c.l.b16 %v3360
      %v3486 = vunpack.c.l.b16 %v3361
      %v3487 = vunpack.c.l.b16 %v3362
      %v3488 = vunpack.c.l.b16 %v3363
      %v3489 = vunpack.c.l.b16 %v3364
      %v3490 = vunpack.c.l.b16 %v3365
      %v3491 = vunpack.c.l.b16 %v3366
      %v3492 = vunpack.c.l.b16 %v3367
      %v3493 = vunpack.c.l.b16 %v3368
      %v3494 = vunpack.c.l.b16 %v3369
      %v3495 = vunpack.c.l.b16 %v3370
      %v3496 = vunpack.c.l.b16 %v3371
      %v3497 = vunpack.c.l.b16 %v3372
      %v3498 = vunpack.c.l.b16 %v3373
      %v3499 = vunpack.c.l.b16 %v3374
      %v3500 = vunpack.c.l.b16 %v3375
      %v3501 = vunpack.c.l.b16 %v3376
      %v3502 = vunpack.c.l.b16 %v3377
      %v3503 = vunpack.c.l.b16 %v3378
      %v3504 = vunpack.c.l.b16 %v3379
      %v3505 = vunpack.c.l.b16 %v3380
      %v3506 = vunpack.c.l.b16 %v3381
      %v3507 = vunpack.c.l.b16 %v3382
      %v3508 = vunpack.c.l.b16 %v3383
      %v3509 = vunpack.c.l.b16 %v3384
      %v3510 = vunpack.c.l.b16 %v3385
      %v3511 = vunpack.c.l.b16 %v3386
      %v3512 = vunpack.c.l.b16 %v3387
      %v3513 = vunpack.c.l.b16 %v3388
      %v3514 = vunpack.c.l.b16 %v3389
      %v3515 = vunpack.c.l.b16 %v3390
      %v3516 = vunpack.c.l.b16 %v3391
      %v3517 = vunpack.c.l.b16 %v3392
      %v3518 = vunpack.c.l.b16 %v3393
      %v3519 = vunpack.c.l.b16 %v3394
      %v3520 = vunpack.c.l.b16 %v3395
      %v3521 = vpack.c.b16 %v3466, %v3465
      %v3522 = vpack.c.b16 %v3468, %v3467
      %v3523 = vpack.c.b16 %v3470, %v3469
      %v3524 = vpack.c.b16 %v3472, %v3471
      %v3525 = vpack.c.b16 %v3474, %v3473
      %v3526 = vpack.c.b16 %v3476, %v3475
      %v3527 = vpack.c.b16 %v3478, %v3477
      %v3528 = vpack.c.b16 %v3480, %v3479
      %v3529 = vpack.c.b16 %v3482, %v3481
      %v3530 = vpack.c.b16 %v3484, %v3483
      %v3531 = vpack.c.b16 %v3486, %v3485
      %v3532 = vpack.c.b16 %v3488, %v3487
      %v3533 = vpack.c.b16 %v3490, %v3489
      %v3534 = vpack.c.b16 %v3492, %v3491
      %v3535 = vpack.c.b16 %v3494, %v3493
      %v3536 = vpack.c.b16 %v3496, %v3495
      %v3537 = vpack.c.b16 %v3498, %v3497
      %v3538 = vpack.c.b16 %v3500, %v3499
      %v3539 = vpack.c.b16 %v3502, %v3501
      %v3540 = vpack.c.b16 %v3504, %v3503
      %v3541 = vpack.c.b16 %v3506, %v3505
      %v3542 = vpack.c.b16 %v3508, %v3507
      %v3543 = vpack.c.b16 %v3510, %v3509
      %v3544 = vpack.c.b16 %v3512, %v3511
      %v3545 = vpack.c.b16 %v3514, %v3513
      %v3546 = vpack.c.b16 %v3516, %v3515
      %v3547 = vpack.c.b16 %v3518, %v3517
      %v3548 = vpack.c.b16 %v3520, %v3519
      %v3561 = vunpack.c.l.b16 %v3397
      %v3562 = vunpack.c.h.b16 %v3397
      %v3563 = vunpack.c.l.b16 %v3398
      %v3564 = vunpack.c.h.b16 %v3398
      %v3565 = vunpack.c.l.b16 %v3399
      %v3566 = vunpack.c.h.b16 %v3399
      %v3567 = vunpack.c.l.b16 %v3400
      %v3568 = vunpack.c.h.b16 %v3400
      %v3569 = vunpack.c.l.b16 %v3401
      %v3570 = vunpack.c.h.b16 %v3401
      %v3571 = vunpack.c.l.b16 %v3402
      %v3572 = vunpack.c.h.b16 %v3402
      %v3573 = vunpack.c.l.b16 %v3403
      %v3574 = vunpack.c.h.b16 %v3403
      %v3575 = vunpack.c.l.b16 %v3404
      %v3576 = vunpack.c.h.b16 %v3404
      %v3577 = vunpack.c.l.b16 %v3405
      %v3578 = vunpack.c.h.b16 %v3405
      %v3579 = vunpack.c.l.b16 %v3406
      %v3580 = vunpack.c.h.b16 %v3406
      %v3581 = vunpack.c.l.b16 %v3407
      %v3582 = vunpack.c.h.b16 %v3407
      %v3583 = vunpack.c.l.b16 %v3408
      %v3584 = vunpack.c.h.b16 %v3408
      %v3585 = vpack.c.b16 %v3563, %v3561
      %v3586 = vpack.c.b16 %v3564, %v3562
      %v3587 = vpack.c.b16 %v3567, %v3565
      %v3588 = vpack.c.b16 %v3568, %v3566
      %v3589 = vpack.c.b16 %v3571, %v3569
      %v3590 = vpack.c.b16 %v3572, %v3570
      %v3591 = vpack.c.b16 %v3575, %v3573
      %v3592 = vpack.c.b16 %v3576, %v3574
      %v3593 = vpack.c.b16 %v3579, %v3577
      %v3594 = vpack.c.b16 %v3580, %v3578
      %v3595 = vpack.c.b16 %v3583, %v3581
      %v3596 = vpack.c.b16 %v3584, %v3582
      %v3610 = vsel %vm713, %v3521, 0
      %v3613 = vsel %vm713, %v3522, 0
      %v3616 = vsel %vm713, %v3523, 0
      %v3619 = vsel %vm713, %v3524, 0
      %v3622 = vsel %vm713, %v3525, 0
      %v3625 = vsel %vm713, %v3526, 0
      %v3628 = vsel %vm713, %v3527, 0
      %v3631 = vsel %vm713, %v3528, 0
      %v3634 = vsel %vm713, %v3529, 0
      %v3637 = vsel %vm713, %v3530, 0
      %v3640 = vsel %vm713, %v3531, 0
      %v3643 = vsel %vm713, %v3532, 0
      %v3646 = vsel %vm713, %v3533, 0
      %v3649 = vsel %vm713, %v3534, 0
      %v3652 = vsel %vm713, %v3535, 0
      %v3655 = vsel %vm713, %v3536, 0
      %v3658 = vsel %vm713, %v3537, 0
      %v3661 = vsel %vm713, %v3538, 0
      %v3664 = vsel %vm713, %v3539, 0
      %v3667 = vsel %vm713, %v3540, 0
      %v3670 = vsel %vm713, %v3541, 0
      %v3673 = vsel %vm713, %v3542, 0
      %v3676 = vsel %vm713, %v3543, 0
      %v3679 = vsel %vm713, %v3544, 0
      %v3682 = vsel %vm713, %v3545, 0
      %v3685 = vsel %vm713, %v3546, 0
      %v3688 = vsel %vm713, %v3547, 0
      %v3691 = vsel %vm713, %v3548, 0
      %3693 = vmatprep.subr.bf16.mxu0 %v3586
      %3694 = vmatpush1.bf16.msra.mxu0 %v3585
      %3695 = vmatprep.subr.bf16.mxu0 %v3588
      %3696 = vmatpush1.bf16.msra.mxu0 %v3587
      %3697 = vmatprep.subr.bf16.mxu0 %v3590
      %3698 = vmatpush1.bf16.msra.mxu0 %v3589
      %3699 = vmatprep.subr.bf16.mxu0 %v3592
      %3700 = vmatpush1.bf16.msra.mxu0 %v3591
      %3701 = vmatprep.subr.bf16.mxu0 %v3594
      %3702 = vmatpush1.bf16.msra.mxu0 %v3593
      %3703 = vmatprep.subr.bf16.mxu0 %v3596
      %3704 = vmatpush1.bf16.msra.mxu0 %v3595
      %3705 = vmatprep.subr.bf16.mxu0 0
      %3706 = vmatpush1.bf16.msra.mxu0 0
      %3707 = vmatprep.subr.bf16.mxu0 0
      %3708 = vmatpush1.bf16.msra.mxu0 0
      %3709 = vmatprep.subr.bf16.mxu0 0
      %3710 = vmatpush1.bf16.msra.mxu0 0
      %3711 = vmatprep.subr.bf16.mxu0 0
      %3712 = vmatpush1.bf16.msra.mxu0 0
      %3713 = vmatprep.subr.bf16.mxu0 0
      %3714 = vmatpush1.bf16.msra.mxu0 0
      %3715 = vmatprep.subr.bf16.mxu0 0
      %3716 = vmatpush1.bf16.msra.mxu0 0
      %3717 = vmatprep.subr.bf16.mxu0 0
      %3718 = vmatpush1.bf16.msra.mxu0 0
      %3719 = vmatprep.subr.bf16.mxu0 0
      %3720 = vmatpush1.bf16.msra.mxu0 0
      %3721 = vmatprep.subr.bf16.mxu0 0
      %3722 = vmatpush1.bf16.msra.mxu0 0
      %3723 = vmatprep.subr.bf16.mxu0 0
      %3724 = vmatpush1.bf16.msra.mxu0 0
      %3725 = vmatprep.mubr.bf16.mxu0 0
      %3726 = vmatmul.mubr.bf16.gmra.mrb[0].mxu0 %v3610
      %v3727 = vpop.f32.mrb[0].mxu0
      %v3728 = vadd.f32 0.0, %v3727
      %v3729 = vpop.f32.mrb[0].mxu0
      %v3730 = vadd.f32 0.0, %v3729
      %v3731 = vpop.f32.mrb[0].mxu0
      %v3732 = vadd.f32 0.0, %v3731
      %v3733 = vpop.f32.mrb[0].mxu0
      %v3734 = vadd.f32 0.0, %v3733
      %3735 = vmatprep.mubr.bf16.mxu0 0
      %3736 = vmatmul.mubr.bf16.gmra.mrb[0].mxu0 %v3613
      %v3737 = vpop.f32.mrb[0].mxu0
      %v3738 = vadd.f32 0.0, %v3737
      %v3739 = vpop.f32.mrb[0].mxu0
      %v3740 = vadd.f32 0.0, %v3739
      %v3741 = vpop.f32.mrb[0].mxu0
      %v3742 = vadd.f32 0.0, %v3741
      %v3743 = vpop.f32.mrb[0].mxu0
      %v3744 = vadd.f32 0.0, %v3743
      %3745 = vmatprep.mubr.bf16.mxu0 0
      %3746 = vmatmul.mubr.bf16.gmra.mrb[0].mxu0 %v3616
      %v3747 = vpop.f32.mrb[0].mxu0
      %v3748 = vadd.f32 0.0, %v3747
      %v3749 = vpop.f32.mrb[0].mxu0
      %v3750 = vadd.f32 0.0, %v3749
      %v3751 = vpop.f32.mrb[0].mxu0
      %v3752 = vadd.f32 0.0, %v3751
      %v3753 = vpop.f32.mrb[0].mxu0
      %v3754 = vadd.f32 0.0, %v3753
      %3755 = vmatprep.mubr.bf16.mxu0 0
      %3756 = vmatmul.mubr.bf16.gmra.mrb[0].mxu0 %v3619
      %v3757 = vpop.f32.mrb[0].mxu0
      %v3758 = vadd.f32 0.0, %v3757
      %v3759 = vpop.f32.mrb[0].mxu0
      %v3760 = vadd.f32 0.0, %v3759
      %v3761 = vpop.f32.mrb[0].mxu0
      %v3762 = vadd.f32 0.0, %v3761
      %v3763 = vpop.f32.mrb[0].mxu0
      %v3764 = vadd.f32 0.0, %v3763
      %3765 = vmatprep.mubr.bf16.mxu0 0
      %3766 = vmatmul.mubr.bf16.gmra.mrb[0].mxu0 %v3622
      %v3767 = vpop.f32.mrb[0].mxu0
      %v3768 = vadd.f32 0.0, %v3767
      %v3769 = vpop.f32.mrb[0].mxu0
      %v3770 = vadd.f32 0.0, %v3769
      %v3771 = vpop.f32.mrb[0].mxu0
      %v3772 = vadd.f32 0.0, %v3771
      %v3773 = vpop.f32.mrb[0].mxu0
      %v3774 = vadd.f32 0.0, %v3773
      %3775 = vmatprep.mubr.bf16.mxu0 0
      %3776 = vmatmul.mubr.bf16.gmra.mrb[0].mxu0 %v3625
      %v3777 = vpop.f32.mrb[0].mxu0
      %v3778 = vadd.f32 0.0, %v3777
      %v3779 = vpop.f32.mrb[0].mxu0
      %v3780 = vadd.f32 0.0, %v3779
      %v3781 = vpop.f32.mrb[0].mxu0
      %v3782 = vadd.f32 0.0, %v3781
      %v3783 = vpop.f32.mrb[0].mxu0
      %v3784 = vadd.f32 0.0, %v3783
      %3785 = vmatprep.mubr.bf16.mxu0 0
      %3786 = vmatmul.mubr.bf16.gmra.mrb[0].mxu0 %v3628
      %v3787 = vpop.f32.mrb[0].mxu0
      %v3788 = vadd.f32 0.0, %v3787
      %v3789 = vpop.f32.mrb[0].mxu0
      %v3790 = vadd.f32 0.0, %v3789
      %v3791 = vpop.f32.mrb[0].mxu0
      %v3792 = vadd.f32 0.0, %v3791
      %v3793 = vpop.f32.mrb[0].mxu0
      %v3794 = vadd.f32 0.0, %v3793
      %3795 = vmatprep.mubr.bf16.mxu0 0
      %3796 = vmatmul.mubr.bf16.gmra.mrb[0].mxu0 %v3631
      %v3797 = vpop.f32.mrb[0].mxu0
      %v3798 = vadd.f32 0.0, %v3797
      %v3799 = vpop.f32.mrb[0].mxu0
      %v3800 = vadd.f32 0.0, %v3799
      %v3801 = vpop.f32.mrb[0].mxu0
      %v3802 = vadd.f32 0.0, %v3801
      %v3803 = vpop.f32.mrb[0].mxu0
      %v3804 = vadd.f32 0.0, %v3803
      %3805 = vmatprep.mubr.bf16.mxu0 0
      %3806 = vmatmul.mubr.bf16.gmra.mrb[0].mxu0 %v3634
      %v3807 = vpop.f32.mrb[0].mxu0
      %v3808 = vadd.f32 0.0, %v3807
      %v3809 = vpop.f32.mrb[0].mxu0
      %v3810 = vadd.f32 0.0, %v3809
      %v3811 = vpop.f32.mrb[0].mxu0
      %v3812 = vadd.f32 0.0, %v3811
      %v3813 = vpop.f32.mrb[0].mxu0
      %v3814 = vadd.f32 0.0, %v3813
      %3815 = vmatprep.mubr.bf16.mxu0 0
      %3816 = vmatmul.mubr.bf16.gmra.mrb[0].mxu0 %v3637
      %v3817 = vpop.f32.mrb[0].mxu0
      %v3818 = vadd.f32 0.0, %v3817
      %v3819 = vpop.f32.mrb[0].mxu0
      %v3820 = vadd.f32 0.0, %v3819
      %v3821 = vpop.f32.mrb[0].mxu0
      %v3822 = vadd.f32 0.0, %v3821
      %v3823 = vpop.f32.mrb[0].mxu0
      %v3824 = vadd.f32 0.0, %v3823
      %3825 = vmatprep.mubr.bf16.mxu0 0
      %3826 = vmatmul.mubr.bf16.gmra.mrb[0].mxu0 %v3640
      %v3827 = vpop.f32.mrb[0].mxu0
      %v3828 = vadd.f32 0.0, %v3827
      %v3829 = vpop.f32.mrb[0].mxu0
      %v3830 = vadd.f32 0.0, %v3829
      %v3831 = vpop.f32.mrb[0].mxu0
      %v3832 = vadd.f32 0.0, %v3831
      %v3833 = vpop.f32.mrb[0].mxu0
      %v3834 = vadd.f32 0.0, %v3833
      %3835 = vmatprep.mubr.bf16.mxu0 0
      %3836 = vmatmul.mubr.bf16.gmra.mrb[0].mxu0 %v3643
      %v3837 = vpop.f32.mrb[0].mxu0
      %v3838 = vadd.f32 0.0, %v3837
      %v3839 = vpop.f32.mrb[0].mxu0
      %v3840 = vadd.f32 0.0, %v3839
      %v3841 = vpop.f32.mrb[0].mxu0
      %v3842 = vadd.f32 0.0, %v3841
      %v3843 = vpop.f32.mrb[0].mxu0
      %v3844 = vadd.f32 0.0, %v3843
      %3845 = vmatprep.mubr.bf16.mxu0 0
      %3846 = vmatmul.mubr.bf16.gmra.mrb[0].mxu0 %v3646
      %v3847 = vpop.f32.mrb[0].mxu0
      %v3848 = vadd.f32 0.0, %v3847
      %v3849 = vpop.f32.mrb[0].mxu0
      %v3850 = vadd.f32 0.0, %v3849
      %v3851 = vpop.f32.mrb[0].mxu0
      %v3852 = vadd.f32 0.0, %v3851
      %v3853 = vpop.f32.mrb[0].mxu0
      %v3854 = vadd.f32 0.0, %v3853
      %3855 = vmatprep.mubr.bf16.mxu0 0
      %3856 = vmatmul.mubr.bf16.gmra.mrb[0].mxu0 %v3649
      %v3857 = vpop.f32.mrb[0].mxu0
      %v3858 = vadd.f32 0.0, %v3857
      %v3859 = vpop.f32.mrb[0].mxu0
      %v3860 = vadd.f32 0.0, %v3859
      %v3861 = vpop.f32.mrb[0].mxu0
      %v3862 = vadd.f32 0.0, %v3861
      %v3863 = vpop.f32.mrb[0].mxu0
      %v3864 = vadd.f32 0.0, %v3863
      %3865 = vmatprep.mubr.bf16.mxu0 0
      %3866 = vmatmul.mubr.bf16.gmra.mrb[0].mxu0 %v3652
      %v3867 = vpop.f32.mrb[0].mxu0
      %v3868 = vadd.f32 0.0, %v3867
      %v3869 = vpop.f32.mrb[0].mxu0
      %v3870 = vadd.f32 0.0, %v3869
      %v3871 = vpop.f32.mrb[0].mxu0
      %v3872 = vadd.f32 0.0, %v3871
      %v3873 = vpop.f32.mrb[0].mxu0
      %v3874 = vadd.f32 0.0, %v3873
      %3875 = vmatprep.mubr.bf16.mxu0 0
      %3876 = vmatmul.mubr.bf16.gmra.mrb[0].mxu0 %v3655
      %v3877 = vpop.f32.mrb[0].mxu0
      %v3878 = vadd.f32 0.0, %v3877
      %v3879 = vpop.f32.mrb[0].mxu0
      %v3880 = vadd.f32 0.0, %v3879
      %v3881 = vpop.f32.mrb[0].mxu0
      %v3882 = vadd.f32 0.0, %v3881
      %v3883 = vpop.f32.mrb[0].mxu0
      %v3884 = vadd.f32 0.0, %v3883
      %3885 = vmatprep.mubr.bf16.mxu0 0
      %3886 = vmatmul.mubr.bf16.gmra.mrb[0].mxu0 %v3658
      %v3887 = vpop.f32.mrb[0].mxu0
      %v3888 = vadd.f32 0.0, %v3887
      %v3889 = vpop.f32.mrb[0].mxu0
      %v3890 = vadd.f32 0.0, %v3889
      %v3891 = vpop.f32.mrb[0].mxu0
      %v3892 = vadd.f32 0.0, %v3891
      %v3893 = vpop.f32.mrb[0].mxu0
      %v3894 = vadd.f32 0.0, %v3893
      %3895 = vmatprep.mubr.bf16.mxu0 0
      %3896 = vmatmul.mubr.bf16.gmra.mrb[0].mxu0 %v3661
      %v3897 = vpop.f32.mrb[0].mxu0
      %v3898 = vadd.f32 0.0, %v3897
      %v3899 = vpop.f32.mrb[0].mxu0
      %v3900 = vadd.f32 0.0, %v3899
      %v3901 = vpop.f32.mrb[0].mxu0
      %v3902 = vadd.f32 0.0, %v3901
      %v3903 = vpop.f32.mrb[0].mxu0
      %v3904 = vadd.f32 0.0, %v3903
      %3905 = vmatprep.mubr.bf16.mxu0 0
      %3906 = vmatmul.mubr.bf16.gmra.mrb[0].mxu0 %v3664
      %v3907 = vpop.f32.mrb[0].mxu0
      %v3908 = vadd.f32 0.0, %v3907
      %v3909 = vpop.f32.mrb[0].mxu0
      %v3910 = vadd.f32 0.0, %v3909
      %v3911 = vpop.f32.mrb[0].mxu0
      %v3912 = vadd.f32 0.0, %v3911
      %v3913 = vpop.f32.mrb[0].mxu0
      %v3914 = vadd.f32 0.0, %v3913
      %3915 = vmatprep.mubr.bf16.mxu0 0
      %3916 = vmatmul.mubr.bf16.gmra.mrb[0].mxu0 %v3667
      %v3917 = vpop.f32.mrb[0].mxu0
      %v3918 = vadd.f32 0.0, %v3917
      %v3919 = vpop.f32.mrb[0].mxu0
      %v3920 = vadd.f32 0.0, %v3919
      %v3921 = vpop.f32.mrb[0].mxu0
      %v3922 = vadd.f32 0.0, %v3921
      %v3923 = vpop.f32.mrb[0].mxu0
      %v3924 = vadd.f32 0.0, %v3923
      %3925 = vmatprep.mubr.bf16.mxu0 0
      %3926 = vmatmul.mubr.bf16.gmra.mrb[0].mxu0 %v3670
      %v3927 = vpop.f32.mrb[0].mxu0
      %v3928 = vadd.f32 0.0, %v3927
      %v3929 = vpop.f32.mrb[0].mxu0
      %v3930 = vadd.f32 0.0, %v3929
      %v3931 = vpop.f32.mrb[0].mxu0
      %v3932 = vadd.f32 0.0, %v3931
      %v3933 = vpop.f32.mrb[0].mxu0
      %v3934 = vadd.f32 0.0, %v3933
      %3935 = vmatprep.mubr.bf16.mxu0 0
      %3936 = vmatmul.mubr.bf16.gmra.mrb[0].mxu0 %v3673
      %v3937 = vpop.f32.mrb[0].mxu0
      %v3938 = vadd.f32 0.0, %v3937
      %v3939 = vpop.f32.mrb[0].mxu0
      %v3940 = vadd.f32 0.0, %v3939
      %v3941 = vpop.f32.mrb[0].mxu0
      %v3942 = vadd.f32 0.0, %v3941
      %v3943 = vpop.f32.mrb[0].mxu0
      %v3944 = vadd.f32 0.0, %v3943
      %3945 = vmatprep.mubr.bf16.mxu0 0
      %3946 = vmatmul.mubr.bf16.gmra.mrb[0].mxu0 %v3676
      %v3947 = vpop.f32.mrb[0].mxu0
      %v3948 = vadd.f32 0.0, %v3947
      %v3949 = vpop.f32.mrb[0].mxu0
      %v3950 = vadd.f32 0.0, %v3949
      %v3951 = vpop.f32.mrb[0].mxu0
      %v3952 = vadd.f32 0.0, %v3951
      %v3953 = vpop.f32.mrb[0].mxu0
      %v3954 = vadd.f32 0.0, %v3953
      %3955 = vmatprep.mubr.bf16.mxu0 0
      %3956 = vmatmul.mubr.bf16.gmra.mrb[0].mxu0 %v3679
      %v3957 = vpop.f32.mrb[0].mxu0
      %v3958 = vadd.f32 0.0, %v3957
      %v3959 = vpop.f32.mrb[0].mxu0
      %v3960 = vadd.f32 0.0, %v3959
      %v3961 = vpop.f32.mrb[0].mxu0
      %v3962 = vadd.f32 0.0, %v3961
      %v3963 = vpop.f32.mrb[0].mxu0
      %v3964 = vadd.f32 0.0, %v3963
      %3965 = vmatprep.mubr.bf16.mxu0 0
      %3966 = vmatmul.mubr.bf16.gmra.mrb[0].mxu0 %v3682
      %v3967 = vpop.f32.mrb[0].mxu0
      %v3968 = vadd.f32 0.0, %v3967
      %v3969 = vpop.f32.mrb[0].mxu0
      %v3970 = vadd.f32 0.0, %v3969
      %v3971 = vpop.f32.mrb[0].mxu0
      %v3972 = vadd.f32 0.0, %v3971
      %v3973 = vpop.f32.mrb[0].mxu0
      %v3974 = vadd.f32 0.0, %v3973
      %3975 = vmatprep.mubr.bf16.mxu0 0
      %3976 = vmatmul.mubr.bf16.gmra.mrb[0].mxu0 %v3685
      %v3977 = vpop.f32.mrb[0].mxu0
      %v3978 = vadd.f32 0.0, %v3977
      %v3979 = vpop.f32.mrb[0].mxu0
      %v3980 = vadd.f32 0.0, %v3979
      %v3981 = vpop.f32.mrb[0].mxu0
      %v3982 = vadd.f32 0.0, %v3981
      %v3983 = vpop.f32.mrb[0].mxu0
      %v3984 = vadd.f32 0.0, %v3983
      %3985 = vmatprep.mubr.bf16.mxu0 0
      %3986 = vmatmul.mubr.bf16.gmra.mrb[0].mxu0 %v3688
      %v3987 = vpop.f32.mrb[0].mxu0
      %v3988 = vadd.f32 0.0, %v3987
      %v3989 = vpop.f32.mrb[0].mxu0
      %v3990 = vadd.f32 0.0, %v3989
      %v3991 = vpop.f32.mrb[0].mxu0
      %v3992 = vadd.f32 0.0, %v3991
      %v3993 = vpop.f32.mrb[0].mxu0
      %v3994 = vadd.f32 0.0, %v3993
      %3995 = vmatprep.mubr.bf16.mxu0 0
      %3996 = vmatmul.mubr.bf16.gmra.mrb[0].mxu0 %v3691
      %v3997 = vpop.f32.mrb[0].mxu0
      %v3998 = vadd.f32 0.0, %v3997
      %v3999 = vpop.f32.mrb[0].mxu0
      %v4000 = vadd.f32 0.0, %v3999
      %v4001 = vpop.f32.mrb[0].mxu0
      %v4002 = vadd.f32 0.0, %v4001
      %v4003 = vpop.f32.mrb[0].mxu0
      %v4004 = vadd.f32 0.0, %v4003
      %4005 = vdwg.mxu0
      %v4006 = vadd.f32 %v3228, %v3728
      %v4007 = vadd.f32 %v3229, %v3730
      %v4008 = vadd.f32 %v3230, %v3732
      %v4009 = vadd.f32 %v3231, %v3734
      %v4010 = vadd.f32 %v3232, %v3738
      %v4011 = vadd.f32 %v3233, %v3740
      %v4012 = vadd.f32 %v3234, %v3742
      %v4013 = vadd.f32 %v3235, %v3744
      %v4014 = vadd.f32 %v3236, %v3748
      %v4015 = vadd.f32 %v3237, %v3750
      %v4016 = vadd.f32 %v3238, %v3752
      %v4017 = vadd.f32 %v3239, %v3754
      %v4018 = vadd.f32 %v3240, %v3758
      %v4019 = vadd.f32 %v3241, %v3760
      %v4020 = vadd.f32 %v3242, %v3762
      %v4021 = vadd.f32 %v3243, %v3764
      %v4022 = vadd.f32 %v3244, %v3768
      %v4023 = vadd.f32 %v3245, %v3770
      %v4024 = vadd.f32 %v3246, %v3772
      %v4025 = vadd.f32 %v3247, %v3774
      %v4026 = vadd.f32 %v3248, %v3778
      %v4027 = vadd.f32 %v3249, %v3780
      %v4028 = vadd.f32 %v3250, %v3782
      %v4029 = vadd.f32 %v3251, %v3784
      %v4030 = vadd.f32 %v3252, %v3788
      %v4031 = vadd.f32 %v3253, %v3790
      %v4032 = vadd.f32 %v3254, %v3792
      %v4033 = vadd.f32 %v3255, %v3794
      %v4034 = vadd.f32 %v3256, %v3798
      %v4035 = vadd.f32 %v3257, %v3800
      %v4036 = vadd.f32 %v3258, %v3802
      %v4037 = vadd.f32 %v3259, %v3804
      %v4038 = vadd.f32 %v3260, %v3808
      %v4039 = vadd.f32 %v3261, %v3810
      %v4040 = vadd.f32 %v3262, %v3812
      %v4041 = vadd.f32 %v3263, %v3814
      %v4042 = vadd.f32 %v3264, %v3818
      %v4043 = vadd.f32 %v3265, %v3820
      %v4044 = vadd.f32 %v3266, %v3822
      %v4045 = vadd.f32 %v3267, %v3824
      %v4046 = vadd.f32 %v3268, %v3828
      %v4047 = vadd.f32 %v3269, %v3830
      %v4048 = vadd.f32 %v3270, %v3832
      %v4049 = vadd.f32 %v3271, %v3834
      %v4050 = vadd.f32 %v3272, %v3838
      %v4051 = vadd.f32 %v3273, %v3840
      %v4052 = vadd.f32 %v3274, %v3842
      %v4053 = vadd.f32 %v3275, %v3844
      %v4054 = vadd.f32 %v3276, %v3848
      %v4055 = vadd.f32 %v3277, %v3850
      %v4056 = vadd.f32 %v3278, %v3852
      %v4057 = vadd.f32 %v3279, %v3854
      %v4058 = vadd.f32 %v3280, %v3858
      %v4059 = vadd.f32 %v3281, %v3860
      %v4060 = vadd.f32 %v3282, %v3862
      %v4061 = vadd.f32 %v3283, %v3864
      %v4062 = vadd.f32 %v3284, %v3868
      %v4063 = vadd.f32 %v3285, %v3870
      %v4064 = vadd.f32 %v3286, %v3872
      %v4065 = vadd.f32 %v3287, %v3874
      %v4066 = vadd.f32 %v3288, %v3878
      %v4067 = vadd.f32 %v3289, %v3880
      %v4068 = vadd.f32 %v3290, %v3882
      %v4069 = vadd.f32 %v3291, %v3884
      %v4070 = vadd.f32 %v3292, %v3888
      %v4071 = vadd.f32 %v3293, %v3890
      %v4072 = vadd.f32 %v3294, %v3892
      %v4073 = vadd.f32 %v3295, %v3894
      %v4074 = vadd.f32 %v3296, %v3898
      %v4075 = vadd.f32 %v3297, %v3900
      %v4076 = vadd.f32 %v3298, %v3902
      %v4077 = vadd.f32 %v3299, %v3904
      %v4078 = vadd.f32 %v3300, %v3908
      %v4079 = vadd.f32 %v3301, %v3910
      %v4080 = vadd.f32 %v3302, %v3912
      %v4081 = vadd.f32 %v3303, %v3914
      %v4082 = vadd.f32 %v3304, %v3918
      %v4083 = vadd.f32 %v3305, %v3920
      %v4084 = vadd.f32 %v3306, %v3922
      %v4085 = vadd.f32 %v3307, %v3924
      %v4086 = vadd.f32 %v3308, %v3928
      %v4087 = vadd.f32 %v3309, %v3930
      %v4088 = vadd.f32 %v3310, %v3932
      %v4089 = vadd.f32 %v3311, %v3934
      %v4090 = vadd.f32 %v3312, %v3938
      %v4091 = vadd.f32 %v3313, %v3940
      %v4092 = vadd.f32 %v3314, %v3942
      %v4093 = vadd.f32 %v3315, %v3944
      %v4094 = vadd.f32 %v3316, %v3948
      %v4095 = vadd.f32 %v3317, %v3950
      %v4096 = vadd.f32 %v3318, %v3952
      %v4097 = vadd.f32 %v3319, %v3954
      %v4098 = vadd.f32 %v3320, %v3958
      %v4099 = vadd.f32 %v3321, %v3960
      %v4100 = vadd.f32 %v3322, %v3962
      %v4101 = vadd.f32 %v3323, %v3964
      %v4102 = vadd.f32 %v3324, %v3968
      %v4103 = vadd.f32 %v3325, %v3970
      %v4104 = vadd.f32 %v3326, %v3972
      %v4105 = vadd.f32 %v3327, %v3974
      %v4106 = vadd.f32 %v3328, %v3978
      %v4107 = vadd.f32 %v3329, %v3980
      %v4108 = vadd.f32 %v3330, %v3982
      %v4109 = vadd.f32 %v3331, %v3984
      %v4110 = vadd.f32 %v3332, %v3988
      %v4111 = vadd.f32 %v3333, %v3990
      %v4112 = vadd.f32 %v3334, %v3992
      %v4113 = vadd.f32 %v3335, %v3994
      %v4114 = vadd.f32 %v3336, %v3998
      %v4115 = vadd.f32 %v3337, %v4000
      %v4116 = vadd.f32 %v3338, %v4002
      %v4117 = vadd.f32 %v3339, %v4004
      %4118 = vst [vmem:[#allocation2] sm:$0xff] %v4006
      %4119 = vst.msk [vmem:[#allocation2 + $0x8] sm:$0xff] %vm1112, %v4007
      %4120 = vst [vmem:[#allocation2 + $0x10] sm:$0xff] %v4008
      %4121 = vst.msk [vmem:[#allocation2 + $0x18] sm:$0xff] %vm1112, %v4009
      %4122 = vst [vmem:[#allocation2 + $0x20] sm:$0xff] %v4010
      %4123 = vst.msk [vmem:[#allocation2 + $0x28] sm:$0xff] %vm1112, %v4011
      %4124 = vst [vmem:[#allocation2 + $0x30] sm:$0xff] %v4012
      %4125 = vst.msk [vmem:[#allocation2 + $0x38] sm:$0xff] %vm1112, %v4013
      %4126 = vst [vmem:[#allocation2 + $0x40] sm:$0xff] %v4014
      %4127 = vst.msk [vmem:[#allocation2 + $0x48] sm:$0xff] %vm1112, %v4015
      %4128 = vst [vmem:[#allocation2 + $0x50] sm:$0xff] %v4016
      %4129 = vst.msk [vmem:[#allocation2 + $0x58] sm:$0xff] %vm1112, %v4017
      %4130 = vst [vmem:[#allocation2 + $0x60] sm:$0xff] %v4018
      %4131 = vst.msk [vmem:[#allocation2 + $0x68] sm:$0xff] %vm1112, %v4019
      %4132 = vst [vmem:[#allocation2 + $0x70] sm:$0xff] %v4020
      %4133 = vst.msk [vmem:[#allocation2 + $0x78] sm:$0xff] %vm1112, %v4021
      %4134 = vst [vmem:[#allocation2 + $0x80] sm:$0xff] %v4022
      %4135 = vst.msk [vmem:[#allocation2 + $0x88] sm:$0xff] %vm1112, %v4023
      %4136 = vst [vmem:[#allocation2 + $0x90] sm:$0xff] %v4024
      %4137 = vst.msk [vmem:[#allocation2 + $0x98] sm:$0xff] %vm1112, %v4025
      %4138 = vst [vmem:[#allocation2 + $0xa0] sm:$0xff] %v4026
      %4139 = vst.msk [vmem:[#allocation2 + $0xa8] sm:$0xff] %vm1112, %v4027
      %4140 = vst [vmem:[#allocation2 + $0xb0] sm:$0xff] %v4028
      %4141 = vst.msk [vmem:[#allocation2 + $0xb8] sm:$0xff] %vm1112, %v4029
      %4142 = vst [vmem:[#allocation2 + $0xc0] sm:$0xff] %v4030
      %4143 = vst.msk [vmem:[#allocation2 + $0xc8] sm:$0xff] %vm1112, %v4031
      %4144 = vst [vmem:[#allocation2 + $0xd0] sm:$0xff] %v4032
      %4145 = vst.msk [vmem:[#allocation2 + $0xd8] sm:$0xff] %vm1112, %v4033
      %4146 = vst [vmem:[#allocation2 + $0xe0] sm:$0xff] %v4034
      %4147 = vst.msk [vmem:[#allocation2 + $0xe8] sm:$0xff] %vm1112, %v4035
      %4148 = vst [vmem:[#allocation2 + $0xf0] sm:$0xff] %v4036
      %4149 = vst.msk [vmem:[#allocation2 + $0xf8] sm:$0xff] %vm1112, %v4037
      %4150 = vst [vmem:[#allocation2 + $0x100] sm:$0xff] %v4038
      %4151 = vst.msk [vmem:[#allocation2 + $0x108] sm:$0xff] %vm1112, %v4039
      %4152 = vst [vmem:[#allocation2 + $0x110] sm:$0xff] %v4040
      %4153 = vst.msk [vmem:[#allocation2 + $0x118] sm:$0xff] %vm1112, %v4041
      %4154 = vst [vmem:[#allocation2 + $0x120] sm:$0xff] %v4042
      %4155 = vst.msk [vmem:[#allocation2 + $0x128] sm:$0xff] %vm1112, %v4043
      %4156 = vst [vmem:[#allocation2 + $0x130] sm:$0xff] %v4044
      %4157 = vst.msk [vmem:[#allocation2 + $0x138] sm:$0xff] %vm1112, %v4045
      %4158 = vst [vmem:[#allocation2 + $0x140] sm:$0xff] %v4046
      %4159 = vst.msk [vmem:[#allocation2 + $0x148] sm:$0xff] %vm1112, %v4047
      %4160 = vst [vmem:[#allocation2 + $0x150] sm:$0xff] %v4048
      %4161 = vst.msk [vmem:[#allocation2 + $0x158] sm:$0xff] %vm1112, %v4049
      %4162 = vst [vmem:[#allocation2 + $0x160] sm:$0xff] %v4050
      %4163 = vst.msk [vmem:[#allocation2 + $0x168] sm:$0xff] %vm1112, %v4051
      %4164 = vst [vmem:[#allocation2 + $0x170] sm:$0xff] %v4052
      %4165 = vst.msk [vmem:[#allocation2 + $0x178] sm:$0xff] %vm1112, %v4053
      %4166 = vst [vmem:[#allocation2 + $0x180] sm:$0xff] %v4054
      %4167 = vst.msk [vmem:[#allocation2 + $0x188] sm:$0xff] %vm1112, %v4055
      %4168 = vst [vmem:[#allocation2 + $0x190] sm:$0xff] %v4056
      %4169 = vst.msk [vmem:[#allocation2 + $0x198] sm:$0xff] %vm1112, %v4057
      %4170 = vst [vmem:[#allocation2 + $0x1a0] sm:$0xff] %v4058
      %4171 = vst.msk [vmem:[#allocation2 + $0x1a8] sm:$0xff] %vm1112, %v4059
      %4172 = vst [vmem:[#allocation2 + $0x1b0] sm:$0xff] %v4060
      %4173 = vst.msk [vmem:[#allocation2 + $0x1b8] sm:$0xff] %vm1112, %v4061
      %4174 = vst [vmem:[#allocation2 + $0x1c0] sm:$0xff] %v4062
      %4175 = vst.msk [vmem:[#allocation2 + $0x1c8] sm:$0xff] %vm1112, %v4063
      %4176 = vst [vmem:[#allocation2 + $0x1d0] sm:$0xff] %v4064
      %4177 = vst.msk [vmem:[#allocation2 + $0x1d8] sm:$0xff] %vm1112, %v4065
      %4178 = vst [vmem:[#allocation2 + $0x1e0] sm:$0xff] %v4066
      %4179 = vst.msk [vmem:[#allocation2 + $0x1e8] sm:$0xff] %vm1112, %v4067
      %4180 = vst [vmem:[#allocation2 + $0x1f0] sm:$0xff] %v4068
      %4181 = vst.msk [vmem:[#allocation2 + $0x1f8] sm:$0xff] %vm1112, %v4069
      %4182 = vst [vmem:[#allocation2 + $0x200] sm:$0xff] %v4070
      %4183 = vst.msk [vmem:[#allocation2 + $0x208] sm:$0xff] %vm1112, %v4071
      %4184 = vst [vmem:[#allocation2 + $0x210] sm:$0xff] %v4072
      %4185 = vst.msk [vmem:[#allocation2 + $0x218] sm:$0xff] %vm1112, %v4073
      %4186 = vst [vmem:[#allocation2 + $0x220] sm:$0xff] %v4074
      %4187 = vst.msk [vmem:[#allocation2 + $0x228] sm:$0xff] %vm1112, %v4075
      %4188 = vst [vmem:[#allocation2 + $0x230] sm:$0xff] %v4076
      %4189 = vst.msk [vmem:[#allocation2 + $0x238] sm:$0xff] %vm1112, %v4077
      %4190 = vst [vmem:[#allocation2 + $0x240] sm:$0xff] %v4078
      %4191 = vst.msk [vmem:[#allocation2 + $0x248] sm:$0xff] %vm1112, %v4079
      %4192 = vst [vmem:[#allocation2 + $0x250] sm:$0xff] %v4080
      %4193 = vst.msk [vmem:[#allocation2 + $0x258] sm:$0xff] %vm1112, %v4081
      %4194 = vst [vmem:[#allocation2 + $0x260] sm:$0xff] %v4082
      %4195 = vst.msk [vmem:[#allocation2 + $0x268] sm:$0xff] %vm1112, %v4083
      %4196 = vst [vmem:[#allocation2 + $0x270] sm:$0xff] %v4084
      %4197 = vst.msk [vmem:[#allocation2 + $0x278] sm:$0xff] %vm1112, %v4085
      %4198 = vst [vmem:[#allocation2 + $0x280] sm:$0xff] %v4086
      %4199 = vst.msk [vmem:[#allocation2 + $0x288] sm:$0xff] %vm1112, %v4087
      %4200 = vst [vmem:[#allocation2 + $0x290] sm:$0xff] %v4088
      %4201 = vst.msk [vmem:[#allocation2 + $0x298] sm:$0xff] %vm1112, %v4089
      %4202 = vst [vmem:[#allocation2 + $0x2a0] sm:$0xff] %v4090
      %4203 = vst.msk [vmem:[#allocation2 + $0x2a8] sm:$0xff] %vm1112, %v4091
      %4204 = vst [vmem:[#allocation2 + $0x2b0] sm:$0xff] %v4092
      %4205 = vst.msk [vmem:[#allocation2 + $0x2b8] sm:$0xff] %vm1112, %v4093
      %4206 = vst [vmem:[#allocation2 + $0x2c0] sm:$0xff] %v4094
      %4207 = vst.msk [vmem:[#allocation2 + $0x2c8] sm:$0xff] %vm1112, %v4095
      %4208 = vst [vmem:[#allocation2 + $0x2d0] sm:$0xff] %v4096
      %4209 = vst.msk [vmem:[#allocation2 + $0x2d8] sm:$0xff] %vm1112, %v4097
      %4210 = vst [vmem:[#allocation2 + $0x2e0] sm:$0xff] %v4098
      %4211 = vst.msk [vmem:[#allocation2 + $0x2e8] sm:$0xff] %vm1112, %v4099
      %4212 = vst [vmem:[#allocation2 + $0x2f0] sm:$0xff] %v4100
      %4213 = vst.msk [vmem:[#allocation2 + $0x2f8] sm:$0xff] %vm1112, %v4101
      %4214 = vst [vmem:[#allocation2 + $0x300] sm:$0xff] %v4102
      %4215 = vst.msk [vmem:[#allocation2 + $0x308] sm:$0xff] %vm1112, %v4103
      %4216 = vst [vmem:[#allocation2 + $0x310] sm:$0xff] %v4104
      %4217 = vst.msk [vmem:[#allocation2 + $0x318] sm:$0xff] %vm1112, %v4105
      %4218 = vst [vmem:[#allocation2 + $0x320] sm:$0xff] %v4106
      %4219 = vst.msk [vmem:[#allocation2 + $0x328] sm:$0xff] %vm1112, %v4107
      %4220 = vst [vmem:[#allocation2 + $0x330] sm:$0xff] %v4108
      %4221 = vst.msk [vmem:[#allocation2 + $0x338] sm:$0xff] %vm1112, %v4109
      %4222 = vst [vmem:[#allocation2 + $0x340] sm:$0xff] %v4110
      %4223 = vst.msk [vmem:[#allocation2 + $0x348] sm:$0xff] %vm1112, %v4111
      %4224 = vst [vmem:[#allocation2 + $0x350] sm:$0xff] %v4112
      %4225 = vst.msk [vmem:[#allocation2 + $0x358] sm:$0xff] %vm1112, %v4113
      %4226 = vst [vmem:[#allocation2 + $0x360] sm:$0xff] %v4114
      %4227 = vst.msk [vmem:[#allocation2 + $0x368] sm:$0xff] %vm1112, %v4115
      %4228 = vst [vmem:[#allocation2 + $0x370] sm:$0xff] %v4116
      %4229 = vst.msk [vmem:[#allocation2 + $0x378] sm:$0xff] %vm1112, %v4117
      %v4230 = vld [vmem:[#allocation2] sm:$0xff]
      %v4231 = vld [vmem:[#allocation2 + $0x8] sm:$0xff]
      %v4232 = vld [vmem:[#allocation2 + $0x10] sm:$0xff]
      %v4233 = vld [vmem:[#allocation2 + $0x18] sm:$0xff]
      %v4234 = vld [vmem:[#allocation2 + $0x20] sm:$0xff]
      %v4235 = vld [vmem:[#allocation2 + $0x28] sm:$0xff]
      %v4236 = vld [vmem:[#allocation2 + $0x30] sm:$0xff]
      %v4237 = vld [vmem:[#allocation2 + $0x38] sm:$0xff]
      %v4238 = vld [vmem:[#allocation2 + $0x40] sm:$0xff]
      %v4239 = vld [vmem:[#allocation2 + $0x48] sm:$0xff]
      %v4240 = vld [vmem:[#allocation2 + $0x50] sm:$0xff]
      %v4241 = vld [vmem:[#allocation2 + $0x58] sm:$0xff]
      %v4242 = vld [vmem:[#allocation2 + $0x60] sm:$0xff]
      %v4243 = vld [vmem:[#allocation2 + $0x68] sm:$0xff]
      %v4244 = vld [vmem:[#allocation2 + $0x70] sm:$0xff]
      %v4245 = vld [vmem:[#allocation2 + $0x78] sm:$0xff]
      %v4246 = vld [vmem:[#allocation2 + $0x80] sm:$0xff]
      %v4247 = vld [vmem:[#allocation2 + $0x88] sm:$0xff]
      %v4248 = vld [vmem:[#allocation2 + $0x90] sm:$0xff]
      %v4249 = vld [vmem:[#allocation2 + $0x98] sm:$0xff]
      %v4250 = vld [vmem:[#allocation2 + $0xa0] sm:$0xff]
      %v4251 = vld [vmem:[#allocation2 + $0xa8] sm:$0xff]
      %v4252 = vld [vmem:[#allocation2 + $0xb0] sm:$0xff]
      %v4253 = vld [vmem:[#allocation2 + $0xb8] sm:$0xff]
      %v4254 = vld [vmem:[#allocation2 + $0xc0] sm:$0xff]
      %v4255 = vld [vmem:[#allocation2 + $0xc8] sm:$0xff]
      %v4256 = vld [vmem:[#allocation2 + $0xd0] sm:$0xff]
      %v4257 = vld [vmem:[#allocation2 + $0xd8] sm:$0xff]
      %v4258 = vld [vmem:[#allocation2 + $0xe0] sm:$0xff]
      %v4259 = vld [vmem:[#allocation2 + $0xe8] sm:$0xff]
      %v4260 = vld [vmem:[#allocation2 + $0xf0] sm:$0xff]
      %v4261 = vld [vmem:[#allocation2 + $0xf8] sm:$0xff]
      %v4262 = vld [vmem:[#allocation2 + $0x100] sm:$0xff]
      %v4263 = vld [vmem:[#allocation2 + $0x108] sm:$0xff]
      %v4264 = vld [vmem:[#allocation2 + $0x110] sm:$0xff]
      %v4265 = vld [vmem:[#allocation2 + $0x118] sm:$0xff]
      %v4266 = vld [vmem:[#allocation2 + $0x120] sm:$0xff]
      %v4267 = vld [vmem:[#allocation2 + $0x128] sm:$0xff]
      %v4268 = vld [vmem:[#allocation2 + $0x130] sm:$0xff]
      %v4269 = vld [vmem:[#allocation2 + $0x138] sm:$0xff]
      %v4270 = vld [vmem:[#allocation2 + $0x140] sm:$0xff]
      %v4271 = vld [vmem:[#allocation2 + $0x148] sm:$0xff]
      %v4272 = vld [vmem:[#allocation2 + $0x150] sm:$0xff]
      %v4273 = vld [vmem:[#allocation2 + $0x158] sm:$0xff]
      %v4274 = vld [vmem:[#allocation2 + $0x160] sm:$0xff]
      %v4275 = vld [vmem:[#allocation2 + $0x168] sm:$0xff]
      %v4276 = vld [vmem:[#allocation2 + $0x170] sm:$0xff]
      %v4277 = vld [vmem:[#allocation2 + $0x178] sm:$0xff]
      %v4278 = vld [vmem:[#allocation2 + $0x180] sm:$0xff]
      %v4279 = vld [vmem:[#allocation2 + $0x188] sm:$0xff]
      %v4280 = vld [vmem:[#allocation2 + $0x190] sm:$0xff]
      %v4281 = vld [vmem:[#allocation2 + $0x198] sm:$0xff]
      %v4282 = vld [vmem:[#allocation2 + $0x1a0] sm:$0xff]
      %v4283 = vld [vmem:[#allocation2 + $0x1a8] sm:$0xff]
      %v4284 = vld [vmem:[#allocation2 + $0x1b0] sm:$0xff]
      %v4285 = vld [vmem:[#allocation2 + $0x1b8] sm:$0xff]
      %v4286 = vld [vmem:[#allocation2 + $0x1c0] sm:$0xff]
      %v4287 = vld [vmem:[#allocation2 + $0x1c8] sm:$0xff]
      %v4288 = vld [vmem:[#allocation2 + $0x1d0] sm:$0xff]
      %v4289 = vld [vmem:[#allocation2 + $0x1d8] sm:$0xff]
      %v4290 = vld [vmem:[#allocation2 + $0x1e0] sm:$0xff]
      %v4291 = vld [vmem:[#allocation2 + $0x1e8] sm:$0xff]
      %v4292 = vld [vmem:[#allocation2 + $0x1f0] sm:$0xff]
      %v4293 = vld [vmem:[#allocation2 + $0x1f8] sm:$0xff]
      %v4294 = vld [vmem:[#allocation2 + $0x200] sm:$0xff]
      %v4295 = vld [vmem:[#allocation2 + $0x208] sm:$0xff]
      %v4296 = vld [vmem:[#allocation2 + $0x210] sm:$0xff]
      %v4297 = vld [vmem:[#allocation2 + $0x218] sm:$0xff]
      %v4298 = vld [vmem:[#allocation2 + $0x220] sm:$0xff]
      %v4299 = vld [vmem:[#allocation2 + $0x228] sm:$0xff]
      %v4300 = vld [vmem:[#allocation2 + $0x230] sm:$0xff]
      %v4301 = vld [vmem:[#allocation2 + $0x238] sm:$0xff]
      %v4302 = vld [vmem:[#allocation2 + $0x240] sm:$0xff]
      %v4303 = vld [vmem:[#allocation2 + $0x248] sm:$0xff]
      %v4304 = vld [vmem:[#allocation2 + $0x250] sm:$0xff]
      %v4305 = vld [vmem:[#allocation2 + $0x258] sm:$0xff]
      %v4306 = vld [vmem:[#allocation2 + $0x260] sm:$0xff]
      %v4307 = vld [vmem:[#allocation2 + $0x268] sm:$0xff]
      %v4308 = vld [vmem:[#allocation2 + $0x270] sm:$0xff]
      %v4309 = vld [vmem:[#allocation2 + $0x278] sm:$0xff]
      %v4310 = vld [vmem:[#allocation2 + $0x280] sm:$0xff]
      %v4311 = vld [vmem:[#allocation2 + $0x288] sm:$0xff]
      %v4312 = vld [vmem:[#allocation2 + $0x290] sm:$0xff]
      %v4313 = vld [vmem:[#allocation2 + $0x298] sm:$0xff]
      %v4314 = vld [vmem:[#allocation2 + $0x2a0] sm:$0xff]
      %v4315 = vld [vmem:[#allocation2 + $0x2a8] sm:$0xff]
      %v4316 = vld [vmem:[#allocation2 + $0x2b0] sm:$0xff]
      %v4317 = vld [vmem:[#allocation2 + $0x2b8] sm:$0xff]
      %v4318 = vld [vmem:[#allocation2 + $0x2c0] sm:$0xff]
      %v4319 = vld [vmem:[#allocation2 + $0x2c8] sm:$0xff]
      %v4320 = vld [vmem:[#allocation2 + $0x2d0] sm:$0xff]
      %v4321 = vld [vmem:[#allocation2 + $0x2d8] sm:$0xff]
      %v4322 = vld [vmem:[#allocation2 + $0x2e0] sm:$0xff]
      %v4323 = vld [vmem:[#allocation2 + $0x2e8] sm:$0xff]
      %v4324 = vld [vmem:[#allocation2 + $0x2f0] sm:$0xff]
      %v4325 = vld [vmem:[#allocation2 + $0x2f8] sm:$0xff]
      %v4326 = vld [vmem:[#allocation2 + $0x300] sm:$0xff]
      %v4327 = vld [vmem:[#allocation2 + $0x308] sm:$0xff]
      %v4328 = vld [vmem:[#allocation2 + $0x310] sm:$0xff]
      %v4329 = vld [vmem:[#allocation2 + $0x318] sm:$0xff]
      %v4330 = vld [vmem:[#allocation2 + $0x320] sm:$0xff]
      %v4331 = vld [vmem:[#allocation2 + $0x328] sm:$0xff]
      %v4332 = vld [vmem:[#allocation2 + $0x330] sm:$0xff]
      %v4333 = vld [vmem:[#allocation2 + $0x338] sm:$0xff]
      %v4334 = vld [vmem:[#allocation2 + $0x340] sm:$0xff]
      %v4335 = vld [vmem:[#allocation2 + $0x348] sm:$0xff]
      %v4336 = vld [vmem:[#allocation2 + $0x350] sm:$0xff]
      %v4337 = vld [vmem:[#allocation2 + $0x358] sm:$0xff]
      %v4338 = vld [vmem:[#allocation2 + $0x360] sm:$0xff]
      %v4339 = vld [vmem:[#allocation2 + $0x368] sm:$0xff]
      %v4340 = vld [vmem:[#allocation2 + $0x370] sm:$0xff]
      %v4341 = vld [vmem:[#allocation2 + $0x378] sm:$0xff]
      %v4342 = vld [vmem:[%s436 + $0x20] sm:$0xf]
      %v4343 = vld [vmem:[%s436 + $0x24] sm:$0xf]
      %v4344 = vld [vmem:[%s436 + $0x28] sm:$0xf]
      %v4345 = vld [vmem:[%s436 + $0x2c] sm:$0xf]
      %v4346 = vld [vmem:[%s436 + $0x30] sm:$0xf]
      %v4347 = vld [vmem:[%s436 + $0x34] sm:$0xf]
      %v4348 = vld [vmem:[%s436 + $0x38] sm:$0xf]
      %v4349 = vld [vmem:[%s436 + $0x3c] sm:$0xf]
      %v4350 = vld [vmem:[%s436 + $0x40] sm:$0xf]
      %v4351 = vld [vmem:[%s436 + $0x44] sm:$0xf]
      %v4352 = vld [vmem:[%s436 + $0x48] sm:$0xf]
      %v4353 = vld [vmem:[%s436 + $0x4c] sm:$0xf]
      %v4354 = vld [vmem:[%s436 + $0x50] sm:$0xf]
      %v4355 = vld [vmem:[%s436 + $0x54] sm:$0xf]
      %v4356 = vld [vmem:[%s436 + $0x58] sm:$0xf]
      %v4357 = vld [vmem:[%s436 + $0x5c] sm:$0xf]
      %v4358 = vld [vmem:[%s436 + $0x60] sm:$0xf]
      %v4359 = vld [vmem:[%s436 + $0x64] sm:$0xf]
      %v4360 = vld [vmem:[%s436 + $0x68] sm:$0xf]
      %v4361 = vld [vmem:[%s436 + $0x6c] sm:$0xf]
      %v4362 = vld [vmem:[%s436 + $0x70] sm:$0xf]
      %v4363 = vld [vmem:[%s436 + $0x74] sm:$0xf]
      %v4364 = vld [vmem:[%s436 + $0x78] sm:$0xf]
      %v4365 = vld [vmem:[%s436 + $0x7c] sm:$0xf]
      %v4366 = vld [vmem:[%s436 + $0x80] sm:$0xf]
      %v4367 = vld [vmem:[%s436 + $0x84] sm:$0xf]
      %v4368 = vld [vmem:[%s436 + $0x88] sm:$0xf]
      %v4369 = vld [vmem:[%s436 + $0x8c] sm:$0xf]
      %v4370 = vld [vmem:[%s436 + $0x90] sm:$0xf]
      %v4371 = vld [vmem:[%s436 + $0x94] sm:$0xf]
      %v4372 = vld [vmem:[%s436 + $0x98] sm:$0xf]
      %v4373 = vld [vmem:[%s436 + $0x9c] sm:$0xf]
      %v4374 = vld [vmem:[%s436 + $0xa0] sm:$0xf]
      %v4375 = vld [vmem:[%s436 + $0xa4] sm:$0xf]
      %v4376 = vld [vmem:[%s436 + $0xa8] sm:$0xf]
      %v4377 = vld [vmem:[%s436 + $0xac] sm:$0xf]
      %v4378 = vld [vmem:[%s436 + $0xb0] sm:$0xf]
      %v4379 = vld [vmem:[%s436 + $0xb4] sm:$0xf]
      %v4380 = vld [vmem:[%s436 + $0xb8] sm:$0xf]
      %v4381 = vld [vmem:[%s436 + $0xbc] sm:$0xf]
      %v4382 = vld [vmem:[%s436 + $0xc0] sm:$0xf]
      %v4383 = vld [vmem:[%s436 + $0xc4] sm:$0xf]
      %v4384 = vld [vmem:[%s436 + $0xc8] sm:$0xf]
      %v4385 = vld [vmem:[%s436 + $0xcc] sm:$0xf]
      %v4386 = vld [vmem:[%s436 + $0xd0] sm:$0xf]
      %v4387 = vld [vmem:[%s436 + $0xd4] sm:$0xf]
      %v4388 = vld [vmem:[%s436 + $0xd8] sm:$0xf]
      %v4389 = vld [vmem:[%s436 + $0xdc] sm:$0xf]
      %v4390 = vld [vmem:[%s436 + $0xe0] sm:$0xf]
      %v4391 = vld [vmem:[%s436 + $0xe4] sm:$0xf]
      %v4392 = vld [vmem:[%s436 + $0xe8] sm:$0xf]
      %v4393 = vld [vmem:[%s436 + $0xec] sm:$0xf]
      %v4394 = vld [vmem:[%s436 + $0xf0] sm:$0xf]
      %v4395 = vld [vmem:[%s436 + $0xf4] sm:$0xf]
      %v4396 = vld [vmem:[%s436 + $0xf8] sm:$0xf]
      %v4397 = vld [vmem:[%s436 + $0xfc] sm:$0xf]
      %s4398 = scalar_lea.vmem %s1, 384
      %v4399 = vld [vmem:[%s4398] sm:$0xff]
      %v4400 = vld [vmem:[%s4398 + $0x8] sm:$0xff]
      %v4401 = vld [vmem:[%s4398 + $0x10] sm:$0xff]
      %v4402 = vld [vmem:[%s4398 + $0x18] sm:$0xff]
      %v4403 = vld [vmem:[%s4398 + $0x20] sm:$0xff]
      %v4404 = vld [vmem:[%s4398 + $0x28] sm:$0xff]
      %v4405 = vld [vmem:[%s4398 + $0x30] sm:$0xff]
      %v4406 = vld [vmem:[%s4398 + $0x38] sm:$0xff]
      %v4407 = vld [vmem:[%s4398 + $0x40] sm:$0xff]
      %v4408 = vld [vmem:[%s4398 + $0x48] sm:$0xff]
      %v4409 = vld [vmem:[%s4398 + $0x50] sm:$0xff]
      %v4410 = vld [vmem:[%s4398 + $0x58] sm:$0xff]
      %v4467 = vunpack.c.l.b16 %v4342
      %v4468 = vunpack.c.l.b16 %v4343
      %v4469 = vunpack.c.l.b16 %v4344
      %v4470 = vunpack.c.l.b16 %v4345
      %v4471 = vunpack.c.l.b16 %v4346
      %v4472 = vunpack.c.l.b16 %v4347
      %v4473 = vunpack.c.l.b16 %v4348
      %v4474 = vunpack.c.l.b16 %v4349
      %v4475 = vunpack.c.l.b16 %v4350
      %v4476 = vunpack.c.l.b16 %v4351
      %v4477 = vunpack.c.l.b16 %v4352
      %v4478 = vunpack.c.l.b16 %v4353
      %v4479 = vunpack.c.l.b16 %v4354
      %v4480 = vunpack.c.l.b16 %v4355
      %v4481 = vunpack.c.l.b16 %v4356
      %v4482 = vunpack.c.l.b16 %v4357
      %v4483 = vunpack.c.l.b16 %v4358
      %v4484 = vunpack.c.l.b16 %v4359
      %v4485 = vunpack.c.l.b16 %v4360
      %v4486 = vunpack.c.l.b16 %v4361
      %v4487 = vunpack.c.l.b16 %v4362
      %v4488 = vunpack.c.l.b16 %v4363
      %v4489 = vunpack.c.l.b16 %v4364
      %v4490 = vunpack.c.l.b16 %v4365
      %v4491 = vunpack.c.l.b16 %v4366
      %v4492 = vunpack.c.l.b16 %v4367
      %v4493 = vunpack.c.l.b16 %v4368
      %v4494 = vunpack.c.l.b16 %v4369
      %v4495 = vunpack.c.l.b16 %v4370
      %v4496 = vunpack.c.l.b16 %v4371
      %v4497 = vunpack.c.l.b16 %v4372
      %v4498 = vunpack.c.l.b16 %v4373
      %v4499 = vunpack.c.l.b16 %v4374
      %v4500 = vunpack.c.l.b16 %v4375
      %v4501 = vunpack.c.l.b16 %v4376
      %v4502 = vunpack.c.l.b16 %v4377
      %v4503 = vunpack.c.l.b16 %v4378
      %v4504 = vunpack.c.l.b16 %v4379
      %v4505 = vunpack.c.l.b16 %v4380
      %v4506 = vunpack.c.l.b16 %v4381
      %v4507 = vunpack.c.l.b16 %v4382
      %v4508 = vunpack.c.l.b16 %v4383
      %v4509 = vunpack.c.l.b16 %v4384
      %v4510 = vunpack.c.l.b16 %v4385
      %v4511 = vunpack.c.l.b16 %v4386
      %v4512 = vunpack.c.l.b16 %v4387
      %v4513 = vunpack.c.l.b16 %v4388
      %v4514 = vunpack.c.l.b16 %v4389
      %v4515 = vunpack.c.l.b16 %v4390
      %v4516 = vunpack.c.l.b16 %v4391
      %v4517 = vunpack.c.l.b16 %v4392
      %v4518 = vunpack.c.l.b16 %v4393
      %v4519 = vunpack.c.l.b16 %v4394
      %v4520 = vunpack.c.l.b16 %v4395
      %v4521 = vunpack.c.l.b16 %v4396
      %v4522 = vunpack.c.l.b16 %v4397
      %v4523 = vpack.c.b16 %v4468, %v4467
      %v4524 = vpack.c.b16 %v4470, %v4469
      %v4525 = vpack.c.b16 %v4472, %v4471
      %v4526 = vpack.c.b16 %v4474, %v4473
      %v4527 = vpack.c.b16 %v4476, %v4475
      %v4528 = vpack.c.b16 %v4478, %v4477
      %v4529 = vpack.c.b16 %v4480, %v4479
      %v4530 = vpack.c.b16 %v4482, %v4481
      %v4531 = vpack.c.b16 %v4484, %v4483
      %v4532 = vpack.c.b16 %v4486, %v4485
      %v4533 = vpack.c.b16 %v4488, %v4487
      %v4534 = vpack.c.b16 %v4490, %v4489
      %v4535 = vpack.c.b16 %v4492, %v4491
      %v4536 = vpack.c.b16 %v4494, %v4493
      %v4537 = vpack.c.b16 %v4496, %v4495
      %v4538 = vpack.c.b16 %v4498, %v4497
      %v4539 = vpack.c.b16 %v4500, %v4499
      %v4540 = vpack.c.b16 %v4502, %v4501
      %v4541 = vpack.c.b16 %v4504, %v4503
      %v4542 = vpack.c.b16 %v4506, %v4505
      %v4543 = vpack.c.b16 %v4508, %v4507
      %v4544 = vpack.c.b16 %v4510, %v4509
      %v4545 = vpack.c.b16 %v4512, %v4511
      %v4546 = vpack.c.b16 %v4514, %v4513
      %v4547 = vpack.c.b16 %v4516, %v4515
      %v4548 = vpack.c.b16 %v4518, %v4517
      %v4549 = vpack.c.b16 %v4520, %v4519
      %v4550 = vpack.c.b16 %v4522, %v4521
      %v4563 = vunpack.c.l.b16 %v4399
      %v4564 = vunpack.c.h.b16 %v4399
      %v4565 = vunpack.c.l.b16 %v4400
      %v4566 = vunpack.c.h.b16 %v4400
      %v4567 = vunpack.c.l.b16 %v4401
      %v4568 = vunpack.c.h.b16 %v4401
      %v4569 = vunpack.c.l.b16 %v4402
      %v4570 = vunpack.c.h.b16 %v4402
      %v4571 = vunpack.c.l.b16 %v4403
      %v4572 = vunpack.c.h.b16 %v4403
      %v4573 = vunpack.c.l.b16 %v4404
      %v4574 = vunpack.c.h.b16 %v4404
      %v4575 = vunpack.c.l.b16 %v4405
      %v4576 = vunpack.c.h.b16 %v4405
      %v4577 = vunpack.c.l.b16 %v4406
      %v4578 = vunpack.c.h.b16 %v4406
      %v4579 = vunpack.c.l.b16 %v4407
      %v4580 = vunpack.c.h.b16 %v4407
      %v4581 = vunpack.c.l.b16 %v4408
      %v4582 = vunpack.c.h.b16 %v4408
      %v4583 = vunpack.c.l.b16 %v4409
      %v4584 = vunpack.c.h.b16 %v4409
      %v4585 = vunpack.c.l.b16 %v4410
      %v4586 = vunpack.c.h.b16 %v4410
      %v4587 = vpack.c.b16 %v4565, %v4563
      %v4588 = vpack.c.b16 %v4566, %v4564
      %v4589 = vpack.c.b16 %v4569, %v4567
      %v4590 = vpack.c.b16 %v4570, %v4568
      %v4591 = vpack.c.b16 %v4573, %v4571
      %v4592 = vpack.c.b16 %v4574, %v4572
      %v4593 = vpack.c.b16 %v4577, %v4575
      %v4594 = vpack.c.b16 %v4578, %v4576
      %v4595 = vpack.c.b16 %v4581, %v4579
      %v4596 = vpack.c.b16 %v4582, %v4580
      %v4597 = vpack.c.b16 %v4585, %v4583
      %v4598 = vpack.c.b16 %v4586, %v4584
      %v4612 = vsel %vm713, %v4523, 0
      %v4615 = vsel %vm713, %v4524, 0
      %v4618 = vsel %vm713, %v4525, 0
      %v4621 = vsel %vm713, %v4526, 0
      %v4624 = vsel %vm713, %v4527, 0
      %v4627 = vsel %vm713, %v4528, 0
      %v4630 = vsel %vm713, %v4529, 0
      %v4633 = vsel %vm713, %v4530, 0
      %v4636 = vsel %vm713, %v4531, 0
      %v4639 = vsel %vm713, %v4532, 0
      %v4642 = vsel %vm713, %v4533, 0
      %v4645 = vsel %vm713, %v4534, 0
      %v4648 = vsel %vm713, %v4535, 0
      %v4651 = vsel %vm713, %v4536, 0
      %v4654 = vsel %vm713, %v4537, 0
      %v4657 = vsel %vm713, %v4538, 0
      %v4660 = vsel %vm713, %v4539, 0
      %v4663 = vsel %vm713, %v4540, 0
      %v4666 = vsel %vm713, %v4541, 0
      %v4669 = vsel %vm713, %v4542, 0
      %v4672 = vsel %vm713, %v4543, 0
      %v4675 = vsel %vm713, %v4544, 0
      %v4678 = vsel %vm713, %v4545, 0
      %v4681 = vsel %vm713, %v4546, 0
      %v4684 = vsel %vm713, %v4547, 0
      %v4687 = vsel %vm713, %v4548, 0
      %v4690 = vsel %vm713, %v4549, 0
      %v4693 = vsel %vm713, %v4550, 0
      %4695 = vmatprep.subr.bf16.mxu0 %v4588
      %4696 = vmatpush1.bf16.msra.mxu0 %v4587
      %4697 = vmatprep.subr.bf16.mxu0 %v4590
      %4698 = vmatpush1.bf16.msra.mxu0 %v4589
      %4699 = vmatprep.subr.bf16.mxu0 %v4592
      %4700 = vmatpush1.bf16.msra.mxu0 %v4591
      %4701 = vmatprep.subr.bf16.mxu0 %v4594
      %4702 = vmatpush1.bf16.msra.mxu0 %v4593
      %4703 = vmatprep.subr.bf16.mxu0 %v4596
      %4704 = vmatpush1.bf16.msra.mxu0 %v4595
      %4705 = vmatprep.subr.bf16.mxu0 %v4598
      %4706 = vmatpush1.bf16.msra.mxu0 %v4597
      %4707 = vmatprep.subr.bf16.mxu0 0
      %4708 = vmatpush1.bf16.msra.mxu0 0
      %4709 = vmatprep.subr.bf16.mxu0 0
      %4710 = vmatpush1.bf16.msra.mxu0 0
      %4711 = vmatprep.subr.bf16.mxu0 0
      %4712 = vmatpush1.bf16.msra.mxu0 0
      %4713 = vmatprep.subr.bf16.mxu0 0
      %4714 = vmatpush1.bf16.msra.mxu0 0
      %4715 = vmatprep.subr.bf16.mxu0 0
      %4716 = vmatpush1.bf16.msra.mxu0 0
      %4717 = vmatprep.subr.bf16.mxu0 0
      %4718 = vmatpush1.bf16.msra.mxu0 0
      %4719 = vmatprep.subr.bf16.mxu0 0
      %4720 = vmatpush1.bf16.msra.mxu0 0
      %4721 = vmatprep.subr.bf16.mxu0 0
      %4722 = vmatpush1.bf16.msra.mxu0 0
      %4723 = vmatprep.subr.bf16.mxu0 0
      %4724 = vmatpush1.bf16.msra.mxu0 0
      %4725 = vmatprep.subr.bf16.mxu0 0
      %4726 = vmatpush1.bf16.msra.mxu0 0
      %4727 = vmatprep.mubr.bf16.mxu0 0
      %4728 = vmatmul.mubr.bf16.gmra.mrb[0].mxu0 %v4612
      %v4729 = vpop.f32.mrb[0].mxu0
      %v4730 = vadd.f32 0.0, %v4729
      %v4731 = vpop.f32.mrb[0].mxu0
      %v4732 = vadd.f32 0.0, %v4731
      %v4733 = vpop.f32.mrb[0].mxu0
      %v4734 = vadd.f32 0.0, %v4733
      %v4735 = vpop.f32.mrb[0].mxu0
      %v4736 = vadd.f32 0.0, %v4735
      %4737 = vmatprep.mubr.bf16.mxu0 0
      %4738 = vmatmul.mubr.bf16.gmra.mrb[0].mxu0 %v4615
      %v4739 = vpop.f32.mrb[0].mxu0
      %v4740 = vadd.f32 0.0, %v4739
      %v4741 = vpop.f32.mrb[0].mxu0
      %v4742 = vadd.f32 0.0, %v4741
      %v4743 = vpop.f32.mrb[0].mxu0
      %v4744 = vadd.f32 0.0, %v4743
      %v4745 = vpop.f32.mrb[0].mxu0
      %v4746 = vadd.f32 0.0, %v4745
      %4747 = vmatprep.mubr.bf16.mxu0 0
      %4748 = vmatmul.mubr.bf16.gmra.mrb[0].mxu0 %v4618
      %v4749 = vpop.f32.mrb[0].mxu0
      %v4750 = vadd.f32 0.0, %v4749
      %v4751 = vpop.f32.mrb[0].mxu0
      %v4752 = vadd.f32 0.0, %v4751
      %v4753 = vpop.f32.mrb[0].mxu0
      %v4754 = vadd.f32 0.0, %v4753
      %v4755 = vpop.f32.mrb[0].mxu0
      %v4756 = vadd.f32 0.0, %v4755
      %4757 = vmatprep.mubr.bf16.mxu0 0
      %4758 = vmatmul.mubr.bf16.gmra.mrb[0].mxu0 %v4621
      %v4759 = vpop.f32.mrb[0].mxu0
      %v4760 = vadd.f32 0.0, %v4759
      %v4761 = vpop.f32.mrb[0].mxu0
      %v4762 = vadd.f32 0.0, %v4761
      %v4763 = vpop.f32.mrb[0].mxu0
      %v4764 = vadd.f32 0.0, %v4763
      %v4765 = vpop.f32.mrb[0].mxu0
      %v4766 = vadd.f32 0.0, %v4765
      %4767 = vmatprep.mubr.bf16.mxu0 0
      %4768 = vmatmul.mubr.bf16.gmra.mrb[0].mxu0 %v4624
      %v4769 = vpop.f32.mrb[0].mxu0
      %v4770 = vadd.f32 0.0, %v4769
      %v4771 = vpop.f32.mrb[0].mxu0
      %v4772 = vadd.f32 0.0, %v4771
      %v4773 = vpop.f32.mrb[0].mxu0
      %v4774 = vadd.f32 0.0, %v4773
      %v4775 = vpop.f32.mrb[0].mxu0
      %v4776 = vadd.f32 0.0, %v4775
      %4777 = vmatprep.mubr.bf16.mxu0 0
      %4778 = vmatmul.mubr.bf16.gmra.mrb[0].mxu0 %v4627
      %v4779 = vpop.f32.mrb[0].mxu0
      %v4780 = vadd.f32 0.0, %v4779
      %v4781 = vpop.f32.mrb[0].mxu0
      %v4782 = vadd.f32 0.0, %v4781
      %v4783 = vpop.f32.mrb[0].mxu0
      %v4784 = vadd.f32 0.0, %v4783
      %v4785 = vpop.f32.mrb[0].mxu0
      %v4786 = vadd.f32 0.0, %v4785
      %4787 = vmatprep.mubr.bf16.mxu0 0
      %4788 = vmatmul.mubr.bf16.gmra.mrb[0].mxu0 %v4630
      %v4789 = vpop.f32.mrb[0].mxu0
      %v4790 = vadd.f32 0.0, %v4789
      %v4791 = vpop.f32.mrb[0].mxu0
      %v4792 = vadd.f32 0.0, %v4791
      %v4793 = vpop.f32.mrb[0].mxu0
      %v4794 = vadd.f32 0.0, %v4793
      %v4795 = vpop.f32.mrb[0].mxu0
      %v4796 = vadd.f32 0.0, %v4795
      %4797 = vmatprep.mubr.bf16.mxu0 0
      %4798 = vmatmul.mubr.bf16.gmra.mrb[0].mxu0 %v4633
      %v4799 = vpop.f32.mrb[0].mxu0
      %v4800 = vadd.f32 0.0, %v4799
      %v4801 = vpop.f32.mrb[0].mxu0
      %v4802 = vadd.f32 0.0, %v4801
      %v4803 = vpop.f32.mrb[0].mxu0
      %v4804 = vadd.f32 0.0, %v4803
      %v4805 = vpop.f32.mrb[0].mxu0
      %v4806 = vadd.f32 0.0, %v4805
      %4807 = vmatprep.mubr.bf16.mxu0 0
      %4808 = vmatmul.mubr.bf16.gmra.mrb[0].mxu0 %v4636
      %v4809 = vpop.f32.mrb[0].mxu0
      %v4810 = vadd.f32 0.0, %v4809
      %v4811 = vpop.f32.mrb[0].mxu0
      %v4812 = vadd.f32 0.0, %v4811
      %v4813 = vpop.f32.mrb[0].mxu0
      %v4814 = vadd.f32 0.0, %v4813
      %v4815 = vpop.f32.mrb[0].mxu0
      %v4816 = vadd.f32 0.0, %v4815
      %4817 = vmatprep.mubr.bf16.mxu0 0
      %4818 = vmatmul.mubr.bf16.gmra.mrb[0].mxu0 %v4639
      %v4819 = vpop.f32.mrb[0].mxu0
      %v4820 = vadd.f32 0.0, %v4819
      %v4821 = vpop.f32.mrb[0].mxu0
      %v4822 = vadd.f32 0.0, %v4821
      %v4823 = vpop.f32.mrb[0].mxu0
      %v4824 = vadd.f32 0.0, %v4823
      %v4825 = vpop.f32.mrb[0].mxu0
      %v4826 = vadd.f32 0.0, %v4825
      %4827 = vmatprep.mubr.bf16.mxu0 0
      %4828 = vmatmul.mubr.bf16.gmra.mrb[0].mxu0 %v4642
      %v4829 = vpop.f32.mrb[0].mxu0
      %v4830 = vadd.f32 0.0, %v4829
      %v4831 = vpop.f32.mrb[0].mxu0
      %v4832 = vadd.f32 0.0, %v4831
      %v4833 = vpop.f32.mrb[0].mxu0
      %v4834 = vadd.f32 0.0, %v4833
      %v4835 = vpop.f32.mrb[0].mxu0
      %v4836 = vadd.f32 0.0, %v4835
      %4837 = vmatprep.mubr.bf16.mxu0 0
      %4838 = vmatmul.mubr.bf16.gmra.mrb[0].mxu0 %v4645
      %v4839 = vpop.f32.mrb[0].mxu0
      %v4840 = vadd.f32 0.0, %v4839
      %v4841 = vpop.f32.mrb[0].mxu0
      %v4842 = vadd.f32 0.0, %v4841
      %v4843 = vpop.f32.mrb[0].mxu0
      %v4844 = vadd.f32 0.0, %v4843
      %v4845 = vpop.f32.mrb[0].mxu0
      %v4846 = vadd.f32 0.0, %v4845
      %4847 = vmatprep.mubr.bf16.mxu0 0
      %4848 = vmatmul.mubr.bf16.gmra.mrb[0].mxu0 %v4648
      %v4849 = vpop.f32.mrb[0].mxu0
      %v4850 = vadd.f32 0.0, %v4849
      %v4851 = vpop.f32.mrb[0].mxu0
      %v4852 = vadd.f32 0.0, %v4851
      %v4853 = vpop.f32.mrb[0].mxu0
      %v4854 = vadd.f32 0.0, %v4853
      %v4855 = vpop.f32.mrb[0].mxu0
      %v4856 = vadd.f32 0.0, %v4855
      %4857 = vmatprep.mubr.bf16.mxu0 0
      %4858 = vmatmul.mubr.bf16.gmra.mrb[0].mxu0 %v4651
      %v4859 = vpop.f32.mrb[0].mxu0
      %v4860 = vadd.f32 0.0, %v4859
      %v4861 = vpop.f32.mrb[0].mxu0
      %v4862 = vadd.f32 0.0, %v4861
      %v4863 = vpop.f32.mrb[0].mxu0
      %v4864 = vadd.f32 0.0, %v4863
      %v4865 = vpop.f32.mrb[0].mxu0
      %v4866 = vadd.f32 0.0, %v4865
      %4867 = vmatprep.mubr.bf16.mxu0 0
      %4868 = vmatmul.mubr.bf16.gmra.mrb[0].mxu0 %v4654
      %v4869 = vpop.f32.mrb[0].mxu0
      %v4870 = vadd.f32 0.0, %v4869
      %v4871 = vpop.f32.mrb[0].mxu0
      %v4872 = vadd.f32 0.0, %v4871
      %v4873 = vpop.f32.mrb[0].mxu0
      %v4874 = vadd.f32 0.0, %v4873
      %v4875 = vpop.f32.mrb[0].mxu0
      %v4876 = vadd.f32 0.0, %v4875
      %4877 = vmatprep.mubr.bf16.mxu0 0
      %4878 = vmatmul.mubr.bf16.gmra.mrb[0].mxu0 %v4657
      %v4879 = vpop.f32.mrb[0].mxu0
      %v4880 = vadd.f32 0.0, %v4879
      %v4881 = vpop.f32.mrb[0].mxu0
      %v4882 = vadd.f32 0.0, %v4881
      %v4883 = vpop.f32.mrb[0].mxu0
      %v4884 = vadd.f32 0.0, %v4883
      %v4885 = vpop.f32.mrb[0].mxu0
      %v4886 = vadd.f32 0.0, %v4885
      %4887 = vmatprep.mubr.bf16.mxu0 0
      %4888 = vmatmul.mubr.bf16.gmra.mrb[0].mxu0 %v4660
      %v4889 = vpop.f32.mrb[0].mxu0
      %v4890 = vadd.f32 0.0, %v4889
      %v4891 = vpop.f32.mrb[0].mxu0
      %v4892 = vadd.f32 0.0, %v4891
      %v4893 = vpop.f32.mrb[0].mxu0
      %v4894 = vadd.f32 0.0, %v4893
      %v4895 = vpop.f32.mrb[0].mxu0
      %v4896 = vadd.f32 0.0, %v4895
      %4897 = vmatprep.mubr.bf16.mxu0 0
      %4898 = vmatmul.mubr.bf16.gmra.mrb[0].mxu0 %v4663
      %v4899 = vpop.f32.mrb[0].mxu0
      %v4900 = vadd.f32 0.0, %v4899
      %v4901 = vpop.f32.mrb[0].mxu0
      %v4902 = vadd.f32 0.0, %v4901
      %v4903 = vpop.f32.mrb[0].mxu0
      %v4904 = vadd.f32 0.0, %v4903
      %v4905 = vpop.f32.mrb[0].mxu0
      %v4906 = vadd.f32 0.0, %v4905
      %4907 = vmatprep.mubr.bf16.mxu0 0
      %4908 = vmatmul.mubr.bf16.gmra.mrb[0].mxu0 %v4666
      %v4909 = vpop.f32.mrb[0].mxu0
      %v4910 = vadd.f32 0.0, %v4909
      %v4911 = vpop.f32.mrb[0].mxu0
      %v4912 = vadd.f32 0.0, %v4911
      %v4913 = vpop.f32.mrb[0].mxu0
      %v4914 = vadd.f32 0.0, %v4913
      %v4915 = vpop.f32.mrb[0].mxu0
      %v4916 = vadd.f32 0.0, %v4915
      %4917 = vmatprep.mubr.bf16.mxu0 0
      %4918 = vmatmul.mubr.bf16.gmra.mrb[0].mxu0 %v4669
      %v4919 = vpop.f32.mrb[0].mxu0
      %v4920 = vadd.f32 0.0, %v4919
      %v4921 = vpop.f32.mrb[0].mxu0
      %v4922 = vadd.f32 0.0, %v4921
      %v4923 = vpop.f32.mrb[0].mxu0
      %v4924 = vadd.f32 0.0, %v4923
      %v4925 = vpop.f32.mrb[0].mxu0
      %v4926 = vadd.f32 0.0, %v4925
      %4927 = vmatprep.mubr.bf16.mxu0 0
      %4928 = vmatmul.mubr.bf16.gmra.mrb[0].mxu0 %v4672
      %v4929 = vpop.f32.mrb[0].mxu0
      %v4930 = vadd.f32 0.0, %v4929
      %v4931 = vpop.f32.mrb[0].mxu0
      %v4932 = vadd.f32 0.0, %v4931
      %v4933 = vpop.f32.mrb[0].mxu0
      %v4934 = vadd.f32 0.0, %v4933
      %v4935 = vpop.f32.mrb[0].mxu0
      %v4936 = vadd.f32 0.0, %v4935
      %4937 = vmatprep.mubr.bf16.mxu0 0
      %4938 = vmatmul.mubr.bf16.gmra.mrb[0].mxu0 %v4675
      %v4939 = vpop.f32.mrb[0].mxu0
      %v4940 = vadd.f32 0.0, %v4939
      %v4941 = vpop.f32.mrb[0].mxu0
      %v4942 = vadd.f32 0.0, %v4941
      %v4943 = vpop.f32.mrb[0].mxu0
      %v4944 = vadd.f32 0.0, %v4943
      %v4945 = vpop.f32.mrb[0].mxu0
      %v4946 = vadd.f32 0.0, %v4945
      %4947 = vmatprep.mubr.bf16.mxu0 0
      %4948 = vmatmul.mubr.bf16.gmra.mrb[0].mxu0 %v4678
      %v4949 = vpop.f32.mrb[0].mxu0
      %v4950 = vadd.f32 0.0, %v4949
      %v4951 = vpop.f32.mrb[0].mxu0
      %v4952 = vadd.f32 0.0, %v4951
      %v4953 = vpop.f32.mrb[0].mxu0
      %v4954 = vadd.f32 0.0, %v4953
      %v4955 = vpop.f32.mrb[0].mxu0
      %v4956 = vadd.f32 0.0, %v4955
      %4957 = vmatprep.mubr.bf16.mxu0 0
      %4958 = vmatmul.mubr.bf16.gmra.mrb[0].mxu0 %v4681
      %v4959 = vpop.f32.mrb[0].mxu0
      %v4960 = vadd.f32 0.0, %v4959
      %v4961 = vpop.f32.mrb[0].mxu0
      %v4962 = vadd.f32 0.0, %v4961
      %v4963 = vpop.f32.mrb[0].mxu0
      %v4964 = vadd.f32 0.0, %v4963
      %v4965 = vpop.f32.mrb[0].mxu0
      %v4966 = vadd.f32 0.0, %v4965
      %4967 = vmatprep.mubr.bf16.mxu0 0
      %4968 = vmatmul.mubr.bf16.gmra.mrb[0].mxu0 %v4684
      %v4969 = vpop.f32.mrb[0].mxu0
      %v4970 = vadd.f32 0.0, %v4969
      %v4971 = vpop.f32.mrb[0].mxu0
      %v4972 = vadd.f32 0.0, %v4971
      %v4973 = vpop.f32.mrb[0].mxu0
      %v4974 = vadd.f32 0.0, %v4973
      %v4975 = vpop.f32.mrb[0].mxu0
      %v4976 = vadd.f32 0.0, %v4975
      %4977 = vmatprep.mubr.bf16.mxu0 0
      %4978 = vmatmul.mubr.bf16.gmra.mrb[0].mxu0 %v4687
      %v4979 = vpop.f32.mrb[0].mxu0
      %v4980 = vadd.f32 0.0, %v4979
      %v4981 = vpop.f32.mrb[0].mxu0
      %v4982 = vadd.f32 0.0, %v4981
      %v4983 = vpop.f32.mrb[0].mxu0
      %v4984 = vadd.f32 0.0, %v4983
      %v4985 = vpop.f32.mrb[0].mxu0
      %v4986 = vadd.f32 0.0, %v4985
      %4987 = vmatprep.mubr.bf16.mxu0 0
      %4988 = vmatmul.mubr.bf16.gmra.mrb[0].mxu0 %v4690
      %v4989 = vpop.f32.mrb[0].mxu0
      %v4990 = vadd.f32 0.0, %v4989
      %v4991 = vpop.f32.mrb[0].mxu0
      %v4992 = vadd.f32 0.0, %v4991
      %v4993 = vpop.f32.mrb[0].mxu0
      %v4994 = vadd.f32 0.0, %v4993
      %v4995 = vpop.f32.mrb[0].mxu0
      %v4996 = vadd.f32 0.0, %v4995
      %4997 = vmatprep.mubr.bf16.mxu0 0
      %4998 = vmatmul.mubr.bf16.gmra.mrb[0].mxu0 %v4693
      %v4999 = vpop.f32.mrb[0].mxu0
      %v5000 = vadd.f32 0.0, %v4999
      %v5001 = vpop.f32.mrb[0].mxu0
      %v5002 = vadd.f32 0.0, %v5001
      %v5003 = vpop.f32.mrb[0].mxu0
      %v5004 = vadd.f32 0.0, %v5003
      %v5005 = vpop.f32.mrb[0].mxu0
      %v5006 = vadd.f32 0.0, %v5005
      %5007 = vdwg.mxu0
      %v5008 = vadd.f32 %v4230, %v4730
      %v5009 = vadd.f32 %v4231, %v4732
      %v5010 = vadd.f32 %v4232, %v4734
      %v5011 = vadd.f32 %v4233, %v4736
      %v5012 = vadd.f32 %v4234, %v4740
      %v5013 = vadd.f32 %v4235, %v4742
      %v5014 = vadd.f32 %v4236, %v4744
      %v5015 = vadd.f32 %v4237, %v4746
      %v5016 = vadd.f32 %v4238, %v4750
      %v5017 = vadd.f32 %v4239, %v4752
      %v5018 = vadd.f32 %v4240, %v4754
      %v5019 = vadd.f32 %v4241, %v4756
      %v5020 = vadd.f32 %v4242, %v4760
      %v5021 = vadd.f32 %v4243, %v4762
      %v5022 = vadd.f32 %v4244, %v4764
      %v5023 = vadd.f32 %v4245, %v4766
      %v5024 = vadd.f32 %v4246, %v4770
      %v5025 = vadd.f32 %v4247, %v4772
      %v5026 = vadd.f32 %v4248, %v4774
      %v5027 = vadd.f32 %v4249, %v4776
      %v5028 = vadd.f32 %v4250, %v4780
      %v5029 = vadd.f32 %v4251, %v4782
      %v5030 = vadd.f32 %v4252, %v4784
      %v5031 = vadd.f32 %v4253, %v4786
      %v5032 = vadd.f32 %v4254, %v4790
      %v5033 = vadd.f32 %v4255, %v4792
      %v5034 = vadd.f32 %v4256, %v4794
      %v5035 = vadd.f32 %v4257, %v4796
      %v5036 = vadd.f32 %v4258, %v4800
      %v5037 = vadd.f32 %v4259, %v4802
      %v5038 = vadd.f32 %v4260, %v4804
      %v5039 = vadd.f32 %v4261, %v4806
      %v5040 = vadd.f32 %v4262, %v4810
      %v5041 = vadd.f32 %v4263, %v4812
      %v5042 = vadd.f32 %v4264, %v4814
      %v5043 = vadd.f32 %v4265, %v4816
      %v5044 = vadd.f32 %v4266, %v4820
      %v5045 = vadd.f32 %v4267, %v4822
      %v5046 = vadd.f32 %v4268, %v4824
      %v5047 = vadd.f32 %v4269, %v4826
      %v5048 = vadd.f32 %v4270, %v4830
      %v5049 = vadd.f32 %v4271, %v4832
      %v5050 = vadd.f32 %v4272, %v4834
      %v5051 = vadd.f32 %v4273, %v4836
      %v5052 = vadd.f32 %v4274, %v4840
      %v5053 = vadd.f32 %v4275, %v4842
      %v5054 = vadd.f32 %v4276, %v4844
      %v5055 = vadd.f32 %v4277, %v4846
      %v5056 = vadd.f32 %v4278, %v4850
      %v5057 = vadd.f32 %v4279, %v4852
      %v5058 = vadd.f32 %v4280, %v4854
      %v5059 = vadd.f32 %v4281, %v4856
      %v5060 = vadd.f32 %v4282, %v4860
      %v5061 = vadd.f32 %v4283, %v4862
      %v5062 = vadd.f32 %v4284, %v4864
      %v5063 = vadd.f32 %v4285, %v4866
      %v5064 = vadd.f32 %v4286, %v4870
      %v5065 = vadd.f32 %v4287, %v4872
      %v5066 = vadd.f32 %v4288, %v4874
      %v5067 = vadd.f32 %v4289, %v4876
      %v5068 = vadd.f32 %v4290, %v4880
      %v5069 = vadd.f32 %v4291, %v4882
      %v5070 = vadd.f32 %v4292, %v4884
      %v5071 = vadd.f32 %v4293, %v4886
      %v5072 = vadd.f32 %v4294, %v4890
      %v5073 = vadd.f32 %v4295, %v4892
      %v5074 = vadd.f32 %v4296, %v4894
      %v5075 = vadd.f32 %v4297, %v4896
      %v5076 = vadd.f32 %v4298, %v4900
      %v5077 = vadd.f32 %v4299, %v4902
      %v5078 = vadd.f32 %v4300, %v4904
      %v5079 = vadd.f32 %v4301, %v4906
      %v5080 = vadd.f32 %v4302, %v4910
      %v5081 = vadd.f32 %v4303, %v4912
      %v5082 = vadd.f32 %v4304, %v4914
      %v5083 = vadd.f32 %v4305, %v4916
      %v5084 = vadd.f32 %v4306, %v4920
      %v5085 = vadd.f32 %v4307, %v4922
      %v5086 = vadd.f32 %v4308, %v4924
      %v5087 = vadd.f32 %v4309, %v4926
      %v5088 = vadd.f32 %v4310, %v4930
      %v5089 = vadd.f32 %v4311, %v4932
      %v5090 = vadd.f32 %v4312, %v4934
      %v5091 = vadd.f32 %v4313, %v4936
      %v5092 = vadd.f32 %v4314, %v4940
      %v5093 = vadd.f32 %v4315, %v4942
      %v5094 = vadd.f32 %v4316, %v4944
      %v5095 = vadd.f32 %v4317, %v4946
      %v5096 = vadd.f32 %v4318, %v4950
      %v5097 = vadd.f32 %v4319, %v4952
      %v5098 = vadd.f32 %v4320, %v4954
      %v5099 = vadd.f32 %v4321, %v4956
      %v5100 = vadd.f32 %v4322, %v4960
      %v5101 = vadd.f32 %v4323, %v4962
      %v5102 = vadd.f32 %v4324, %v4964
      %v5103 = vadd.f32 %v4325, %v4966
      %v5104 = vadd.f32 %v4326, %v4970
      %v5105 = vadd.f32 %v4327, %v4972
      %v5106 = vadd.f32 %v4328, %v4974
      %v5107 = vadd.f32 %v4329, %v4976
      %v5108 = vadd.f32 %v4330, %v4980
      %v5109 = vadd.f32 %v4331, %v4982
      %v5110 = vadd.f32 %v4332, %v4984
      %v5111 = vadd.f32 %v4333, %v4986
      %v5112 = vadd.f32 %v4334, %v4990
      %v5113 = vadd.f32 %v4335, %v4992
      %v5114 = vadd.f32 %v4336, %v4994
      %v5115 = vadd.f32 %v4337, %v4996
      %v5116 = vadd.f32 %v4338, %v5000
      %v5117 = vadd.f32 %v4339, %v5002
      %v5118 = vadd.f32 %v4340, %v5004
      %v5119 = vadd.f32 %v4341, %v5006
      %5120 = vst [vmem:[#allocation2] sm:$0xff] %v5008
      %5121 = vst.msk [vmem:[#allocation2 + $0x8] sm:$0xff] %vm1112, %v5009
      %5122 = vst [vmem:[#allocation2 + $0x10] sm:$0xff] %v5010
      %5123 = vst.msk [vmem:[#allocation2 + $0x18] sm:$0xff] %vm1112, %v5011
      %5124 = vst [vmem:[#allocation2 + $0x20] sm:$0xff] %v5012
      %5125 = vst.msk [vmem:[#allocation2 + $0x28] sm:$0xff] %vm1112, %v5013
      %5126 = vst [vmem:[#allocation2 + $0x30] sm:$0xff] %v5014
      %5127 = vst.msk [vmem:[#allocation2 + $0x38] sm:$0xff] %vm1112, %v5015
      %5128 = vst [vmem:[#allocation2 + $0x40] sm:$0xff] %v5016
      %5129 = vst.msk [vmem:[#allocation2 + $0x48] sm:$0xff] %vm1112, %v5017
      %5130 = vst [vmem:[#allocation2 + $0x50] sm:$0xff] %v5018
      %5131 = vst.msk [vmem:[#allocation2 + $0x58] sm:$0xff] %vm1112, %v5019
      %5132 = vst [vmem:[#allocation2 + $0x60] sm:$0xff] %v5020
      %5133 = vst.msk [vmem:[#allocation2 + $0x68] sm:$0xff] %vm1112, %v5021
      %5134 = vst [vmem:[#allocation2 + $0x70] sm:$0xff] %v5022
      %5135 = vst.msk [vmem:[#allocation2 + $0x78] sm:$0xff] %vm1112, %v5023
      %5136 = vst [vmem:[#allocation2 + $0x80] sm:$0xff] %v5024
      %5137 = vst.msk [vmem:[#allocation2 + $0x88] sm:$0xff] %vm1112, %v5025
      %5138 = vst [vmem:[#allocation2 + $0x90] sm:$0xff] %v5026
      %5139 = vst.msk [vmem:[#allocation2 + $0x98] sm:$0xff] %vm1112, %v5027
      %5140 = vst [vmem:[#allocation2 + $0xa0] sm:$0xff] %v5028
      %5141 = vst.msk [vmem:[#allocation2 + $0xa8] sm:$0xff] %vm1112, %v5029
      %5142 = vst [vmem:[#allocation2 + $0xb0] sm:$0xff] %v5030
      %5143 = vst.msk [vmem:[#allocation2 + $0xb8] sm:$0xff] %vm1112, %v5031
      %5144 = vst [vmem:[#allocation2 + $0xc0] sm:$0xff] %v5032
      %5145 = vst.msk [vmem:[#allocation2 + $0xc8] sm:$0xff] %vm1112, %v5033
      %5146 = vst [vmem:[#allocation2 + $0xd0] sm:$0xff] %v5034
      %5147 = vst.msk [vmem:[#allocation2 + $0xd8] sm:$0xff] %vm1112, %v5035
      %5148 = vst [vmem:[#allocation2 + $0xe0] sm:$0xff] %v5036
      %5149 = vst.msk [vmem:[#allocation2 + $0xe8] sm:$0xff] %vm1112, %v5037
      %5150 = vst [vmem:[#allocation2 + $0xf0] sm:$0xff] %v5038
      %5151 = vst.msk [vmem:[#allocation2 + $0xf8] sm:$0xff] %vm1112, %v5039
      %5152 = vst [vmem:[#allocation2 + $0x100] sm:$0xff] %v5040
      %5153 = vst.msk [vmem:[#allocation2 + $0x108] sm:$0xff] %vm1112, %v5041
      %5154 = vst [vmem:[#allocation2 + $0x110] sm:$0xff] %v5042
      %5155 = vst.msk [vmem:[#allocation2 + $0x118] sm:$0xff] %vm1112, %v5043
      %5156 = vst [vmem:[#allocation2 + $0x120] sm:$0xff] %v5044
      %5157 = vst.msk [vmem:[#allocation2 + $0x128] sm:$0xff] %vm1112, %v5045
      %5158 = vst [vmem:[#allocation2 + $0x130] sm:$0xff] %v5046
      %5159 = vst.msk [vmem:[#allocation2 + $0x138] sm:$0xff] %vm1112, %v5047
      %5160 = vst [vmem:[#allocation2 + $0x140] sm:$0xff] %v5048
      %5161 = vst.msk [vmem:[#allocation2 + $0x148] sm:$0xff] %vm1112, %v5049
      %5162 = vst [vmem:[#allocation2 + $0x150] sm:$0xff] %v5050
      %5163 = vst.msk [vmem:[#allocation2 + $0x158] sm:$0xff] %vm1112, %v5051
      %5164 = vst [vmem:[#allocation2 + $0x160] sm:$0xff] %v5052
      %5165 = vst.msk [vmem:[#allocation2 + $0x168] sm:$0xff] %vm1112, %v5053
      %5166 = vst [vmem:[#allocation2 + $0x170] sm:$0xff] %v5054
      %5167 = vst.msk [vmem:[#allocation2 + $0x178] sm:$0xff] %vm1112, %v5055
      %5168 = vst [vmem:[#allocation2 + $0x180] sm:$0xff] %v5056
      %5169 = vst.msk [vmem:[#allocation2 + $0x188] sm:$0xff] %vm1112, %v5057
      %5170 = vst [vmem:[#allocation2 + $0x190] sm:$0xff] %v5058
      %5171 = vst.msk [vmem:[#allocation2 + $0x198] sm:$0xff] %vm1112, %v5059
      %5172 = vst [vmem:[#allocation2 + $0x1a0] sm:$0xff] %v5060
      %5173 = vst.msk [vmem:[#allocation2 + $0x1a8] sm:$0xff] %vm1112, %v5061
      %5174 = vst [vmem:[#allocation2 + $0x1b0] sm:$0xff] %v5062
      %5175 = vst.msk [vmem:[#allocation2 + $0x1b8] sm:$0xff] %vm1112, %v5063
      %5176 = vst [vmem:[#allocation2 + $0x1c0] sm:$0xff] %v5064
      %5177 = vst.msk [vmem:[#allocation2 + $0x1c8] sm:$0xff] %vm1112, %v5065
      %5178 = vst [vmem:[#allocation2 + $0x1d0] sm:$0xff] %v5066
      %5179 = vst.msk [vmem:[#allocation2 + $0x1d8] sm:$0xff] %vm1112, %v5067
      %5180 = vst [vmem:[#allocation2 + $0x1e0] sm:$0xff] %v5068
      %5181 = vst.msk [vmem:[#allocation2 + $0x1e8] sm:$0xff] %vm1112, %v5069
      %5182 = vst [vmem:[#allocation2 + $0x1f0] sm:$0xff] %v5070
      %5183 = vst.msk [vmem:[#allocation2 + $0x1f8] sm:$0xff] %vm1112, %v5071
      %5184 = vst [vmem:[#allocation2 + $0x200] sm:$0xff] %v5072
      %5185 = vst.msk [vmem:[#allocation2 + $0x208] sm:$0xff] %vm1112, %v5073
      %5186 = vst [vmem:[#allocation2 + $0x210] sm:$0xff] %v5074
      %5187 = vst.msk [vmem:[#allocation2 + $0x218] sm:$0xff] %vm1112, %v5075
      %5188 = vst [vmem:[#allocation2 + $0x220] sm:$0xff] %v5076
      %5189 = vst.msk [vmem:[#allocation2 + $0x228] sm:$0xff] %vm1112, %v5077
      %5190 = vst [vmem:[#allocation2 + $0x230] sm:$0xff] %v5078
      %5191 = vst.msk [vmem:[#allocation2 + $0x238] sm:$0xff] %vm1112, %v5079
      %5192 = vst [vmem:[#allocation2 + $0x240] sm:$0xff] %v5080
      %5193 = vst.msk [vmem:[#allocation2 + $0x248] sm:$0xff] %vm1112, %v5081
      %5194 = vst [vmem:[#allocation2 + $0x250] sm:$0xff] %v5082
      %5195 = vst.msk [vmem:[#allocation2 + $0x258] sm:$0xff] %vm1112, %v5083
      %5196 = vst [vmem:[#allocation2 + $0x260] sm:$0xff] %v5084
      %5197 = vst.msk [vmem:[#allocation2 + $0x268] sm:$0xff] %vm1112, %v5085
      %5198 = vst [vmem:[#allocation2 + $0x270] sm:$0xff] %v5086
      %5199 = vst.msk [vmem:[#allocation2 + $0x278] sm:$0xff] %vm1112, %v5087
      %5200 = vst [vmem:[#allocation2 + $0x280] sm:$0xff] %v5088
      %5201 = vst.msk [vmem:[#allocation2 + $0x288] sm:$0xff] %vm1112, %v5089
      %5202 = vst [vmem:[#allocation2 + $0x290] sm:$0xff] %v5090
      %5203 = vst.msk [vmem:[#allocation2 + $0x298] sm:$0xff] %vm1112, %v5091
      %5204 = vst [vmem:[#allocation2 + $0x2a0] sm:$0xff] %v5092
      %5205 = vst.msk [vmem:[#allocation2 + $0x2a8] sm:$0xff] %vm1112, %v5093
      %5206 = vst [vmem:[#allocation2 + $0x2b0] sm:$0xff] %v5094
      %5207 = vst.msk [vmem:[#allocation2 + $0x2b8] sm:$0xff] %vm1112, %v5095
      %5208 = vst [vmem:[#allocation2 + $0x2c0] sm:$0xff] %v5096
      %5209 = vst.msk [vmem:[#allocation2 + $0x2c8] sm:$0xff] %vm1112, %v5097
      %5210 = vst [vmem:[#allocation2 + $0x2d0] sm:$0xff] %v5098
      %5211 = vst.msk [vmem:[#allocation2 + $0x2d8] sm:$0xff] %vm1112, %v5099
      %5212 = vst [vmem:[#allocation2 + $0x2e0] sm:$0xff] %v5100
      %5213 = vst.msk [vmem:[#allocation2 + $0x2e8] sm:$0xff] %vm1112, %v5101
      %5214 = vst [vmem:[#allocation2 + $0x2f0] sm:$0xff] %v5102
      %5215 = vst.msk [vmem:[#allocation2 + $0x2f8] sm:$0xff] %vm1112, %v5103
      %5216 = vst [vmem:[#allocation2 + $0x300] sm:$0xff] %v5104
      %5217 = vst.msk [vmem:[#allocation2 + $0x308] sm:$0xff] %vm1112, %v5105
      %5218 = vst [vmem:[#allocation2 + $0x310] sm:$0xff] %v5106
      %5219 = vst.msk [vmem:[#allocation2 + $0x318] sm:$0xff] %vm1112, %v5107
      %5220 = vst [vmem:[#allocation2 + $0x320] sm:$0xff] %v5108
      %5221 = vst.msk [vmem:[#allocation2 + $0x328] sm:$0xff] %vm1112, %v5109
      %5222 = vst [vmem:[#allocation2 + $0x330] sm:$0xff] %v5110
      %5223 = vst.msk [vmem:[#allocation2 + $0x338] sm:$0xff] %vm1112, %v5111
      %5224 = vst [vmem:[#allocation2 + $0x340] sm:$0xff] %v5112
      %5225 = vst.msk [vmem:[#allocation2 + $0x348] sm:$0xff] %vm1112, %v5113
      %5226 = vst [vmem:[#allocation2 + $0x350] sm:$0xff] %v5114
      %5227 = vst.msk [vmem:[#allocation2 + $0x358] sm:$0xff] %vm1112, %v5115
      %5228 = vst [vmem:[#allocation2 + $0x360] sm:$0xff] %v5116
      %5229 = vst.msk [vmem:[#allocation2 + $0x368] sm:$0xff] %vm1112, %v5117
      %5230 = vst [vmem:[#allocation2 + $0x370] sm:$0xff] %v5118
      %5231 = vst.msk [vmem:[#allocation2 + $0x378] sm:$0xff] %vm1112, %v5119
      %v5232 = vld [vmem:[#allocation2] sm:$0xff]
      %v5233 = vld [vmem:[#allocation2 + $0x8] sm:$0xff]
      %v5234 = vld [vmem:[#allocation2 + $0x10] sm:$0xff]
      %v5235 = vld [vmem:[#allocation2 + $0x18] sm:$0xff]
      %v5236 = vld [vmem:[#allocation2 + $0x20] sm:$0xff]
      %v5237 = vld [vmem:[#allocation2 + $0x28] sm:$0xff]
      %v5238 = vld [vmem:[#allocation2 + $0x30] sm:$0xff]
      %v5239 = vld [vmem:[#allocation2 + $0x38] sm:$0xff]
      %v5240 = vmax.f32 %v5232, %v5236
      %v5241 = vmax.f32 %v5233, %v5237
      %v5242 = vmax.f32 %v5234, %v5238
      %v5243 = vmax.f32 %v5235, %v5239
      %5244 = vst [vmem:[#allocation2] sm:$0xff] %v5240
      %5245 = vst.msk [vmem:[#allocation2 + $0x8] sm:$0xff] %vm1112, %v5241
      %5246 = vst [vmem:[#allocation2 + $0x10] sm:$0xff] %v5242
      %5247 = vst.msk [vmem:[#allocation2 + $0x18] sm:$0xff] %vm1112, %v5243
      %v5248 = vld [vmem:[#allocation2 + $0x40] sm:$0xff]
      %v5249 = vld [vmem:[#allocation2 + $0x48] sm:$0xff]
      %v5250 = vld [vmem:[#allocation2 + $0x50] sm:$0xff]
      %v5251 = vld [vmem:[#allocation2 + $0x58] sm:$0xff]
      %v5252 = vld [vmem:[#allocation2 + $0x60] sm:$0xff]
      %v5253 = vld [vmem:[#allocation2 + $0x68] sm:$0xff]
      %v5254 = vld [vmem:[#allocation2 + $0x70] sm:$0xff]
      %v5255 = vld [vmem:[#allocation2 + $0x78] sm:$0xff]
      %v5256 = vmax.f32 %v5248, %v5252
      %v5257 = vmax.f32 %v5249, %v5253
      %v5258 = vmax.f32 %v5250, %v5254
      %v5259 = vmax.f32 %v5251, %v5255
      %5260 = vst [vmem:[#allocation2 + $0x20] sm:$0xff] %v5256
      %5261 = vst.msk [vmem:[#allocation2 + $0x28] sm:$0xff] %vm1112, %v5257
      %5262 = vst [vmem:[#allocation2 + $0x30] sm:$0xff] %v5258
      %5263 = vst.msk [vmem:[#allocation2 + $0x38] sm:$0xff] %vm1112, %v5259
      %v5264 = vld [vmem:[#allocation2 + $0x80] sm:$0xff]
      %v5265 = vld [vmem:[#allocation2 + $0x88] sm:$0xff]
      %v5266 = vld [vmem:[#allocation2 + $0x90] sm:$0xff]
      %v5267 = vld [vmem:[#allocation2 + $0x98] sm:$0xff]
      %v5268 = vld [vmem:[#allocation2 + $0xa0] sm:$0xff]
      %v5269 = vld [vmem:[#allocation2 + $0xa8] sm:$0xff]
      %v5270 = vld [vmem:[#allocation2 + $0xb0] sm:$0xff]
      %v5271 = vld [vmem:[#allocation2 + $0xb8] sm:$0xff]
      %v5272 = vmax.f32 %v5264, %v5268
      %v5273 = vmax.f32 %v5265, %v5269
      %v5274 = vmax.f32 %v5266, %v5270
      %v5275 = vmax.f32 %v5267, %v5271
      %5276 = vst [vmem:[#allocation2 + $0x40] sm:$0xff] %v5272
      %5277 = vst.msk [vmem:[#allocation2 + $0x48] sm:$0xff] %vm1112, %v5273
      %5278 = vst [vmem:[#allocation2 + $0x50] sm:$0xff] %v5274
      %5279 = vst.msk [vmem:[#allocation2 + $0x58] sm:$0xff] %vm1112, %v5275
      %v5280 = vld [vmem:[#allocation2 + $0xc0] sm:$0xff]
      %v5281 = vld [vmem:[#allocation2 + $0xc8] sm:$0xff]
      %v5282 = vld [vmem:[#allocation2 + $0xd0] sm:$0xff]
      %v5283 = vld [vmem:[#allocation2 + $0xd8] sm:$0xff]
      %v5284 = vld [vmem:[#allocation2 + $0xe0] sm:$0xff]
      %v5285 = vld [vmem:[#allocation2 + $0xe8] sm:$0xff]
      %v5286 = vld [vmem:[#allocation2 + $0xf0] sm:$0xff]
      %v5287 = vld [vmem:[#allocation2 + $0xf8] sm:$0xff]
      %v5288 = vmax.f32 %v5280, %v5284
      %v5289 = vmax.f32 %v5281, %v5285
      %v5290 = vmax.f32 %v5282, %v5286
      %v5291 = vmax.f32 %v5283, %v5287
      %5292 = vst [vmem:[#allocation2 + $0x60] sm:$0xff] %v5288
      %5293 = vst.msk [vmem:[#allocation2 + $0x68] sm:$0xff] %vm1112, %v5289
      %5294 = vst [vmem:[#allocation2 + $0x70] sm:$0xff] %v5290
      %5295 = vst.msk [vmem:[#allocation2 + $0x78] sm:$0xff] %vm1112, %v5291
      %v5296 = vld [vmem:[#allocation2 + $0x100] sm:$0xff]
      %v5297 = vld [vmem:[#allocation2 + $0x108] sm:$0xff]
      %v5298 = vld [vmem:[#allocation2 + $0x110] sm:$0xff]
      %v5299 = vld [vmem:[#allocation2 + $0x118] sm:$0xff]
      %v5300 = vld [vmem:[#allocation2 + $0x120] sm:$0xff]
      %v5301 = vld [vmem:[#allocation2 + $0x128] sm:$0xff]
      %v5302 = vld [vmem:[#allocation2 + $0x130] sm:$0xff]
      %v5303 = vld [vmem:[#allocation2 + $0x138] sm:$0xff]
      %v5304 = vmax.f32 %v5296, %v5300
      %v5305 = vmax.f32 %v5297, %v5301
      %v5306 = vmax.f32 %v5298, %v5302
      %v5307 = vmax.f32 %v5299, %v5303
      %5308 = vst [vmem:[#allocation2 + $0x80] sm:$0xff] %v5304
      %5309 = vst.msk [vmem:[#allocation2 + $0x88] sm:$0xff] %vm1112, %v5305
      %5310 = vst [vmem:[#allocation2 + $0x90] sm:$0xff] %v5306
      %5311 = vst.msk [vmem:[#allocation2 + $0x98] sm:$0xff] %vm1112, %v5307
      %v5312 = vld [vmem:[#allocation2 + $0x140] sm:$0xff]
      %v5313 = vld [vmem:[#allocation2 + $0x148] sm:$0xff]
      %v5314 = vld [vmem:[#allocation2 + $0x150] sm:$0xff]
      %v5315 = vld [vmem:[#allocation2 + $0x158] sm:$0xff]
      %v5316 = vld [vmem:[#allocation2 + $0x160] sm:$0xff]
      %v5317 = vld [vmem:[#allocation2 + $0x168] sm:$0xff]
      %v5318 = vld [vmem:[#allocation2 + $0x170] sm:$0xff]
      %v5319 = vld [vmem:[#allocation2 + $0x178] sm:$0xff]
      %v5320 = vmax.f32 %v5312, %v5316
      %v5321 = vmax.f32 %v5313, %v5317
      %v5322 = vmax.f32 %v5314, %v5318
      %v5323 = vmax.f32 %v5315, %v5319
      %5324 = vst [vmem:[#allocation2 + $0xa0] sm:$0xff] %v5320
      %5325 = vst.msk [vmem:[#allocation2 + $0xa8] sm:$0xff] %vm1112, %v5321
      %5326 = vst [vmem:[#allocation2 + $0xb0] sm:$0xff] %v5322
      %5327 = vst.msk [vmem:[#allocation2 + $0xb8] sm:$0xff] %vm1112, %v5323
      %v5328 = vld [vmem:[#allocation2 + $0x180] sm:$0xff]
      %v5329 = vld [vmem:[#allocation2 + $0x188] sm:$0xff]
      %v5330 = vld [vmem:[#allocation2 + $0x190] sm:$0xff]
      %v5331 = vld [vmem:[#allocation2 + $0x198] sm:$0xff]
      %v5332 = vld [vmem:[#allocation2 + $0x1a0] sm:$0xff]
      %v5333 = vld [vmem:[#allocation2 + $0x1a8] sm:$0xff]
      %v5334 = vld [vmem:[#allocation2 + $0x1b0] sm:$0xff]
      %v5335 = vld [vmem:[#allocation2 + $0x1b8] sm:$0xff]
      %v5336 = vmax.f32 %v5328, %v5332
      %v5337 = vmax.f32 %v5329, %v5333
      %v5338 = vmax.f32 %v5330, %v5334
      %v5339 = vmax.f32 %v5331, %v5335
      %5340 = vst [vmem:[#allocation2 + $0xc0] sm:$0xff] %v5336
      %5341 = vst.msk [vmem:[#allocation2 + $0xc8] sm:$0xff] %vm1112, %v5337
      %5342 = vst [vmem:[#allocation2 + $0xd0] sm:$0xff] %v5338
      %5343 = vst.msk [vmem:[#allocation2 + $0xd8] sm:$0xff] %vm1112, %v5339
      %v5344 = vld [vmem:[#allocation2 + $0x1c0] sm:$0xff]
      %v5345 = vld [vmem:[#allocation2 + $0x1c8] sm:$0xff]
      %v5346 = vld [vmem:[#allocation2 + $0x1d0] sm:$0xff]
      %v5347 = vld [vmem:[#allocation2 + $0x1d8] sm:$0xff]
      %v5348 = vld [vmem:[#allocation2 + $0x1e0] sm:$0xff]
      %v5349 = vld [vmem:[#allocation2 + $0x1e8] sm:$0xff]
      %v5350 = vld [vmem:[#allocation2 + $0x1f0] sm:$0xff]
      %v5351 = vld [vmem:[#allocation2 + $0x1f8] sm:$0xff]
      %v5352 = vmax.f32 %v5344, %v5348
      %v5353 = vmax.f32 %v5345, %v5349
      %v5354 = vmax.f32 %v5346, %v5350
      %v5355 = vmax.f32 %v5347, %v5351
      %5356 = vst [vmem:[#allocation2 + $0xe0] sm:$0xff] %v5352
      %5357 = vst.msk [vmem:[#allocation2 + $0xe8] sm:$0xff] %vm1112, %v5353
      %5358 = vst [vmem:[#allocation2 + $0xf0] sm:$0xff] %v5354
      %5359 = vst.msk [vmem:[#allocation2 + $0xf8] sm:$0xff] %vm1112, %v5355
      %v5360 = vld [vmem:[#allocation2 + $0x200] sm:$0xff]
      %v5361 = vld [vmem:[#allocation2 + $0x208] sm:$0xff]
      %v5362 = vld [vmem:[#allocation2 + $0x210] sm:$0xff]
      %v5363 = vld [vmem:[#allocation2 + $0x218] sm:$0xff]
      %v5364 = vld [vmem:[#allocation2 + $0x220] sm:$0xff]
      %v5365 = vld [vmem:[#allocation2 + $0x228] sm:$0xff]
      %v5366 = vld [vmem:[#allocation2 + $0x230] sm:$0xff]
      %v5367 = vld [vmem:[#allocation2 + $0x238] sm:$0xff]
      %v5368 = vmax.f32 %v5360, %v5364
      %v5369 = vmax.f32 %v5361, %v5365
      %v5370 = vmax.f32 %v5362, %v5366
      %v5371 = vmax.f32 %v5363, %v5367
      %5372 = vst [vmem:[#allocation2 + $0x100] sm:$0xff] %v5368
      %5373 = vst.msk [vmem:[#allocation2 + $0x108] sm:$0xff] %vm1112, %v5369
      %5374 = vst [vmem:[#allocation2 + $0x110] sm:$0xff] %v5370
      %5375 = vst.msk [vmem:[#allocation2 + $0x118] sm:$0xff] %vm1112, %v5371
      %v5376 = vld [vmem:[#allocation2 + $0x240] sm:$0xff]
      %v5377 = vld [vmem:[#allocation2 + $0x248] sm:$0xff]
      %v5378 = vld [vmem:[#allocation2 + $0x250] sm:$0xff]
      %v5379 = vld [vmem:[#allocation2 + $0x258] sm:$0xff]
      %v5380 = vld [vmem:[#allocation2 + $0x260] sm:$0xff]
      %v5381 = vld [vmem:[#allocation2 + $0x268] sm:$0xff]
      %v5382 = vld [vmem:[#allocation2 + $0x270] sm:$0xff]
      %v5383 = vld [vmem:[#allocation2 + $0x278] sm:$0xff]
      %v5384 = vmax.f32 %v5376, %v5380
      %v5385 = vmax.f32 %v5377, %v5381
      %v5386 = vmax.f32 %v5378, %v5382
      %v5387 = vmax.f32 %v5379, %v5383
      %5388 = vst [vmem:[#allocation2 + $0x120] sm:$0xff] %v5384
      %5389 = vst.msk [vmem:[#allocation2 + $0x128] sm:$0xff] %vm1112, %v5385
      %5390 = vst [vmem:[#allocation2 + $0x130] sm:$0xff] %v5386
      %5391 = vst.msk [vmem:[#allocation2 + $0x138] sm:$0xff] %vm1112, %v5387
      %v5392 = vld [vmem:[#allocation2 + $0x280] sm:$0xff]
      %v5393 = vld [vmem:[#allocation2 + $0x288] sm:$0xff]
      %v5394 = vld [vmem:[#allocation2 + $0x290] sm:$0xff]
      %v5395 = vld [vmem:[#allocation2 + $0x298] sm:$0xff]
      %v5396 = vld [vmem:[#allocation2 + $0x2a0] sm:$0xff]
      %v5397 = vld [vmem:[#allocation2 + $0x2a8] sm:$0xff]
      %v5398 = vld [vmem:[#allocation2 + $0x2b0] sm:$0xff]
      %v5399 = vld [vmem:[#allocation2 + $0x2b8] sm:$0xff]
      %v5400 = vmax.f32 %v5392, %v5396
      %v5401 = vmax.f32 %v5393, %v5397
      %v5402 = vmax.f32 %v5394, %v5398
      %v5403 = vmax.f32 %v5395, %v5399
      %5404 = vst [vmem:[#allocation2 + $0x140] sm:$0xff] %v5400
      %5405 = vst.msk [vmem:[#allocation2 + $0x148] sm:$0xff] %vm1112, %v5401
      %5406 = vst [vmem:[#allocation2 + $0x150] sm:$0xff] %v5402
      %5407 = vst.msk [vmem:[#allocation2 + $0x158] sm:$0xff] %vm1112, %v5403
      %v5408 = vld [vmem:[#allocation2 + $0x2c0] sm:$0xff]
      %v5409 = vld [vmem:[#allocation2 + $0x2c8] sm:$0xff]
      %v5410 = vld [vmem:[#allocation2 + $0x2d0] sm:$0xff]
      %v5411 = vld [vmem:[#allocation2 + $0x2d8] sm:$0xff]
      %v5412 = vld [vmem:[#allocation2 + $0x2e0] sm:$0xff]
      %v5413 = vld [vmem:[#allocation2 + $0x2e8] sm:$0xff]
      %v5414 = vld [vmem:[#allocation2 + $0x2f0] sm:$0xff]
      %v5415 = vld [vmem:[#allocation2 + $0x2f8] sm:$0xff]
      %v5416 = vmax.f32 %v5408, %v5412
      %v5417 = vmax.f32 %v5409, %v5413
      %v5418 = vmax.f32 %v5410, %v5414
      %v5419 = vmax.f32 %v5411, %v5415
      %5420 = vst [vmem:[#allocation2 + $0x160] sm:$0xff] %v5416
      %5421 = vst.msk [vmem:[#allocation2 + $0x168] sm:$0xff] %vm1112, %v5417
      %5422 = vst [vmem:[#allocation2 + $0x170] sm:$0xff] %v5418
      %5423 = vst.msk [vmem:[#allocation2 + $0x178] sm:$0xff] %vm1112, %v5419
      %v5424 = vld [vmem:[#allocation2 + $0x300] sm:$0xff]
      %v5425 = vld [vmem:[#allocation2 + $0x308] sm:$0xff]
      %v5426 = vld [vmem:[#allocation2 + $0x310] sm:$0xff]
      %v5427 = vld [vmem:[#allocation2 + $0x318] sm:$0xff]
      %v5428 = vld [vmem:[#allocation2 + $0x320] sm:$0xff]
      %v5429 = vld [vmem:[#allocation2 + $0x328] sm:$0xff]
      %v5430 = vld [vmem:[#allocation2 + $0x330] sm:$0xff]
      %v5431 = vld [vmem:[#allocation2 + $0x338] sm:$0xff]
      %v5432 = vmax.f32 %v5424, %v5428
      %v5433 = vmax.f32 %v5425, %v5429
      %v5434 = vmax.f32 %v5426, %v5430
      %v5435 = vmax.f32 %v5427, %v5431
      %5436 = vst [vmem:[#allocation2 + $0x180] sm:$0xff] %v5432
      %5437 = vst.msk [vmem:[#allocation2 + $0x188] sm:$0xff] %vm1112, %v5433
      %5438 = vst [vmem:[#allocation2 + $0x190] sm:$0xff] %v5434
      %5439 = vst.msk [vmem:[#allocation2 + $0x198] sm:$0xff] %vm1112, %v5435
      %v5440 = vld [vmem:[#allocation2 + $0x340] sm:$0xff]
      %v5441 = vld [vmem:[#allocation2 + $0x348] sm:$0xff]
      %v5442 = vld [vmem:[#allocation2 + $0x350] sm:$0xff]
      %v5443 = vld [vmem:[#allocation2 + $0x358] sm:$0xff]
      %v5444 = vld [vmem:[#allocation2 + $0x360] sm:$0xff]
      %v5445 = vld [vmem:[#allocation2 + $0x368] sm:$0xff]
      %v5446 = vld [vmem:[#allocation2 + $0x370] sm:$0xff]
      %v5447 = vld [vmem:[#allocation2 + $0x378] sm:$0xff]
      %v5448 = vmax.f32 %v5440, %v5444
      %v5449 = vmax.f32 %v5441, %v5445
      %v5450 = vmax.f32 %v5442, %v5446
      %v5451 = vmax.f32 %v5443, %v5447
      %5452 = vst [vmem:[#allocation2 + $0x1a0] sm:$0xff] %v5448
      %5453 = vst.msk [vmem:[#allocation2 + $0x1a8] sm:$0xff] %vm1112, %v5449
      %5454 = vst [vmem:[#allocation2 + $0x1b0] sm:$0xff] %v5450
      %5455 = vst.msk [vmem:[#allocation2 + $0x1b8] sm:$0xff] %vm1112, %v5451
      %v5456 = vld [vmem:[#allocation2] sm:$0xff]
      %v5457 = vld [vmem:[#allocation2 + $0x8] sm:$0xff]
      %v5458 = vld [vmem:[#allocation2 + $0x10] sm:$0xff]
      %v5459 = vld [vmem:[#allocation2 + $0x18] sm:$0xff]
      %v5460 = vld [vmem:[#allocation2 + $0x20] sm:$0xff]
      %v5461 = vld [vmem:[#allocation2 + $0x28] sm:$0xff]
      %v5462 = vld [vmem:[#allocation2 + $0x30] sm:$0xff]
      %v5463 = vld [vmem:[#allocation2 + $0x38] sm:$0xff]
      %v5464 = vld [vmem:[#allocation2 + $0x40] sm:$0xff]
      %v5465 = vld [vmem:[#allocation2 + $0x48] sm:$0xff]
      %v5466 = vld [vmem:[#allocation2 + $0x50] sm:$0xff]
      %v5467 = vld [vmem:[#allocation2 + $0x58] sm:$0xff]
      %v5468 = vld [vmem:[#allocation2 + $0x60] sm:$0xff]
      %v5469 = vld [vmem:[#allocation2 + $0x68] sm:$0xff]
      %v5470 = vld [vmem:[#allocation2 + $0x70] sm:$0xff]
      %v5471 = vld [vmem:[#allocation2 + $0x78] sm:$0xff]
      %v5472 = vld [vmem:[#allocation2 + $0x80] sm:$0xff]
      %v5473 = vld [vmem:[#allocation2 + $0x88] sm:$0xff]
      %v5474 = vld [vmem:[#allocation2 + $0x90] sm:$0xff]
      %v5475 = vld [vmem:[#allocation2 + $0x98] sm:$0xff]
      %v5476 = vld [vmem:[#allocation2 + $0xa0] sm:$0xff]
      %v5477 = vld [vmem:[#allocation2 + $0xa8] sm:$0xff]
      %v5478 = vld [vmem:[#allocation2 + $0xb0] sm:$0xff]
      %v5479 = vld [vmem:[#allocation2 + $0xb8] sm:$0xff]
      %v5480 = vld [vmem:[#allocation2 + $0xc0] sm:$0xff]
      %v5481 = vld [vmem:[#allocation2 + $0xc8] sm:$0xff]
      %v5482 = vld [vmem:[#allocation2 + $0xd0] sm:$0xff]
      %v5483 = vld [vmem:[#allocation2 + $0xd8] sm:$0xff]
      %v5484 = vld [vmem:[#allocation2 + $0xe0] sm:$0xff]
      %v5485 = vld [vmem:[#allocation2 + $0xe8] sm:$0xff]
      %v5486 = vld [vmem:[#allocation2 + $0xf0] sm:$0xff]
      %v5487 = vld [vmem:[#allocation2 + $0xf8] sm:$0xff]
      %v5488 = vld [vmem:[#allocation2 + $0x100] sm:$0xff]
      %v5489 = vld [vmem:[#allocation2 + $0x108] sm:$0xff]
      %v5490 = vld [vmem:[#allocation2 + $0x110] sm:$0xff]
      %v5491 = vld [vmem:[#allocation2 + $0x118] sm:$0xff]
      %v5492 = vld [vmem:[#allocation2 + $0x120] sm:$0xff]
      %v5493 = vld [vmem:[#allocation2 + $0x128] sm:$0xff]
      %v5494 = vld [vmem:[#allocation2 + $0x130] sm:$0xff]
      %v5495 = vld [vmem:[#allocation2 + $0x138] sm:$0xff]
      %v5496 = vld [vmem:[#allocation2 + $0x140] sm:$0xff]
      %v5497 = vld [vmem:[#allocation2 + $0x148] sm:$0xff]
      %v5498 = vld [vmem:[#allocation2 + $0x150] sm:$0xff]
      %v5499 = vld [vmem:[#allocation2 + $0x158] sm:$0xff]
      %v5500 = vld [vmem:[#allocation2 + $0x160] sm:$0xff]
      %v5501 = vld [vmem:[#allocation2 + $0x168] sm:$0xff]
      %v5502 = vld [vmem:[#allocation2 + $0x170] sm:$0xff]
      %v5503 = vld [vmem:[#allocation2 + $0x178] sm:$0xff]
      %v5504 = vld [vmem:[#allocation2 + $0x180] sm:$0xff]
      %v5505 = vld [vmem:[#allocation2 + $0x188] sm:$0xff]
      %v5506 = vld [vmem:[#allocation2 + $0x190] sm:$0xff]
      %v5507 = vld [vmem:[#allocation2 + $0x198] sm:$0xff]
      %v5508 = vld [vmem:[#allocation2 + $0x1a0] sm:$0xff]
      %v5509 = vld [vmem:[#allocation2 + $0x1a8] sm:$0xff]
      %v5510 = vld [vmem:[#allocation2 + $0x1b0] sm:$0xff]
      %v5511 = vld [vmem:[#allocation2 + $0x1b8] sm:$0xff]
      %v5512 = vpack.c.bf16 %v5458, %v5456
      %v5513 = vpack.c.bf16 %v5459, %v5457
      %v5514 = vpack.c.bf16 %v5462, %v5460
      %v5515 = vpack.c.bf16 %v5463, %v5461
      %v5516 = vpack.c.bf16 %v5466, %v5464
      %v5517 = vpack.c.bf16 %v5467, %v5465
      %v5518 = vpack.c.bf16 %v5470, %v5468
      %v5519 = vpack.c.bf16 %v5471, %v5469
      %v5520 = vpack.c.bf16 %v5474, %v5472
      %v5521 = vpack.c.bf16 %v5475, %v5473
      %v5522 = vpack.c.bf16 %v5478, %v5476
      %v5523 = vpack.c.bf16 %v5479, %v5477
      %v5524 = vpack.c.bf16 %v5482, %v5480
      %v5525 = vpack.c.bf16 %v5483, %v5481
      %v5526 = vpack.c.bf16 %v5486, %v5484
      %v5527 = vpack.c.bf16 %v5487, %v5485
      %v5528 = vpack.c.bf16 %v5490, %v5488
      %v5529 = vpack.c.bf16 %v5491, %v5489
      %v5530 = vpack.c.bf16 %v5494, %v5492
      %v5531 = vpack.c.bf16 %v5495, %v5493
      %v5532 = vpack.c.bf16 %v5498, %v5496
      %v5533 = vpack.c.bf16 %v5499, %v5497
      %v5534 = vpack.c.bf16 %v5502, %v5500
      %v5535 = vpack.c.bf16 %v5503, %v5501
      %v5536 = vpack.c.bf16 %v5506, %v5504
      %v5537 = vpack.c.bf16 %v5507, %v5505
      %v5538 = vpack.c.bf16 %v5510, %v5508
      %v5539 = vpack.c.bf16 %v5511, %v5509
      %v5540 = vld [vmem:[%s2] sm:$0xf]
      %v5541 = vld [vmem:[%s2 + $0x4] sm:$0xf]
      %v5542 = vld [vmem:[%s2 + $0x8] sm:$0xf]
      %v5543 = vld [vmem:[%s2 + $0xc] sm:$0xf]
      %v5544 = vld [vmem:[%s2 + $0x10] sm:$0xf]
      %v5545 = vld [vmem:[%s2 + $0x14] sm:$0xf]
      %v5546 = vld [vmem:[%s2 + $0x18] sm:$0xf]
      %v5547 = vld [vmem:[%s2 + $0x1c] sm:$0xf]
      %v5548 = vld [vmem:[%s2 + $0x20] sm:$0xf]
      %v5549 = vld [vmem:[%s2 + $0x24] sm:$0xf]
      %v5550 = vld [vmem:[%s2 + $0x28] sm:$0xf]
      %v5551 = vld [vmem:[%s2 + $0x2c] sm:$0xf]
      %v5552 = vld [vmem:[%s2 + $0x30] sm:$0xf]
      %v5553 = vld [vmem:[%s2 + $0x34] sm:$0xf]
      %v5554 = vld [vmem:[%s2 + $0x38] sm:$0xf]
      %v5555 = vld [vmem:[%s2 + $0x3c] sm:$0xf]
      %v5556 = vld [vmem:[%s2 + $0x40] sm:$0xf]
      %v5557 = vld [vmem:[%s2 + $0x44] sm:$0xf]
      %v5558 = vld [vmem:[%s2 + $0x48] sm:$0xf]
      %v5559 = vld [vmem:[%s2 + $0x4c] sm:$0xf]
      %v5560 = vld [vmem:[%s2 + $0x50] sm:$0xf]
      %v5582 = vunpack.c.l.b16 %v5540
      %v5583 = vunpack.c.l.b16 %v5541
      %v5584 = vunpack.c.l.b16 %v5542
      %v5585 = vunpack.c.l.b16 %v5543
      %v5586 = vunpack.c.l.b16 %v5544
      %v5587 = vunpack.c.l.b16 %v5545
      %v5588 = vunpack.c.l.b16 %v5546
      %v5589 = vunpack.c.l.b16 %v5547
      %v5590 = vunpack.c.l.b16 %v5548
      %v5591 = vunpack.c.l.b16 %v5549
      %v5592 = vunpack.c.l.b16 %v5550
      %v5593 = vunpack.c.l.b16 %v5551
      %v5594 = vunpack.c.l.b16 %v5552
      %v5595 = vunpack.c.l.b16 %v5553
      %v5596 = vunpack.c.l.b16 %v5554
      %v5597 = vunpack.c.l.b16 %v5555
      %v5598 = vunpack.c.l.b16 %v5556
      %v5599 = vunpack.c.l.b16 %v5557
      %v5600 = vunpack.c.l.b16 %v5558
      %v5601 = vunpack.c.l.b16 %v5559
      %v5602 = vunpack.c.l.b16 %v5560
      %v5603 = vpack.c.b16 %v5583, %v5582
      %v5604 = vpack.c.b16 %v5585, %v5584
      %v5605 = vpack.c.b16 %v5587, %v5586
      %v5606 = vpack.c.b16 %v5589, %v5588
      %v5607 = vpack.c.b16 %v5591, %v5590
      %v5608 = vpack.c.b16 %v5593, %v5592
      %v5609 = vpack.c.b16 %v5595, %v5594
      %v5610 = vpack.c.b16 %v5597, %v5596
      %v5611 = vpack.c.b16 %v5599, %v5598
      %v5612 = vpack.c.b16 %v5601, %v5600
      %v5613 = vpack.c.b16 %v5602, %v5602
      %v5625 = vsel %vm1112, %v5513, 0
      %v5628 = vsel %vm1112, %v5515, 0
      %v5631 = vsel %vm1112, %v5517, 0
      %v5634 = vsel %vm1112, %v5519, 0
      %v5637 = vsel %vm1112, %v5521, 0
      %v5640 = vsel %vm1112, %v5523, 0
      %v5643 = vsel %vm1112, %v5525, 0
      %v5646 = vsel %vm1112, %v5527, 0
      %v5649 = vsel %vm1112, %v5529, 0
      %v5652 = vsel %vm1112, %v5531, 0
      %v5655 = vsel %vm1112, %v5533, 0
      %v5658 = vsel %vm1112, %v5535, 0
      %v5661 = vsel %vm1112, %v5537, 0
      %v5664 = vsel %vm1112, %v5539, 0
      %vm5666 = vcmask 1043456
      %v5668 = vsel %vm5666, %v5613, 0
      %5670 = vmatprep.subr.bf16.mxu0 0
      %5671 = vmatpush1.bf16.msra.mxu0 %v5603
      %5672 = vmatprep.subr.bf16.mxu0 0
      %5673 = vmatpush1.bf16.msra.mxu0 %v5604
      %5674 = vmatprep.subr.bf16.mxu0 0
      %5675 = vmatpush1.bf16.msra.mxu0 %v5605
      %5676 = vmatprep.subr.bf16.mxu0 0
      %5677 = vmatpush1.bf16.msra.mxu0 %v5606
      %5678 = vmatprep.subr.bf16.mxu0 0
      %5679 = vmatpush1.bf16.msra.mxu0 %v5607
      %5680 = vmatprep.subr.bf16.mxu0 0
      %5681 = vmatpush1.bf16.msra.mxu0 %v5608
      %5682 = vmatprep.subr.bf16.mxu0 0
      %5683 = vmatpush1.bf16.msra.mxu0 %v5609
      %5684 = vmatprep.subr.bf16.mxu0 0
      %5685 = vmatpush1.bf16.msra.mxu0 %v5610
      %5686 = vmatprep.subr.bf16.mxu0 0
      %5687 = vmatpush1.bf16.msra.mxu0 %v5611
      %5688 = vmatprep.subr.bf16.mxu0 0
      %5689 = vmatpush1.bf16.msra.mxu0 %v5612
      %5690 = vmatprep.subr.bf16.mxu0 0
      %5691 = vmatpush1.bf16.msra.mxu0 %v5668
      %5692 = vmatprep.subr.bf16.mxu0 0
      %5693 = vmatpush1.bf16.msra.mxu0 0
      %5694 = vmatprep.subr.bf16.mxu0 0
      %5695 = vmatpush1.bf16.msra.mxu0 0
      %5696 = vmatprep.subr.bf16.mxu0 0
      %5697 = vmatpush1.bf16.msra.mxu0 0
      %5698 = vmatprep.subr.bf16.mxu0 0
      %5699 = vmatpush1.bf16.msra.mxu0 0
      %5700 = vmatprep.subr.bf16.mxu0 0
      %5701 = vmatpush1.bf16.msra.mxu0 0
      %5702 = vmatprep.mubr.bf16.mxu0 %v5625
      %5703 = vmatmul.mubr.bf16.gmra.mrb[0].mxu0 %v5512
      %v5704 = vpop.f32.mrb[0].mxu0
      %v5705 = vadd.f32 0.0, %v5704
      %v5706 = vpop.f32.mrb[0].mxu0
      %v5707 = vpop.f32.mrb[0].mxu0
      %v5708 = vadd.f32 0.0, %v5707
      %v5709 = vpop.f32.mrb[0].mxu0
      %5710 = vmatprep.mubr.bf16.mxu0 %v5628
      %5711 = vmatmul.mubr.bf16.gmra.mrb[0].mxu0 %v5514
      %v5712 = vpop.f32.mrb[0].mxu0
      %v5713 = vadd.f32 0.0, %v5712
      %v5714 = vpop.f32.mrb[0].mxu0
      %v5715 = vpop.f32.mrb[0].mxu0
      %v5716 = vadd.f32 0.0, %v5715
      %v5717 = vpop.f32.mrb[0].mxu0
      %5718 = vmatprep.mubr.bf16.mxu0 %v5631
      %5719 = vmatmul.mubr.bf16.gmra.mrb[0].mxu0 %v5516
      %v5720 = vpop.f32.mrb[0].mxu0
      %v5721 = vadd.f32 0.0, %v5720
      %v5722 = vpop.f32.mrb[0].mxu0
      %v5723 = vpop.f32.mrb[0].mxu0
      %v5724 = vadd.f32 0.0, %v5723
      %v5725 = vpop.f32.mrb[0].mxu0
      %5726 = vmatprep.mubr.bf16.mxu0 %v5634
      %5727 = vmatmul.mubr.bf16.gmra.mrb[0].mxu0 %v5518
      %v5728 = vpop.f32.mrb[0].mxu0
      %v5729 = vadd.f32 0.0, %v5728
      %v5730 = vpop.f32.mrb[0].mxu0
      %v5731 = vpop.f32.mrb[0].mxu0
      %v5732 = vadd.f32 0.0, %v5731
      %v5733 = vpop.f32.mrb[0].mxu0
      %5734 = vmatprep.mubr.bf16.mxu0 %v5637
      %5735 = vmatmul.mubr.bf16.gmra.mrb[0].mxu0 %v5520
      %v5736 = vpop.f32.mrb[0].mxu0
      %v5737 = vadd.f32 0.0, %v5736
      %v5738 = vpop.f32.mrb[0].mxu0
      %v5739 = vpop.f32.mrb[0].mxu0
      %v5740 = vadd.f32 0.0, %v5739
      %v5741 = vpop.f32.mrb[0].mxu0
      %5742 = vmatprep.mubr.bf16.mxu0 %v5640
      %5743 = vmatmul.mubr.bf16.gmra.mrb[0].mxu0 %v5522
      %v5744 = vpop.f32.mrb[0].mxu0
      %v5745 = vadd.f32 0.0, %v5744
      %v5746 = vpop.f32.mrb[0].mxu0
      %v5747 = vpop.f32.mrb[0].mxu0
      %v5748 = vadd.f32 0.0, %v5747
      %v5749 = vpop.f32.mrb[0].mxu0
      %5750 = vmatprep.mubr.bf16.mxu0 %v5643
      %5751 = vmatmul.mubr.bf16.gmra.mrb[0].mxu0 %v5524
      %v5752 = vpop.f32.mrb[0].mxu0
      %v5753 = vadd.f32 0.0, %v5752
      %v5754 = vpop.f32.mrb[0].mxu0
      %v5755 = vpop.f32.mrb[0].mxu0
      %v5756 = vadd.f32 0.0, %v5755
      %v5757 = vpop.f32.mrb[0].mxu0
      %5758 = vmatprep.mubr.bf16.mxu0 %v5646
      %5759 = vmatmul.mubr.bf16.gmra.mrb[0].mxu0 %v5526
      %v5760 = vpop.f32.mrb[0].mxu0
      %v5761 = vadd.f32 0.0, %v5760
      %v5762 = vpop.f32.mrb[0].mxu0
      %v5763 = vpop.f32.mrb[0].mxu0
      %v5764 = vadd.f32 0.0, %v5763
      %v5765 = vpop.f32.mrb[0].mxu0
      %5766 = vmatprep.mubr.bf16.mxu0 %v5649
      %5767 = vmatmul.mubr.bf16.gmra.mrb[0].mxu0 %v5528
      %v5768 = vpop.f32.mrb[0].mxu0
      %v5769 = vadd.f32 0.0, %v5768
      %v5770 = vpop.f32.mrb[0].mxu0
      %v5771 = vpop.f32.mrb[0].mxu0
      %v5772 = vadd.f32 0.0, %v5771
      %v5773 = vpop.f32.mrb[0].mxu0
      %5774 = vmatprep.mubr.bf16.mxu0 %v5652
      %5775 = vmatmul.mubr.bf16.gmra.mrb[0].mxu0 %v5530
      %v5776 = vpop.f32.mrb[0].mxu0
      %v5777 = vadd.f32 0.0, %v5776
      %v5778 = vpop.f32.mrb[0].mxu0
      %v5779 = vpop.f32.mrb[0].mxu0
      %v5780 = vadd.f32 0.0, %v5779
      %v5781 = vpop.f32.mrb[0].mxu0
      %5782 = vmatprep.mubr.bf16.mxu0 %v5655
      %5783 = vmatmul.mubr.bf16.gmra.mrb[0].mxu0 %v5532
      %v5784 = vpop.f32.mrb[0].mxu0
      %v5785 = vadd.f32 0.0, %v5784
      %v5786 = vpop.f32.mrb[0].mxu0
      %v5787 = vpop.f32.mrb[0].mxu0
      %v5788 = vadd.f32 0.0, %v5787
      %v5789 = vpop.f32.mrb[0].mxu0
      %5790 = vmatprep.mubr.bf16.mxu0 %v5658
      %5791 = vmatmul.mubr.bf16.gmra.mrb[0].mxu0 %v5534
      %v5792 = vpop.f32.mrb[0].mxu0
      %v5793 = vadd.f32 0.0, %v5792
      %v5794 = vpop.f32.mrb[0].mxu0
      %v5795 = vpop.f32.mrb[0].mxu0
      %v5796 = vadd.f32 0.0, %v5795
      %v5797 = vpop.f32.mrb[0].mxu0
      %5798 = vmatprep.mubr.bf16.mxu0 %v5661
      %5799 = vmatmul.mubr.bf16.gmra.mrb[0].mxu0 %v5536
      %v5800 = vpop.f32.mrb[0].mxu0
      %v5801 = vadd.f32 0.0, %v5800
      %v5802 = vpop.f32.mrb[0].mxu0
      %v5803 = vpop.f32.mrb[0].mxu0
      %v5804 = vadd.f32 0.0, %v5803
      %v5805 = vpop.f32.mrb[0].mxu0
      %5806 = vmatprep.mubr.bf16.mxu0 %v5664
      %5807 = vmatmul.mubr.bf16.gmra.mrb[0].mxu0 %v5538
      %v5808 = vpop.f32.mrb[0].mxu0
      %v5809 = vadd.f32 0.0, %v5808
      %v5810 = vpop.f32.mrb[0].mxu0
      %v5811 = vpop.f32.mrb[0].mxu0
      %v5812 = vadd.f32 0.0, %v5811
      %v5813 = vpop.f32.mrb[0].mxu0
      %5814 = vdwg.mxu0
      %s5815 = scalar_lea.vmem %s2, 84
      %v5816 = vld [vmem:[%s5815] sm:$0xf]
      %v5817 = vld [vmem:[%s5815 + $0x4] sm:$0xf]
      %v5818 = vld [vmem:[%s5815 + $0x8] sm:$0xf]
      %v5819 = vld [vmem:[%s5815 + $0xc] sm:$0xf]
      %v5820 = vld [vmem:[%s5815 + $0x10] sm:$0xf]
      %v5821 = vld [vmem:[%s5815 + $0x14] sm:$0xf]
      %v5822 = vld [vmem:[%s5815 + $0x18] sm:$0xf]
      %v5823 = vld [vmem:[%s5815 + $0x1c] sm:$0xf]
      %v5824 = vld [vmem:[%s5815 + $0x20] sm:$0xf]
      %v5825 = vld [vmem:[%s5815 + $0x24] sm:$0xf]
      %v5826 = vld [vmem:[%s5815 + $0x28] sm:$0xf]
      %v5827 = vld [vmem:[%s5815 + $0x2c] sm:$0xf]
      %v5828 = vld [vmem:[%s5815 + $0x30] sm:$0xf]
      %v5829 = vld [vmem:[%s5815 + $0x34] sm:$0xf]
      %v5830 = vld [vmem:[%s5815 + $0x38] sm:$0xf]
      %v5831 = vld [vmem:[%s5815 + $0x3c] sm:$0xf]
      %v5832 = vld [vmem:[%s5815 + $0x40] sm:$0xf]
      %v5833 = vld [vmem:[%s5815 + $0x44] sm:$0xf]
      %v5834 = vld [vmem:[%s5815 + $0x48] sm:$0xf]
      %v5835 = vld [vmem:[%s5815 + $0x4c] sm:$0xf]
      %v5836 = vld [vmem:[%s5815 + $0x50] sm:$0xf]
      %v5858 = vunpack.c.l.b16 %v5816
      %v5859 = vunpack.c.l.b16 %v5817
      %v5860 = vunpack.c.l.b16 %v5818
      %v5861 = vunpack.c.l.b16 %v5819
      %v5862 = vunpack.c.l.b16 %v5820
      %v5863 = vunpack.c.l.b16 %v5821
      %v5864 = vunpack.c.l.b16 %v5822
      %v5865 = vunpack.c.l.b16 %v5823
      %v5866 = vunpack.c.l.b16 %v5824
      %v5867 = vunpack.c.l.b16 %v5825
      %v5868 = vunpack.c.l.b16 %v5826
      %v5869 = vunpack.c.l.b16 %v5827
      %v5870 = vunpack.c.l.b16 %v5828
      %v5871 = vunpack.c.l.b16 %v5829
      %v5872 = vunpack.c.l.b16 %v5830
      %v5873 = vunpack.c.l.b16 %v5831
      %v5874 = vunpack.c.l.b16 %v5832
      %v5875 = vunpack.c.l.b16 %v5833
      %v5876 = vunpack.c.l.b16 %v5834
      %v5877 = vunpack.c.l.b16 %v5835
      %v5878 = vunpack.c.l.b16 %v5836
      %v5879 = vpack.c.b16 %v5859, %v5858
      %v5880 = vpack.c.b16 %v5861, %v5860
      %v5881 = vpack.c.b16 %v5863, %v5862
      %v5882 = vpack.c.b16 %v5865, %v5864
      %v5883 = vpack.c.b16 %v5867, %v5866
      %v5884 = vpack.c.b16 %v5869, %v5868
      %v5885 = vpack.c.b16 %v5871, %v5870
      %v5886 = vpack.c.b16 %v5873, %v5872
      %v5887 = vpack.c.b16 %v5875, %v5874
      %v5888 = vpack.c.b16 %v5877, %v5876
      %v5889 = vpack.c.b16 %v5878, %v5878
      %v5901 = vsel %vm5666, %v5889, 0
      %5903 = vmatprep.subr.bf16.mxu0 0
      %5904 = vmatpush1.bf16.msra.mxu0 %v5879
      %5905 = vmatprep.subr.bf16.mxu0 0
      %5906 = vmatpush1.bf16.msra.mxu0 %v5880
      %5907 = vmatprep.subr.bf16.mxu0 0
      %5908 = vmatpush1.bf16.msra.mxu0 %v5881
      %5909 = vmatprep.subr.bf16.mxu0 0
      %5910 = vmatpush1.bf16.msra.mxu0 %v5882
      %5911 = vmatprep.subr.bf16.mxu0 0
      %5912 = vmatpush1.bf16.msra.mxu0 %v5883
      %5913 = vmatprep.subr.bf16.mxu0 0
      %5914 = vmatpush1.bf16.msra.mxu0 %v5884
      %5915 = vmatprep.subr.bf16.mxu0 0
      %5916 = vmatpush1.bf16.msra.mxu0 %v5885
      %5917 = vmatprep.subr.bf16.mxu0 0
      %5918 = vmatpush1.bf16.msra.mxu0 %v5886
      %5919 = vmatprep.subr.bf16.mxu0 0
      %5920 = vmatpush1.bf16.msra.mxu0 %v5887
      %5921 = vmatprep.subr.bf16.mxu0 0
      %5922 = vmatpush1.bf16.msra.mxu0 %v5888
      %5923 = vmatprep.subr.bf16.mxu0 0
      %5924 = vmatpush1.bf16.msra.mxu0 %v5901
      %5925 = vmatprep.subr.bf16.mxu0 0
      %5926 = vmatpush1.bf16.msra.mxu0 0
      %5927 = vmatprep.subr.bf16.mxu0 0
      %5928 = vmatpush1.bf16.msra.mxu0 0
      %5929 = vmatprep.subr.bf16.mxu0 0
      %5930 = vmatpush1.bf16.msra.mxu0 0
      %5931 = vmatprep.subr.bf16.mxu0 0
      %5932 = vmatpush1.bf16.msra.mxu0 0
      %5933 = vmatprep.subr.bf16.mxu0 0
      %5934 = vmatpush1.bf16.msra.mxu0 0
      %5935 = vmatprep.mubr.bf16.mxu0 %v5625
      %5936 = vmatmul.mubr.bf16.gmra.mrb[0].mxu0 %v5512
      %v5937 = vpop.f32.mrb[0].mxu0
      %v5938 = vadd.f32 0.0, %v5937
      %v5939 = vpop.f32.mrb[0].mxu0
      %v5940 = vpop.f32.mrb[0].mxu0
      %v5941 = vadd.f32 0.0, %v5940
      %v5942 = vpop.f32.mrb[0].mxu0
      %5943 = vmatprep.mubr.bf16.mxu0 %v5628
      %5944 = vmatmul.mubr.bf16.gmra.mrb[0].mxu0 %v5514
      %v5945 = vpop.f32.mrb[0].mxu0
      %v5946 = vadd.f32 0.0, %v5945
      %v5947 = vpop.f32.mrb[0].mxu0
      %v5948 = vpop.f32.mrb[0].mxu0
      %v5949 = vadd.f32 0.0, %v5948
      %v5950 = vpop.f32.mrb[0].mxu0
      %5951 = vmatprep.mubr.bf16.mxu0 %v5631
      %5952 = vmatmul.mubr.bf16.gmra.mrb[0].mxu0 %v5516
      %v5953 = vpop.f32.mrb[0].mxu0
      %v5954 = vadd.f32 0.0, %v5953
      %v5955 = vpop.f32.mrb[0].mxu0
      %v5956 = vpop.f32.mrb[0].mxu0
      %v5957 = vadd.f32 0.0, %v5956
      %v5958 = vpop.f32.mrb[0].mxu0
      %5959 = vmatprep.mubr.bf16.mxu0 %v5634
      %5960 = vmatmul.mubr.bf16.gmra.mrb[0].mxu0 %v5518
      %v5961 = vpop.f32.mrb[0].mxu0
      %v5962 = vadd.f32 0.0, %v5961
      %v5963 = vpop.f32.mrb[0].mxu0
      %v5964 = vpop.f32.mrb[0].mxu0
      %v5965 = vadd.f32 0.0, %v5964
      %v5966 = vpop.f32.mrb[0].mxu0
      %5967 = vmatprep.mubr.bf16.mxu0 %v5637
      %5968 = vmatmul.mubr.bf16.gmra.mrb[0].mxu0 %v5520
      %v5969 = vpop.f32.mrb[0].mxu0
      %v5970 = vadd.f32 0.0, %v5969
      %v5971 = vpop.f32.mrb[0].mxu0
      %v5972 = vpop.f32.mrb[0].mxu0
      %v5973 = vadd.f32 0.0, %v5972
      %v5974 = vpop.f32.mrb[0].mxu0
      %5975 = vmatprep.mubr.bf16.mxu0 %v5640
      %5976 = vmatmul.mubr.bf16.gmra.mrb[0].mxu0 %v5522
      %v5977 = vpop.f32.mrb[0].mxu0
      %v5978 = vadd.f32 0.0, %v5977
      %v5979 = vpop.f32.mrb[0].mxu0
      %v5980 = vpop.f32.mrb[0].mxu0
      %v5981 = vadd.f32 0.0, %v5980
      %v5982 = vpop.f32.mrb[0].mxu0
      %5983 = vmatprep.mubr.bf16.mxu0 %v5643
      %5984 = vmatmul.mubr.bf16.gmra.mrb[0].mxu0 %v5524
      %v5985 = vpop.f32.mrb[0].mxu0
      %v5986 = vadd.f32 0.0, %v5985
      %v5987 = vpop.f32.mrb[0].mxu0
      %v5988 = vpop.f32.mrb[0].mxu0
      %v5989 = vadd.f32 0.0, %v5988
      %v5990 = vpop.f32.mrb[0].mxu0
      %5991 = vmatprep.mubr.bf16.mxu0 %v5646
      %5992 = vmatmul.mubr.bf16.gmra.mrb[0].mxu0 %v5526
      %v5993 = vpop.f32.mrb[0].mxu0
      %v5994 = vadd.f32 0.0, %v5993
      %v5995 = vpop.f32.mrb[0].mxu0
      %v5996 = vpop.f32.mrb[0].mxu0
      %v5997 = vadd.f32 0.0, %v5996
      %v5998 = vpop.f32.mrb[0].mxu0
      %5999 = vmatprep.mubr.bf16.mxu0 %v5649
      %6000 = vmatmul.mubr.bf16.gmra.mrb[0].mxu0 %v5528
      %v6001 = vpop.f32.mrb[0].mxu0
      %v6002 = vadd.f32 0.0, %v6001
      %v6003 = vpop.f32.mrb[0].mxu0
      %v6004 = vpop.f32.mrb[0].mxu0
      %v6005 = vadd.f32 0.0, %v6004
      %v6006 = vpop.f32.mrb[0].mxu0
      %6007 = vmatprep.mubr.bf16.mxu0 %v5652
      %6008 = vmatmul.mubr.bf16.gmra.mrb[0].mxu0 %v5530
      %v6009 = vpop.f32.mrb[0].mxu0
      %v6010 = vadd.f32 0.0, %v6009
      %v6011 = vpop.f32.mrb[0].mxu0
      %v6012 = vpop.f32.mrb[0].mxu0
      %v6013 = vadd.f32 0.0, %v6012
      %v6014 = vpop.f32.mrb[0].mxu0
      %6015 = vmatprep.mubr.bf16.mxu0 %v5655
      %6016 = vmatmul.mubr.bf16.gmra.mrb[0].mxu0 %v5532
      %v6017 = vpop.f32.mrb[0].mxu0
      %v6018 = vadd.f32 0.0, %v6017
      %v6019 = vpop.f32.mrb[0].mxu0
      %v6020 = vpop.f32.mrb[0].mxu0
      %v6021 = vadd.f32 0.0, %v6020
      %v6022 = vpop.f32.mrb[0].mxu0
      %6023 = vmatprep.mubr.bf16.mxu0 %v5658
      %6024 = vmatmul.mubr.bf16.gmra.mrb[0].mxu0 %v5534
      %v6025 = vpop.f32.mrb[0].mxu0
      %v6026 = vadd.f32 0.0, %v6025
      %v6027 = vpop.f32.mrb[0].mxu0
      %v6028 = vpop.f32.mrb[0].mxu0
      %v6029 = vadd.f32 0.0, %v6028
      %v6030 = vpop.f32.mrb[0].mxu0
      %6031 = vmatprep.mubr.bf16.mxu0 %v5661
      %6032 = vmatmul.mubr.bf16.gmra.mrb[0].mxu0 %v5536
      %v6033 = vpop.f32.mrb[0].mxu0
      %v6034 = vadd.f32 0.0, %v6033
      %v6035 = vpop.f32.mrb[0].mxu0
      %v6036 = vpop.f32.mrb[0].mxu0
      %v6037 = vadd.f32 0.0, %v6036
      %v6038 = vpop.f32.mrb[0].mxu0
      %6039 = vmatprep.mubr.bf16.mxu0 %v5664
      %6040 = vmatmul.mubr.bf16.gmra.mrb[0].mxu0 %v5538
      %v6041 = vpop.f32.mrb[0].mxu0
      %v6042 = vadd.f32 0.0, %v6041
      %v6043 = vpop.f32.mrb[0].mxu0
      %v6044 = vpop.f32.mrb[0].mxu0
      %v6045 = vadd.f32 0.0, %v6044
      %v6046 = vpop.f32.mrb[0].mxu0
      %6047 = vdwg.mxu0
      %v6048 = vmax.f32 %v5705, %v5938
      %v6049 = vmax.f32 %v5708, %v5941
      %v6050 = vmax.f32 %v5713, %v5946
      %v6051 = vmax.f32 %v5716, %v5949
      %v6052 = vmax.f32 %v5721, %v5954
      %v6053 = vmax.f32 %v5724, %v5957
      %v6054 = vmax.f32 %v5729, %v5962
      %v6055 = vmax.f32 %v5732, %v5965
      %v6056 = vmax.f32 %v5737, %v5970
      %v6057 = vmax.f32 %v5740, %v5973
      %v6058 = vmax.f32 %v5745, %v5978
      %v6059 = vmax.f32 %v5748, %v5981
      %v6060 = vmax.f32 %v5753, %v5986
      %v6061 = vmax.f32 %v5756, %v5989
      %v6062 = vmax.f32 %v5761, %v5994
      %v6063 = vmax.f32 %v5764, %v5997
      %v6064 = vmax.f32 %v5769, %v6002
      %v6065 = vmax.f32 %v5772, %v6005
      %v6066 = vmax.f32 %v5777, %v6010
      %v6067 = vmax.f32 %v5780, %v6013
      %v6068 = vmax.f32 %v5785, %v6018
      %v6069 = vmax.f32 %v5788, %v6021
      %v6070 = vmax.f32 %v5793, %v6026
      %v6071 = vmax.f32 %v5796, %v6029
      %v6072 = vmax.f32 %v5801, %v6034
      %v6073 = vmax.f32 %v5804, %v6037
      %v6074 = vmax.f32 %v5809, %v6042
      %v6075 = vmax.f32 %v5812, %v6045
      %v6076 = vld [vmem:[%s3] sm:$0x1]
      %v6078 = vlaneseq
      %v6079 = vshrl.u32 %v6078, 7
      %v6080 = vsub.s32 0, %v6079
      %v6081 = vrot.slane %v6076, %v6080
      %v6083 = vadd.f32 %v6048, %v6081
      %v6084 = vadd.f32 %v6049, %v6081
      %v6085 = vadd.f32 %v6050, %v6081
      %v6086 = vadd.f32 %v6051, %v6081
      %v6087 = vadd.f32 %v6052, %v6081
      %v6088 = vadd.f32 %v6053, %v6081
      %v6089 = vadd.f32 %v6054, %v6081
      %v6090 = vadd.f32 %v6055, %v6081
      %v6091 = vadd.f32 %v6056, %v6081
      %v6092 = vadd.f32 %v6057, %v6081
      %v6093 = vadd.f32 %v6058, %v6081
      %v6094 = vadd.f32 %v6059, %v6081
      %v6095 = vadd.f32 %v6060, %v6081
      %v6096 = vadd.f32 %v6061, %v6081
      %v6097 = vadd.f32 %v6062, %v6081
      %v6098 = vadd.f32 %v6063, %v6081
      %v6099 = vadd.f32 %v6064, %v6081
      %v6100 = vadd.f32 %v6065, %v6081
      %v6101 = vadd.f32 %v6066, %v6081
      %v6102 = vadd.f32 %v6067, %v6081
      %v6103 = vadd.f32 %v6068, %v6081
      %v6104 = vadd.f32 %v6069, %v6081
      %v6105 = vadd.f32 %v6070, %v6081
      %v6106 = vadd.f32 %v6071, %v6081
      %v6107 = vadd.f32 %v6072, %v6081
      %v6108 = vadd.f32 %v6073, %v6081
      %v6109 = vadd.f32 %v6074, %v6081
      %v6110 = vadd.f32 %v6075, %v6081
      %v6111 = vmax.f32 %v6083, 0.0
      %v6112 = vmax.f32 %v6084, 0.0
      %v6113 = vmax.f32 %v6085, 0.0
      %v6114 = vmax.f32 %v6086, 0.0
      %v6115 = vmax.f32 %v6087, 0.0
      %v6116 = vmax.f32 %v6088, 0.0
      %v6117 = vmax.f32 %v6089, 0.0
      %v6118 = vmax.f32 %v6090, 0.0
      %v6119 = vmax.f32 %v6091, 0.0
      %v6120 = vmax.f32 %v6092, 0.0
      %v6121 = vmax.f32 %v6093, 0.0
      %v6122 = vmax.f32 %v6094, 0.0
      %v6123 = vmax.f32 %v6095, 0.0
      %v6124 = vmax.f32 %v6096, 0.0
      %v6125 = vmax.f32 %v6097, 0.0
      %v6126 = vmax.f32 %v6098, 0.0
      %v6127 = vmax.f32 %v6099, 0.0
      %v6128 = vmax.f32 %v6100, 0.0
      %v6129 = vmax.f32 %v6101, 0.0
      %v6130 = vmax.f32 %v6102, 0.0
      %v6131 = vmax.f32 %v6103, 0.0
      %v6132 = vmax.f32 %v6104, 0.0
      %v6133 = vmax.f32 %v6105, 0.0
      %v6134 = vmax.f32 %v6106, 0.0
      %v6135 = vmax.f32 %v6107, 0.0
      %v6136 = vmax.f32 %v6108, 0.0
      %v6137 = vmax.f32 %v6109, 0.0
      %v6138 = vmax.f32 %v6110, 0.0
      %v6139 = vpack.c.bf16 %v6112, %v6111
      %v6140 = vpack.c.bf16 %v6114, %v6113
      %v6141 = vpack.c.bf16 %v6116, %v6115
      %v6142 = vpack.c.bf16 %v6118, %v6117
      %v6143 = vpack.c.bf16 %v6120, %v6119
      %v6144 = vpack.c.bf16 %v6122, %v6121
      %v6145 = vpack.c.bf16 %v6124, %v6123
      %v6146 = vpack.c.bf16 %v6126, %v6125
      %v6147 = vpack.c.bf16 %v6128, %v6127
      %v6148 = vpack.c.bf16 %v6130, %v6129
      %v6149 = vld [vmem:[%s4] sm:$0xff]
      %v6150 = vld [vmem:[%s4 + $0x8] sm:$0xff]
      %v6151 = vld [vmem:[%s4 + $0x10] sm:$0xff]
      %v6152 = vld [vmem:[%s4 + $0x18] sm:$0xff]
      %v6153 = vld [vmem:[%s4 + $0x20] sm:$0xff]
      %v6154 = vld [vmem:[%s4 + $0x28] sm:$0xff]
      %v6155 = vld [vmem:[%s4 + $0x30] sm:$0xff]
      %v6156 = vld [vmem:[%s4 + $0x38] sm:$0xff]
      %v6157 = vld [vmem:[%s4 + $0x40] sm:$0xff]
      %v6158 = vld [vmem:[%s4 + $0x48] sm:$0xff]
      %v6159 = vld [vmem:[%s4 + $0x50] sm:$0x33]
      %v6171 = vunpack.c.l.b16 %v6149
      %v6172 = vunpack.c.h.b16 %v6149
      %v6173 = vunpack.c.l.b16 %v6150
      %v6174 = vunpack.c.h.b16 %v6150
      %v6175 = vunpack.c.l.b16 %v6151
      %v6176 = vunpack.c.h.b16 %v6151
      %v6177 = vunpack.c.l.b16 %v6152
      %v6178 = vunpack.c.h.b16 %v6152
      %v6179 = vunpack.c.l.b16 %v6153
      %v6180 = vunpack.c.h.b16 %v6153
      %v6181 = vunpack.c.l.b16 %v6154
      %v6182 = vunpack.c.h.b16 %v6154
      %v6183 = vunpack.c.l.b16 %v6155
      %v6184 = vunpack.c.h.b16 %v6155
      %v6185 = vunpack.c.l.b16 %v6156
      %v6186 = vunpack.c.h.b16 %v6156
      %v6187 = vunpack.c.l.b16 %v6157
      %v6188 = vunpack.c.h.b16 %v6157
      %v6189 = vunpack.c.l.b16 %v6158
      %v6190 = vunpack.c.h.b16 %v6158
      %v6191 = vunpack.c.l.b16 %v6159
      %v6192 = vunpack.c.h.b16 %v6159
      %v6193 = vpack.c.b16 %v6173, %v6171
      %v6194 = vpack.c.b16 %v6174, %v6172
      %v6195 = vpack.c.b16 %v6177, %v6175
      %v6196 = vpack.c.b16 %v6178, %v6176
      %v6197 = vpack.c.b16 %v6181, %v6179
      %v6198 = vpack.c.b16 %v6182, %v6180
      %v6199 = vpack.c.b16 %v6185, %v6183
      %v6200 = vpack.c.b16 %v6186, %v6184
      %v6201 = vpack.c.b16 %v6189, %v6187
      %v6202 = vpack.c.b16 %v6190, %v6188
      %v6203 = vpack.c.b16 %v6191, %v6191
      %v6204 = vpack.c.b16 %v6192, %v6192
      %vm6215 = vcmask 687104
      %v6217 = vsel %vm6215, %v6139, 0
      %v6220 = vsel %vm6215, %v6140, 0
      %v6223 = vsel %vm6215, %v6141, 0
      %v6226 = vsel %vm6215, %v6142, 0
      %v6229 = vsel %vm6215, %v6143, 0
      %v6232 = vsel %vm6215, %v6144, 0
      %v6235 = vsel %vm6215, %v6145, 0
      %v6238 = vsel %vm6215, %v6146, 0
      %v6241 = vsel %vm6215, %v6147, 0
      %v6244 = vsel %vm6215, %v6148, 0
      %vm6246 = vcmask 1041408
      %v6248 = vsel %vm6246, %v6203, 0
      %v6251 = vsel %vm6246, %v6204, 0
      %6253 = vmatprep.subr.bf16.mxu0 %v6194
      %6254 = vmatpush1.bf16.msra.mxu0 %v6193
      %6255 = vmatprep.subr.bf16.mxu0 %v6196
      %6256 = vmatpush1.bf16.msra.mxu0 %v6195
      %6257 = vmatprep.subr.bf16.mxu0 %v6198
      %6258 = vmatpush1.bf16.msra.mxu0 %v6197
      %6259 = vmatprep.subr.bf16.mxu0 %v6200
      %6260 = vmatpush1.bf16.msra.mxu0 %v6199
      %6261 = vmatprep.subr.bf16.mxu0 %v6202
      %6262 = vmatpush1.bf16.msra.mxu0 %v6201
      %6263 = vmatprep.subr.bf16.mxu0 %v6251
      %6264 = vmatpush1.bf16.msra.mxu0 %v6248
      %6265 = vmatprep.subr.bf16.mxu0 0
      %6266 = vmatpush1.bf16.msra.mxu0 0
      %6267 = vmatprep.subr.bf16.mxu0 0
      %6268 = vmatpush1.bf16.msra.mxu0 0
      %6269 = vmatprep.subr.bf16.mxu0 0
      %6270 = vmatpush1.bf16.msra.mxu0 0
      %6271 = vmatprep.subr.bf16.mxu0 0
      %6272 = vmatpush1.bf16.msra.mxu0 0
      %6273 = vmatprep.subr.bf16.mxu0 0
      %6274 = vmatpush1.bf16.msra.mxu0 0
      %6275 = vmatprep.subr.bf16.mxu0 0
      %6276 = vmatpush1.bf16.msra.mxu0 0
      %6277 = vmatprep.subr.bf16.mxu0 0
      %6278 = vmatpush1.bf16.msra.mxu0 0
      %6279 = vmatprep.subr.bf16.mxu0 0
      %6280 = vmatpush1.bf16.msra.mxu0 0
      %6281 = vmatprep.subr.bf16.mxu0 0
      %6282 = vmatpush1.bf16.msra.mxu0 0
      %6283 = vmatprep.subr.bf16.mxu0 0
      %6284 = vmatpush1.bf16.msra.mxu0 0
      %6285 = vmatprep.mubr.bf16.mxu0 0
      %6286 = vmatmul.mubr.bf16.gmra.mrb[0].mxu0 %v6217
      %v6287 = vpop.f32.mrb[0].mxu0
      %v6288 = vadd.f32 0.0, %v6287
      %v6289 = vpop.f32.mrb[0].mxu0
      %v6290 = vadd.f32 0.0, %v6289
      %v6291 = vpop.f32.mrb[0].mxu0
      %v6292 = vadd.f32 0.0, %v6291
      %v6293 = vpop.f32.mrb[0].mxu0
      %v6294 = vadd.f32 0.0, %v6293
      %6295 = vmatprep.mubr.bf16.mxu0 0
      %6296 = vmatmul.mubr.bf16.gmra.mrb[0].mxu0 %v6220
      %v6297 = vpop.f32.mrb[0].mxu0
      %v6298 = vadd.f32 0.0, %v6297
      %v6299 = vpop.f32.mrb[0].mxu0
      %v6300 = vadd.f32 0.0, %v6299
      %v6301 = vpop.f32.mrb[0].mxu0
      %v6302 = vadd.f32 0.0, %v6301
      %v6303 = vpop.f32.mrb[0].mxu0
      %v6304 = vadd.f32 0.0, %v6303
      %6305 = vmatprep.mubr.bf16.mxu0 0
      %6306 = vmatmul.mubr.bf16.gmra.mrb[0].mxu0 %v6223
      %v6307 = vpop.f32.mrb[0].mxu0
      %v6308 = vadd.f32 0.0, %v6307
      %v6309 = vpop.f32.mrb[0].mxu0
      %v6310 = vadd.f32 0.0, %v6309
      %v6311 = vpop.f32.mrb[0].mxu0
      %v6312 = vadd.f32 0.0, %v6311
      %v6313 = vpop.f32.mrb[0].mxu0
      %v6314 = vadd.f32 0.0, %v6313
      %6315 = vmatprep.mubr.bf16.mxu0 0
      %6316 = vmatmul.mubr.bf16.gmra.mrb[0].mxu0 %v6226
      %v6317 = vpop.f32.mrb[0].mxu0
      %v6318 = vadd.f32 0.0, %v6317
      %v6319 = vpop.f32.mrb[0].mxu0
      %v6320 = vadd.f32 0.0, %v6319
      %v6321 = vpop.f32.mrb[0].mxu0
      %v6322 = vadd.f32 0.0, %v6321
      %v6323 = vpop.f32.mrb[0].mxu0
      %v6324 = vadd.f32 0.0, %v6323
      %6325 = vmatprep.mubr.bf16.mxu0 0
      %6326 = vmatmul.mubr.bf16.gmra.mrb[0].mxu0 %v6229
      %v6327 = vpop.f32.mrb[0].mxu0
      %v6328 = vadd.f32 0.0, %v6327
      %v6329 = vpop.f32.mrb[0].mxu0
      %v6330 = vadd.f32 0.0, %v6329
      %v6331 = vpop.f32.mrb[0].mxu0
      %v6332 = vadd.f32 0.0, %v6331
      %v6333 = vpop.f32.mrb[0].mxu0
      %v6334 = vadd.f32 0.0, %v6333
      %6335 = vmatprep.mubr.bf16.mxu0 0
      %6336 = vmatmul.mubr.bf16.gmra.mrb[0].mxu0 %v6232
      %v6337 = vpop.f32.mrb[0].mxu0
      %v6338 = vadd.f32 0.0, %v6337
      %v6339 = vpop.f32.mrb[0].mxu0
      %v6340 = vadd.f32 0.0, %v6339
      %v6341 = vpop.f32.mrb[0].mxu0
      %v6342 = vadd.f32 0.0, %v6341
      %v6343 = vpop.f32.mrb[0].mxu0
      %v6344 = vadd.f32 0.0, %v6343
      %6345 = vmatprep.mubr.bf16.mxu0 0
      %6346 = vmatmul.mubr.bf16.gmra.mrb[0].mxu0 %v6235
      %v6347 = vpop.f32.mrb[0].mxu0
      %v6348 = vadd.f32 0.0, %v6347
      %v6349 = vpop.f32.mrb[0].mxu0
      %v6350 = vadd.f32 0.0, %v6349
      %v6351 = vpop.f32.mrb[0].mxu0
      %v6352 = vadd.f32 0.0, %v6351
      %v6353 = vpop.f32.mrb[0].mxu0
      %v6354 = vadd.f32 0.0, %v6353
      %6355 = vmatprep.mubr.bf16.mxu0 0
      %6356 = vmatmul.mubr.bf16.gmra.mrb[0].mxu0 %v6238
      %v6357 = vpop.f32.mrb[0].mxu0
      %v6358 = vadd.f32 0.0, %v6357
      %v6359 = vpop.f32.mrb[0].mxu0
      %v6360 = vadd.f32 0.0, %v6359
      %v6361 = vpop.f32.mrb[0].mxu0
      %v6362 = vadd.f32 0.0, %v6361
      %v6363 = vpop.f32.mrb[0].mxu0
      %v6364 = vadd.f32 0.0, %v6363
      %6365 = vmatprep.mubr.bf16.mxu0 0
      %6366 = vmatmul.mubr.bf16.gmra.mrb[0].mxu0 %v6241
      %v6367 = vpop.f32.mrb[0].mxu0
      %v6368 = vadd.f32 0.0, %v6367
      %v6369 = vpop.f32.mrb[0].mxu0
      %v6370 = vadd.f32 0.0, %v6369
      %v6371 = vpop.f32.mrb[0].mxu0
      %v6372 = vadd.f32 0.0, %v6371
      %v6373 = vpop.f32.mrb[0].mxu0
      %v6374 = vadd.f32 0.0, %v6373
      %6375 = vmatprep.mubr.bf16.mxu0 0
      %6376 = vmatmul.mubr.bf16.gmra.mrb[0].mxu0 %v6244
      %v6377 = vpop.f32.mrb[0].mxu0
      %v6378 = vadd.f32 0.0, %v6377
      %v6379 = vpop.f32.mrb[0].mxu0
      %v6380 = vadd.f32 0.0, %v6379
      %v6381 = vpop.f32.mrb[0].mxu0
      %v6382 = vadd.f32 0.0, %v6381
      %v6383 = vpop.f32.mrb[0].mxu0
      %v6384 = vadd.f32 0.0, %v6383
      %6385 = vdwg.mxu0
      %6386 = vst [vmem:[#allocation3] sm:$0xff] %v6288
      %vm6387 = vcmask 261120
      %6388 = vst.msk [vmem:[#allocation3 + $0x8] sm:$0xff] %vm6387, %v6290
      %6389 = vst [vmem:[#allocation3 + $0x10] sm:$0xff] %v6292
      %6390 = vst.msk [vmem:[#allocation3 + $0x18] sm:$0xff] %vm6387, %v6294
      %6391 = vst [vmem:[#allocation3 + $0x20] sm:$0xff] %v6298
      %6392 = vst.msk [vmem:[#allocation3 + $0x28] sm:$0xff] %vm6387, %v6300
      %6393 = vst [vmem:[#allocation3 + $0x30] sm:$0xff] %v6302
      %6394 = vst.msk [vmem:[#allocation3 + $0x38] sm:$0xff] %vm6387, %v6304
      %6395 = vst [vmem:[#allocation3 + $0x40] sm:$0xff] %v6308
      %6396 = vst.msk [vmem:[#allocation3 + $0x48] sm:$0xff] %vm6387, %v6310
      %6397 = vst [vmem:[#allocation3 + $0x50] sm:$0xff] %v6312
      %6398 = vst.msk [vmem:[#allocation3 + $0x58] sm:$0xff] %vm6387, %v6314
      %6399 = vst [vmem:[#allocation3 + $0x60] sm:$0xff] %v6318
      %6400 = vst.msk [vmem:[#allocation3 + $0x68] sm:$0xff] %vm6387, %v6320
      %6401 = vst [vmem:[#allocation3 + $0x70] sm:$0xff] %v6322
      %6402 = vst.msk [vmem:[#allocation3 + $0x78] sm:$0xff] %vm6387, %v6324
      %6403 = vst [vmem:[#allocation3 + $0x80] sm:$0xff] %v6328
      %6404 = vst.msk [vmem:[#allocation3 + $0x88] sm:$0xff] %vm6387, %v6330
      %6405 = vst [vmem:[#allocation3 + $0x90] sm:$0xff] %v6332
      %6406 = vst.msk [vmem:[#allocation3 + $0x98] sm:$0xff] %vm6387, %v6334
      %6407 = vst [vmem:[#allocation3 + $0xa0] sm:$0xff] %v6338
      %6408 = vst.msk [vmem:[#allocation3 + $0xa8] sm:$0xff] %vm6387, %v6340
      %6409 = vst [vmem:[#allocation3 + $0xb0] sm:$0xff] %v6342
      %6410 = vst.msk [vmem:[#allocation3 + $0xb8] sm:$0xff] %vm6387, %v6344
      %6411 = vst [vmem:[#allocation3 + $0xc0] sm:$0xff] %v6348
      %6412 = vst.msk [vmem:[#allocation3 + $0xc8] sm:$0xff] %vm6387, %v6350
      %6413 = vst [vmem:[#allocation3 + $0xd0] sm:$0xff] %v6352
      %6414 = vst.msk [vmem:[#allocation3 + $0xd8] sm:$0xff] %vm6387, %v6354
      %6415 = vst [vmem:[#allocation3 + $0xe0] sm:$0xff] %v6358
      %6416 = vst.msk [vmem:[#allocation3 + $0xe8] sm:$0xff] %vm6387, %v6360
      %6417 = vst [vmem:[#allocation3 + $0xf0] sm:$0xff] %v6362
      %6418 = vst.msk [vmem:[#allocation3 + $0xf8] sm:$0xff] %vm6387, %v6364
      %6419 = vst [vmem:[#allocation3 + $0x100] sm:$0xff] %v6368
      %6420 = vst.msk [vmem:[#allocation3 + $0x108] sm:$0xff] %vm6387, %v6370
      %6421 = vst [vmem:[#allocation3 + $0x110] sm:$0xff] %v6372
      %6422 = vst.msk [vmem:[#allocation3 + $0x118] sm:$0xff] %vm6387, %v6374
      %6423 = vst [vmem:[#allocation3 + $0x120] sm:$0xff] %v6378
      %6424 = vst.msk [vmem:[#allocation3 + $0x128] sm:$0xff] %vm6387, %v6380
      %6425 = vst [vmem:[#allocation3 + $0x130] sm:$0xff] %v6382
      %6426 = vst.msk [vmem:[#allocation3 + $0x138] sm:$0xff] %vm6387, %v6384
      %v6427 = vld [vmem:[#allocation3] sm:$0xff]
      %v6428 = vld [vmem:[#allocation3 + $0x8] sm:$0xff]
      %v6429 = vld [vmem:[#allocation3 + $0x10] sm:$0xff]
      %v6430 = vld [vmem:[#allocation3 + $0x18] sm:$0xff]
      %v6431 = vld [vmem:[#allocation3 + $0x20] sm:$0xff]
      %v6432 = vld [vmem:[#allocation3 + $0x28] sm:$0xff]
      %v6433 = vld [vmem:[#allocation3 + $0x30] sm:$0xff]
      %v6434 = vld [vmem:[#allocation3 + $0x38] sm:$0xff]
      %v6435 = vld [vmem:[#allocation3 + $0x40] sm:$0xff]
      %v6436 = vld [vmem:[#allocation3 + $0x48] sm:$0xff]
      %v6437 = vld [vmem:[#allocation3 + $0x50] sm:$0xff]
      %v6438 = vld [vmem:[#allocation3 + $0x58] sm:$0xff]
      %v6439 = vld [vmem:[#allocation3 + $0x60] sm:$0xff]
      %v6440 = vld [vmem:[#allocation3 + $0x68] sm:$0xff]
      %v6441 = vld [vmem:[#allocation3 + $0x70] sm:$0xff]
      %v6442 = vld [vmem:[#allocation3 + $0x78] sm:$0xff]
      %v6443 = vld [vmem:[#allocation3 + $0x80] sm:$0xff]
      %v6444 = vld [vmem:[#allocation3 + $0x88] sm:$0xff]
      %v6445 = vld [vmem:[#allocation3 + $0x90] sm:$0xff]
      %v6446 = vld [vmem:[#allocation3 + $0x98] sm:$0xff]
      %v6447 = vld [vmem:[#allocation3 + $0xa0] sm:$0xff]
      %v6448 = vld [vmem:[#allocation3 + $0xa8] sm:$0xff]
      %v6449 = vld [vmem:[#allocation3 + $0xb0] sm:$0xff]
      %v6450 = vld [vmem:[#allocation3 + $0xb8] sm:$0xff]
      %v6451 = vld [vmem:[#allocation3 + $0xc0] sm:$0xff]
      %v6452 = vld [vmem:[#allocation3 + $0xc8] sm:$0xff]
      %v6453 = vld [vmem:[#allocation3 + $0xd0] sm:$0xff]
      %v6454 = vld [vmem:[#allocation3 + $0xd8] sm:$0xff]
      %v6455 = vld [vmem:[#allocation3 + $0xe0] sm:$0xff]
      %v6456 = vld [vmem:[#allocation3 + $0xe8] sm:$0xff]
      %v6457 = vld [vmem:[#allocation3 + $0xf0] sm:$0xff]
      %v6458 = vld [vmem:[#allocation3 + $0xf8] sm:$0xff]
      %v6459 = vld [vmem:[#allocation3 + $0x100] sm:$0xff]
      %v6460 = vld [vmem:[#allocation3 + $0x108] sm:$0xff]
      %v6461 = vld [vmem:[#allocation3 + $0x110] sm:$0xff]
      %v6462 = vld [vmem:[#allocation3 + $0x118] sm:$0xff]
      %v6463 = vld [vmem:[#allocation3 + $0x120] sm:$0xff]
      %v6464 = vld [vmem:[#allocation3 + $0x128] sm:$0xff]
      %v6465 = vld [vmem:[#allocation3 + $0x130] sm:$0xff]
      %v6466 = vld [vmem:[#allocation3 + $0x138] sm:$0xff]
      %v6467 = vpack.c.bf16 %v6132, %v6131
      %s6468 = scalar_lea.vmem %s4, 88
      %v6469 = vld [vmem:[%s6468] sm:$0xff]
      %v6470 = vld [vmem:[%s6468 + $0x8] sm:$0xff]
      %v6471 = vld [vmem:[%s6468 + $0x10] sm:$0xff]
      %v6472 = vld [vmem:[%s6468 + $0x18] sm:$0xff]
      %v6473 = vld [vmem:[%s6468 + $0x20] sm:$0xff]
      %v6474 = vld [vmem:[%s6468 + $0x28] sm:$0xff]
      %v6475 = vld [vmem:[%s6468 + $0x30] sm:$0xff]
      %v6476 = vld [vmem:[%s6468 + $0x38] sm:$0xff]
      %v6477 = vld [vmem:[%s6468 + $0x40] sm:$0xff]
      %v6478 = vld [vmem:[%s6468 + $0x48] sm:$0xff]
      %v6479 = vld [vmem:[%s6468 + $0x50] sm:$0x33]
      %v6491 = vunpack.c.l.b16 %v6469
      %v6492 = vunpack.c.h.b16 %v6469
      %v6493 = vunpack.c.l.b16 %v6470
      %v6494 = vunpack.c.h.b16 %v6470
      %v6495 = vunpack.c.l.b16 %v6471
      %v6496 = vunpack.c.h.b16 %v6471
      %v6497 = vunpack.c.l.b16 %v6472
      %v6498 = vunpack.c.h.b16 %v6472
      %v6499 = vunpack.c.l.b16 %v6473
      %v6500 = vunpack.c.h.b16 %v6473
      %v6501 = vunpack.c.l.b16 %v6474
      %v6502 = vunpack.c.h.b16 %v6474
      %v6503 = vunpack.c.l.b16 %v6475
      %v6504 = vunpack.c.h.b16 %v6475
      %v6505 = vunpack.c.l.b16 %v6476
      %v6506 = vunpack.c.h.b16 %v6476
      %v6507 = vunpack.c.l.b16 %v6477
      %v6508 = vunpack.c.h.b16 %v6477
      %v6509 = vunpack.c.l.b16 %v6478
      %v6510 = vunpack.c.h.b16 %v6478
      %v6511 = vunpack.c.l.b16 %v6479
      %v6512 = vunpack.c.h.b16 %v6479
      %v6513 = vpack.c.b16 %v6493, %v6491
      %v6514 = vpack.c.b16 %v6494, %v6492
      %v6515 = vpack.c.b16 %v6497, %v6495
      %v6516 = vpack.c.b16 %v6498, %v6496
      %v6517 = vpack.c.b16 %v6501, %v6499
      %v6518 = vpack.c.b16 %v6502, %v6500
      %v6519 = vpack.c.b16 %v6505, %v6503
      %v6520 = vpack.c.b16 %v6506, %v6504
      %v6521 = vpack.c.b16 %v6509, %v6507
      %v6522 = vpack.c.b16 %v6510, %v6508
      %v6523 = vpack.c.b16 %v6511, %v6511
      %v6524 = vpack.c.b16 %v6512, %v6512
      %v6536 = vsel %vm6215, %v6467, 0
      %v6539 = vsel %vm6246, %v6523, 0
      %v6542 = vsel %vm6246, %v6524, 0
      %6544 = vmatprep.subr.bf16.mxu0 %v6514
      %6545 = vmatpush1.bf16.msra.mxu0 %v6513
      %6546 = vmatprep.subr.bf16.mxu0 %v6516
      %6547 = vmatpush1.bf16.msra.mxu0 %v6515
      %6548 = vmatprep.subr.bf16.mxu0 %v6518
      %6549 = vmatpush1.bf16.msra.mxu0 %v6517
      %6550 = vmatprep.subr.bf16.mxu0 %v6520
      %6551 = vmatpush1.bf16.msra.mxu0 %v6519
      %6552 = vmatprep.subr.bf16.mxu0 %v6522
      %6553 = vmatpush1.bf16.msra.mxu0 %v6521
      %6554 = vmatprep.subr.bf16.mxu0 %v6542
      %6555 = vmatpush1.bf16.msra.mxu0 %v6539
      %6556 = vmatprep.subr.bf16.mxu0 0
      %6557 = vmatpush1.bf16.msra.mxu0 0
      %6558 = vmatprep.subr.bf16.mxu0 0
      %6559 = vmatpush1.bf16.msra.mxu0 0
      %6560 = vmatprep.subr.bf16.mxu0 0
      %6561 = vmatpush1.bf16.msra.mxu0 0
      %6562 = vmatprep.subr.bf16.mxu0 0
      %6563 = vmatpush1.bf16.msra.mxu0 0
      %6564 = vmatprep.subr.bf16.mxu0 0
      %6565 = vmatpush1.bf16.msra.mxu0 0
      %6566 = vmatprep.subr.bf16.mxu0 0
      %6567 = vmatpush1.bf16.msra.mxu0 0
      %6568 = vmatprep.subr.bf16.mxu0 0
      %6569 = vmatpush1.bf16.msra.mxu0 0
      %6570 = vmatprep.subr.bf16.mxu0 0
      %6571 = vmatpush1.bf16.msra.mxu0 0
      %6572 = vmatprep.subr.bf16.mxu0 0
      %6573 = vmatpush1.bf16.msra.mxu0 0
      %6574 = vmatprep.subr.bf16.mxu0 0
      %6575 = vmatpush1.bf16.msra.mxu0 0
      %6576 = vmatprep.mubr.bf16.mxu0 0
      %6577 = vmatmul.mubr.bf16.gmra.mrb[0].mxu0 %v6220
      %v6578 = vpop.f32.mrb[0].mxu0
      %v6579 = vadd.f32 0.0, %v6578
      %v6580 = vpop.f32.mrb[0].mxu0
      %v6581 = vadd.f32 0.0, %v6580
      %v6582 = vpop.f32.mrb[0].mxu0
      %v6583 = vadd.f32 0.0, %v6582
      %v6584 = vpop.f32.mrb[0].mxu0
      %v6585 = vadd.f32 0.0, %v6584
      %6586 = vmatprep.mubr.bf16.mxu0 0
      %6587 = vmatmul.mubr.bf16.gmra.mrb[0].mxu0 %v6223
      %v6588 = vpop.f32.mrb[0].mxu0
      %v6589 = vadd.f32 0.0, %v6588
      %v6590 = vpop.f32.mrb[0].mxu0
      %v6591 = vadd.f32 0.0, %v6590
      %v6592 = vpop.f32.mrb[0].mxu0
      %v6593 = vadd.f32 0.0, %v6592
      %v6594 = vpop.f32.mrb[0].mxu0
      %v6595 = vadd.f32 0.0, %v6594
      %6596 = vmatprep.mubr.bf16.mxu0 0
      %6597 = vmatmul.mubr.bf16.gmra.mrb[0].mxu0 %v6226
      %v6598 = vpop.f32.mrb[0].mxu0
      %v6599 = vadd.f32 0.0, %v6598
      %v6600 = vpop.f32.mrb[0].mxu0
      %v6601 = vadd.f32 0.0, %v6600
      %v6602 = vpop.f32.mrb[0].mxu0
      %v6603 = vadd.f32 0.0, %v6602
      %v6604 = vpop.f32.mrb[0].mxu0
      %v6605 = vadd.f32 0.0, %v6604
      %6606 = vmatprep.mubr.bf16.mxu0 0
      %6607 = vmatmul.mubr.bf16.gmra.mrb[0].mxu0 %v6229
      %v6608 = vpop.f32.mrb[0].mxu0
      %v6609 = vadd.f32 0.0, %v6608
      %v6610 = vpop.f32.mrb[0].mxu0
      %v6611 = vadd.f32 0.0, %v6610
      %v6612 = vpop.f32.mrb[0].mxu0
      %v6613 = vadd.f32 0.0, %v6612
      %v6614 = vpop.f32.mrb[0].mxu0
      %v6615 = vadd.f32 0.0, %v6614
      %6616 = vmatprep.mubr.bf16.mxu0 0
      %6617 = vmatmul.mubr.bf16.gmra.mrb[0].mxu0 %v6232
      %v6618 = vpop.f32.mrb[0].mxu0
      %v6619 = vadd.f32 0.0, %v6618
      %v6620 = vpop.f32.mrb[0].mxu0
      %v6621 = vadd.f32 0.0, %v6620
      %v6622 = vpop.f32.mrb[0].mxu0
      %v6623 = vadd.f32 0.0, %v6622
      %v6624 = vpop.f32.mrb[0].mxu0
      %v6625 = vadd.f32 0.0, %v6624
      %6626 = vmatprep.mubr.bf16.mxu0 0
      %6627 = vmatmul.mubr.bf16.gmra.mrb[0].mxu0 %v6235
      %v6628 = vpop.f32.mrb[0].mxu0
      %v6629 = vadd.f32 0.0, %v6628
      %v6630 = vpop.f32.mrb[0].mxu0
      %v6631 = vadd.f32 0.0, %v6630
      %v6632 = vpop.f32.mrb[0].mxu0
      %v6633 = vadd.f32 0.0, %v6632
      %v6634 = vpop.f32.mrb[0].mxu0
      %v6635 = vadd.f32 0.0, %v6634
      %6636 = vmatprep.mubr.bf16.mxu0 0
      %6637 = vmatmul.mubr.bf16.gmra.mrb[0].mxu0 %v6238
      %v6638 = vpop.f32.mrb[0].mxu0
      %v6639 = vadd.f32 0.0, %v6638
      %v6640 = vpop.f32.mrb[0].mxu0
      %v6641 = vadd.f32 0.0, %v6640
      %v6642 = vpop.f32.mrb[0].mxu0
      %v6643 = vadd.f32 0.0, %v6642
      %v6644 = vpop.f32.mrb[0].mxu0
      %v6645 = vadd.f32 0.0, %v6644
      %6646 = vmatprep.mubr.bf16.mxu0 0
      %6647 = vmatmul.mubr.bf16.gmra.mrb[0].mxu0 %v6241
      %v6648 = vpop.f32.mrb[0].mxu0
      %v6649 = vadd.f32 0.0, %v6648
      %v6650 = vpop.f32.mrb[0].mxu0
      %v6651 = vadd.f32 0.0, %v6650
      %v6652 = vpop.f32.mrb[0].mxu0
      %v6653 = vadd.f32 0.0, %v6652
      %v6654 = vpop.f32.mrb[0].mxu0
      %v6655 = vadd.f32 0.0, %v6654
      %6656 = vmatprep.mubr.bf16.mxu0 0
      %6657 = vmatmul.mubr.bf16.gmra.mrb[0].mxu0 %v6244
      %v6658 = vpop.f32.mrb[0].mxu0
      %v6659 = vadd.f32 0.0, %v6658
      %v6660 = vpop.f32.mrb[0].mxu0
      %v6661 = vadd.f32 0.0, %v6660
      %v6662 = vpop.f32.mrb[0].mxu0
      %v6663 = vadd.f32 0.0, %v6662
      %v6664 = vpop.f32.mrb[0].mxu0
      %v6665 = vadd.f32 0.0, %v6664
      %6666 = vmatprep.mubr.bf16.mxu0 0
      %6667 = vmatmul.mubr.bf16.gmra.mrb[0].mxu0 %v6536
      %v6668 = vpop.f32.mrb[0].mxu0
      %v6669 = vadd.f32 0.0, %v6668
      %v6670 = vpop.f32.mrb[0].mxu0
      %v6671 = vadd.f32 0.0, %v6670
      %v6672 = vpop.f32.mrb[0].mxu0
      %v6673 = vadd.f32 0.0, %v6672
      %v6674 = vpop.f32.mrb[0].mxu0
      %v6675 = vadd.f32 0.0, %v6674
      %6676 = vdwg.mxu0
      %v6677 = vadd.f32 %v6427, %v6579
      %v6678 = vadd.f32 %v6428, %v6581
      %v6679 = vadd.f32 %v6429, %v6583
      %v6680 = vadd.f32 %v6430, %v6585
      %v6681 = vadd.f32 %v6431, %v6589
      %v6682 = vadd.f32 %v6432, %v6591
      %v6683 = vadd.f32 %v6433, %v6593
      %v6684 = vadd.f32 %v6434, %v6595
      %v6685 = vadd.f32 %v6435, %v6599
      %v6686 = vadd.f32 %v6436, %v6601
      %v6687 = vadd.f32 %v6437, %v6603
      %v6688 = vadd.f32 %v6438, %v6605
      %v6689 = vadd.f32 %v6439, %v6609
      %v6690 = vadd.f32 %v6440, %v6611
      %v6691 = vadd.f32 %v6441, %v6613
      %v6692 = vadd.f32 %v6442, %v6615
      %v6693 = vadd.f32 %v6443, %v6619
      %v6694 = vadd.f32 %v6444, %v6621
      %v6695 = vadd.f32 %v6445, %v6623
      %v6696 = vadd.f32 %v6446, %v6625
      %v6697 = vadd.f32 %v6447, %v6629
      %v6698 = vadd.f32 %v6448, %v6631
      %v6699 = vadd.f32 %v6449, %v6633
      %v6700 = vadd.f32 %v6450, %v6635
      %v6701 = vadd.f32 %v6451, %v6639
      %v6702 = vadd.f32 %v6452, %v6641
      %v6703 = vadd.f32 %v6453, %v6643
      %v6704 = vadd.f32 %v6454, %v6645
      %v6705 = vadd.f32 %v6455, %v6649
      %v6706 = vadd.f32 %v6456, %v6651
      %v6707 = vadd.f32 %v6457, %v6653
      %v6708 = vadd.f32 %v6458, %v6655
      %v6709 = vadd.f32 %v6459, %v6659
      %v6710 = vadd.f32 %v6460, %v6661
      %v6711 = vadd.f32 %v6461, %v6663
      %v6712 = vadd.f32 %v6462, %v6665
      %v6713 = vadd.f32 %v6463, %v6669
      %v6714 = vadd.f32 %v6464, %v6671
      %v6715 = vadd.f32 %v6465, %v6673
      %v6716 = vadd.f32 %v6466, %v6675
      %6717 = vst [vmem:[#allocation3] sm:$0xff] %v6677
      %6718 = vst.msk [vmem:[#allocation3 + $0x8] sm:$0xff] %vm6387, %v6678
      %6719 = vst [vmem:[#allocation3 + $0x10] sm:$0xff] %v6679
      %6720 = vst.msk [vmem:[#allocation3 + $0x18] sm:$0xff] %vm6387, %v6680
      %6721 = vst [vmem:[#allocation3 + $0x20] sm:$0xff] %v6681
      %6722 = vst.msk [vmem:[#allocation3 + $0x28] sm:$0xff] %vm6387, %v6682
      %6723 = vst [vmem:[#allocation3 + $0x30] sm:$0xff] %v6683
      %6724 = vst.msk [vmem:[#allocation3 + $0x38] sm:$0xff] %vm6387, %v6684
      %6725 = vst [vmem:[#allocation3 + $0x40] sm:$0xff] %v6685
      %6726 = vst.msk [vmem:[#allocation3 + $0x48] sm:$0xff] %vm6387, %v6686
      %6727 = vst [vmem:[#allocation3 + $0x50] sm:$0xff] %v6687
      %6728 = vst.msk [vmem:[#allocation3 + $0x58] sm:$0xff] %vm6387, %v6688
      %6729 = vst [vmem:[#allocation3 + $0x60] sm:$0xff] %v6689
      %6730 = vst.msk [vmem:[#allocation3 + $0x68] sm:$0xff] %vm6387, %v6690
      %6731 = vst [vmem:[#allocation3 + $0x70] sm:$0xff] %v6691
      %6732 = vst.msk [vmem:[#allocation3 + $0x78] sm:$0xff] %vm6387, %v6692
      %6733 = vst [vmem:[#allocation3 + $0x80] sm:$0xff] %v6693
      %6734 = vst.msk [vmem:[#allocation3 + $0x88] sm:$0xff] %vm6387, %v6694
      %6735 = vst [vmem:[#allocation3 + $0x90] sm:$0xff] %v6695
      %6736 = vst.msk [vmem:[#allocation3 + $0x98] sm:$0xff] %vm6387, %v6696
      %6737 = vst [vmem:[#allocation3 + $0xa0] sm:$0xff] %v6697
      %6738 = vst.msk [vmem:[#allocation3 + $0xa8] sm:$0xff] %vm6387, %v6698
      %6739 = vst [vmem:[#allocation3 + $0xb0] sm:$0xff] %v6699
      %6740 = vst.msk [vmem:[#allocation3 + $0xb8] sm:$0xff] %vm6387, %v6700
      %6741 = vst [vmem:[#allocation3 + $0xc0] sm:$0xff] %v6701
      %6742 = vst.msk [vmem:[#allocation3 + $0xc8] sm:$0xff] %vm6387, %v6702
      %6743 = vst [vmem:[#allocation3 + $0xd0] sm:$0xff] %v6703
      %6744 = vst.msk [vmem:[#allocation3 + $0xd8] sm:$0xff] %vm6387, %v6704
      %6745 = vst [vmem:[#allocation3 + $0xe0] sm:$0xff] %v6705
      %6746 = vst.msk [vmem:[#allocation3 + $0xe8] sm:$0xff] %vm6387, %v6706
      %6747 = vst [vmem:[#allocation3 + $0xf0] sm:$0xff] %v6707
      %6748 = vst.msk [vmem:[#allocation3 + $0xf8] sm:$0xff] %vm6387, %v6708
      %6749 = vst [vmem:[#allocation3 + $0x100] sm:$0xff] %v6709
      %6750 = vst.msk [vmem:[#allocation3 + $0x108] sm:$0xff] %vm6387, %v6710
      %6751 = vst [vmem:[#allocation3 + $0x110] sm:$0xff] %v6711
      %6752 = vst.msk [vmem:[#allocation3 + $0x118] sm:$0xff] %vm6387, %v6712
      %6753 = vst [vmem:[#allocation3 + $0x120] sm:$0xff] %v6713
      %6754 = vst.msk [vmem:[#allocation3 + $0x128] sm:$0xff] %vm6387, %v6714
      %6755 = vst [vmem:[#allocation3 + $0x130] sm:$0xff] %v6715
      %6756 = vst.msk [vmem:[#allocation3 + $0x138] sm:$0xff] %vm6387, %v6716
      %v6757 = vld [vmem:[#allocation3] sm:$0xff]
      %v6758 = vld [vmem:[#allocation3 + $0x8] sm:$0xff]
      %v6759 = vld [vmem:[#allocation3 + $0x10] sm:$0xff]
      %v6760 = vld [vmem:[#allocation3 + $0x18] sm:$0xff]
      %v6761 = vld [vmem:[#allocation3 + $0x20] sm:$0xff]
      %v6762 = vld [vmem:[#allocation3 + $0x28] sm:$0xff]
      %v6763 = vld [vmem:[#allocation3 + $0x30] sm:$0xff]
      %v6764 = vld [vmem:[#allocation3 + $0x38] sm:$0xff]
      %v6765 = vld [vmem:[#allocation3 + $0x40] sm:$0xff]
      %v6766 = vld [vmem:[#allocation3 + $0x48] sm:$0xff]
      %v6767 = vld [vmem:[#allocation3 + $0x50] sm:$0xff]
      %v6768 = vld [vmem:[#allocation3 + $0x58] sm:$0xff]
      %v6769 = vld [vmem:[#allocation3 + $0x60] sm:$0xff]
      %v6770 = vld [vmem:[#allocation3 + $0x68] sm:$0xff]
      %v6771 = vld [vmem:[#allocation3 + $0x70] sm:$0xff]
      %v6772 = vld [vmem:[#allocation3 + $0x78] sm:$0xff]
      %v6773 = vld [vmem:[#allocation3 + $0x80] sm:$0xff]
      %v6774 = vld [vmem:[#allocation3 + $0x88] sm:$0xff]
      %v6775 = vld [vmem:[#allocation3 + $0x90] sm:$0xff]
      %v6776 = vld [vmem:[#allocation3 + $0x98] sm:$0xff]
      %v6777 = vld [vmem:[#allocation3 + $0xa0] sm:$0xff]
      %v6778 = vld [vmem:[#allocation3 + $0xa8] sm:$0xff]
      %v6779 = vld [vmem:[#allocation3 + $0xb0] sm:$0xff]
      %v6780 = vld [vmem:[#allocation3 + $0xb8] sm:$0xff]
      %v6781 = vld [vmem:[#allocation3 + $0xc0] sm:$0xff]
      %v6782 = vld [vmem:[#allocation3 + $0xc8] sm:$0xff]
      %v6783 = vld [vmem:[#allocation3 + $0xd0] sm:$0xff]
      %v6784 = vld [vmem:[#allocation3 + $0xd8] sm:$0xff]
      %v6785 = vld [vmem:[#allocation3 + $0xe0] sm:$0xff]
      %v6786 = vld [vmem:[#allocation3 + $0xe8] sm:$0xff]
      %v6787 = vld [vmem:[#allocation3 + $0xf0] sm:$0xff]
      %v6788 = vld [vmem:[#allocation3 + $0xf8] sm:$0xff]
      %v6789 = vld [vmem:[#allocation3 + $0x100] sm:$0xff]
      %v6790 = vld [vmem:[#allocation3 + $0x108] sm:$0xff]
      %v6791 = vld [vmem:[#allocation3 + $0x110] sm:$0xff]
      %v6792 = vld [vmem:[#allocation3 + $0x118] sm:$0xff]
      %v6793 = vld [vmem:[#allocation3 + $0x120] sm:$0xff]
      %v6794 = vld [vmem:[#allocation3 + $0x128] sm:$0xff]
      %v6795 = vld [vmem:[#allocation3 + $0x130] sm:$0xff]
      %v6796 = vld [vmem:[#allocation3 + $0x138] sm:$0xff]
      %v6797 = vpack.c.bf16 %v6134, %v6133
      %s6798 = scalar_lea.vmem %s4, 176
      %v6799 = vld [vmem:[%s6798] sm:$0xff]
      %v6800 = vld [vmem:[%s6798 + $0x8] sm:$0xff]
      %v6801 = vld [vmem:[%s6798 + $0x10] sm:$0xff]
      %v6802 = vld [vmem:[%s6798 + $0x18] sm:$0xff]
      %v6803 = vld [vmem:[%s6798 + $0x20] sm:$0xff]
      %v6804 = vld [vmem:[%s6798 + $0x28] sm:$0xff]
      %v6805 = vld [vmem:[%s6798 + $0x30] sm:$0xff]
      %v6806 = vld [vmem:[%s6798 + $0x38] sm:$0xff]
      %v6807 = vld [vmem:[%s6798 + $0x40] sm:$0xff]
      %v6808 = vld [vmem:[%s6798 + $0x48] sm:$0xff]
      %v6809 = vld [vmem:[%s6798 + $0x50] sm:$0x33]
      %v6821 = vunpack.c.l.b16 %v6799
      %v6822 = vunpack.c.h.b16 %v6799
      %v6823 = vunpack.c.l.b16 %v6800
      %v6824 = vunpack.c.h.b16 %v6800
      %v6825 = vunpack.c.l.b16 %v6801
      %v6826 = vunpack.c.h.b16 %v6801
      %v6827 = vunpack.c.l.b16 %v6802
      %v6828 = vunpack.c.h.b16 %v6802
      %v6829 = vunpack.c.l.b16 %v6803
      %v6830 = vunpack.c.h.b16 %v6803
      %v6831 = vunpack.c.l.b16 %v6804
      %v6832 = vunpack.c.h.b16 %v6804
      %v6833 = vunpack.c.l.b16 %v6805
      %v6834 = vunpack.c.h.b16 %v6805
      %v6835 = vunpack.c.l.b16 %v6806
      %v6836 = vunpack.c.h.b16 %v6806
      %v6837 = vunpack.c.l.b16 %v6807
      %v6838 = vunpack.c.h.b16 %v6807
      %v6839 = vunpack.c.l.b16 %v6808
      %v6840 = vunpack.c.h.b16 %v6808
      %v6841 = vunpack.c.l.b16 %v6809
      %v6842 = vunpack.c.h.b16 %v6809
      %v6843 = vpack.c.b16 %v6823, %v6821
      %v6844 = vpack.c.b16 %v6824, %v6822
      %v6845 = vpack.c.b16 %v6827, %v6825
      %v6846 = vpack.c.b16 %v6828, %v6826
      %v6847 = vpack.c.b16 %v6831, %v6829
      %v6848 = vpack.c.b16 %v6832, %v6830
      %v6849 = vpack.c.b16 %v6835, %v6833
      %v6850 = vpack.c.b16 %v6836, %v6834
      %v6851 = vpack.c.b16 %v6839, %v6837
      %v6852 = vpack.c.b16 %v6840, %v6838
      %v6853 = vpack.c.b16 %v6841, %v6841
      %v6854 = vpack.c.b16 %v6842, %v6842
      %v6866 = vsel %vm6215, %v6797, 0
      %v6869 = vsel %vm6246, %v6853, 0
      %v6872 = vsel %vm6246, %v6854, 0
      %6874 = vmatprep.subr.bf16.mxu0 %v6844
      %6875 = vmatpush1.bf16.msra.mxu0 %v6843
      %6876 = vmatprep.subr.bf16.mxu0 %v6846
      %6877 = vmatpush1.bf16.msra.mxu0 %v6845
      %6878 = vmatprep.subr.bf16.mxu0 %v6848
      %6879 = vmatpush1.bf16.msra.mxu0 %v6847
      %6880 = vmatprep.subr.bf16.mxu0 %v6850
      %6881 = vmatpush1.bf16.msra.mxu0 %v6849
      %6882 = vmatprep.subr.bf16.mxu0 %v6852
      %6883 = vmatpush1.bf16.msra.mxu0 %v6851
      %6884 = vmatprep.subr.bf16.mxu0 %v6872
      %6885 = vmatpush1.bf16.msra.mxu0 %v6869
      %6886 = vmatprep.subr.bf16.mxu0 0
      %6887 = vmatpush1.bf16.msra.mxu0 0
      %6888 = vmatprep.subr.bf16.mxu0 0
      %6889 = vmatpush1.bf16.msra.mxu0 0
      %6890 = vmatprep.subr.bf16.mxu0 0
      %6891 = vmatpush1.bf16.msra.mxu0 0
      %6892 = vmatprep.subr.bf16.mxu0 0
      %6893 = vmatpush1.bf16.msra.mxu0 0
      %6894 = vmatprep.subr.bf16.mxu0 0
      %6895 = vmatpush1.bf16.msra.mxu0 0
      %6896 = vmatprep.subr.bf16.mxu0 0
      %6897 = vmatpush1.bf16.msra.mxu0 0
      %6898 = vmatprep.subr.bf16.mxu0 0
      %6899 = vmatpush1.bf16.msra.mxu0 0
      %6900 = vmatprep.subr.bf16.mxu0 0
      %6901 = vmatpush1.bf16.msra.mxu0 0
      %6902 = vmatprep.subr.bf16.mxu0 0
      %6903 = vmatpush1.bf16.msra.mxu0 0
      %6904 = vmatprep.subr.bf16.mxu0 0
      %6905 = vmatpush1.bf16.msra.mxu0 0
      %6906 = vmatprep.mubr.bf16.mxu0 0
      %6907 = vmatmul.mubr.bf16.gmra.mrb[0].mxu0 %v6223
      %v6908 = vpop.f32.mrb[0].mxu0
      %v6909 = vadd.f32 0.0, %v6908
      %v6910 = vpop.f32.mrb[0].mxu0
      %v6911 = vadd.f32 0.0, %v6910
      %v6912 = vpop.f32.mrb[0].mxu0
      %v6913 = vadd.f32 0.0, %v6912
      %v6914 = vpop.f32.mrb[0].mxu0
      %v6915 = vadd.f32 0.0, %v6914
      %6916 = vmatprep.mubr.bf16.mxu0 0
      %6917 = vmatmul.mubr.bf16.gmra.mrb[0].mxu0 %v6226
      %v6918 = vpop.f32.mrb[0].mxu0
      %v6919 = vadd.f32 0.0, %v6918
      %v6920 = vpop.f32.mrb[0].mxu0
      %v6921 = vadd.f32 0.0, %v6920
      %v6922 = vpop.f32.mrb[0].mxu0
      %v6923 = vadd.f32 0.0, %v6922
      %v6924 = vpop.f32.mrb[0].mxu0
      %v6925 = vadd.f32 0.0, %v6924
      %6926 = vmatprep.mubr.bf16.mxu0 0
      %6927 = vmatmul.mubr.bf16.gmra.mrb[0].mxu0 %v6229
      %v6928 = vpop.f32.mrb[0].mxu0
      %v6929 = vadd.f32 0.0, %v6928
      %v6930 = vpop.f32.mrb[0].mxu0
      %v6931 = vadd.f32 0.0, %v6930
      %v6932 = vpop.f32.mrb[0].mxu0
      %v6933 = vadd.f32 0.0, %v6932
      %v6934 = vpop.f32.mrb[0].mxu0
      %v6935 = vadd.f32 0.0, %v6934
      %6936 = vmatprep.mubr.bf16.mxu0 0
      %6937 = vmatmul.mubr.bf16.gmra.mrb[0].mxu0 %v6232
      %v6938 = vpop.f32.mrb[0].mxu0
      %v6939 = vadd.f32 0.0, %v6938
      %v6940 = vpop.f32.mrb[0].mxu0
      %v6941 = vadd.f32 0.0, %v6940
      %v6942 = vpop.f32.mrb[0].mxu0
      %v6943 = vadd.f32 0.0, %v6942
      %v6944 = vpop.f32.mrb[0].mxu0
      %v6945 = vadd.f32 0.0, %v6944
      %6946 = vmatprep.mubr.bf16.mxu0 0
      %6947 = vmatmul.mubr.bf16.gmra.mrb[0].mxu0 %v6235
      %v6948 = vpop.f32.mrb[0].mxu0
      %v6949 = vadd.f32 0.0, %v6948
      %v6950 = vpop.f32.mrb[0].mxu0
      %v6951 = vadd.f32 0.0, %v6950
      %v6952 = vpop.f32.mrb[0].mxu0
      %v6953 = vadd.f32 0.0, %v6952
      %v6954 = vpop.f32.mrb[0].mxu0
      %v6955 = vadd.f32 0.0, %v6954
      %6956 = vmatprep.mubr.bf16.mxu0 0
      %6957 = vmatmul.mubr.bf16.gmra.mrb[0].mxu0 %v6238
      %v6958 = vpop.f32.mrb[0].mxu0
      %v6959 = vadd.f32 0.0, %v6958
      %v6960 = vpop.f32.mrb[0].mxu0
      %v6961 = vadd.f32 0.0, %v6960
      %v6962 = vpop.f32.mrb[0].mxu0
      %v6963 = vadd.f32 0.0, %v6962
      %v6964 = vpop.f32.mrb[0].mxu0
      %v6965 = vadd.f32 0.0, %v6964
      %6966 = vmatprep.mubr.bf16.mxu0 0
      %6967 = vmatmul.mubr.bf16.gmra.mrb[0].mxu0 %v6241
      %v6968 = vpop.f32.mrb[0].mxu0
      %v6969 = vadd.f32 0.0, %v6968
      %v6970 = vpop.f32.mrb[0].mxu0
      %v6971 = vadd.f32 0.0, %v6970
      %v6972 = vpop.f32.mrb[0].mxu0
      %v6973 = vadd.f32 0.0, %v6972
      %v6974 = vpop.f32.mrb[0].mxu0
      %v6975 = vadd.f32 0.0, %v6974
      %6976 = vmatprep.mubr.bf16.mxu0 0
      %6977 = vmatmul.mubr.bf16.gmra.mrb[0].mxu0 %v6244
      %v6978 = vpop.f32.mrb[0].mxu0
      %v6979 = vadd.f32 0.0, %v6978
      %v6980 = vpop.f32.mrb[0].mxu0
      %v6981 = vadd.f32 0.0, %v6980
      %v6982 = vpop.f32.mrb[0].mxu0
      %v6983 = vadd.f32 0.0, %v6982
      %v6984 = vpop.f32.mrb[0].mxu0
      %v6985 = vadd.f32 0.0, %v6984
      %6986 = vmatprep.mubr.bf16.mxu0 0
      %6987 = vmatmul.mubr.bf16.gmra.mrb[0].mxu0 %v6536
      %v6988 = vpop.f32.mrb[0].mxu0
      %v6989 = vadd.f32 0.0, %v6988
      %v6990 = vpop.f32.mrb[0].mxu0
      %v6991 = vadd.f32 0.0, %v6990
      %v6992 = vpop.f32.mrb[0].mxu0
      %v6993 = vadd.f32 0.0, %v6992
      %v6994 = vpop.f32.mrb[0].mxu0
      %v6995 = vadd.f32 0.0, %v6994
      %6996 = vmatprep.mubr.bf16.mxu0 0
      %6997 = vmatmul.mubr.bf16.gmra.mrb[0].mxu0 %v6866
      %v6998 = vpop.f32.mrb[0].mxu0
      %v6999 = vadd.f32 0.0, %v6998
      %v7000 = vpop.f32.mrb[0].mxu0
      %v7001 = vadd.f32 0.0, %v7000
      %v7002 = vpop.f32.mrb[0].mxu0
      %v7003 = vadd.f32 0.0, %v7002
      %v7004 = vpop.f32.mrb[0].mxu0
      %v7005 = vadd.f32 0.0, %v7004
      %7006 = vdwg.mxu0
      %v7007 = vadd.f32 %v6757, %v6909
      %v7008 = vadd.f32 %v6758, %v6911
      %v7009 = vadd.f32 %v6759, %v6913
      %v7010 = vadd.f32 %v6760, %v6915
      %v7011 = vadd.f32 %v6761, %v6919
      %v7012 = vadd.f32 %v6762, %v6921
      %v7013 = vadd.f32 %v6763, %v6923
      %v7014 = vadd.f32 %v6764, %v6925
      %v7015 = vadd.f32 %v6765, %v6929
      %v7016 = vadd.f32 %v6766, %v6931
      %v7017 = vadd.f32 %v6767, %v6933
      %v7018 = vadd.f32 %v6768, %v6935
      %v7019 = vadd.f32 %v6769, %v6939
      %v7020 = vadd.f32 %v6770, %v6941
      %v7021 = vadd.f32 %v6771, %v6943
      %v7022 = vadd.f32 %v6772, %v6945
      %v7023 = vadd.f32 %v6773, %v6949
      %v7024 = vadd.f32 %v6774, %v6951
      %v7025 = vadd.f32 %v6775, %v6953
      %v7026 = vadd.f32 %v6776, %v6955
      %v7027 = vadd.f32 %v6777, %v6959
      %v7028 = vadd.f32 %v6778, %v6961
      %v7029 = vadd.f32 %v6779, %v6963
      %v7030 = vadd.f32 %v6780, %v6965
      %v7031 = vadd.f32 %v6781, %v6969
      %v7032 = vadd.f32 %v6782, %v6971
      %v7033 = vadd.f32 %v6783, %v6973
      %v7034 = vadd.f32 %v6784, %v6975
      %v7035 = vadd.f32 %v6785, %v6979
      %v7036 = vadd.f32 %v6786, %v6981
      %v7037 = vadd.f32 %v6787, %v6983
      %v7038 = vadd.f32 %v6788, %v6985
      %v7039 = vadd.f32 %v6789, %v6989
      %v7040 = vadd.f32 %v6790, %v6991
      %v7041 = vadd.f32 %v6791, %v6993
      %v7042 = vadd.f32 %v6792, %v6995
      %v7043 = vadd.f32 %v6793, %v6999
      %v7044 = vadd.f32 %v6794, %v7001
      %v7045 = vadd.f32 %v6795, %v7003
      %v7046 = vadd.f32 %v6796, %v7005
      %7047 = vst [vmem:[#allocation3] sm:$0xff] %v7007
      %7048 = vst.msk [vmem:[#allocation3 + $0x8] sm:$0xff] %vm6387, %v7008
      %7049 = vst [vmem:[#allocation3 + $0x10] sm:$0xff] %v7009
      %7050 = vst.msk [vmem:[#allocation3 + $0x18] sm:$0xff] %vm6387, %v7010
      %7051 = vst [vmem:[#allocation3 + $0x20] sm:$0xff] %v7011
      %7052 = vst.msk [vmem:[#allocation3 + $0x28] sm:$0xff] %vm6387, %v7012
      %7053 = vst [vmem:[#allocation3 + $0x30] sm:$0xff] %v7013
      %7054 = vst.msk [vmem:[#allocation3 + $0x38] sm:$0xff] %vm6387, %v7014
      %7055 = vst [vmem:[#allocation3 + $0x40] sm:$0xff] %v7015
      %7056 = vst.msk [vmem:[#allocation3 + $0x48] sm:$0xff] %vm6387, %v7016
      %7057 = vst [vmem:[#allocation3 + $0x50] sm:$0xff] %v7017
      %7058 = vst.msk [vmem:[#allocation3 + $0x58] sm:$0xff] %vm6387, %v7018
      %7059 = vst [vmem:[#allocation3 + $0x60] sm:$0xff] %v7019
      %7060 = vst.msk [vmem:[#allocation3 + $0x68] sm:$0xff] %vm6387, %v7020
      %7061 = vst [vmem:[#allocation3 + $0x70] sm:$0xff] %v7021
      %7062 = vst.msk [vmem:[#allocation3 + $0x78] sm:$0xff] %vm6387, %v7022
      %7063 = vst [vmem:[#allocation3 + $0x80] sm:$0xff] %v7023
      %7064 = vst.msk [vmem:[#allocation3 + $0x88] sm:$0xff] %vm6387, %v7024
      %7065 = vst [vmem:[#allocation3 + $0x90] sm:$0xff] %v7025
      %7066 = vst.msk [vmem:[#allocation3 + $0x98] sm:$0xff] %vm6387, %v7026
      %7067 = vst [vmem:[#allocation3 + $0xa0] sm:$0xff] %v7027
      %7068 = vst.msk [vmem:[#allocation3 + $0xa8] sm:$0xff] %vm6387, %v7028
      %7069 = vst [vmem:[#allocation3 + $0xb0] sm:$0xff] %v7029
      %7070 = vst.msk [vmem:[#allocation3 + $0xb8] sm:$0xff] %vm6387, %v7030
      %7071 = vst [vmem:[#allocation3 + $0xc0] sm:$0xff] %v7031
      %7072 = vst.msk [vmem:[#allocation3 + $0xc8] sm:$0xff] %vm6387, %v7032
      %7073 = vst [vmem:[#allocation3 + $0xd0] sm:$0xff] %v7033
      %7074 = vst.msk [vmem:[#allocation3 + $0xd8] sm:$0xff] %vm6387, %v7034
      %7075 = vst [vmem:[#allocation3 + $0xe0] sm:$0xff] %v7035
      %7076 = vst.msk [vmem:[#allocation3 + $0xe8] sm:$0xff] %vm6387, %v7036
      %7077 = vst [vmem:[#allocation3 + $0xf0] sm:$0xff] %v7037
      %7078 = vst.msk [vmem:[#allocation3 + $0xf8] sm:$0xff] %vm6387, %v7038
      %7079 = vst [vmem:[#allocation3 + $0x100] sm:$0xff] %v7039
      %7080 = vst.msk [vmem:[#allocation3 + $0x108] sm:$0xff] %vm6387, %v7040
      %7081 = vst [vmem:[#allocation3 + $0x110] sm:$0xff] %v7041
      %7082 = vst.msk [vmem:[#allocation3 + $0x118] sm:$0xff] %vm6387, %v7042
      %7083 = vst [vmem:[#allocation3 + $0x120] sm:$0xff] %v7043
      %7084 = vst.msk [vmem:[#allocation3 + $0x128] sm:$0xff] %vm6387, %v7044
      %7085 = vst [vmem:[#allocation3 + $0x130] sm:$0xff] %v7045
      %7086 = vst.msk [vmem:[#allocation3 + $0x138] sm:$0xff] %vm6387, %v7046
      %v7087 = vld [vmem:[#allocation3] sm:$0xff]
      %v7088 = vld [vmem:[#allocation3 + $0x8] sm:$0xff]
      %v7089 = vld [vmem:[#allocation3 + $0x10] sm:$0xff]
      %v7090 = vld [vmem:[#allocation3 + $0x18] sm:$0xff]
      %v7091 = vld [vmem:[#allocation3 + $0x20] sm:$0xff]
      %v7092 = vld [vmem:[#allocation3 + $0x28] sm:$0xff]
      %v7093 = vld [vmem:[#allocation3 + $0x30] sm:$0xff]
      %v7094 = vld [vmem:[#allocation3 + $0x38] sm:$0xff]
      %v7095 = vld [vmem:[#allocation3 + $0x40] sm:$0xff]
      %v7096 = vld [vmem:[#allocation3 + $0x48] sm:$0xff]
      %v7097 = vld [vmem:[#allocation3 + $0x50] sm:$0xff]
      %v7098 = vld [vmem:[#allocation3 + $0x58] sm:$0xff]
      %v7099 = vld [vmem:[#allocation3 + $0x60] sm:$0xff]
      %v7100 = vld [vmem:[#allocation3 + $0x68] sm:$0xff]
      %v7101 = vld [vmem:[#allocation3 + $0x70] sm:$0xff]
      %v7102 = vld [vmem:[#allocation3 + $0x78] sm:$0xff]
      %v7103 = vld [vmem:[#allocation3 + $0x80] sm:$0xff]
      %v7104 = vld [vmem:[#allocation3 + $0x88] sm:$0xff]
      %v7105 = vld [vmem:[#allocation3 + $0x90] sm:$0xff]
      %v7106 = vld [vmem:[#allocation3 + $0x98] sm:$0xff]
      %v7107 = vld [vmem:[#allocation3 + $0xa0] sm:$0xff]
      %v7108 = vld [vmem:[#allocation3 + $0xa8] sm:$0xff]
      %v7109 = vld [vmem:[#allocation3 + $0xb0] sm:$0xff]
      %v7110 = vld [vmem:[#allocation3 + $0xb8] sm:$0xff]
      %v7111 = vld [vmem:[#allocation3 + $0xc0] sm:$0xff]
      %v7112 = vld [vmem:[#allocation3 + $0xc8] sm:$0xff]
      %v7113 = vld [vmem:[#allocation3 + $0xd0] sm:$0xff]
      %v7114 = vld [vmem:[#allocation3 + $0xd8] sm:$0xff]
      %v7115 = vld [vmem:[#allocation3 + $0xe0] sm:$0xff]
      %v7116 = vld [vmem:[#allocation3 + $0xe8] sm:$0xff]
      %v7117 = vld [vmem:[#allocation3 + $0xf0] sm:$0xff]
      %v7118 = vld [vmem:[#allocation3 + $0xf8] sm:$0xff]
      %v7119 = vld [vmem:[#allocation3 + $0x100] sm:$0xff]
      %v7120 = vld [vmem:[#allocation3 + $0x108] sm:$0xff]
      %v7121 = vld [vmem:[#allocation3 + $0x110] sm:$0xff]
      %v7122 = vld [vmem:[#allocation3 + $0x118] sm:$0xff]
      %v7123 = vld [vmem:[#allocation3 + $0x120] sm:$0xff]
      %v7124 = vld [vmem:[#allocation3 + $0x128] sm:$0xff]
      %v7125 = vld [vmem:[#allocation3 + $0x130] sm:$0xff]
      %v7126 = vld [vmem:[#allocation3 + $0x138] sm:$0xff]
      %v7127 = vpack.c.bf16 %v6136, %v6135
      %s7128 = scalar_lea.vmem %s4, 264
      %v7129 = vld [vmem:[%s7128] sm:$0xff]
      %v7130 = vld [vmem:[%s7128 + $0x8] sm:$0xff]
      %v7131 = vld [vmem:[%s7128 + $0x10] sm:$0xff]
      %v7132 = vld [vmem:[%s7128 + $0x18] sm:$0xff]
      %v7133 = vld [vmem:[%s7128 + $0x20] sm:$0xff]
      %v7134 = vld [vmem:[%s7128 + $0x28] sm:$0xff]
      %v7135 = vld [vmem:[%s7128 + $0x30] sm:$0xff]
      %v7136 = vld [vmem:[%s7128 + $0x38] sm:$0xff]
      %v7137 = vld [vmem:[%s7128 + $0x40] sm:$0xff]
      %v7138 = vld [vmem:[%s7128 + $0x48] sm:$0xff]
      %v7139 = vld [vmem:[%s7128 + $0x50] sm:$0x33]
      %v7151 = vunpack.c.l.b16 %v7129
      %v7152 = vunpack.c.h.b16 %v7129
      %v7153 = vunpack.c.l.b16 %v7130
      %v7154 = vunpack.c.h.b16 %v7130
      %v7155 = vunpack.c.l.b16 %v7131
      %v7156 = vunpack.c.h.b16 %v7131
      %v7157 = vunpack.c.l.b16 %v7132
      %v7158 = vunpack.c.h.b16 %v7132
      %v7159 = vunpack.c.l.b16 %v7133
      %v7160 = vunpack.c.h.b16 %v7133
      %v7161 = vunpack.c.l.b16 %v7134
      %v7162 = vunpack.c.h.b16 %v7134
      %v7163 = vunpack.c.l.b16 %v7135
      %v7164 = vunpack.c.h.b16 %v7135
      %v7165 = vunpack.c.l.b16 %v7136
      %v7166 = vunpack.c.h.b16 %v7136
      %v7167 = vunpack.c.l.b16 %v7137
      %v7168 = vunpack.c.h.b16 %v7137
      %v7169 = vunpack.c.l.b16 %v7138
      %v7170 = vunpack.c.h.b16 %v7138
      %v7171 = vunpack.c.l.b16 %v7139
      %v7172 = vunpack.c.h.b16 %v7139
      %v7173 = vpack.c.b16 %v7153, %v7151
      %v7174 = vpack.c.b16 %v7154, %v7152
      %v7175 = vpack.c.b16 %v7157, %v7155
      %v7176 = vpack.c.b16 %v7158, %v7156
      %v7177 = vpack.c.b16 %v7161, %v7159
      %v7178 = vpack.c.b16 %v7162, %v7160
      %v7179 = vpack.c.b16 %v7165, %v7163
      %v7180 = vpack.c.b16 %v7166, %v7164
      %v7181 = vpack.c.b16 %v7169, %v7167
      %v7182 = vpack.c.b16 %v7170, %v7168
      %v7183 = vpack.c.b16 %v7171, %v7171
      %v7184 = vpack.c.b16 %v7172, %v7172
      %v7196 = vsel %vm6215, %v7127, 0
      %v7199 = vsel %vm6246, %v7183, 0
      %v7202 = vsel %vm6246, %v7184, 0
      %7204 = vmatprep.subr.bf16.mxu0 %v7174
      %7205 = vmatpush1.bf16.msra.mxu0 %v7173
      %7206 = vmatprep.subr.bf16.mxu0 %v7176
      %7207 = vmatpush1.bf16.msra.mxu0 %v7175
      %7208 = vmatprep.subr.bf16.mxu0 %v7178
      %7209 = vmatpush1.bf16.msra.mxu0 %v7177
      %7210 = vmatprep.subr.bf16.mxu0 %v7180
      %7211 = vmatpush1.bf16.msra.mxu0 %v7179
      %7212 = vmatprep.subr.bf16.mxu0 %v7182
      %7213 = vmatpush1.bf16.msra.mxu0 %v7181
      %7214 = vmatprep.subr.bf16.mxu0 %v7202
      %7215 = vmatpush1.bf16.msra.mxu0 %v7199
      %7216 = vmatprep.subr.bf16.mxu0 0
      %7217 = vmatpush1.bf16.msra.mxu0 0
      %7218 = vmatprep.subr.bf16.mxu0 0
      %7219 = vmatpush1.bf16.msra.mxu0 0
      %7220 = vmatprep.subr.bf16.mxu0 0
      %7221 = vmatpush1.bf16.msra.mxu0 0
      %7222 = vmatprep.subr.bf16.mxu0 0
      %7223 = vmatpush1.bf16.msra.mxu0 0
      %7224 = vmatprep.subr.bf16.mxu0 0
      %7225 = vmatpush1.bf16.msra.mxu0 0
      %7226 = vmatprep.subr.bf16.mxu0 0
      %7227 = vmatpush1.bf16.msra.mxu0 0
      %7228 = vmatprep.subr.bf16.mxu0 0
      %7229 = vmatpush1.bf16.msra.mxu0 0
      %7230 = vmatprep.subr.bf16.mxu0 0
      %7231 = vmatpush1.bf16.msra.mxu0 0
      %7232 = vmatprep.subr.bf16.mxu0 0
      %7233 = vmatpush1.bf16.msra.mxu0 0
      %7234 = vmatprep.subr.bf16.mxu0 0
      %7235 = vmatpush1.bf16.msra.mxu0 0
      %7236 = vmatprep.mubr.bf16.mxu0 0
      %7237 = vmatmul.mubr.bf16.gmra.mrb[0].mxu0 %v6226
      %v7238 = vpop.f32.mrb[0].mxu0
      %v7239 = vadd.f32 0.0, %v7238
      %v7240 = vpop.f32.mrb[0].mxu0
      %v7241 = vadd.f32 0.0, %v7240
      %v7242 = vpop.f32.mrb[0].mxu0
      %v7243 = vadd.f32 0.0, %v7242
      %v7244 = vpop.f32.mrb[0].mxu0
      %v7245 = vadd.f32 0.0, %v7244
      %7246 = vmatprep.mubr.bf16.mxu0 0
      %7247 = vmatmul.mubr.bf16.gmra.mrb[0].mxu0 %v6229
      %v7248 = vpop.f32.mrb[0].mxu0
      %v7249 = vadd.f32 0.0, %v7248
      %v7250 = vpop.f32.mrb[0].mxu0
      %v7251 = vadd.f32 0.0, %v7250
      %v7252 = vpop.f32.mrb[0].mxu0
      %v7253 = vadd.f32 0.0, %v7252
      %v7254 = vpop.f32.mrb[0].mxu0
      %v7255 = vadd.f32 0.0, %v7254
      %7256 = vmatprep.mubr.bf16.mxu0 0
      %7257 = vmatmul.mubr.bf16.gmra.mrb[0].mxu0 %v6232
      %v7258 = vpop.f32.mrb[0].mxu0
      %v7259 = vadd.f32 0.0, %v7258
      %v7260 = vpop.f32.mrb[0].mxu0
      %v7261 = vadd.f32 0.0, %v7260
      %v7262 = vpop.f32.mrb[0].mxu0
      %v7263 = vadd.f32 0.0, %v7262
      %v7264 = vpop.f32.mrb[0].mxu0
      %v7265 = vadd.f32 0.0, %v7264
      %7266 = vmatprep.mubr.bf16.mxu0 0
      %7267 = vmatmul.mubr.bf16.gmra.mrb[0].mxu0 %v6235
      %v7268 = vpop.f32.mrb[0].mxu0
      %v7269 = vadd.f32 0.0, %v7268
      %v7270 = vpop.f32.mrb[0].mxu0
      %v7271 = vadd.f32 0.0, %v7270
      %v7272 = vpop.f32.mrb[0].mxu0
      %v7273 = vadd.f32 0.0, %v7272
      %v7274 = vpop.f32.mrb[0].mxu0
      %v7275 = vadd.f32 0.0, %v7274
      %7276 = vmatprep.mubr.bf16.mxu0 0
      %7277 = vmatmul.mubr.bf16.gmra.mrb[0].mxu0 %v6238
      %v7278 = vpop.f32.mrb[0].mxu0
      %v7279 = vadd.f32 0.0, %v7278
      %v7280 = vpop.f32.mrb[0].mxu0
      %v7281 = vadd.f32 0.0, %v7280
      %v7282 = vpop.f32.mrb[0].mxu0
      %v7283 = vadd.f32 0.0, %v7282
      %v7284 = vpop.f32.mrb[0].mxu0
      %v7285 = vadd.f32 0.0, %v7284
      %7286 = vmatprep.mubr.bf16.mxu0 0
      %7287 = vmatmul.mubr.bf16.gmra.mrb[0].mxu0 %v6241
      %v7288 = vpop.f32.mrb[0].mxu0
      %v7289 = vadd.f32 0.0, %v7288
      %v7290 = vpop.f32.mrb[0].mxu0
      %v7291 = vadd.f32 0.0, %v7290
      %v7292 = vpop.f32.mrb[0].mxu0
      %v7293 = vadd.f32 0.0, %v7292
      %v7294 = vpop.f32.mrb[0].mxu0
      %v7295 = vadd.f32 0.0, %v7294
      %7296 = vmatprep.mubr.bf16.mxu0 0
      %7297 = vmatmul.mubr.bf16.gmra.mrb[0].mxu0 %v6244
      %v7298 = vpop.f32.mrb[0].mxu0
      %v7299 = vadd.f32 0.0, %v7298
      %v7300 = vpop.f32.mrb[0].mxu0
      %v7301 = vadd.f32 0.0, %v7300
      %v7302 = vpop.f32.mrb[0].mxu0
      %v7303 = vadd.f32 0.0, %v7302
      %v7304 = vpop.f32.mrb[0].mxu0
      %v7305 = vadd.f32 0.0, %v7304
      %7306 = vmatprep.mubr.bf16.mxu0 0
      %7307 = vmatmul.mubr.bf16.gmra.mrb[0].mxu0 %v6536
      %v7308 = vpop.f32.mrb[0].mxu0
      %v7309 = vadd.f32 0.0, %v7308
      %v7310 = vpop.f32.mrb[0].mxu0
      %v7311 = vadd.f32 0.0, %v7310
      %v7312 = vpop.f32.mrb[0].mxu0
      %v7313 = vadd.f32 0.0, %v7312
      %v7314 = vpop.f32.mrb[0].mxu0
      %v7315 = vadd.f32 0.0, %v7314
      %7316 = vmatprep.mubr.bf16.mxu0 0
      %7317 = vmatmul.mubr.bf16.gmra.mrb[0].mxu0 %v6866
      %v7318 = vpop.f32.mrb[0].mxu0
      %v7319 = vadd.f32 0.0, %v7318
      %v7320 = vpop.f32.mrb[0].mxu0
      %v7321 = vadd.f32 0.0, %v7320
      %v7322 = vpop.f32.mrb[0].mxu0
      %v7323 = vadd.f32 0.0, %v7322
      %v7324 = vpop.f32.mrb[0].mxu0
      %v7325 = vadd.f32 0.0, %v7324
      %7326 = vmatprep.mubr.bf16.mxu0 0
      %7327 = vmatmul.mubr.bf16.gmra.mrb[0].mxu0 %v7196
      %v7328 = vpop.f32.mrb[0].mxu0
      %v7329 = vadd.f32 0.0, %v7328
      %v7330 = vpop.f32.mrb[0].mxu0
      %v7331 = vadd.f32 0.0, %v7330
      %v7332 = vpop.f32.mrb[0].mxu0
      %v7333 = vadd.f32 0.0, %v7332
      %v7334 = vpop.f32.mrb[0].mxu0
      %v7335 = vadd.f32 0.0, %v7334
      %7336 = vdwg.mxu0
      %v7337 = vadd.f32 %v7087, %v7239
      %v7338 = vadd.f32 %v7088, %v7241
      %v7339 = vadd.f32 %v7089, %v7243
      %v7340 = vadd.f32 %v7090, %v7245
      %v7341 = vadd.f32 %v7091, %v7249
      %v7342 = vadd.f32 %v7092, %v7251
      %v7343 = vadd.f32 %v7093, %v7253
      %v7344 = vadd.f32 %v7094, %v7255
      %v7345 = vadd.f32 %v7095, %v7259
      %v7346 = vadd.f32 %v7096, %v7261
      %v7347 = vadd.f32 %v7097, %v7263
      %v7348 = vadd.f32 %v7098, %v7265
      %v7349 = vadd.f32 %v7099, %v7269
      %v7350 = vadd.f32 %v7100, %v7271
      %v7351 = vadd.f32 %v7101, %v7273
      %v7352 = vadd.f32 %v7102, %v7275
      %v7353 = vadd.f32 %v7103, %v7279
      %v7354 = vadd.f32 %v7104, %v7281
      %v7355 = vadd.f32 %v7105, %v7283
      %v7356 = vadd.f32 %v7106, %v7285
      %v7357 = vadd.f32 %v7107, %v7289
      %v7358 = vadd.f32 %v7108, %v7291
      %v7359 = vadd.f32 %v7109, %v7293
      %v7360 = vadd.f32 %v7110, %v7295
      %v7361 = vadd.f32 %v7111, %v7299
      %v7362 = vadd.f32 %v7112, %v7301
      %v7363 = vadd.f32 %v7113, %v7303
      %v7364 = vadd.f32 %v7114, %v7305
      %v7365 = vadd.f32 %v7115, %v7309
      %v7366 = vadd.f32 %v7116, %v7311
      %v7367 = vadd.f32 %v7117, %v7313
      %v7368 = vadd.f32 %v7118, %v7315
      %v7369 = vadd.f32 %v7119, %v7319
      %v7370 = vadd.f32 %v7120, %v7321
      %v7371 = vadd.f32 %v7121, %v7323
      %v7372 = vadd.f32 %v7122, %v7325
      %v7373 = vadd.f32 %v7123, %v7329
      %v7374 = vadd.f32 %v7124, %v7331
      %v7375 = vadd.f32 %v7125, %v7333
      %v7376 = vadd.f32 %v7126, %v7335
      %7377 = vst [vmem:[#allocation3] sm:$0xff] %v7337
      %7378 = vst.msk [vmem:[#allocation3 + $0x8] sm:$0xff] %vm6387, %v7338
      %7379 = vst [vmem:[#allocation3 + $0x10] sm:$0xff] %v7339
      %7380 = vst.msk [vmem:[#allocation3 + $0x18] sm:$0xff] %vm6387, %v7340
      %7381 = vst [vmem:[#allocation3 + $0x20] sm:$0xff] %v7341
      %7382 = vst.msk [vmem:[#allocation3 + $0x28] sm:$0xff] %vm6387, %v7342
      %7383 = vst [vmem:[#allocation3 + $0x30] sm:$0xff] %v7343
      %7384 = vst.msk [vmem:[#allocation3 + $0x38] sm:$0xff] %vm6387, %v7344
      %7385 = vst [vmem:[#allocation3 + $0x40] sm:$0xff] %v7345
      %7386 = vst.msk [vmem:[#allocation3 + $0x48] sm:$0xff] %vm6387, %v7346
      %7387 = vst [vmem:[#allocation3 + $0x50] sm:$0xff] %v7347
      %7388 = vst.msk [vmem:[#allocation3 + $0x58] sm:$0xff] %vm6387, %v7348
      %7389 = vst [vmem:[#allocation3 + $0x60] sm:$0xff] %v7349
      %7390 = vst.msk [vmem:[#allocation3 + $0x68] sm:$0xff] %vm6387, %v7350
      %7391 = vst [vmem:[#allocation3 + $0x70] sm:$0xff] %v7351
      %7392 = vst.msk [vmem:[#allocation3 + $0x78] sm:$0xff] %vm6387, %v7352
      %7393 = vst [vmem:[#allocation3 + $0x80] sm:$0xff] %v7353
      %7394 = vst.msk [vmem:[#allocation3 + $0x88] sm:$0xff] %vm6387, %v7354
      %7395 = vst [vmem:[#allocation3 + $0x90] sm:$0xff] %v7355
      %7396 = vst.msk [vmem:[#allocation3 + $0x98] sm:$0xff] %vm6387, %v7356
      %7397 = vst [vmem:[#allocation3 + $0xa0] sm:$0xff] %v7357
      %7398 = vst.msk [vmem:[#allocation3 + $0xa8] sm:$0xff] %vm6387, %v7358
      %7399 = vst [vmem:[#allocation3 + $0xb0] sm:$0xff] %v7359
      %7400 = vst.msk [vmem:[#allocation3 + $0xb8] sm:$0xff] %vm6387, %v7360
      %7401 = vst [vmem:[#allocation3 + $0xc0] sm:$0xff] %v7361
      %7402 = vst.msk [vmem:[#allocation3 + $0xc8] sm:$0xff] %vm6387, %v7362
      %7403 = vst [vmem:[#allocation3 + $0xd0] sm:$0xff] %v7363
      %7404 = vst.msk [vmem:[#allocation3 + $0xd8] sm:$0xff] %vm6387, %v7364
      %7405 = vst [vmem:[#allocation3 + $0xe0] sm:$0xff] %v7365
      %7406 = vst.msk [vmem:[#allocation3 + $0xe8] sm:$0xff] %vm6387, %v7366
      %7407 = vst [vmem:[#allocation3 + $0xf0] sm:$0xff] %v7367
      %7408 = vst.msk [vmem:[#allocation3 + $0xf8] sm:$0xff] %vm6387, %v7368
      %7409 = vst [vmem:[#allocation3 + $0x100] sm:$0xff] %v7369
      %7410 = vst.msk [vmem:[#allocation3 + $0x108] sm:$0xff] %vm6387, %v7370
      %7411 = vst [vmem:[#allocation3 + $0x110] sm:$0xff] %v7371
      %7412 = vst.msk [vmem:[#allocation3 + $0x118] sm:$0xff] %vm6387, %v7372
      %7413 = vst [vmem:[#allocation3 + $0x120] sm:$0xff] %v7373
      %7414 = vst.msk [vmem:[#allocation3 + $0x128] sm:$0xff] %vm6387, %v7374
      %7415 = vst [vmem:[#allocation3 + $0x130] sm:$0xff] %v7375
      %7416 = vst.msk [vmem:[#allocation3 + $0x138] sm:$0xff] %vm6387, %v7376
      %v7417 = vld [vmem:[#allocation3] sm:$0xff]
      %v7418 = vld [vmem:[#allocation3 + $0x8] sm:$0xff]
      %v7419 = vld [vmem:[#allocation3 + $0x10] sm:$0xff]
      %v7420 = vld [vmem:[#allocation3 + $0x18] sm:$0xff]
      %v7421 = vld [vmem:[#allocation3 + $0x20] sm:$0xff]
      %v7422 = vld [vmem:[#allocation3 + $0x28] sm:$0xff]
      %v7423 = vld [vmem:[#allocation3 + $0x30] sm:$0xff]
      %v7424 = vld [vmem:[#allocation3 + $0x38] sm:$0xff]
      %v7425 = vld [vmem:[#allocation3 + $0x40] sm:$0xff]
      %v7426 = vld [vmem:[#allocation3 + $0x48] sm:$0xff]
      %v7427 = vld [vmem:[#allocation3 + $0x50] sm:$0xff]
      %v7428 = vld [vmem:[#allocation3 + $0x58] sm:$0xff]
      %v7429 = vld [vmem:[#allocation3 + $0x60] sm:$0xff]
      %v7430 = vld [vmem:[#allocation3 + $0x68] sm:$0xff]
      %v7431 = vld [vmem:[#allocation3 + $0x70] sm:$0xff]
      %v7432 = vld [vmem:[#allocation3 + $0x78] sm:$0xff]
      %v7433 = vld [vmem:[#allocation3 + $0x80] sm:$0xff]
      %v7434 = vld [vmem:[#allocation3 + $0x88] sm:$0xff]
      %v7435 = vld [vmem:[#allocation3 + $0x90] sm:$0xff]
      %v7436 = vld [vmem:[#allocation3 + $0x98] sm:$0xff]
      %v7437 = vld [vmem:[#allocation3 + $0xa0] sm:$0xff]
      %v7438 = vld [vmem:[#allocation3 + $0xa8] sm:$0xff]
      %v7439 = vld [vmem:[#allocation3 + $0xb0] sm:$0xff]
      %v7440 = vld [vmem:[#allocation3 + $0xb8] sm:$0xff]
      %v7441 = vld [vmem:[#allocation3 + $0xc0] sm:$0xff]
      %v7442 = vld [vmem:[#allocation3 + $0xc8] sm:$0xff]
      %v7443 = vld [vmem:[#allocation3 + $0xd0] sm:$0xff]
      %v7444 = vld [vmem:[#allocation3 + $0xd8] sm:$0xff]
      %v7445 = vld [vmem:[#allocation3 + $0xe0] sm:$0xff]
      %v7446 = vld [vmem:[#allocation3 + $0xe8] sm:$0xff]
      %v7447 = vld [vmem:[#allocation3 + $0xf0] sm:$0xff]
      %v7448 = vld [vmem:[#allocation3 + $0xf8] sm:$0xff]
      %v7449 = vld [vmem:[#allocation3 + $0x100] sm:$0xff]
      %v7450 = vld [vmem:[#allocation3 + $0x108] sm:$0xff]
      %v7451 = vld [vmem:[#allocation3 + $0x110] sm:$0xff]
      %v7452 = vld [vmem:[#allocation3 + $0x118] sm:$0xff]
      %v7453 = vld [vmem:[#allocation3 + $0x120] sm:$0xff]
      %v7454 = vld [vmem:[#allocation3 + $0x128] sm:$0xff]
      %v7455 = vld [vmem:[#allocation3 + $0x130] sm:$0xff]
      %v7456 = vld [vmem:[#allocation3 + $0x138] sm:$0xff]
      %v7457 = vpack.c.bf16 %v6138, %v6137
      %s7458 = scalar_lea.vmem %s4, 352
      %v7459 = vld [vmem:[%s7458] sm:$0xff]
      %v7460 = vld [vmem:[%s7458 + $0x8] sm:$0xff]
      %v7461 = vld [vmem:[%s7458 + $0x10] sm:$0xff]
      %v7462 = vld [vmem:[%s7458 + $0x18] sm:$0xff]
      %v7463 = vld [vmem:[%s7458 + $0x20] sm:$0xff]
      %v7464 = vld [vmem:[%s7458 + $0x28] sm:$0xff]
      %v7465 = vld [vmem:[%s7458 + $0x30] sm:$0xff]
      %v7466 = vld [vmem:[%s7458 + $0x38] sm:$0xff]
      %v7467 = vld [vmem:[%s7458 + $0x40] sm:$0xff]
      %v7468 = vld [vmem:[%s7458 + $0x48] sm:$0xff]
      %v7469 = vld [vmem:[%s7458 + $0x50] sm:$0x33]
      %v7481 = vunpack.c.l.b16 %v7459
      %v7482 = vunpack.c.h.b16 %v7459
      %v7483 = vunpack.c.l.b16 %v7460
      %v7484 = vunpack.c.h.b16 %v7460
      %v7485 = vunpack.c.l.b16 %v7461
      %v7486 = vunpack.c.h.b16 %v7461
      %v7487 = vunpack.c.l.b16 %v7462
      %v7488 = vunpack.c.h.b16 %v7462
      %v7489 = vunpack.c.l.b16 %v7463
      %v7490 = vunpack.c.h.b16 %v7463
      %v7491 = vunpack.c.l.b16 %v7464
      %v7492 = vunpack.c.h.b16 %v7464
      %v7493 = vunpack.c.l.b16 %v7465
      %v7494 = vunpack.c.h.b16 %v7465
      %v7495 = vunpack.c.l.b16 %v7466
      %v7496 = vunpack.c.h.b16 %v7466
      %v7497 = vunpack.c.l.b16 %v7467
      %v7498 = vunpack.c.h.b16 %v7467
      %v7499 = vunpack.c.l.b16 %v7468
      %v7500 = vunpack.c.h.b16 %v7468
      %v7501 = vunpack.c.l.b16 %v7469
      %v7502 = vunpack.c.h.b16 %v7469
      %v7503 = vpack.c.b16 %v7483, %v7481
      %v7504 = vpack.c.b16 %v7484, %v7482
      %v7505 = vpack.c.b16 %v7487, %v7485
      %v7506 = vpack.c.b16 %v7488, %v7486
      %v7507 = vpack.c.b16 %v7491, %v7489
      %v7508 = vpack.c.b16 %v7492, %v7490
      %v7509 = vpack.c.b16 %v7495, %v7493
      %v7510 = vpack.c.b16 %v7496, %v7494
      %v7511 = vpack.c.b16 %v7499, %v7497
      %v7512 = vpack.c.b16 %v7500, %v7498
      %v7513 = vpack.c.b16 %v7501, %v7501
      %v7514 = vpack.c.b16 %v7502, %v7502
      %v7526 = vsel %vm6215, %v7457, 0
      %v7529 = vsel %vm6246, %v7513, 0
      %v7532 = vsel %vm6246, %v7514, 0
      %7534 = vmatprep.subr.bf16.mxu0 %v7504
      %7535 = vmatpush1.bf16.msra.mxu0 %v7503
      %7536 = vmatprep.subr.bf16.mxu0 %v7506
      %7537 = vmatpush1.bf16.msra.mxu0 %v7505
      %7538 = vmatprep.subr.bf16.mxu0 %v7508
      %7539 = vmatpush1.bf16.msra.mxu0 %v7507
      %7540 = vmatprep.subr.bf16.mxu0 %v7510
      %7541 = vmatpush1.bf16.msra.mxu0 %v7509
      %7542 = vmatprep.subr.bf16.mxu0 %v7512
      %7543 = vmatpush1.bf16.msra.mxu0 %v7511
      %7544 = vmatprep.subr.bf16.mxu0 %v7532
      %7545 = vmatpush1.bf16.msra.mxu0 %v7529
      %7546 = vmatprep.subr.bf16.mxu0 0
      %7547 = vmatpush1.bf16.msra.mxu0 0
      %7548 = vmatprep.subr.bf16.mxu0 0
      %7549 = vmatpush1.bf16.msra.mxu0 0
      %7550 = vmatprep.subr.bf16.mxu0 0
      %7551 = vmatpush1.bf16.msra.mxu0 0
      %7552 = vmatprep.subr.bf16.mxu0 0
      %7553 = vmatpush1.bf16.msra.mxu0 0
      %7554 = vmatprep.subr.bf16.mxu0 0
      %7555 = vmatpush1.bf16.msra.mxu0 0
      %7556 = vmatprep.subr.bf16.mxu0 0
      %7557 = vmatpush1.bf16.msra.mxu0 0
      %7558 = vmatprep.subr.bf16.mxu0 0
      %7559 = vmatpush1.bf16.msra.mxu0 0
      %7560 = vmatprep.subr.bf16.mxu0 0
      %7561 = vmatpush1.bf16.msra.mxu0 0
      %7562 = vmatprep.subr.bf16.mxu0 0
      %7563 = vmatpush1.bf16.msra.mxu0 0
      %7564 = vmatprep.subr.bf16.mxu0 0
      %7565 = vmatpush1.bf16.msra.mxu0 0
      %7566 = vmatprep.mubr.bf16.mxu0 0
      %7567 = vmatmul.mubr.bf16.gmra.mrb[0].mxu0 %v6229
      %v7568 = vpop.f32.mrb[0].mxu0
      %v7569 = vadd.f32 0.0, %v7568
      %v7570 = vpop.f32.mrb[0].mxu0
      %v7571 = vadd.f32 0.0, %v7570
      %v7572 = vpop.f32.mrb[0].mxu0
      %v7573 = vadd.f32 0.0, %v7572
      %v7574 = vpop.f32.mrb[0].mxu0
      %v7575 = vadd.f32 0.0, %v7574
      %7576 = vmatprep.mubr.bf16.mxu0 0
      %7577 = vmatmul.mubr.bf16.gmra.mrb[0].mxu0 %v6232
      %v7578 = vpop.f32.mrb[0].mxu0
      %v7579 = vadd.f32 0.0, %v7578
      %v7580 = vpop.f32.mrb[0].mxu0
      %v7581 = vadd.f32 0.0, %v7580
      %v7582 = vpop.f32.mrb[0].mxu0
      %v7583 = vadd.f32 0.0, %v7582
      %v7584 = vpop.f32.mrb[0].mxu0
      %v7585 = vadd.f32 0.0, %v7584
      %7586 = vmatprep.mubr.bf16.mxu0 0
      %7587 = vmatmul.mubr.bf16.gmra.mrb[0].mxu0 %v6235
      %v7588 = vpop.f32.mrb[0].mxu0
      %v7589 = vadd.f32 0.0, %v7588
      %v7590 = vpop.f32.mrb[0].mxu0
      %v7591 = vadd.f32 0.0, %v7590
      %v7592 = vpop.f32.mrb[0].mxu0
      %v7593 = vadd.f32 0.0, %v7592
      %v7594 = vpop.f32.mrb[0].mxu0
      %v7595 = vadd.f32 0.0, %v7594
      %7596 = vmatprep.mubr.bf16.mxu0 0
      %7597 = vmatmul.mubr.bf16.gmra.mrb[0].mxu0 %v6238
      %v7598 = vpop.f32.mrb[0].mxu0
      %v7599 = vadd.f32 0.0, %v7598
      %v7600 = vpop.f32.mrb[0].mxu0
      %v7601 = vadd.f32 0.0, %v7600
      %v7602 = vpop.f32.mrb[0].mxu0
      %v7603 = vadd.f32 0.0, %v7602
      %v7604 = vpop.f32.mrb[0].mxu0
      %v7605 = vadd.f32 0.0, %v7604
      %7606 = vmatprep.mubr.bf16.mxu0 0
      %7607 = vmatmul.mubr.bf16.gmra.mrb[0].mxu0 %v6241
      %v7608 = vpop.f32.mrb[0].mxu0
      %v7609 = vadd.f32 0.0, %v7608
      %v7610 = vpop.f32.mrb[0].mxu0
      %v7611 = vadd.f32 0.0, %v7610
      %v7612 = vpop.f32.mrb[0].mxu0
      %v7613 = vadd.f32 0.0, %v7612
      %v7614 = vpop.f32.mrb[0].mxu0
      %v7615 = vadd.f32 0.0, %v7614
      %7616 = vmatprep.mubr.bf16.mxu0 0
      %7617 = vmatmul.mubr.bf16.gmra.mrb[0].mxu0 %v6244
      %v7618 = vpop.f32.mrb[0].mxu0
      %v7619 = vadd.f32 0.0, %v7618
      %v7620 = vpop.f32.mrb[0].mxu0
      %v7621 = vadd.f32 0.0, %v7620
      %v7622 = vpop.f32.mrb[0].mxu0
      %v7623 = vadd.f32 0.0, %v7622
      %v7624 = vpop.f32.mrb[0].mxu0
      %v7625 = vadd.f32 0.0, %v7624
      %7626 = vmatprep.mubr.bf16.mxu0 0
      %7627 = vmatmul.mubr.bf16.gmra.mrb[0].mxu0 %v6536
      %v7628 = vpop.f32.mrb[0].mxu0
      %v7629 = vadd.f32 0.0, %v7628
      %v7630 = vpop.f32.mrb[0].mxu0
      %v7631 = vadd.f32 0.0, %v7630
      %v7632 = vpop.f32.mrb[0].mxu0
      %v7633 = vadd.f32 0.0, %v7632
      %v7634 = vpop.f32.mrb[0].mxu0
      %v7635 = vadd.f32 0.0, %v7634
      %7636 = vmatprep.mubr.bf16.mxu0 0
      %7637 = vmatmul.mubr.bf16.gmra.mrb[0].mxu0 %v6866
      %v7638 = vpop.f32.mrb[0].mxu0
      %v7639 = vadd.f32 0.0, %v7638
      %v7640 = vpop.f32.mrb[0].mxu0
      %v7641 = vadd.f32 0.0, %v7640
      %v7642 = vpop.f32.mrb[0].mxu0
      %v7643 = vadd.f32 0.0, %v7642
      %v7644 = vpop.f32.mrb[0].mxu0
      %v7645 = vadd.f32 0.0, %v7644
      %7646 = vmatprep.mubr.bf16.mxu0 0
      %7647 = vmatmul.mubr.bf16.gmra.mrb[0].mxu0 %v7196
      %v7648 = vpop.f32.mrb[0].mxu0
      %v7649 = vadd.f32 0.0, %v7648
      %v7650 = vpop.f32.mrb[0].mxu0
      %v7651 = vadd.f32 0.0, %v7650
      %v7652 = vpop.f32.mrb[0].mxu0
      %v7653 = vadd.f32 0.0, %v7652
      %v7654 = vpop.f32.mrb[0].mxu0
      %v7655 = vadd.f32 0.0, %v7654
      %7656 = vmatprep.mubr.bf16.mxu0 0
      %7657 = vmatmul.mubr.bf16.gmra.mrb[0].mxu0 %v7526
      %v7658 = vpop.f32.mrb[0].mxu0
      %v7659 = vadd.f32 0.0, %v7658
      %v7660 = vpop.f32.mrb[0].mxu0
      %v7661 = vadd.f32 0.0, %v7660
      %v7662 = vpop.f32.mrb[0].mxu0
      %v7663 = vadd.f32 0.0, %v7662
      %v7664 = vpop.f32.mrb[0].mxu0
      %v7665 = vadd.f32 0.0, %v7664
      %7666 = vdwg.mxu0
      %v7667 = vadd.f32 %v7417, %v7569
      %v7668 = vadd.f32 %v7418, %v7571
      %v7669 = vadd.f32 %v7419, %v7573
      %v7670 = vadd.f32 %v7420, %v7575
      %v7671 = vadd.f32 %v7421, %v7579
      %v7672 = vadd.f32 %v7422, %v7581
      %v7673 = vadd.f32 %v7423, %v7583
      %v7674 = vadd.f32 %v7424, %v7585
      %v7675 = vadd.f32 %v7425, %v7589
      %v7676 = vadd.f32 %v7426, %v7591
      %v7677 = vadd.f32 %v7427, %v7593
      %v7678 = vadd.f32 %v7428, %v7595
      %v7679 = vadd.f32 %v7429, %v7599
      %v7680 = vadd.f32 %v7430, %v7601
      %v7681 = vadd.f32 %v7431, %v7603
      %v7682 = vadd.f32 %v7432, %v7605
      %v7683 = vadd.f32 %v7433, %v7609
      %v7684 = vadd.f32 %v7434, %v7611
      %v7685 = vadd.f32 %v7435, %v7613
      %v7686 = vadd.f32 %v7436, %v7615
      %v7687 = vadd.f32 %v7437, %v7619
      %v7688 = vadd.f32 %v7438, %v7621
      %v7689 = vadd.f32 %v7439, %v7623
      %v7690 = vadd.f32 %v7440, %v7625
      %v7691 = vadd.f32 %v7441, %v7629
      %v7692 = vadd.f32 %v7442, %v7631
      %v7693 = vadd.f32 %v7443, %v7633
      %v7694 = vadd.f32 %v7444, %v7635
      %v7695 = vadd.f32 %v7445, %v7639
      %v7696 = vadd.f32 %v7446, %v7641
      %v7697 = vadd.f32 %v7447, %v7643
      %v7698 = vadd.f32 %v7448, %v7645
      %v7699 = vadd.f32 %v7449, %v7649
      %v7700 = vadd.f32 %v7450, %v7651
      %v7701 = vadd.f32 %v7451, %v7653
      %v7702 = vadd.f32 %v7452, %v7655
      %v7703 = vadd.f32 %v7453, %v7659
      %v7704 = vadd.f32 %v7454, %v7661
      %v7705 = vadd.f32 %v7455, %v7663
      %v7706 = vadd.f32 %v7456, %v7665
      %7707 = vst [vmem:[#allocation3] sm:$0xff] %v7667
      %7708 = vst.msk [vmem:[#allocation3 + $0x8] sm:$0xff] %vm6387, %v7668
      %7709 = vst [vmem:[#allocation3 + $0x10] sm:$0xff] %v7669
      %7710 = vst.msk [vmem:[#allocation3 + $0x18] sm:$0xff] %vm6387, %v7670
      %7711 = vst [vmem:[#allocation3 + $0x20] sm:$0xff] %v7671
      %7712 = vst.msk [vmem:[#allocation3 + $0x28] sm:$0xff] %vm6387, %v7672
      %7713 = vst [vmem:[#allocation3 + $0x30] sm:$0xff] %v7673
      %7714 = vst.msk [vmem:[#allocation3 + $0x38] sm:$0xff] %vm6387, %v7674
      %7715 = vst [vmem:[#allocation3 + $0x40] sm:$0xff] %v7675
      %7716 = vst.msk [vmem:[#allocation3 + $0x48] sm:$0xff] %vm6387, %v7676
      %7717 = vst [vmem:[#allocation3 + $0x50] sm:$0xff] %v7677
      %7718 = vst.msk [vmem:[#allocation3 + $0x58] sm:$0xff] %vm6387, %v7678
      %7719 = vst [vmem:[#allocation3 + $0x60] sm:$0xff] %v7679
      %7720 = vst.msk [vmem:[#allocation3 + $0x68] sm:$0xff] %vm6387, %v7680
      %7721 = vst [vmem:[#allocation3 + $0x70] sm:$0xff] %v7681
      %7722 = vst.msk [vmem:[#allocation3 + $0x78] sm:$0xff] %vm6387, %v7682
      %7723 = vst [vmem:[#allocation3 + $0x80] sm:$0xff] %v7683
      %7724 = vst.msk [vmem:[#allocation3 + $0x88] sm:$0xff] %vm6387, %v7684
      %7725 = vst [vmem:[#allocation3 + $0x90] sm:$0xff] %v7685
      %7726 = vst.msk [vmem:[#allocation3 + $0x98] sm:$0xff] %vm6387, %v7686
      %7727 = vst [vmem:[#allocation3 + $0xa0] sm:$0xff] %v7687
      %7728 = vst.msk [vmem:[#allocation3 + $0xa8] sm:$0xff] %vm6387, %v7688
      %7729 = vst [vmem:[#allocation3 + $0xb0] sm:$0xff] %v7689
      %7730 = vst.msk [vmem:[#allocation3 + $0xb8] sm:$0xff] %vm6387, %v7690
      %7731 = vst [vmem:[#allocation3 + $0xc0] sm:$0xff] %v7691
      %7732 = vst.msk [vmem:[#allocation3 + $0xc8] sm:$0xff] %vm6387, %v7692
      %7733 = vst [vmem:[#allocation3 + $0xd0] sm:$0xff] %v7693
      %7734 = vst.msk [vmem:[#allocation3 + $0xd8] sm:$0xff] %vm6387, %v7694
      %7735 = vst [vmem:[#allocation3 + $0xe0] sm:$0xff] %v7695
      %7736 = vst.msk [vmem:[#allocation3 + $0xe8] sm:$0xff] %vm6387, %v7696
      %7737 = vst [vmem:[#allocation3 + $0xf0] sm:$0xff] %v7697
      %7738 = vst.msk [vmem:[#allocation3 + $0xf8] sm:$0xff] %vm6387, %v7698
      %7739 = vst [vmem:[#allocation3 + $0x100] sm:$0xff] %v7699
      %7740 = vst.msk [vmem:[#allocation3 + $0x108] sm:$0xff] %vm6387, %v7700
      %7741 = vst [vmem:[#allocation3 + $0x110] sm:$0xff] %v7701
      %7742 = vst.msk [vmem:[#allocation3 + $0x118] sm:$0xff] %vm6387, %v7702
      %7743 = vst [vmem:[#allocation3 + $0x120] sm:$0xff] %v7703
      %7744 = vst.msk [vmem:[#allocation3 + $0x128] sm:$0xff] %vm6387, %v7704
      %7745 = vst [vmem:[#allocation3 + $0x130] sm:$0xff] %v7705
      %7746 = vst.msk [vmem:[#allocation3 + $0x138] sm:$0xff] %vm6387, %v7706
      %v7747 = vld [vmem:[#allocation3] sm:$0xff]
      %v7748 = vld [vmem:[#allocation3 + $0x8] sm:$0xff]
      %v7749 = vld [vmem:[#allocation3 + $0x10] sm:$0xff]
      %v7750 = vld [vmem:[#allocation3 + $0x18] sm:$0xff]
      %v7751 = vld [vmem:[#allocation3 + $0x20] sm:$0xff]
      %v7752 = vld [vmem:[#allocation3 + $0x28] sm:$0xff]
      %v7753 = vld [vmem:[#allocation3 + $0x30] sm:$0xff]
      %v7754 = vld [vmem:[#allocation3 + $0x38] sm:$0xff]
      %v7755 = vld [vmem:[#allocation3 + $0x40] sm:$0xff]
      %v7756 = vld [vmem:[#allocation3 + $0x48] sm:$0xff]
      %v7757 = vld [vmem:[#allocation3 + $0x50] sm:$0xff]
      %v7758 = vld [vmem:[#allocation3 + $0x58] sm:$0xff]
      %v7759 = vld [vmem:[#allocation3 + $0x60] sm:$0xff]
      %v7760 = vld [vmem:[#allocation3 + $0x68] sm:$0xff]
      %v7761 = vld [vmem:[#allocation3 + $0x70] sm:$0xff]
      %v7762 = vld [vmem:[#allocation3 + $0x78] sm:$0xff]
      %v7763 = vld [vmem:[#allocation3 + $0x80] sm:$0xff]
      %v7764 = vld [vmem:[#allocation3 + $0x88] sm:$0xff]
      %v7765 = vld [vmem:[#allocation3 + $0x90] sm:$0xff]
      %v7766 = vld [vmem:[#allocation3 + $0x98] sm:$0xff]
      %v7767 = vld [vmem:[#allocation3 + $0xa0] sm:$0xff]
      %v7768 = vld [vmem:[#allocation3 + $0xa8] sm:$0xff]
      %v7769 = vld [vmem:[#allocation3 + $0xb0] sm:$0xff]
      %v7770 = vld [vmem:[#allocation3 + $0xb8] sm:$0xff]
      %v7771 = vld [vmem:[#allocation3 + $0xc0] sm:$0xff]
      %v7772 = vld [vmem:[#allocation3 + $0xc8] sm:$0xff]
      %v7773 = vld [vmem:[#allocation3 + $0xd0] sm:$0xff]
      %v7774 = vld [vmem:[#allocation3 + $0xd8] sm:$0xff]
      %v7775 = vld [vmem:[#allocation3 + $0xe0] sm:$0xff]
      %v7776 = vld [vmem:[#allocation3 + $0xe8] sm:$0xff]
      %v7777 = vld [vmem:[#allocation3 + $0xf0] sm:$0xff]
      %v7778 = vld [vmem:[#allocation3 + $0xf8] sm:$0xff]
      %v7779 = vld [vmem:[#allocation3 + $0x100] sm:$0xff]
      %v7780 = vld [vmem:[#allocation3 + $0x108] sm:$0xff]
      %v7781 = vld [vmem:[#allocation3 + $0x110] sm:$0xff]
      %v7782 = vld [vmem:[#allocation3 + $0x118] sm:$0xff]
      %v7783 = vld [vmem:[#allocation3 + $0x120] sm:$0xff]
      %v7784 = vld [vmem:[#allocation3 + $0x128] sm:$0xff]
      %v7785 = vld [vmem:[#allocation3 + $0x130] sm:$0xff]
      %v7786 = vld [vmem:[#allocation3 + $0x138] sm:$0xff]
      %v7787 = vpack.c.bf16 %v7749, %v7747
      %v7788 = vpack.c.bf16 %v7750, %v7748
      %v7789 = vpack.c.bf16 %v7753, %v7751
      %v7790 = vpack.c.bf16 %v7754, %v7752
      %v7791 = vpack.c.bf16 %v7757, %v7755
      %v7792 = vpack.c.bf16 %v7758, %v7756
      %v7793 = vpack.c.bf16 %v7761, %v7759
      %v7794 = vpack.c.bf16 %v7762, %v7760
      %v7795 = vpack.c.bf16 %v7765, %v7763
      %v7796 = vpack.c.bf16 %v7766, %v7764
      %v7797 = vpack.c.bf16 %v7769, %v7767
      %v7798 = vpack.c.bf16 %v7770, %v7768
      %v7799 = vpack.c.bf16 %v7773, %v7771
      %v7800 = vpack.c.bf16 %v7774, %v7772
      %v7801 = vpack.c.bf16 %v7777, %v7775
      %v7802 = vpack.c.bf16 %v7778, %v7776
      %v7803 = vpack.c.bf16 %v7781, %v7779
      %v7804 = vpack.c.bf16 %v7782, %v7780
      %v7805 = vpack.c.bf16 %v7785, %v7783
      %v7806 = vpack.c.bf16 %v7786, %v7784
      %v7807 = vld [vmem:[%s5] sm:$0xf]
      %v7808 = vld [vmem:[%s5 + $0x4] sm:$0xf]
      %v7809 = vld [vmem:[%s5 + $0x8] sm:$0xf]
      %v7810 = vld [vmem:[%s5 + $0xc] sm:$0xf]
      %v7811 = vld [vmem:[%s5 + $0x10] sm:$0xf]
      %v7812 = vld [vmem:[%s5 + $0x14] sm:$0xf]
      %v7813 = vld [vmem:[%s5 + $0x18] sm:$0xf]
      %v7814 = vld [vmem:[%s5 + $0x1c] sm:$0xf]
      %v7815 = vld [vmem:[%s5 + $0x20] sm:$0xf]
      %v7816 = vld [vmem:[%s5 + $0x24] sm:$0xf]
      %v7817 = vld [vmem:[%s5 + $0x28] sm:$0xf]
      %v7818 = vld [vmem:[%s5 + $0x2c] sm:$0xf]
      %v7819 = vld [vmem:[%s5 + $0x30] sm:$0xf]
      %v7820 = vld [vmem:[%s5 + $0x34] sm:$0xf]
      %v7821 = vld [vmem:[%s5 + $0x38] sm:$0xf]
      %v7822 = vld [vmem:[%s5 + $0x3c] sm:$0xf]
      %v7823 = vld [vmem:[%s5 + $0x40] sm:$0xf]
      %v7824 = vld [vmem:[%s5 + $0x44] sm:$0xf]
      %v7825 = vld [vmem:[%s5 + $0x48] sm:$0xf]
      %v7826 = vld [vmem:[%s5 + $0x4c] sm:$0xf]
      %v7847 = vunpack.c.l.b16 %v7807
      %v7848 = vunpack.c.l.b16 %v7808
      %v7849 = vunpack.c.l.b16 %v7809
      %v7850 = vunpack.c.l.b16 %v7810
      %v7851 = vunpack.c.l.b16 %v7811
      %v7852 = vunpack.c.l.b16 %v7812
      %v7853 = vunpack.c.l.b16 %v7813
      %v7854 = vunpack.c.l.b16 %v7814
      %v7855 = vunpack.c.l.b16 %v7815
      %v7856 = vunpack.c.l.b16 %v7816
      %v7857 = vunpack.c.l.b16 %v7817
      %v7858 = vunpack.c.l.b16 %v7818
      %v7859 = vunpack.c.l.b16 %v7819
      %v7860 = vunpack.c.l.b16 %v7820
      %v7861 = vunpack.c.l.b16 %v7821
      %v7862 = vunpack.c.l.b16 %v7822
      %v7863 = vunpack.c.l.b16 %v7823
      %v7864 = vunpack.c.l.b16 %v7824
      %v7865 = vunpack.c.l.b16 %v7825
      %v7866 = vunpack.c.l.b16 %v7826
      %v7867 = vpack.c.b16 %v7848, %v7847
      %v7868 = vpack.c.b16 %v7850, %v7849
      %v7869 = vpack.c.b16 %v7852, %v7851
      %v7870 = vpack.c.b16 %v7854, %v7853
      %v7871 = vpack.c.b16 %v7856, %v7855
      %v7872 = vpack.c.b16 %v7858, %v7857
      %v7873 = vpack.c.b16 %v7860, %v7859
      %v7874 = vpack.c.b16 %v7862, %v7861
      %v7875 = vpack.c.b16 %v7864, %v7863
      %v7876 = vpack.c.b16 %v7866, %v7865
      %v7888 = vsel %vm6387, %v7788, 0
      %v7891 = vsel %vm6387, %v7790, 0
      %v7894 = vsel %vm6387, %v7792, 0
      %v7897 = vsel %vm6387, %v7794, 0
      %v7900 = vsel %vm6387, %v7796, 0
      %v7903 = vsel %vm6387, %v7798, 0
      %v7906 = vsel %vm6387, %v7800, 0
      %v7909 = vsel %vm6387, %v7802, 0
      %v7912 = vsel %vm6387, %v7804, 0
      %v7915 = vsel %vm6387, %v7806, 0
      %7917 = vmatprep.subr.bf16.mxu0 0
      %7918 = vmatpush1.bf16.msra.mxu0 %v7867
      %7919 = vmatprep.subr.bf16.mxu0 0
      %7920 = vmatpush1.bf16.msra.mxu0 %v7868
      %7921 = vmatprep.subr.bf16.mxu0 0
      %7922 = vmatpush1.bf16.msra.mxu0 %v7869
      %7923 = vmatprep.subr.bf16.mxu0 0
      %7924 = vmatpush1.bf16.msra.mxu0 %v7870
      %7925 = vmatprep.subr.bf16.mxu0 0
      %7926 = vmatpush1.bf16.msra.mxu0 %v7871
      %7927 = vmatprep.subr.bf16.mxu0 0
      %7928 = vmatpush1.bf16.msra.mxu0 %v7872
      %7929 = vmatprep.subr.bf16.mxu0 0
      %7930 = vmatpush1.bf16.msra.mxu0 %v7873
      %7931 = vmatprep.subr.bf16.mxu0 0
      %7932 = vmatpush1.bf16.msra.mxu0 %v7874
      %7933 = vmatprep.subr.bf16.mxu0 0
      %7934 = vmatpush1.bf16.msra.mxu0 %v7875
      %7935 = vmatprep.subr.bf16.mxu0 0
      %7936 = vmatpush1.bf16.msra.mxu0 %v7876
      %7937 = vmatprep.subr.bf16.mxu0 0
      %7938 = vmatpush1.bf16.msra.mxu0 0
      %7939 = vmatprep.subr.bf16.mxu0 0
      %7940 = vmatpush1.bf16.msra.mxu0 0
      %7941 = vmatprep.subr.bf16.mxu0 0
      %7942 = vmatpush1.bf16.msra.mxu0 0
      %7943 = vmatprep.subr.bf16.mxu0 0
      %7944 = vmatpush1.bf16.msra.mxu0 0
      %7945 = vmatprep.subr.bf16.mxu0 0
      %7946 = vmatpush1.bf16.msra.mxu0 0
      %7947 = vmatprep.subr.bf16.mxu0 0
      %7948 = vmatpush1.bf16.msra.mxu0 0
      %7949 = vmatprep.mubr.bf16.mxu0 %v7888
      %7950 = vmatmul.mubr.bf16.gmra.mrb[0].mxu0 %v7787
      %v7951 = vpop.f32.mrb[0].mxu0
      %v7952 = vadd.f32 0.0, %v7951
      %v7953 = vpop.f32.mrb[0].mxu0
      %v7954 = vpop.f32.mrb[0].mxu0
      %v7955 = vadd.f32 0.0, %v7954
      %v7956 = vpop.f32.mrb[0].mxu0
      %7957 = vmatprep.mubr.bf16.mxu0 %v7891
      %7958 = vmatmul.mubr.bf16.gmra.mrb[0].mxu0 %v7789
      %v7959 = vpop.f32.mrb[0].mxu0
      %v7960 = vadd.f32 0.0, %v7959
      %v7961 = vpop.f32.mrb[0].mxu0
      %v7962 = vpop.f32.mrb[0].mxu0
      %v7963 = vadd.f32 0.0, %v7962
      %v7964 = vpop.f32.mrb[0].mxu0
      %7965 = vmatprep.mubr.bf16.mxu0 %v7894
      %7966 = vmatmul.mubr.bf16.gmra.mrb[0].mxu0 %v7791
      %v7967 = vpop.f32.mrb[0].mxu0
      %v7968 = vadd.f32 0.0, %v7967
      %v7969 = vpop.f32.mrb[0].mxu0
      %v7970 = vpop.f32.mrb[0].mxu0
      %v7971 = vadd.f32 0.0, %v7970
      %v7972 = vpop.f32.mrb[0].mxu0
      %7973 = vmatprep.mubr.bf16.mxu0 %v7897
      %7974 = vmatmul.mubr.bf16.gmra.mrb[0].mxu0 %v7793
      %v7975 = vpop.f32.mrb[0].mxu0
      %v7976 = vadd.f32 0.0, %v7975
      %v7977 = vpop.f32.mrb[0].mxu0
      %v7978 = vpop.f32.mrb[0].mxu0
      %v7979 = vadd.f32 0.0, %v7978
      %v7980 = vpop.f32.mrb[0].mxu0
      %7981 = vmatprep.mubr.bf16.mxu0 %v7900
      %7982 = vmatmul.mubr.bf16.gmra.mrb[0].mxu0 %v7795
      %v7983 = vpop.f32.mrb[0].mxu0
      %v7984 = vadd.f32 0.0, %v7983
      %v7985 = vpop.f32.mrb[0].mxu0
      %v7986 = vpop.f32.mrb[0].mxu0
      %v7987 = vadd.f32 0.0, %v7986
      %v7988 = vpop.f32.mrb[0].mxu0
      %7989 = vmatprep.mubr.bf16.mxu0 %v7903
      %7990 = vmatmul.mubr.bf16.gmra.mrb[0].mxu0 %v7797
      %v7991 = vpop.f32.mrb[0].mxu0
      %v7992 = vadd.f32 0.0, %v7991
      %v7993 = vpop.f32.mrb[0].mxu0
      %v7994 = vpop.f32.mrb[0].mxu0
      %v7995 = vadd.f32 0.0, %v7994
      %v7996 = vpop.f32.mrb[0].mxu0
      %7997 = vmatprep.mubr.bf16.mxu0 %v7906
      %7998 = vmatmul.mubr.bf16.gmra.mrb[0].mxu0 %v7799
      %v7999 = vpop.f32.mrb[0].mxu0
      %v8000 = vadd.f32 0.0, %v7999
      %v8001 = vpop.f32.mrb[0].mxu0
      %v8002 = vpop.f32.mrb[0].mxu0
      %v8003 = vadd.f32 0.0, %v8002
      %v8004 = vpop.f32.mrb[0].mxu0
      %8005 = vmatprep.mubr.bf16.mxu0 %v7909
      %8006 = vmatmul.mubr.bf16.gmra.mrb[0].mxu0 %v7801
      %v8007 = vpop.f32.mrb[0].mxu0
      %v8008 = vadd.f32 0.0, %v8007
      %v8009 = vpop.f32.mrb[0].mxu0
      %v8010 = vpop.f32.mrb[0].mxu0
      %v8011 = vadd.f32 0.0, %v8010
      %v8012 = vpop.f32.mrb[0].mxu0
      %8013 = vmatprep.mubr.bf16.mxu0 %v7912
      %8014 = vmatmul.mubr.bf16.gmra.mrb[0].mxu0 %v7803
      %v8015 = vpop.f32.mrb[0].mxu0
      %v8016 = vadd.f32 0.0, %v8015
      %v8017 = vpop.f32.mrb[0].mxu0
      %v8018 = vpop.f32.mrb[0].mxu0
      %v8019 = vadd.f32 0.0, %v8018
      %v8020 = vpop.f32.mrb[0].mxu0
      %8021 = vmatprep.mubr.bf16.mxu0 %v7915
      %8022 = vmatmul.mubr.bf16.gmra.mrb[0].mxu0 %v7805
      %v8023 = vpop.f32.mrb[0].mxu0
      %v8024 = vadd.f32 0.0, %v8023
      %v8025 = vpop.f32.mrb[0].mxu0
      %v8026 = vpop.f32.mrb[0].mxu0
      %v8027 = vadd.f32 0.0, %v8026
      %v8028 = vpop.f32.mrb[0].mxu0
      %8029 = vdwg.mxu0
      %s8030 = scalar_lea.vmem %s5, 80
      %v8031 = vld [vmem:[%s8030] sm:$0xf]
      %v8032 = vld [vmem:[%s8030 + $0x4] sm:$0xf]
      %v8033 = vld [vmem:[%s8030 + $0x8] sm:$0xf]
      %v8034 = vld [vmem:[%s8030 + $0xc] sm:$0xf]
      %v8035 = vld [vmem:[%s8030 + $0x10] sm:$0xf]
      %v8036 = vld [vmem:[%s8030 + $0x14] sm:$0xf]
      %v8037 = vld [vmem:[%s8030 + $0x18] sm:$0xf]
      %v8038 = vld [vmem:[%s8030 + $0x1c] sm:$0xf]
      %v8039 = vld [vmem:[%s8030 + $0x20] sm:$0xf]
      %v8040 = vld [vmem:[%s8030 + $0x24] sm:$0xf]
      %v8041 = vld [vmem:[%s8030 + $0x28] sm:$0xf]
      %v8042 = vld [vmem:[%s8030 + $0x2c] sm:$0xf]
      %v8043 = vld [vmem:[%s8030 + $0x30] sm:$0xf]
      %v8044 = vld [vmem:[%s8030 + $0x34] sm:$0xf]
      %v8045 = vld [vmem:[%s8030 + $0x38] sm:$0xf]
      %v8046 = vld [vmem:[%s8030 + $0x3c] sm:$0xf]
      %v8047 = vld [vmem:[%s8030 + $0x40] sm:$0xf]
      %v8048 = vld [vmem:[%s8030 + $0x44] sm:$0xf]
      %v8049 = vld [vmem:[%s8030 + $0x48] sm:$0xf]
      %v8050 = vld [vmem:[%s8030 + $0x4c] sm:$0xf]
      %v8071 = vunpack.c.l.b16 %v8031
      %v8072 = vunpack.c.l.b16 %v8032
      %v8073 = vunpack.c.l.b16 %v8033
      %v8074 = vunpack.c.l.b16 %v8034
      %v8075 = vunpack.c.l.b16 %v8035
      %v8076 = vunpack.c.l.b16 %v8036
      %v8077 = vunpack.c.l.b16 %v8037
      %v8078 = vunpack.c.l.b16 %v8038
      %v8079 = vunpack.c.l.b16 %v8039
      %v8080 = vunpack.c.l.b16 %v8040
      %v8081 = vunpack.c.l.b16 %v8041
      %v8082 = vunpack.c.l.b16 %v8042
      %v8083 = vunpack.c.l.b16 %v8043
      %v8084 = vunpack.c.l.b16 %v8044
      %v8085 = vunpack.c.l.b16 %v8045
      %v8086 = vunpack.c.l.b16 %v8046
      %v8087 = vunpack.c.l.b16 %v8047
      %v8088 = vunpack.c.l.b16 %v8048
      %v8089 = vunpack.c.l.b16 %v8049
      %v8090 = vunpack.c.l.b16 %v8050
      %v8091 = vpack.c.b16 %v8072, %v8071
      %v8092 = vpack.c.b16 %v8074, %v8073
      %v8093 = vpack.c.b16 %v8076, %v8075
      %v8094 = vpack.c.b16 %v8078, %v8077
      %v8095 = vpack.c.b16 %v8080, %v8079
      %v8096 = vpack.c.b16 %v8082, %v8081
      %v8097 = vpack.c.b16 %v8084, %v8083
      %v8098 = vpack.c.b16 %v8086, %v8085
      %v8099 = vpack.c.b16 %v8088, %v8087
      %v8100 = vpack.c.b16 %v8090, %v8089
      %8111 = vmatprep.subr.bf16.mxu0 0
      %8112 = vmatpush1.bf16.msra.mxu0 %v8091
      %8113 = vmatprep.subr.bf16.mxu0 0
      %8114 = vmatpush1.bf16.msra.mxu0 %v8092
      %8115 = vmatprep.subr.bf16.mxu0 0
      %8116 = vmatpush1.bf16.msra.mxu0 %v8093
      %8117 = vmatprep.subr.bf16.mxu0 0
      %8118 = vmatpush1.bf16.msra.mxu0 %v8094
      %8119 = vmatprep.subr.bf16.mxu0 0
      %8120 = vmatpush1.bf16.msra.mxu0 %v8095
      %8121 = vmatprep.subr.bf16.mxu0 0
      %8122 = vmatpush1.bf16.msra.mxu0 %v8096
      %8123 = vmatprep.subr.bf16.mxu0 0
      %8124 = vmatpush1.bf16.msra.mxu0 %v8097
      %8125 = vmatprep.subr.bf16.mxu0 0
      %8126 = vmatpush1.bf16.msra.mxu0 %v8098
      %8127 = vmatprep.subr.bf16.mxu0 0
      %8128 = vmatpush1.bf16.msra.mxu0 %v8099
      %8129 = vmatprep.subr.bf16.mxu0 0
      %8130 = vmatpush1.bf16.msra.mxu0 %v8100
      %8131 = vmatprep.subr.bf16.mxu0 0
      %8132 = vmatpush1.bf16.msra.mxu0 0
      %8133 = vmatprep.subr.bf16.mxu0 0
      %8134 = vmatpush1.bf16.msra.mxu0 0
      %8135 = vmatprep.subr.bf16.mxu0 0
      %8136 = vmatpush1.bf16.msra.mxu0 0
      %8137 = vmatprep.subr.bf16.mxu0 0
      %8138 = vmatpush1.bf16.msra.mxu0 0
      %8139 = vmatprep.subr.bf16.mxu0 0
      %8140 = vmatpush1.bf16.msra.mxu0 0
      %8141 = vmatprep.subr.bf16.mxu0 0
      %8142 = vmatpush1.bf16.msra.mxu0 0
      %8143 = vmatprep.mubr.bf16.mxu0 %v7888
      %8144 = vmatmul.mubr.bf16.gmra.mrb[0].mxu0 %v7787
      %v8145 = vpop.f32.mrb[0].mxu0
      %v8146 = vadd.f32 0.0, %v8145
      %v8147 = vpop.f32.mrb[0].mxu0
      %v8148 = vpop.f32.mrb[0].mxu0
      %v8149 = vadd.f32 0.0, %v8148
      %v8150 = vpop.f32.mrb[0].mxu0
      %8151 = vmatprep.mubr.bf16.mxu0 %v7891
      %8152 = vmatmul.mubr.bf16.gmra.mrb[0].mxu0 %v7789
      %v8153 = vpop.f32.mrb[0].mxu0
      %v8154 = vadd.f32 0.0, %v8153
      %v8155 = vpop.f32.mrb[0].mxu0
      %v8156 = vpop.f32.mrb[0].mxu0
      %v8157 = vadd.f32 0.0, %v8156
      %v8158 = vpop.f32.mrb[0].mxu0
      %8159 = vmatprep.mubr.bf16.mxu0 %v7894
      %8160 = vmatmul.mubr.bf16.gmra.mrb[0].mxu0 %v7791
      %v8161 = vpop.f32.mrb[0].mxu0
      %v8162 = vadd.f32 0.0, %v8161
      %v8163 = vpop.f32.mrb[0].mxu0
      %v8164 = vpop.f32.mrb[0].mxu0
      %v8165 = vadd.f32 0.0, %v8164
      %v8166 = vpop.f32.mrb[0].mxu0
      %8167 = vmatprep.mubr.bf16.mxu0 %v7897
      %8168 = vmatmul.mubr.bf16.gmra.mrb[0].mxu0 %v7793
      %v8169 = vpop.f32.mrb[0].mxu0
      %v8170 = vadd.f32 0.0, %v8169
      %v8171 = vpop.f32.mrb[0].mxu0
      %v8172 = vpop.f32.mrb[0].mxu0
      %v8173 = vadd.f32 0.0, %v8172
      %v8174 = vpop.f32.mrb[0].mxu0
      %8175 = vmatprep.mubr.bf16.mxu0 %v7900
      %8176 = vmatmul.mubr.bf16.gmra.mrb[0].mxu0 %v7795
      %v8177 = vpop.f32.mrb[0].mxu0
      %v8178 = vadd.f32 0.0, %v8177
      %v8179 = vpop.f32.mrb[0].mxu0
      %v8180 = vpop.f32.mrb[0].mxu0
      %v8181 = vadd.f32 0.0, %v8180
      %v8182 = vpop.f32.mrb[0].mxu0
      %8183 = vmatprep.mubr.bf16.mxu0 %v7903
      %8184 = vmatmul.mubr.bf16.gmra.mrb[0].mxu0 %v7797
      %v8185 = vpop.f32.mrb[0].mxu0
      %v8186 = vadd.f32 0.0, %v8185
      %v8187 = vpop.f32.mrb[0].mxu0
      %v8188 = vpop.f32.mrb[0].mxu0
      %v8189 = vadd.f32 0.0, %v8188
      %v8190 = vpop.f32.mrb[0].mxu0
      %8191 = vmatprep.mubr.bf16.mxu0 %v7906
      %8192 = vmatmul.mubr.bf16.gmra.mrb[0].mxu0 %v7799
      %v8193 = vpop.f32.mrb[0].mxu0
      %v8194 = vadd.f32 0.0, %v8193
      %v8195 = vpop.f32.mrb[0].mxu0
      %v8196 = vpop.f32.mrb[0].mxu0
      %v8197 = vadd.f32 0.0, %v8196
      %v8198 = vpop.f32.mrb[0].mxu0
      %8199 = vmatprep.mubr.bf16.mxu0 %v7909
      %8200 = vmatmul.mubr.bf16.gmra.mrb[0].mxu0 %v7801
      %v8201 = vpop.f32.mrb[0].mxu0
      %v8202 = vadd.f32 0.0, %v8201
      %v8203 = vpop.f32.mrb[0].mxu0
      %v8204 = vpop.f32.mrb[0].mxu0
      %v8205 = vadd.f32 0.0, %v8204
      %v8206 = vpop.f32.mrb[0].mxu0
      %8207 = vmatprep.mubr.bf16.mxu0 %v7912
      %8208 = vmatmul.mubr.bf16.gmra.mrb[0].mxu0 %v7803
      %v8209 = vpop.f32.mrb[0].mxu0
      %v8210 = vadd.f32 0.0, %v8209
      %v8211 = vpop.f32.mrb[0].mxu0
      %v8212 = vpop.f32.mrb[0].mxu0
      %v8213 = vadd.f32 0.0, %v8212
      %v8214 = vpop.f32.mrb[0].mxu0
      %8215 = vmatprep.mubr.bf16.mxu0 %v7915
      %8216 = vmatmul.mubr.bf16.gmra.mrb[0].mxu0 %v7805
      %v8217 = vpop.f32.mrb[0].mxu0
      %v8218 = vadd.f32 0.0, %v8217
      %v8219 = vpop.f32.mrb[0].mxu0
      %v8220 = vpop.f32.mrb[0].mxu0
      %v8221 = vadd.f32 0.0, %v8220
      %v8222 = vpop.f32.mrb[0].mxu0
      %8223 = vdwg.mxu0
      %v8224 = vmax.f32 %v7952, %v8146
      %v8225 = vmax.f32 %v7955, %v8149
      %v8226 = vmax.f32 %v7960, %v8154
      %v8227 = vmax.f32 %v7963, %v8157
      %v8228 = vmax.f32 %v7968, %v8162
      %v8229 = vmax.f32 %v7971, %v8165
      %v8230 = vmax.f32 %v7976, %v8170
      %v8231 = vmax.f32 %v7979, %v8173
      %v8232 = vmax.f32 %v7984, %v8178
      %v8233 = vmax.f32 %v7987, %v8181
      %v8234 = vmax.f32 %v7992, %v8186
      %v8235 = vmax.f32 %v7995, %v8189
      %v8236 = vmax.f32 %v8000, %v8194
      %v8237 = vmax.f32 %v8003, %v8197
      %v8238 = vmax.f32 %v8008, %v8202
      %v8239 = vmax.f32 %v8011, %v8205
      %v8240 = vmax.f32 %v8016, %v8210
      %v8241 = vmax.f32 %v8019, %v8213
      %v8242 = vmax.f32 %v8024, %v8218
      %v8243 = vmax.f32 %v8027, %v8221
      %v8244 = vmax.f32 %v8224, %v8226
      %v8245 = vmax.f32 %v8225, %v8227
      %v8246 = vld [vmem:[%s6] sm:$0x1]
      %v8248 = vlaneseq
      %v8249 = vshrl.u32 %v8248, 7
      %v8250 = vsub.s32 0, %v8249
      %v8251 = vrot.slane %v8246, %v8250
      %v8253 = vadd.f32 %v8244, %v8251
      %v8254 = vadd.f32 %v8245, %v8251
      %v8255 = vmax.f32 %v8253, 0.0
      %v8256 = vmax.f32 %v8254, 0.0
      %v8257 = vpack.c.bf16 %v8256, %v8255
      %vm8258 = vcmask 654336
      %8259 = vst.msk [vmem:[#allocation4] sm:$0xff] %vm8258, %v8257
      %v8260 = vmax.f32 %v8228, %v8230
      %v8261 = vmax.f32 %v8229, %v8231
      %v8262 = vld [vmem:[%s6] sm:$0x1]
      %v8264 = vlaneseq
      %v8265 = vshrl.u32 %v8264, 7
      %v8266 = vsub.s32 0, %v8265
      %v8267 = vrot.slane %v8262, %v8266
      %v8269 = vadd.f32 %v8260, %v8267
      %v8270 = vadd.f32 %v8261, %v8267
      %v8271 = vmax.f32 %v8269, 0.0
      %v8272 = vmax.f32 %v8270, 0.0
      %v8273 = vpack.c.bf16 %v8272, %v8271
      %8275 = vrot.lane.b32.xlu0 %v8273, 80
      %v8276 = vpop.permute.xlu0 %8275
      %vm8278 = vcmask 1048192
      %8279 = vst.msk [vmem:[#allocation4] sm:$0xff] %vm8278, %v8276
      %8280 = vst.msk [vmem:[#allocation4 + $0x8] sm:$0xff] %vm6387, %v8276
      %v8281 = vmax.f32 %v8232, %v8234
      %v8282 = vmax.f32 %v8233, %v8235
      %v8283 = vld [vmem:[%s6] sm:$0x1]
      %v8285 = vlaneseq
      %v8286 = vshrl.u32 %v8285, 7
      %v8287 = vsub.s32 0, %v8286
      %v8288 = vrot.slane %v8283, %v8287
      %v8290 = vadd.f32 %v8281, %v8288
      %v8291 = vadd.f32 %v8282, %v8288
      %v8292 = vmax.f32 %v8290, 0.0
      %v8293 = vmax.f32 %v8291, 0.0
      %v8294 = vpack.c.bf16 %v8293, %v8292
      %8296 = vrot.lane.b32.xlu0 %v8294, 32
      %v8297 = vpop.permute.xlu0 %8296
      %vm8299 = vcmask 916736
      %8300 = vst.msk [vmem:[#allocation4 + $0x8] sm:$0xff] %vm8299, %v8297
      %v8301 = vmax.f32 %v8236, %v8238
      %v8302 = vmax.f32 %v8237, %v8239
      %v8303 = vld [vmem:[%s6] sm:$0x1]
      %v8305 = vlaneseq
      %v8306 = vshrl.u32 %v8305, 7
      %v8307 = vsub.s32 0, %v8306
      %v8308 = vrot.slane %v8303, %v8307
      %v8310 = vadd.f32 %v8301, %v8308
      %v8311 = vadd.f32 %v8302, %v8308
      %v8312 = vmax.f32 %v8310, 0.0
      %v8313 = vmax.f32 %v8311, 0.0
      %v8314 = vpack.c.bf16 %v8313, %v8312
      %8316 = vrot.lane.b32.xlu0 %v8314, 112
      %v8317 = vpop.permute.xlu0 %8316
      %vm8319 = vcmask 1048448
      %8320 = vst.msk [vmem:[#allocation4 + $0x8] sm:$0xff] %vm8319, %v8317
      %vm8321 = vcmask 523264
      %8322 = vst.msk [vmem:[#allocation4 + $0x10] sm:$0xff] %vm8321, %v8317
      %v8323 = vmax.f32 %v8240, %v8242
      %v8324 = vmax.f32 %v8241, %v8243
      %v8325 = vld [vmem:[%s6] sm:$0x1]
      %v8327 = vlaneseq
      %v8328 = vshrl.u32 %v8327, 7
      %v8329 = vsub.s32 0, %v8328
      %v8330 = vrot.slane %v8325, %v8329
      %v8332 = vadd.f32 %v8323, %v8330
      %v8333 = vadd.f32 %v8324, %v8330
      %v8334 = vmax.f32 %v8332, 0.0
      %v8335 = vmax.f32 %v8333, 0.0
      %v8336 = vpack.c.bf16 %v8335, %v8334
      %8338 = vrot.lane.b32.xlu0 %v8336, 64
      %v8339 = vpop.permute.xlu0 %8338
      %vm8341 = vcmask 1048064
      %8342 = vst.msk [vmem:[#allocation4 + $0x10] sm:$0xff] %vm8341, %v8339
      %vm8343 = vcmask 130048
      %8344 = vst.msk [vmem:[#allocation4 + $0x18] sm:$0xff] %vm8343, %v8339
      %v8345 = vld [vmem:[#allocation4] sm:$0xff]
      %v8346 = vld [vmem:[#allocation4 + $0x8] sm:$0xff]
      %v8347 = vld [vmem:[#allocation4 + $0x10] sm:$0xff]
      %v8348 = vld [vmem:[#allocation4 + $0x18] sm:$0xff]
      %v8349 = vld [vmem:[%s7] sm:$0xf]
      %v8350 = vld [vmem:[%s7 + $0x4] sm:$0xf]
      %v8351 = vld [vmem:[%s7 + $0x8] sm:$0xf]
      %v8352 = vld [vmem:[%s7 + $0xc] sm:$0xf]
      %v8353 = vld [vmem:[%s7 + $0x10] sm:$0xf]
      %v8354 = vld [vmem:[%s7 + $0x14] sm:$0xf]
      %v8355 = vld [vmem:[%s7 + $0x18] sm:$0xf]
      %v8356 = vld [vmem:[%s7 + $0x1c] sm:$0xf]
      %v8357 = vld [vmem:[%s7 + $0x20] sm:$0xf]
      %v8358 = vld [vmem:[%s7 + $0x24] sm:$0xf]
      %v8359 = vld [vmem:[%s7 + $0x28] sm:$0xf]
      %v8360 = vld [vmem:[%s7 + $0x2c] sm:$0xf]
      %v8361 = vld [vmem:[%s7 + $0x30] sm:$0xf]
      %v8362 = vld [vmem:[%s7 + $0x34] sm:$0xf]
      %v8363 = vld [vmem:[%s7 + $0x38] sm:$0xf]
      %v8364 = vld [vmem:[%s7 + $0x3c] sm:$0xf]
      %v8365 = vld [vmem:[%s7 + $0x40] sm:$0xf]
      %v8366 = vld [vmem:[%s7 + $0x44] sm:$0xf]
      %v8367 = vld [vmem:[%s7 + $0x48] sm:$0xf]
      %v8368 = vld [vmem:[%s7 + $0x4c] sm:$0xf]
      %v8369 = vld [vmem:[%s7 + $0x50] sm:$0xf]
      %v8370 = vld [vmem:[%s7 + $0x54] sm:$0xf]
      %v8371 = vld [vmem:[%s7 + $0x58] sm:$0xf]
      %v8372 = vld [vmem:[%s7 + $0x5c] sm:$0xf]
      %v8373 = vld [vmem:[%s7 + $0x60] sm:$0xf]
      %v8374 = vld [vmem:[%s7 + $0x64] sm:$0xf]
      %v8375 = vld [vmem:[%s7 + $0x68] sm:$0xf]
      %v8376 = vld [vmem:[%s7 + $0x6c] sm:$0xf]
      %v8377 = vld [vmem:[%s7 + $0x70] sm:$0xf]
      %v8378 = vld [vmem:[%s7 + $0x74] sm:$0xf]
      %v8379 = vld [vmem:[%s7 + $0x78] sm:$0xf]
      %v8380 = vld [vmem:[%s7 + $0x7c] sm:$0xf]
      %v8381 = vld [vmem:[%s7 + $0x80] sm:$0xf]
      %v8382 = vld [vmem:[%s7 + $0x84] sm:$0xf]
      %v8383 = vld [vmem:[%s7 + $0x88] sm:$0xf]
      %v8384 = vld [vmem:[%s7 + $0x8c] sm:$0xf]
      %v8385 = vld [vmem:[%s7 + $0x90] sm:$0xf]
      %v8386 = vld [vmem:[%s7 + $0x94] sm:$0xf]
      %v8387 = vld [vmem:[%s7 + $0x98] sm:$0xf]
      %v8388 = vld [vmem:[%s7 + $0x9c] sm:$0xf]
      %v8389 = vld [vmem:[%s7 + $0xa0] sm:$0xf]
      %v8390 = vld [vmem:[%s7 + $0xa4] sm:$0xf]
      %v8391 = vld [vmem:[%s7 + $0xa8] sm:$0xf]
      %v8392 = vld [vmem:[%s7 + $0xac] sm:$0xf]
      %v8393 = vld [vmem:[%s7 + $0xb0] sm:$0xf]
      %v8394 = vld [vmem:[%s7 + $0xb4] sm:$0xf]
      %v8395 = vld [vmem:[%s7 + $0xb8] sm:$0xf]
      %v8396 = vld [vmem:[%s7 + $0xbc] sm:$0xf]
      %v8397 = vld [vmem:[%s7 + $0xc0] sm:$0xf]
      %v8398 = vld [vmem:[%s7 + $0xc4] sm:$0xf]
      %v8399 = vld [vmem:[%s8] sm:$0x1]
      %v8401 = vlaneseq
      %v8402 = vshrl.u32 %v8401, 7
      %v8403 = vsub.s32 0, %v8402
      %v8404 = vrot.slane %v8399, %v8403
      %v8456 = vunpack.c.l.b16 %v8349
      %v8457 = vunpack.c.l.b16 %v8350
      %v8458 = vunpack.c.l.b16 %v8351
      %v8459 = vunpack.c.l.b16 %v8352
      %v8460 = vunpack.c.l.b16 %v8353
      %v8461 = vunpack.c.l.b16 %v8354
      %v8462 = vunpack.c.l.b16 %v8355
      %v8463 = vunpack.c.l.b16 %v8356
      %v8464 = vunpack.c.l.b16 %v8357
      %v8465 = vunpack.c.l.b16 %v8358
      %v8466 = vunpack.c.l.b16 %v8359
      %v8467 = vunpack.c.l.b16 %v8360
      %v8468 = vunpack.c.l.b16 %v8361
      %v8469 = vunpack.c.l.b16 %v8362
      %v8470 = vunpack.c.l.b16 %v8363
      %v8471 = vunpack.c.l.b16 %v8364
      %v8472 = vunpack.c.l.b16 %v8365
      %v8473 = vunpack.c.l.b16 %v8366
      %v8474 = vunpack.c.l.b16 %v8367
      %v8475 = vunpack.c.l.b16 %v8368
      %v8476 = vunpack.c.l.b16 %v8369
      %v8477 = vunpack.c.l.b16 %v8370
      %v8478 = vunpack.c.l.b16 %v8371
      %v8479 = vunpack.c.l.b16 %v8372
      %v8480 = vunpack.c.l.b16 %v8373
      %v8481 = vunpack.c.l.b16 %v8374
      %v8482 = vunpack.c.l.b16 %v8375
      %v8483 = vunpack.c.l.b16 %v8376
      %v8484 = vunpack.c.l.b16 %v8377
      %v8485 = vunpack.c.l.b16 %v8378
      %v8486 = vunpack.c.l.b16 %v8379
      %v8487 = vunpack.c.l.b16 %v8380
      %v8488 = vunpack.c.l.b16 %v8381
      %v8489 = vunpack.c.l.b16 %v8382
      %v8490 = vunpack.c.l.b16 %v8383
      %v8491 = vunpack.c.l.b16 %v8384
      %v8492 = vunpack.c.l.b16 %v8385
      %v8493 = vunpack.c.l.b16 %v8386
      %v8494 = vunpack.c.l.b16 %v8387
      %v8495 = vunpack.c.l.b16 %v8388
      %v8496 = vunpack.c.l.b16 %v8389
      %v8497 = vunpack.c.l.b16 %v8390
      %v8498 = vunpack.c.l.b16 %v8391
      %v8499 = vunpack.c.l.b16 %v8392
      %v8500 = vunpack.c.l.b16 %v8393
      %v8501 = vunpack.c.l.b16 %v8394
      %v8502 = vunpack.c.l.b16 %v8395
      %v8503 = vunpack.c.l.b16 %v8396
      %v8504 = vunpack.c.l.b16 %v8397
      %v8505 = vunpack.c.l.b16 %v8398
      %v8506 = vpack.c.b16 %v8457, %v8456
      %v8507 = vpack.c.b16 %v8459, %v8458
      %v8508 = vpack.c.b16 %v8461, %v8460
      %v8509 = vpack.c.b16 %v8463, %v8462
      %v8510 = vpack.c.b16 %v8465, %v8464
      %v8511 = vpack.c.b16 %v8467, %v8466
      %v8512 = vpack.c.b16 %v8469, %v8468
      %v8513 = vpack.c.b16 %v8471, %v8470
      %v8514 = vpack.c.b16 %v8473, %v8472
      %v8515 = vpack.c.b16 %v8475, %v8474
      %v8516 = vpack.c.b16 %v8477, %v8476
      %v8517 = vpack.c.b16 %v8479, %v8478
      %v8518 = vpack.c.b16 %v8481, %v8480
      %v8519 = vpack.c.b16 %v8483, %v8482
      %v8520 = vpack.c.b16 %v8485, %v8484
      %v8521 = vpack.c.b16 %v8487, %v8486
      %v8522 = vpack.c.b16 %v8489, %v8488
      %v8523 = vpack.c.b16 %v8491, %v8490
      %v8524 = vpack.c.b16 %v8493, %v8492
      %v8525 = vpack.c.b16 %v8495, %v8494
      %v8526 = vpack.c.b16 %v8497, %v8496
      %v8527 = vpack.c.b16 %v8499, %v8498
      %v8528 = vpack.c.b16 %v8501, %v8500
      %v8529 = vpack.c.b16 %v8503, %v8502
      %v8530 = vpack.c.b16 %v8505, %v8504
      %v8557 = vsel %vm8343, %v8348, 0
      %8559 = vmatprep.subr.bf16.mxu0 0
      %8560 = vmatpush1.bf16.msra.mxu0 %v8506
      %8561 = vmatprep.subr.bf16.mxu0 0
      %8562 = vmatpush1.bf16.msra.mxu0 %v8507
      %8563 = vmatprep.subr.bf16.mxu0 0
      %8564 = vmatpush1.bf16.msra.mxu0 %v8508
      %8565 = vmatprep.subr.bf16.mxu0 0
      %8566 = vmatpush1.bf16.msra.mxu0 %v8509
      %8567 = vmatprep.subr.bf16.mxu0 0
      %8568 = vmatpush1.bf16.msra.mxu0 %v8510
      %8569 = vmatprep.subr.bf16.mxu0 0
      %8570 = vmatpush1.bf16.msra.mxu0 %v8511
      %8571 = vmatprep.subr.bf16.mxu0 0
      %8572 = vmatpush1.bf16.msra.mxu0 %v8512
      %8573 = vmatprep.subr.bf16.mxu0 0
      %8574 = vmatpush1.bf16.msra.mxu0 %v8513
      %8575 = vmatprep.subr.bf16.mxu0 0
      %8576 = vmatpush1.bf16.msra.mxu0 %v8514
      %8577 = vmatprep.subr.bf16.mxu0 0
      %8578 = vmatpush1.bf16.msra.mxu0 %v8515
      %8579 = vmatprep.subr.bf16.mxu0 0
      %8580 = vmatpush1.bf16.msra.mxu0 %v8516
      %8581 = vmatprep.subr.bf16.mxu0 0
      %8582 = vmatpush1.bf16.msra.mxu0 %v8517
      %8583 = vmatprep.subr.bf16.mxu0 0
      %8584 = vmatpush1.bf16.msra.mxu0 %v8518
      %8585 = vmatprep.subr.bf16.mxu0 0
      %8586 = vmatpush1.bf16.msra.mxu0 %v8519
      %8587 = vmatprep.subr.bf16.mxu0 0
      %8588 = vmatpush1.bf16.msra.mxu0 %v8520
      %8589 = vmatprep.subr.bf16.mxu0 0
      %8590 = vmatpush1.bf16.msra.mxu0 %v8521
      %8591 = vmatprep.mubr.bf16.mxu0 %v8346
      %8592 = vmatmul.mubr.bf16.gmra.mrb[0].mxu0 %v8345
      %v8593 = vpop.f32.mrb[0].mxu0
      %v8594 = vadd.f32 %v8404, %v8593
      %v8595 = vpop.f32.mrb[0].mxu0
      %v8596 = vpop.f32.mrb[0].mxu0
      %v8597 = vadd.f32 %v8404, %v8596
      %v8598 = vpop.f32.mrb[0].mxu0
      %8599 = vdwg.mxu0
      %8600 = vmatprep.subr.bf16.mxu0 0
      %8601 = vmatpush1.bf16.msra.mxu0 %v8522
      %8602 = vmatprep.subr.bf16.mxu0 0
      %8603 = vmatpush1.bf16.msra.mxu0 %v8523
      %8604 = vmatprep.subr.bf16.mxu0 0
      %8605 = vmatpush1.bf16.msra.mxu0 %v8524
      %8606 = vmatprep.subr.bf16.mxu0 0
      %8607 = vmatpush1.bf16.msra.mxu0 %v8525
      %8608 = vmatprep.subr.bf16.mxu0 0
      %8609 = vmatpush1.bf16.msra.mxu0 %v8526
      %8610 = vmatprep.subr.bf16.mxu0 0
      %8611 = vmatpush1.bf16.msra.mxu0 %v8527
      %8612 = vmatprep.subr.bf16.mxu0 0
      %8613 = vmatpush1.bf16.msra.mxu0 %v8528
      %8614 = vmatprep.subr.bf16.mxu0 0
      %8615 = vmatpush1.bf16.msra.mxu0 %v8529
      %8616 = vmatprep.subr.bf16.mxu0 0
      %8617 = vmatpush1.bf16.msra.mxu0 %v8530
      %8618 = vmatprep.subr.bf16.mxu0 0
      %8619 = vmatpush1.bf16.msra.mxu0 0
      %8620 = vmatprep.subr.bf16.mxu0 0
      %8621 = vmatpush1.bf16.msra.mxu0 0
      %8622 = vmatprep.subr.bf16.mxu0 0
      %8623 = vmatpush1.bf16.msra.mxu0 0
      %8624 = vmatprep.subr.bf16.mxu0 0
      %8625 = vmatpush1.bf16.msra.mxu0 0
      %8626 = vmatprep.subr.bf16.mxu0 0
      %8627 = vmatpush1.bf16.msra.mxu0 0
      %8628 = vmatprep.subr.bf16.mxu0 0
      %8629 = vmatpush1.bf16.msra.mxu0 0
      %8630 = vmatprep.subr.bf16.mxu0 0
      %8631 = vmatpush1.bf16.msra.mxu0 0
      %8632 = vmatprep.mubr.bf16.mxu0 %v8557
      %8633 = vmatmul.mubr.bf16.gmra.mrb[0].mxu0 %v8347
      %v8634 = vpop.f32.mrb[0].mxu0
      %v8635 = vadd.f32 %v8594, %v8634
      %v8636 = vpop.f32.mrb[0].mxu0
      %v8637 = vpop.f32.mrb[0].mxu0
      %v8638 = vadd.f32 %v8597, %v8637
      %v8639 = vpop.f32.mrb[0].mxu0
      %8640 = vdwg.mxu0
      %v8641 = vmax.f32 %v8635, 0.0
      %v8642 = vmax.f32 %v8638, 0.0
      %v8643 = vpack.c.bf16 %v8642, %v8641
      %v8644 = vld [vmem:[%s9] sm:$0xf]
      %v8645 = vld [vmem:[%s9 + $0x4] sm:$0xf]
      %v8646 = vld [vmem:[%s9 + $0x8] sm:$0xf]
      %v8647 = vld [vmem:[%s9 + $0xc] sm:$0xf]
      %v8648 = vld [vmem:[%s9 + $0x10] sm:$0xf]
      %v8649 = vld [vmem:[%s9 + $0x14] sm:$0xf]
      %v8650 = vld [vmem:[%s9 + $0x18] sm:$0xf]
      %v8651 = vld [vmem:[%s9 + $0x1c] sm:$0xf]
      %v8652 = vld [vmem:[%s9 + $0x20] sm:$0xf]
      %v8653 = vld [vmem:[%s9 + $0x24] sm:$0xf]
      %v8654 = vld [vmem:[%s9 + $0x28] sm:$0xf]
      %v8655 = vld [vmem:[%s9 + $0x2c] sm:$0xf]
      %v8656 = vld [vmem:[%s9 + $0x30] sm:$0xf]
      %v8657 = vld [vmem:[%s9 + $0x34] sm:$0xf]
      %v8658 = vld [vmem:[%s9 + $0x38] sm:$0xf]
      %v8659 = vld [vmem:[%s10] sm:$0x1]
      %v8661 = vlaneseq
      %v8662 = vshrl.u32 %v8661, 7
      %v8663 = vsub.s32 0, %v8662
      %v8664 = vrot.slane %v8659, %v8663
      %v8681 = vunpack.c.l.b16 %v8644
      %v8682 = vunpack.c.l.b16 %v8645
      %v8683 = vunpack.c.l.b16 %v8646
      %v8684 = vunpack.c.l.b16 %v8647
      %v8685 = vunpack.c.l.b16 %v8648
      %v8686 = vunpack.c.l.b16 %v8649
      %v8687 = vunpack.c.l.b16 %v8650
      %v8688 = vunpack.c.l.b16 %v8651
      %v8689 = vunpack.c.l.b16 %v8652
      %v8690 = vunpack.c.l.b16 %v8653
      %v8691 = vunpack.c.l.b16 %v8654
      %v8692 = vunpack.c.l.b16 %v8655
      %v8693 = vunpack.c.l.b16 %v8656
      %v8694 = vunpack.c.l.b16 %v8657
      %v8695 = vunpack.c.l.b16 %v8658
      %v8696 = vpack.c.b16 %v8682, %v8681
      %v8697 = vpack.c.b16 %v8684, %v8683
      %v8698 = vpack.c.b16 %v8686, %v8685
      %v8699 = vpack.c.b16 %v8688, %v8687
      %v8700 = vpack.c.b16 %v8690, %v8689
      %v8701 = vpack.c.b16 %v8692, %v8691
      %v8702 = vpack.c.b16 %v8694, %v8693
      %v8703 = vpack.c.b16 %v8695, %v8695
      %vm8711 = vcmask 982016
      %v8713 = vsel %vm8711, %v8643, 0
      %v8716 = vsel %vm5666, %v8703, 0
      %8718 = vmatprep.subr.bf16.mxu0 0
      %8719 = vmatpush1.bf16.msra.mxu0 %v8696
      %8720 = vmatprep.subr.bf16.mxu0 0
      %8721 = vmatpush1.bf16.msra.mxu0 %v8697
      %8722 = vmatprep.subr.bf16.mxu0 0
      %8723 = vmatpush1.bf16.msra.mxu0 %v8698
      %8724 = vmatprep.subr.bf16.mxu0 0
      %8725 = vmatpush1.bf16.msra.mxu0 %v8699
      %8726 = vmatprep.subr.bf16.mxu0 0
      %8727 = vmatpush1.bf16.msra.mxu0 %v8700
      %8728 = vmatprep.subr.bf16.mxu0 0
      %8729 = vmatpush1.bf16.msra.mxu0 %v8701
      %8730 = vmatprep.subr.bf16.mxu0 0
      %8731 = vmatpush1.bf16.msra.mxu0 %v8702
      %8732 = vmatprep.subr.bf16.mxu0 0
      %8733 = vmatpush1.bf16.msra.mxu0 %v8716
      %8734 = vmatprep.subr.bf16.mxu0 0
      %8735 = vmatpush1.bf16.msra.mxu0 0
      %8736 = vmatprep.subr.bf16.mxu0 0
      %8737 = vmatpush1.bf16.msra.mxu0 0
      %8738 = vmatprep.subr.bf16.mxu0 0
      %8739 = vmatpush1.bf16.msra.mxu0 0
      %8740 = vmatprep.subr.bf16.mxu0 0
      %8741 = vmatpush1.bf16.msra.mxu0 0
      %8742 = vmatprep.subr.bf16.mxu0 0
      %8743 = vmatpush1.bf16.msra.mxu0 0
      %8744 = vmatprep.subr.bf16.mxu0 0
      %8745 = vmatpush1.bf16.msra.mxu0 0
      %8746 = vmatprep.subr.bf16.mxu0 0
      %8747 = vmatpush1.bf16.msra.mxu0 0
      %8748 = vmatprep.subr.bf16.mxu0 0
      %8749 = vmatpush1.bf16.msra.mxu0 0
      %8750 = vmatprep.mubr.bf16.mxu0 0
      %8751 = vmatmul.mubr.bf16.gmra.mrb[0].mxu0 %v8713
      %v8752 = vpop.f32.mrb[0].mxu0
      %v8753 = vadd.f32 %v8664, %v8752
      %v8754 = vpop.f32.mrb[0].mxu0
      %v8755 = vpop.f32.mrb[0].mxu0
      %v8756 = vadd.f32 %v8664, %v8755
      %v8757 = vpop.f32.mrb[0].mxu0
      %8758 = vdwg.mxu0
      %v8759 = vmax.f32 %v8753, 0.0
      %v8760 = vmax.f32 %v8756, 0.0
      %v8761 = vpack.c.bf16 %v8760, %v8759
      %v8762 = vld [vmem:[%s11] sm:$0xf]
      %v8763 = vld [vmem:[%s11 + $0x4] sm:$0xf]
      %v8764 = vld [vmem:[%s11 + $0x8] sm:$0xf]
      %v8765 = vld [vmem:[%s11 + $0xc] sm:$0xf]
      %v8766 = vld [vmem:[%s11 + $0x10] sm:$0xf]
      %v8767 = vld [vmem:[%s11 + $0x14] sm:$0xf]
      %v8768 = vld [vmem:[%s11 + $0x18] sm:$0xf]
      %v8769 = vld [vmem:[%s11 + $0x1c] sm:$0xf]
      %v8770 = vld [vmem:[%s11 + $0x20] sm:$0xf]
      %v8771 = vld [vmem:[%s11 + $0x24] sm:$0xf]
      %v8772 = vld [vmem:[%s11 + $0x28] sm:$0x3]
      %v8773 = vld [vmem:[%s12] sm:$0x1]
      %v8775 = vlaneseq
      %v8776 = vshrl.u32 %v8775, 7
      %v8777 = vsub.s32 0, %v8776
      %v8778 = vrot.slane %v8773, %v8777
      %v8791 = vunpack.c.l.b16 %v8762
      %v8792 = vunpack.c.l.b16 %v8763
      %v8793 = vunpack.c.l.b16 %v8764
      %v8794 = vunpack.c.l.b16 %v8765
      %v8795 = vunpack.c.l.b16 %v8766
      %v8796 = vunpack.c.l.b16 %v8767
      %v8797 = vunpack.c.l.b16 %v8768
      %v8798 = vunpack.c.l.b16 %v8769
      %v8799 = vunpack.c.l.b16 %v8770
      %v8800 = vunpack.c.l.b16 %v8771
      %v8801 = vunpack.c.l.b16 %v8772
      %v8802 = vpack.c.b16 %v8792, %v8791
      %v8803 = vpack.c.b16 %v8794, %v8793
      %v8804 = vpack.c.b16 %v8796, %v8795
      %v8805 = vpack.c.b16 %v8798, %v8797
      %v8806 = vpack.c.b16 %v8800, %v8799
      %v8807 = vpack.c.b16 %v8801, %v8801
      %v8814 = vsel %vm6215, %v8761, 0
      %v8817 = vsel %vm6246, %v8807, 0
      %8819 = vmatprep.subr.bf16.mxu0 0
      %8820 = vmatpush1.bf16.msra.mxu0 %v8802
      %8821 = vmatprep.subr.bf16.mxu0 0
      %8822 = vmatpush1.bf16.msra.mxu0 %v8803
      %8823 = vmatprep.subr.bf16.mxu0 0
      %8824 = vmatpush1.bf16.msra.mxu0 %v8804
      %8825 = vmatprep.subr.bf16.mxu0 0
      %8826 = vmatpush1.bf16.msra.mxu0 %v8805
      %8827 = vmatprep.subr.bf16.mxu0 0
      %8828 = vmatpush1.bf16.msra.mxu0 %v8806
      %8829 = vmatprep.subr.bf16.mxu0 0
      %8830 = vmatpush1.bf16.msra.mxu0 %v8817
      %8831 = vmatprep.subr.bf16.mxu0 0
      %8832 = vmatpush1.bf16.msra.mxu0 0
      %8833 = vmatprep.subr.bf16.mxu0 0
      %8834 = vmatpush1.bf16.msra.mxu0 0
      %8835 = vmatprep.subr.bf16.mxu0 0
      %8836 = vmatpush1.bf16.msra.mxu0 0
      %8837 = vmatprep.subr.bf16.mxu0 0
      %8838 = vmatpush1.bf16.msra.mxu0 0
      %8839 = vmatprep.subr.bf16.mxu0 0
      %8840 = vmatpush1.bf16.msra.mxu0 0
      %8841 = vmatprep.subr.bf16.mxu0 0
      %8842 = vmatpush1.bf16.msra.mxu0 0
      %8843 = vmatprep.subr.bf16.mxu0 0
      %8844 = vmatpush1.bf16.msra.mxu0 0
      %8845 = vmatprep.subr.bf16.mxu0 0
      %8846 = vmatpush1.bf16.msra.mxu0 0
      %8847 = vmatprep.subr.bf16.mxu0 0
      %8848 = vmatpush1.bf16.msra.mxu0 0
      %8849 = vmatprep.subr.bf16.mxu0 0
      %8850 = vmatpush1.bf16.msra.mxu0 0
      %8851 = vmatprep.mubr.bf16.mxu0 0
      %8852 = vmatmul.mubr.bf16.gmra.mrb[0].mxu0 %v8814
      %v8853 = vpop.f32.mrb[0].mxu0
      %v8854 = vadd.f32 %v8778, %v8853
      %v8855 = vpop.f32.mrb[0].mxu0
      %v8856 = vpop.f32.mrb[0].mxu0
      %v8857 = vadd.f32 %v8778, %v8856
      %v8858 = vpop.f32.mrb[0].mxu0
      %8859 = vdwg.mxu0
      %8860 = vst [vmem:[%s442] sm:$0xff] %v8854
      %8861 = vst [vmem:[%s442 + $0x8] sm:$0xff] %v8857
      %s8862 = smul.u32 2, %s24
      %p8863 = scmp.lt.s32.totalorder %s8862, 3
      %s8864 = scalar_select %p8863, %s8862, 3
      %s8865 = smul.addr %s8864, 8
      %s8866 = scalar_lea.vmem %s13, %s8865
      // Predicated region
      $region73: #{lenet_forward.1} parent=71 // pred_check
        %p8867 = pneg %p320
      $region74: #{lenet_forward.1} parent=71 // pred_check_branch
        %8869 = sbr.rel (%p8867) target = $region76
      $region75: #{lenet_forward.1} parent=71 // pred_region
        %s8870 = smul.u32 2, %s24
      $region76: #{lenet_forward.1} parent=71 // pred_fallthru
        _
    $region72: #{lenet_forward.1} parent=5 // pred_fallthru
      _
    %p8871 = scmp.le.s32.totalorder 2, %s19
    // Predicated region
    $region77: #{lenet_forward.1} parent=5 // pred_check
      %p8872 = pneg %p8871
    $region78: #{lenet_forward.1} parent=5 // pred_check_branch
      %8874 = sbr.rel (%p8872) target = $region80
    $region79: #{lenet_forward.1} parent=5 // pred_region
      %s8875 = ssub.s32 %s19, 2
      // Predicated region
      $region81: #{lenet_forward.1} parent=79 // pred_check
        %p8876 = pneg %p326
      $region82: #{lenet_forward.1} parent=79 // pred_check_branch
        %8878 = sbr.rel (%p8876) target = $region84
      $region83: #{lenet_forward.1} parent=79 // pred_region
        %s8879 = smul.u32 2, %s25
        %p8880 = scmp.lt.s32.totalorder %s8879, 3
        %s8881 = scalar_select %p8880, %s8879, 3
        %s8882 = smul.addr %s8881, 8
        %s8883 = scalar_lea.vmem %s13, %s8882
      $region84: #{lenet_forward.1} parent=79 // pred_fallthru
        _
    $region80: #{lenet_forward.1} parent=5 // pred_fallthru
      _
  $region6: #{lenet_forward.1} parent=0 // loop_footer
    %s23 = sadd.s32 1, %s19
  $region7: #{lenet_forward.1} parent=0 // loop_footer_branch
    %18 = sbr.rel target = $region3
  $region8: #{lenet_forward.1} parent=0 // loop_exit
    _

</llo_original>
